<compile_context>
chip_gen: v7x
topology: tpu7x:2x2x1
jax: 0.10.0
libtpu: 0.0.40
codegen_flags: <defaults>
</compile_context>

<pallas_src>
import jax
import jax.numpy as jnp
from jax.experimental import pallas as pl
from jax.experimental.pallas import tpu as pltpu


# ----------------------------- shared value-level math -----------------------------
# These helpers operate on plain jnp values, so the very same code runs inside the
# Pallas kernels (on loaded VMEM blocks) and in the pure-JAX reference self-check.

def _leaky(x):
    return jnp.where(x > 0, x, 0.2 * x)            # LeakyReLU(0.2)


def _pad_hw1(x):
    """Zero-pad axes 1 (H) and 2 (W) of a (BN,H,W,C) value by 1 on each side.
    Done with concatenation (supported inside Mosaic) instead of lax.pad."""
    bn, h, w, c = x.shape
    zw = jnp.zeros((bn, h, 1, c), x.dtype)
    x = jnp.concatenate([zw, x, zw], axis=2)
    zh = jnp.zeros((bn, 1, w + 2, c), x.dtype)
    return jnp.concatenate([zh, x, zh], axis=1)


def _conv3x3(x, w, bias):
    """'Same' (1,3,3) conv as ONE fused matmul: (BN*H*W, 9*Cin) @ (9*Cin, Cout)."""
    bn, h, wd, cin = x.shape
    xp = _pad_hw1(x)
    cols = [xp[:, dy:dy + h, dx:dx + wd, :].reshape(bn * h * wd, cin)
            for dy in range(3) for dx in range(3)]
    patches = jnp.concatenate(cols, axis=-1)                       # (M, 9*Cin)
    y = jnp.dot(patches, w, preferred_element_type=jnp.float32)
    if bias is not None:
        y = y + bias
    return y.reshape(bn, h, wd, w.shape[-1])


def _spatial_apply(x, w1, b1, w2, b2):
    y = _leaky(_conv3x3(x, w1, b1))
    return _leaky(_conv3x3(y, w2, b2))


def _angular_apply(xa, w1, w2):
    y = _leaky(jnp.dot(xa, w1, preferred_element_type=jnp.float32))
    return _leaky(jnp.dot(y, w2, preferred_element_type=jnp.float32))


def _epi_apply(x, w1, w2, an):
    """EPiConv.epiconv on a (BD, an, Wd, Cin) slab -> (BD, Wd, an*E_ch).
    conv (1, an, 2*(an//2)+1), pad (0,0,an//2), bias-free -> leaky -> 1x1 -> leaky,
    fused into two matmuls with an in-VMEM im2col."""
    bd, v, wd, cin = x.shape
    pad = an // 2
    kw_sz = 2 * pad + 1
    zw = jnp.zeros((bd, v, pad, cin), x.dtype)
    xp = jnp.concatenate([zw, x, zw], axis=2)                      # (BD, an, Wd+2p, C)
    cols = [xp[:, vv:vv + 1, kw:kw + wd, :].reshape(bd * wd, cin)
            for vv in range(v) for kw in range(kw_sz)]
    patches = jnp.concatenate(cols, axis=-1)                       # (M, an*Kw*Cin)
    y = _leaky(jnp.dot(patches, w1, preferred_element_type=jnp.float32))
    y = _leaky(jnp.dot(y, w2, preferred_element_type=jnp.float32))
    return y.reshape(bd, wd, w2.shape[-1])


def _fuse_apply(cat, xres, w1, b1, w2, b2):
    bn, h, wd, ct = cat.shape
    y = _leaky(jnp.dot(cat.reshape(bn * h * wd, ct), w1,
                       preferred_element_type=jnp.float32) + b1)
    y = _conv3x3(y.reshape(bn, h, wd, -1), w2, b2)                 # no activation
    return y + xres                                                # final residual (+x)


# ----------------------------- Pallas kernels -----------------------------

def _spa_kernel(x_ref, w1_ref, b1_ref, w2_ref, b2_ref, out_ref):
    out_ref[...] = _spatial_apply(x_ref[...], w1_ref[...], b1_ref[...],
                                  w2_ref[...], b2_ref[...])


def _ang_kernel(x_ref, w1_ref, w2_ref, out_ref):
    out_ref[...] = _angular_apply(x_ref[...], w1_ref[...], w2_ref[...])


def _make_epi_kernel(an):
    def kernel(x_ref, w1_ref, w2_ref, out_ref):
        out_ref[...] = _epi_apply(x_ref[...], w1_ref[0], w2_ref[0], an)
    return kernel


def _fuse_kernel(cat_ref, xres_ref, w1_ref, b1_ref, w2_ref, b2_ref, out_ref):
    out_ref[...] = _fuse_apply(cat_ref[...], xres_ref[...], w1_ref[...], b1_ref[...],
                               w2_ref[...], b2_ref[...])


# ----------------------------- pallas_call wrappers -----------------------------

_PARALLEL = pltpu.CompilerParams(dimension_semantics=("parallel",))


def _wspec(shape):
    r = len(shape)
    return pl.BlockSpec(shape, lambda i, _r=r: (0,) * _r)


def spatial_conv_pallas(xs, w1, b1, w2, b2):
    bn, h, w, c = xs.shape
    g = 2 if bn % 2 == 0 else 1                     # 2-way parallel grid (v7x 2 TCs)
    blk = bn // g
    spec = pl.BlockSpec((blk, h, w, c), lambda i: (i, 0, 0, 0))
    return pl.pallas_call(
        _spa_kernel,
        out_shape=jax.ShapeDtypeStruct((bn, h, w, c), jnp.float32),
        grid=(g,),
        in_specs=[spec, _wspec(w1.shape), _wspec(b1.shape),
                  _wspec(w2.shape), _wspec(b2.shape)],
        out_specs=spec,
        compiler_params=_PARALLEL,
    )(xs, w1, b1, w2, b2)


def angular_conv_pallas(xa, w1, w2):
    m, k = xa.shape
    n_out = w2.shape[-1]
    g = 2 if m % 16 == 0 else 1
    blk = m // g
    return pl.pallas_call(
        _ang_kernel,
        out_shape=jax.ShapeDtypeStruct((m, n_out), jnp.float32),
        grid=(g,),
        in_specs=[pl.BlockSpec((blk, k), lambda i: (i, 0)),
                  _wspec(w1.shape), _wspec(w2.shape)],
        out_specs=pl.BlockSpec((blk, n_out), lambda i: (i, 0)),
        compiler_params=_PARALLEL,
    )(xa, w1, w2)


def epi_conv_pallas(xcat, w1s, w2s, an, n_apps):
    bds, v, wd, c = xcat.shape                      # bds = n_apps * BD
    bd = bds // n_apps
    e2 = w2s.shape[-1]
    return pl.pallas_call(
        _make_epi_kernel(an),
        out_shape=jax.ShapeDtypeStruct((bds, wd, e2), jnp.float32),
        grid=(n_apps,),
        in_specs=[pl.BlockSpec((bd, v, wd, c), lambda i: (i, 0, 0, 0)),
                  pl.BlockSpec((1,) + w1s.shape[1:], lambda i: (i, 0, 0)),
                  pl.BlockSpec((1,) + w2s.shape[1:], lambda i: (i, 0, 0))],
        out_specs=pl.BlockSpec((bd, wd, e2), lambda i: (i, 0, 0)),
        compiler_params=_PARALLEL,
    )(xcat, w1s, w2s)


def fuse_conv_pallas(cat, xres, w1, b1, w2, b2):
    bn, h, w, ct = cat.shape
    c = w1.shape[-1]
    g = 2 if bn % 2 == 0 else 1
    blk = bn // g
    return pl.pallas_call(
        _fuse_kernel,
        out_shape=jax.ShapeDtypeStruct((bn, h, w, c), jnp.float32),
        grid=(g,),
        in_specs=[pl.BlockSpec((blk, h, w, ct), lambda i: (i, 0, 0, 0)),
                  pl.BlockSpec((blk, h, w, c), lambda i: (i, 0, 0, 0)),
                  _wspec(w1.shape), _wspec(b1.shape),
                  _wspec(w2.shape), _wspec(b2.shape)],
        out_specs=pl.BlockSpec((blk, h, w, c), lambda i: (i, 0, 0, 0)),
        compiler_params=_PARALLEL,
    )(cat, xres, w1, b1, w2, b2)


# ----------------------------- C42_Conv forward (glue) -----------------------------

def c42_forward(x, params, an, use_pallas=True):
    b, c, n, h, w = x.shape
    assert n == an * an
    e_ch = params["we2"].shape[0]
    a_ch = params["wa1"].shape[-1]

    # ---- SpatialConv branch (s_out) ----
    xs = jnp.transpose(x, (0, 2, 3, 4, 1)).reshape(b * n, h, w, c)       # (BN,h,w,c)
    if use_pallas:
        s_cl = spatial_conv_pallas(xs, params["ws1"], params["bs1"],
                                   params["ws2"], params["bs2"])
    else:
        s_cl = _spatial_apply(xs, params["ws1"], params["bs1"],
                              params["ws2"], params["bs2"])
    s_cl = s_cl.reshape(b, n, h, w, c)

    # ---- AngularConv branch (a_out) ----
    xa = jnp.transpose(x, (0, 3, 4, 1, 2)).reshape(b * h * w, c * n)     # feat = (c,n)
    if use_pallas:
        ya = angular_conv_pallas(xa, params["wa1"], params["wa2"])
    else:
        ya = _angular_apply(xa, params["wa1"], params["wa2"])
    a_cl = ya.reshape(b, h, w, a_ch, n).transpose(0, 4, 1, 2, 3)         # (b,n,h,w,A)

    # ---- EPI branches (epiconv on epih/epiv, dpiconv on dpih/dpiv) ----
    x6 = x.reshape(b, c, an, an, h, w)

    def prep(fm):  # (b,c,A1,A2,A3,A4) -> (b*A1*A3, A2, A4, c)  [matches EPiConv perm]
        bb, cc, a1, a2, a3, a4 = fm.shape
        return jnp.transpose(fm, (0, 2, 4, 3, 5, 1)).reshape(bb * a1 * a3, a2, a4, cc)

    xe_h = prep(x6)                                                       # epih
    xd_h = prep(jnp.transpose(x6, (0, 1, 3, 2, 4, 5)))                    # dpih
    xe_v = prep(jnp.transpose(x6, (0, 1, 3, 2, 5, 4)))                    # epiv
    xd_v = prep(jnp.transpose(x6, (0, 1, 2, 3, 5, 4)))                    # dpiv

    w1s = jnp.stack([params["we1"], params["wd1"]])
    w2s = jnp.stack([params["we2"], params["wd2"]])
    if use_pallas:
        yh = epi_conv_pallas(jnp.concatenate([xe_h, xd_h], 0), w1s, w2s, an, 2)
        yv = epi_conv_pallas(jnp.concatenate([xe_v, xd_v], 0), w1s, w2s, an, 2)
    else:
        yh = jnp.concatenate([_epi_apply(xe_h, params["we1"], params["we2"], an),
                              _epi_apply(xd_h, params["wd1"], params["wd2"], an)], 0)
        yv = jnp.concatenate([_epi_apply(xe_v, params["we1"], params["we2"], an),
                              _epi_apply(xd_v, params["wd1"], params["wd2"], an)], 0)
    bdh, bdv = xe_h.shape[0], xe_v.shape[0]
    yh_e, yh_d = yh[:bdh], yh[bdh:]
    yv_e, yv_d = yv[:bdv], yv[bdv:]

    def split(t, a1, a3, a4):  # (b*A1*A3, A4, an*E) -> (b, A1, A3, A4, E, an)
        return t.reshape(b, a1, a3, a4, e_ch, an)

    # map each EPI result back to (b, n=u*an+v, h, w, E) channels-last
    eh = split(yh_e, an, h, w).transpose(0, 1, 5, 2, 3, 4).reshape(b, n, h, w, e_ch)
    dh = split(yh_d, an, h, w).transpose(0, 5, 1, 2, 3, 4).reshape(b, n, h, w, e_ch)
    ev = split(yv_e, an, w, h).transpose(0, 5, 1, 3, 2, 4).reshape(b, n, h, w, e_ch)
    dv = split(yv_d, an, w, h).transpose(0, 1, 5, 3, 2, 4).reshape(b, n, h, w, e_ch)

    # ---- fuse (1x1 + LeakyReLU + (1,3,3)) + residual ----
    cat = jnp.concatenate([s_cl, a_cl, eh, ev, dh, dv], axis=-1)         # torch cat order
    cat = cat.reshape(b * n, h, w, -1)
    if use_pallas:
        out_cl = fuse_conv_pallas(cat, xs, params["wf1"], params["bf1"],
                                  params["wf2"], params["bf2"])
    else:
        out_cl = _fuse_apply(cat, xs, params["wf1"], params["bf1"],
                             params["wf2"], params["bf2"])
    return out_cl.reshape(b, n, h, w, c).transpose(0, 4, 1, 2, 3)        # (b,c,n,h,w)


# ----------------------------- deterministic parameter init -----------------------------

def init_params(key, ch, an):
    n = an * an
    a_ch = ch // 4
    e_ch = ch // 2
    kw_sz = an // 2 * 2 + 1
    c_total = ch + a_ch + 4 * e_ch
    ks = list(jax.random.split(key, 14))

    def rnd(k, shape, scale=0.1):
        return (scale * jax.random.normal(k, shape)).astype(jnp.float32)

    def conv3x3_w(k, cin, cout):            # torch (cout, cin, 1, 3, 3) -> (9*cin, cout)
        wt = rnd(k, (cout, cin, 3, 3))
        return jnp.transpose(wt, (2, 3, 1, 0)).reshape(9 * cin, cout)

    def pw_w(k, cin, cout):                 # torch (cout, cin, 1, 1, 1) -> (cin, cout)
        return rnd(k, (cout, cin)).T

    def epi_w(k, cin, cout):                # torch (cout, cin, 1, an, Kw) -> (an*Kw*cin, cout)
        wt = rnd(k, (cout, cin, an, kw_sz))
        return jnp.transpose(wt, (2, 3, 1, 0)).reshape(an * kw_sz * cin, cout)

    return dict(
        # SpatialConv (bias=True)
        ws1=conv3x3_w(ks[0], ch, ch), bs1=rnd(ks[1], (1, ch)),
        ws2=conv3x3_w(ks[2], ch, ch), bs2=rnd(ks[3], (1, ch)),
        # AngularConv (bias=False)
        wa1=pw_w(ks[4], ch * n, a_ch), wa2=pw_w(ks[5], a_ch, a_ch * n),
        # epiconv / dpiconv (bias=False)
        we1=epi_w(ks[6], ch, e_ch), we2=pw_w(ks[7], e_ch, an * e_ch),
        wd1=epi_w(ks[8], ch, e_ch), wd2=pw_w(ks[9], e_ch, an * e_ch),
        # fuse (bias=True)
        wf1=pw_w(ks[10], c_total, ch), bf1=rnd(ks[11], (1, ch)),
        wf2=conv3x3_w(ks[12], ch, ch), bf2=rnd(ks[13], (1, ch)),
    )


# ----------------------------- main -----------------------------

if __name__ == "__main__":
    key = jax.random.PRNGKey(0)
    angRes = 2
    ch = 8                      # S_ch, A_ch, E_ch, D_ch = 8, 2, 4, 4
    b, h, w = 2, 8, 8
    n = angRes * angRes

    kx, kp = jax.random.split(key)
    x = jax.random.normal(kx, (b, ch, n, h, w), dtype=jnp.float32)
    params = init_params(kp, ch, angRes)

    fwd = jax.jit(lambda xx: c42_forward(xx, params, angRes, use_pallas=True))
    out = jax.block_until_ready(fwd(x))
    assert out.shape == (b, ch, n, h, w)
    assert bool(jnp.all(jnp.isfinite(out)))

    # self-check: Pallas kernels vs the same math in plain JAX (f32 reference)
    with jax.default_matmul_precision("highest"):
        ref = jax.block_until_ready(
            jax.jit(lambda xx: c42_forward(xx, params, angRes, use_pallas=False))(x))
    err = float(jnp.max(jnp.abs(out - ref)))
    assert err < 5e-2, f"pallas/ref mismatch: {err}"

    print("KERNEL_OK")
</pallas_src>

<mosaic_0001>
module attributes {stable_mosaic.version = 11 : i64} {
  func.func @_spa_kernel(%arg0: i32, %arg1: memref<4x8x8x8xf32, #tpu.memory_space<vmem>>, %arg2: memref<72x8xf32, #tpu.memory_space<vmem>>, %arg3: memref<1x8xf32, #tpu.memory_space<vmem>>, %arg4: memref<72x8xf32, #tpu.memory_space<vmem>>, %arg5: memref<1x8xf32, #tpu.memory_space<vmem>>, %arg6: memref<4x8x8x8xf32, #tpu.memory_space<vmem>>) attributes {dimension_semantics = [#tpu.dimension_semantics<parallel>], iteration_bounds = array<i64: 2>, scalar_prefetch = 0 : i64, scratch_operands = 0 : i64, tpu.core_type = #tpu.core_type<tc>, window_params = [{transform_indices = @transform_0, window_bounds = array<i64: 4, 8, 8, 8>}, {pipeline_mode = #tpu.pipeline_mode<synchronous>, transform_indices = @transform_1, window_bounds = array<i64: 72, 8>}, {pipeline_mode = #tpu.pipeline_mode<synchronous>, transform_indices = @transform_2, window_bounds = array<i64: 1, 8>}, {pipeline_mode = #tpu.pipeline_mode<synchronous>, transform_indices = @transform_3, window_bounds = array<i64: 72, 8>}, {pipeline_mode = #tpu.pipeline_mode<synchronous>, transform_indices = @transform_4, window_bounds = array<i64: 1, 8>}, {transform_indices = @transform_5, window_bounds = array<i64: 4, 8, 8, 8>}]} {
    %c0 = arith.constant 0 : index
    %c0_0 = arith.constant 0 : index
    %c0_1 = arith.constant 0 : index
    %c0_2 = arith.constant 0 : index
    %0 = vector.load %arg1[%c0, %c0_0, %c0_1, %c0_2] : memref<4x8x8x8xf32, #tpu.memory_space<vmem>>, vector<4x8x8x8xf32>
    %c0_3 = arith.constant 0 : index
    %c0_4 = arith.constant 0 : index
    %1 = vector.load %arg2[%c0_3, %c0_4] : memref<72x8xf32, #tpu.memory_space<vmem>>, vector<72x8xf32>
    %c0_5 = arith.constant 0 : index
    %c0_6 = arith.constant 0 : index
    %2 = vector.load %arg3[%c0_5, %c0_6] : memref<1x8xf32, #tpu.memory_space<vmem>>, vector<1x8xf32>
    %c0_7 = arith.constant 0 : index
    %c0_8 = arith.constant 0 : index
    %3 = vector.load %arg4[%c0_7, %c0_8] : memref<72x8xf32, #tpu.memory_space<vmem>>, vector<72x8xf32>
    %c0_9 = arith.constant 0 : index
    %c0_10 = arith.constant 0 : index
    %4 = vector.load %arg5[%c0_9, %c0_10] : memref<1x8xf32, #tpu.memory_space<vmem>>, vector<1x8xf32>
    %cst = arith.constant 0.000000e+00 : f32
    %5 = vector.broadcast %cst : f32 to vector<4x8x1x8xf32>
    %6 = tpu.concatenate %5, %0, %5 in 2 : vector<4x8x1x8xf32>, vector<4x8x8x8xf32>, vector<4x8x1x8xf32> -> vector<4x8x10x8xf32>
    %cst_11 = arith.constant 0.000000e+00 : f32
    %7 = vector.broadcast %cst_11 : f32 to vector<4x1x10x8xf32>
    %8 = tpu.concatenate %7, %6, %7 in 1 : vector<4x1x10x8xf32>, vector<4x8x10x8xf32>, vector<4x1x10x8xf32> -> vector<4x10x10x8xf32>
    %9 = vector.extract_strided_slice %8 {offsets = [0, 0, 0, 0], sizes = [4, 8, 8, 8], strides = [1, 1, 1, 1]} : vector<4x10x10x8xf32> to vector<4x8x8x8xf32>
    %10 = vector.shape_cast %9 : vector<4x8x8x8xf32> to vector<256x8xf32>
    %11 = vector.extract_strided_slice %8 {offsets = [0, 0, 1, 0], sizes = [4, 8, 8, 8], strides = [1, 1, 1, 1]} : vector<4x10x10x8xf32> to vector<4x8x8x8xf32>
    %12 = vector.shape_cast %11 : vector<4x8x8x8xf32> to vector<256x8xf32>
    %13 = vector.extract_strided_slice %8 {offsets = [0, 0, 2, 0], sizes = [4, 8, 8, 8], strides = [1, 1, 1, 1]} : vector<4x10x10x8xf32> to vector<4x8x8x8xf32>
    %14 = vector.shape_cast %13 : vector<4x8x8x8xf32> to vector<256x8xf32>
    %15 = vector.extract_strided_slice %8 {offsets = [0, 1, 0, 0], sizes = [4, 8, 8, 8], strides = [1, 1, 1, 1]} : vector<4x10x10x8xf32> to vector<4x8x8x8xf32>
    %16 = vector.shape_cast %15 : vector<4x8x8x8xf32> to vector<256x8xf32>
    %17 = vector.extract_strided_slice %8 {offsets = [0, 1, 1, 0], sizes = [4, 8, 8, 8], strides = [1, 1, 1, 1]} : vector<4x10x10x8xf32> to vector<4x8x8x8xf32>
    %18 = vector.shape_cast %17 : vector<4x8x8x8xf32> to vector<256x8xf32>
    %19 = vector.extract_strided_slice %8 {offsets = [0, 1, 2, 0], sizes = [4, 8, 8, 8], strides = [1, 1, 1, 1]} : vector<4x10x10x8xf32> to vector<4x8x8x8xf32>
    %20 = vector.shape_cast %19 : vector<4x8x8x8xf32> to vector<256x8xf32>
    %21 = vector.extract_strided_slice %8 {offsets = [0, 2, 0, 0], sizes = [4, 8, 8, 8], strides = [1, 1, 1, 1]} : vector<4x10x10x8xf32> to vector<4x8x8x8xf32>
    %22 = vector.shape_cast %21 : vector<4x8x8x8xf32> to vector<256x8xf32>
    %23 = vector.extract_strided_slice %8 {offsets = [0, 2, 1, 0], sizes = [4, 8, 8, 8], strides = [1, 1, 1, 1]} : vector<4x10x10x8xf32> to vector<4x8x8x8xf32>
    %24 = vector.shape_cast %23 : vector<4x8x8x8xf32> to vector<256x8xf32>
    %25 = vector.extract_strided_slice %8 {offsets = [0, 2, 2, 0], sizes = [4, 8, 8, 8], strides = [1, 1, 1, 1]} : vector<4x10x10x8xf32> to vector<4x8x8x8xf32>
    %26 = vector.shape_cast %25 : vector<4x8x8x8xf32> to vector<256x8xf32>
    %27 = tpu.concatenate %10, %12, %14, %16, %18, %20, %22, %24, %26 in 1 : vector<256x8xf32>, vector<256x8xf32>, vector<256x8xf32>, vector<256x8xf32>, vector<256x8xf32>, vector<256x8xf32>, vector<256x8xf32>, vector<256x8xf32>, vector<256x8xf32> -> vector<256x72xf32>
    %cst_12 = arith.constant dense<0.000000e+00> : vector<256x8xf32>
    %28 = tpu.matmul %27, %1, %cst_12 {dimension_numbers = #tpu.dot_dimension_numbers<[1], [0], [0], [1], [0, 0, 1, 1], [], []>} : vector<256x72xf32>, vector<72x8xf32>, vector<256x8xf32> -> vector<256x8xf32>
    %29 = vector.broadcast %2 : vector<1x8xf32> to vector<256x8xf32>
    %30 = arith.addf %28, %29 : vector<256x8xf32>
    %31 = vector.shape_cast %30 : vector<256x8xf32> to vector<4x8x8x8xf32>
    %cst_13 = arith.constant 0.000000e+00 : f32
    %32 = vector.broadcast %cst_13 : f32 to vector<4x8x8x8xf32>
    %33 = arith.cmpf ogt, %31, %32 : vector<4x8x8x8xf32>
    %cst_14 = arith.constant 2.000000e-01 : f32
    %34 = vector.broadcast %cst_14 : f32 to vector<4x8x8x8xf32>
    %35 = arith.mulf %34, %31 : vector<4x8x8x8xf32>
    %36 = arith.select %33, %31, %35 : vector<4x8x8x8xi1>, vector<4x8x8x8xf32>
    %cst_15 = arith.constant 0.000000e+00 : f32
    %37 = vector.broadcast %cst_15 : f32 to vector<4x8x1x8xf32>
    %38 = tpu.concatenate %37, %36, %37 in 2 : vector<4x8x1x8xf32>, vector<4x8x8x8xf32>, vector<4x8x1x8xf32> -> vector<4x8x10x8xf32>
    %cst_16 = arith.constant 0.000000e+00 : f32
    %39 = vector.broadcast %cst_16 : f32 to vector<4x1x10x8xf32>
    %40 = tpu.concatenate %39, %38, %39 in 1 : vector<4x1x10x8xf32>, vector<4x8x10x8xf32>, vector<4x1x10x8xf32> -> vector<4x10x10x8xf32>
    %41 = vector.extract_strided_slice %40 {offsets = [0, 0, 0, 0], sizes = [4, 8, 8, 8], strides = [1, 1, 1, 1]} : vector<4x10x10x8xf32> to vector<4x8x8x8xf32>
    %42 = vector.shape_cast %41 : vector<4x8x8x8xf32> to vector<256x8xf32>
    %43 = vector.extract_strided_slice %40 {offsets = [0, 0, 1, 0], sizes = [4, 8, 8, 8], strides = [1, 1, 1, 1]} : vector<4x10x10x8xf32> to vector<4x8x8x8xf32>
    %44 = vector.shape_cast %43 : vector<4x8x8x8xf32> to vector<256x8xf32>
    %45 = vector.extract_strided_slice %40 {offsets = [0, 0, 2, 0], sizes = [4, 8, 8, 8], strides = [1, 1, 1, 1]} : vector<4x10x10x8xf32> to vector<4x8x8x8xf32>
    %46 = vector.shape_cast %45 : vector<4x8x8x8xf32> to vector<256x8xf32>
    %47 = vector.extract_strided_slice %40 {offsets = [0, 1, 0, 0], sizes = [4, 8, 8, 8], strides = [1, 1, 1, 1]} : vector<4x10x10x8xf32> to vector<4x8x8x8xf32>
    %48 = vector.shape_cast %47 : vector<4x8x8x8xf32> to vector<256x8xf32>
    %49 = vector.extract_strided_slice %40 {offsets = [0, 1, 1, 0], sizes = [4, 8, 8, 8], strides = [1, 1, 1, 1]} : vector<4x10x10x8xf32> to vector<4x8x8x8xf32>
    %50 = vector.shape_cast %49 : vector<4x8x8x8xf32> to vector<256x8xf32>
    %51 = vector.extract_strided_slice %40 {offsets = [0, 1, 2, 0], sizes = [4, 8, 8, 8], strides = [1, 1, 1, 1]} : vector<4x10x10x8xf32> to vector<4x8x8x8xf32>
    %52 = vector.shape_cast %51 : vector<4x8x8x8xf32> to vector<256x8xf32>
    %53 = vector.extract_strided_slice %40 {offsets = [0, 2, 0, 0], sizes = [4, 8, 8, 8], strides = [1, 1, 1, 1]} : vector<4x10x10x8xf32> to vector<4x8x8x8xf32>
    %54 = vector.shape_cast %53 : vector<4x8x8x8xf32> to vector<256x8xf32>
    %55 = vector.extract_strided_slice %40 {offsets = [0, 2, 1, 0], sizes = [4, 8, 8, 8], strides = [1, 1, 1, 1]} : vector<4x10x10x8xf32> to vector<4x8x8x8xf32>
    %56 = vector.shape_cast %55 : vector<4x8x8x8xf32> to vector<256x8xf32>
    %57 = vector.extract_strided_slice %40 {offsets = [0, 2, 2, 0], sizes = [4, 8, 8, 8], strides = [1, 1, 1, 1]} : vector<4x10x10x8xf32> to vector<4x8x8x8xf32>
    %58 = vector.shape_cast %57 : vector<4x8x8x8xf32> to vector<256x8xf32>
    %59 = tpu.concatenate %42, %44, %46, %48, %50, %52, %54, %56, %58 in 1 : vector<256x8xf32>, vector<256x8xf32>, vector<256x8xf32>, vector<256x8xf32>, vector<256x8xf32>, vector<256x8xf32>, vector<256x8xf32>, vector<256x8xf32>, vector<256x8xf32> -> vector<256x72xf32>
    %cst_17 = arith.constant dense<0.000000e+00> : vector<256x8xf32>
    %60 = tpu.matmul %59, %3, %cst_17 {dimension_numbers = #tpu.dot_dimension_numbers<[1], [0], [0], [1], [0, 0, 1, 1], [], []>} : vector<256x72xf32>, vector<72x8xf32>, vector<256x8xf32> -> vector<256x8xf32>
    %61 = vector.broadcast %4 : vector<1x8xf32> to vector<256x8xf32>
    %62 = arith.addf %60, %61 : vector<256x8xf32>
    %63 = vector.shape_cast %62 : vector<256x8xf32> to vector<4x8x8x8xf32>
    %cst_18 = arith.constant 0.000000e+00 : f32
    %64 = vector.broadcast %cst_18 : f32 to vector<4x8x8x8xf32>
    %65 = arith.cmpf ogt, %63, %64 : vector<4x8x8x8xf32>
    %cst_19 = arith.constant 2.000000e-01 : f32
    %66 = vector.broadcast %cst_19 : f32 to vector<4x8x8x8xf32>
    %67 = arith.mulf %66, %63 : vector<4x8x8x8xf32>
    %68 = arith.select %65, %63, %67 : vector<4x8x8x8xi1>, vector<4x8x8x8xf32>
    %c0_20 = arith.constant 0 : index
    %c0_21 = arith.constant 0 : index
    %c0_22 = arith.constant 0 : index
    %c0_23 = arith.constant 0 : index
    %69 = vector.load %arg6[%c0_20, %c0_21, %c0_22, %c0_23] : memref<4x8x8x8xf32, #tpu.memory_space<vmem>>, vector<4x8x8x8xf32>
    tpu.vector_store %arg6[%c0_20, %c0_21, %c0_22, %c0_23], %68 {strides = array<i32>} : memref<4x8x8x8xf32, #tpu.memory_space<vmem>>, vector<4x8x8x8xf32>,
    return
  }
  func.func @transform_0(%arg0: i32) -> (i32, i32, i32, i32) {
    %c0_i32 = arith.constant 0 : i32
    %c0_i32_0 = arith.constant 0 : i32
    %c0_i32_1 = arith.constant 0 : i32
    %c0_i32_2 = arith.constant 0 : i32
    return %arg0, %c0_i32, %c0_i32_0, %c0_i32_1 : i32, i32, i32, i32
  }
  func.func @transform_1(%arg0: i32) -> (i32, i32) {
    %c0_i32 = arith.constant 0 : i32
    %c0_i32_0 = arith.constant 0 : i32
    %c0_i32_1 = arith.constant 0 : i32
    return %c0_i32, %c0_i32_0 : i32, i32
  }
  func.func @transform_2(%arg0: i32) -> (i32, i32) {
    %c0_i32 = arith.constant 0 : i32
    %c0_i32_0 = arith.constant 0 : i32
    %c0_i32_1 = arith.constant 0 : i32
    return %c0_i32, %c0_i32_0 : i32, i32
  }
  func.func @transform_3(%arg0: i32) -> (i32, i32) {
    %c0_i32 = arith.constant 0 : i32
    %c0_i32_0 = arith.constant 0 : i32
    %c0_i32_1 = arith.constant 0 : i32
    return %c0_i32, %c0_i32_0 : i32, i32
  }
  func.func @transform_4(%arg0: i32) -> (i32, i32) {
    %c0_i32 = arith.constant 0 : i32
    %c0_i32_0 = arith.constant 0 : i32
    %c0_i32_1 = arith.constant 0 : i32
    return %c0_i32, %c0_i32_0 : i32, i32
  }
  func.func @transform_5(%arg0: i32) -> (i32, i32, i32, i32) {
    %c0_i32 = arith.constant 0 : i32
    %c0_i32_0 = arith.constant 0 : i32
    %c0_i32_1 = arith.constant 0 : i32
    %c0_i32_2 = arith.constant 0 : i32
    return %arg0, %c0_i32, %c0_i32_0, %c0_i32_1 : i32, i32, i32, i32
  }
}

module attributes {stable_mosaic.version = 11 : i64} {
  func.func @_ang_kernel(%arg0: i32, %arg1: memref<64x32xf32, #tpu.memory_space<vmem>>, %arg2: memref<32x2xf32, #tpu.memory_space<vmem>>, %arg3: memref<2x8xf32, #tpu.memory_space<vmem>>, %arg4: memref<64x8xf32, #tpu.memory_space<vmem>>) attributes {dimension_semantics = [#tpu.dimension_semantics<parallel>], iteration_bounds = array<i64: 2>, scalar_prefetch = 0 : i64, scratch_operands = 0 : i64, tpu.core_type = #tpu.core_type<tc>, window_params = [{transform_indices = @transform_0, window_bounds = array<i64: 64, 32>}, {pipeline_mode = #tpu.pipeline_mode<synchronous>, transform_indices = @transform_1, window_bounds = array<i64: 32, 2>}, {pipeline_mode = #tpu.pipeline_mode<synchronous>, transform_indices = @transform_2, window_bounds = array<i64: 2, 8>}, {transform_indices = @transform_3, window_bounds = array<i64: 64, 8>}]} {
    %c0 = arith.constant 0 : index
    %c0_0 = arith.constant 0 : index
    %0 = vector.load %arg1[%c0, %c0_0] : memref<64x32xf32, #tpu.memory_space<vmem>>, vector<64x32xf32>
    %c0_1 = arith.constant 0 : index
    %c0_2 = arith.constant 0 : index
    %1 = vector.load %arg2[%c0_1, %c0_2] : memref<32x2xf32, #tpu.memory_space<vmem>>, vector<32x2xf32>
    %c0_3 = arith.constant 0 : index
    %c0_4 = arith.constant 0 : index
    %2 = vector.load %arg3[%c0_3, %c0_4] : memref<2x8xf32, #tpu.memory_space<vmem>>, vector<2x8xf32>
    %cst = arith.constant dense<0.000000e+00> : vector<64x2xf32>
    %3 = tpu.matmul %0, %1, %cst {dimension_numbers = #tpu.dot_dimension_numbers<[1], [0], [0], [1], [0, 0, 1, 1], [], []>} : vector<64x32xf32>, vector<32x2xf32>, vector<64x2xf32> -> vector<64x2xf32>
    %cst_5 = arith.constant 0.000000e+00 : f32
    %4 = vector.broadcast %cst_5 : f32 to vector<64x2xf32>
    %5 = arith.cmpf ogt, %3, %4 : vector<64x2xf32>
    %cst_6 = arith.constant 2.000000e-01 : f32
    %6 = vector.broadcast %cst_6 : f32 to vector<64x2xf32>
    %7 = arith.mulf %6, %3 : vector<64x2xf32>
    %8 = arith.select %5, %3, %7 : vector<64x2xi1>, vector<64x2xf32>
    %cst_7 = arith.constant dense<0.000000e+00> : vector<64x8xf32>
    %9 = tpu.matmul %8, %2, %cst_7 {dimension_numbers = #tpu.dot_dimension_numbers<[1], [0], [0], [1], [0, 0, 1, 1], [], []>} : vector<64x2xf32>, vector<2x8xf32>, vector<64x8xf32> -> vector<64x8xf32>
    %cst_8 = arith.constant 0.000000e+00 : f32
    %10 = vector.broadcast %cst_8 : f32 to vector<64x8xf32>
    %11 = arith.cmpf ogt, %9, %10 : vector<64x8xf32>
    %cst_9 = arith.constant 2.000000e-01 : f32
    %12 = vector.broadcast %cst_9 : f32 to vector<64x8xf32>
    %13 = arith.mulf %12, %9 : vector<64x8xf32>
    %14 = arith.select %11, %9, %13 : vector<64x8xi1>, vector<64x8xf32>
    %c0_10 = arith.constant 0 : index
    %c0_11 = arith.constant 0 : index
    %15 = vector.load %arg4[%c0_10, %c0_11] : memref<64x8xf32, #tpu.memory_space<vmem>>, vector<64x8xf32>
    tpu.vector_store %arg4[%c0_10, %c0_11], %14 {strides = array<i32>} : memref<64x8xf32, #tpu.memory_space<vmem>>, vector<64x8xf32>,
    return
  }
  func.func @transform_0(%arg0: i32) -> (i32, i32) {
    %c0_i32 = arith.constant 0 : i32
    %c0_i32_0 = arith.constant 0 : i32
    return %arg0, %c0_i32 : i32, i32
  }
  func.func @transform_1(%arg0: i32) -> (i32, i32) {
    %c0_i32 = arith.constant 0 : i32
    %c0_i32_0 = arith.constant 0 : i32
    %c0_i32_1 = arith.constant 0 : i32
    return %c0_i32, %c0_i32_0 : i32, i32
  }
  func.func @transform_2(%arg0: i32) -> (i32, i32) {
    %c0_i32 = arith.constant 0 : i32
    %c0_i32_0 = arith.constant 0 : i32
    %c0_i32_1 = arith.constant 0 : i32
    return %c0_i32, %c0_i32_0 : i32, i32
  }
  func.func @transform_3(%arg0: i32) -> (i32, i32) {
    %c0_i32 = arith.constant 0 : i32
    %c0_i32_0 = arith.constant 0 : i32
    return %arg0, %c0_i32 : i32, i32
  }
}

module attributes {stable_mosaic.version = 11 : i64} {
  func.func @kernel(%arg0: i32, %arg1: memref<32x2x8x8xf32, #tpu.memory_space<vmem>>, %arg2: memref<1x48x4xf32, #tpu.memory_space<vmem>>, %arg3: memref<1x4x8xf32, #tpu.memory_space<vmem>>, %arg4: memref<32x8x8xf32, #tpu.memory_space<vmem>>) attributes {dimension_semantics = [#tpu.dimension_semantics<parallel>], iteration_bounds = array<i64: 2>, scalar_prefetch = 0 : i64, scratch_operands = 0 : i64, tpu.core_type = #tpu.core_type<tc>, window_params = [{transform_indices = @transform_0, window_bounds = array<i64: 32, 2, 8, 8>}, {transform_indices = @transform_1, window_bounds = array<i64: 1, 48, 4>}, {transform_indices = @transform_2, window_bounds = array<i64: 1, 4, 8>}, {transform_indices = @transform_3, window_bounds = array<i64: 32, 8, 8>}]} {
    %c0 = arith.constant 0 : index
    %c0_0 = arith.constant 0 : index
    %c0_1 = arith.constant 0 : index
    %c0_2 = arith.constant 0 : index
    %0 = vector.load %arg1[%c0, %c0_0, %c0_1, %c0_2] : memref<32x2x8x8xf32, #tpu.memory_space<vmem>>, vector<32x2x8x8xf32>
    %c0_3 = arith.constant 0 : index
    %c0_4 = arith.constant 0 : index
    %c0_5 = arith.constant 0 : index
    %1 = vector.load %arg2[%c0_3, %c0_4, %c0_5] : memref<1x48x4xf32, #tpu.memory_space<vmem>>, vector<1x48x4xf32>
    %2 = vector.shape_cast %1 : vector<1x48x4xf32> to vector<48x4xf32>
    %c0_6 = arith.constant 0 : index
    %c0_7 = arith.constant 0 : index
    %c0_8 = arith.constant 0 : index
    %3 = vector.load %arg3[%c0_6, %c0_7, %c0_8] : memref<1x4x8xf32, #tpu.memory_space<vmem>>, vector<1x4x8xf32>
    %4 = vector.shape_cast %3 : vector<1x4x8xf32> to vector<4x8xf32>
    %cst = arith.constant 0.000000e+00 : f32
    %5 = vector.broadcast %cst : f32 to vector<32x2x1x8xf32>
    %6 = tpu.concatenate %5, %0, %5 in 2 : vector<32x2x1x8xf32>, vector<32x2x8x8xf32>, vector<32x2x1x8xf32> -> vector<32x2x10x8xf32>
    %7 = vector.extract_strided_slice %6 {offsets = [0, 0, 0, 0], sizes = [32, 1, 8, 8], strides = [1, 1, 1, 1]} : vector<32x2x10x8xf32> to vector<32x1x8x8xf32>
    %8 = vector.shape_cast %7 : vector<32x1x8x8xf32> to vector<256x8xf32>
    %9 = vector.extract_strided_slice %6 {offsets = [0, 0, 1, 0], sizes = [32, 1, 8, 8], strides = [1, 1, 1, 1]} : vector<32x2x10x8xf32> to vector<32x1x8x8xf32>
    %10 = vector.shape_cast %9 : vector<32x1x8x8xf32> to vector<256x8xf32>
    %11 = vector.extract_strided_slice %6 {offsets = [0, 0, 2, 0], sizes = [32, 1, 8, 8], strides = [1, 1, 1, 1]} : vector<32x2x10x8xf32> to vector<32x1x8x8xf32>
    %12 = vector.shape_cast %11 : vector<32x1x8x8xf32> to vector<256x8xf32>
    %13 = vector.extract_strided_slice %6 {offsets = [0, 1, 0, 0], sizes = [32, 1, 8, 8], strides = [1, 1, 1, 1]} : vector<32x2x10x8xf32> to vector<32x1x8x8xf32>
    %14 = vector.shape_cast %13 : vector<32x1x8x8xf32> to vector<256x8xf32>
    %15 = vector.extract_strided_slice %6 {offsets = [0, 1, 1, 0], sizes = [32, 1, 8, 8], strides = [1, 1, 1, 1]} : vector<32x2x10x8xf32> to vector<32x1x8x8xf32>
    %16 = vector.shape_cast %15 : vector<32x1x8x8xf32> to vector<256x8xf32>
    %17 = vector.extract_strided_slice %6 {offsets = [0, 1, 2, 0], sizes = [32, 1, 8, 8], strides = [1, 1, 1, 1]} : vector<32x2x10x8xf32> to vector<32x1x8x8xf32>
    %18 = vector.shape_cast %17 : vector<32x1x8x8xf32> to vector<256x8xf32>
    %19 = tpu.concatenate %8, %10, %12, %14, %16, %18 in 1 : vector<256x8xf32>, vector<256x8xf32>, vector<256x8xf32>, vector<256x8xf32>, vector<256x8xf32>, vector<256x8xf32> -> vector<256x48xf32>
    %cst_9 = arith.constant dense<0.000000e+00> : vector<256x4xf32>
    %20 = tpu.matmul %19, %2, %cst_9 {dimension_numbers = #tpu.dot_dimension_numbers<[1], [0], [0], [1], [0, 0, 1, 1], [], []>} : vector<256x48xf32>, vector<48x4xf32>, vector<256x4xf32> -> vector<256x4xf32>
    %cst_10 = arith.constant 0.000000e+00 : f32
    %21 = vector.broadcast %cst_10 : f32 to vector<256x4xf32>
    %22 = arith.cmpf ogt, %20, %21 : vector<256x4xf32>
    %cst_11 = arith.constant 2.000000e-01 : f32
    %23 = vector.broadcast %cst_11 : f32 to vector<256x4xf32>
    %24 = arith.mulf %23, %20 : vector<256x4xf32>
    %25 = arith.select %22, %20, %24 : vector<256x4xi1>, vector<256x4xf32>
    %cst_12 = arith.constant dense<0.000000e+00> : vector<256x8xf32>
    %26 = tpu.matmul %25, %4, %cst_12 {dimension_numbers = #tpu.dot_dimension_numbers<[1], [0], [0], [1], [0, 0, 1, 1], [], []>} : vector<256x4xf32>, vector<4x8xf32>, vector<256x8xf32> -> vector<256x8xf32>
    %cst_13 = arith.constant 0.000000e+00 : f32
    %27 = vector.broadcast %cst_13 : f32 to vector<256x8xf32>
    %28 = arith.cmpf ogt, %26, %27 : vector<256x8xf32>
    %cst_14 = arith.constant 2.000000e-01 : f32
    %29 = vector.broadcast %cst_14 : f32 to vector<256x8xf32>
    %30 = arith.mulf %29, %26 : vector<256x8xf32>
    %31 = arith.select %28, %26, %30 : vector<256x8xi1>, vector<256x8xf32>
    %32 = vector.shape_cast %31 : vector<256x8xf32> to vector<32x8x8xf32>
    %c0_15 = arith.constant 0 : index
    %c0_16 = arith.constant 0 : index
    %c0_17 = arith.constant 0 : index
    %33 = vector.load %arg4[%c0_15, %c0_16, %c0_17] : memref<32x8x8xf32, #tpu.memory_space<vmem>>, vector<32x8x8xf32>
    tpu.vector_store %arg4[%c0_15, %c0_16, %c0_17], %32 {strides = array<i32>} : memref<32x8x8xf32, #tpu.memory_space<vmem>>, vector<32x8x8xf32>,
    return
  }
  func.func @transform_0(%arg0: i32) -> (i32, i32, i32, i32) {
    %c0_i32 = arith.constant 0 : i32
    %c0_i32_0 = arith.constant 0 : i32
    %c0_i32_1 = arith.constant 0 : i32
    %c0_i32_2 = arith.constant 0 : i32
    return %arg0, %c0_i32, %c0_i32_0, %c0_i32_1 : i32, i32, i32, i32
  }
  func.func @transform_1(%arg0: i32) -> (i32, i32, i32) {
    %c0_i32 = arith.constant 0 : i32
    %c0_i32_0 = arith.constant 0 : i32
    %c0_i32_1 = arith.constant 0 : i32
    return %arg0, %c0_i32, %c0_i32_0 : i32, i32, i32
  }
  func.func @transform_2(%arg0: i32) -> (i32, i32, i32) {
    %c0_i32 = arith.constant 0 : i32
    %c0_i32_0 = arith.constant 0 : i32
    %c0_i32_1 = arith.constant 0 : i32
    return %arg0, %c0_i32, %c0_i32_0 : i32, i32, i32
  }
  func.func @transform_3(%arg0: i32) -> (i32, i32, i32) {
    %c0_i32 = arith.constant 0 : i32
    %c0_i32_0 = arith.constant 0 : i32
    %c0_i32_1 = arith.constant 0 : i32
    return %arg0, %c0_i32, %c0_i32_0 : i32, i32, i32
  }
}

module attributes {stable_mosaic.version = 11 : i64} {
  func.func @_fuse_kernel(%arg0: i32, %arg1: memref<4x8x8x26xf32, #tpu.memory_space<vmem>>, %arg2: memref<4x8x8x8xf32, #tpu.memory_space<vmem>>, %arg3: memref<26x8xf32, #tpu.memory_space<vmem>>, %arg4: memref<1x8xf32, #tpu.memory_space<vmem>>, %arg5: memref<72x8xf32, #tpu.memory_space<vmem>>, %arg6: memref<1x8xf32, #tpu.memory_space<vmem>>, %arg7: memref<4x8x8x8xf32, #tpu.memory_space<vmem>>) attributes {dimension_semantics = [#tpu.dimension_semantics<parallel>], iteration_bounds = array<i64: 2>, scalar_prefetch = 0 : i64, scratch_operands = 0 : i64, tpu.core_type = #tpu.core_type<tc>, window_params = [{transform_indices = @transform_0, window_bounds = array<i64: 4, 8, 8, 26>}, {transform_indices = @transform_1, window_bounds = array<i64: 4, 8, 8, 8>}, {pipeline_mode = #tpu.pipeline_mode<synchronous>, transform_indices = @transform_2, window_bounds = array<i64: 26, 8>}, {pipeline_mode = #tpu.pipeline_mode<synchronous>, transform_indices = @transform_3, window_bounds = array<i64: 1, 8>}, {pipeline_mode = #tpu.pipeline_mode<synchronous>, transform_indices = @transform_4, window_bounds = array<i64: 72, 8>}, {pipeline_mode = #tpu.pipeline_mode<synchronous>, transform_indices = @transform_5, window_bounds = array<i64: 1, 8>}, {transform_indices = @transform_6, window_bounds = array<i64: 4, 8, 8, 8>}]} {
    %c0 = arith.constant 0 : index
    %c0_0 = arith.constant 0 : index
    %c0_1 = arith.constant 0 : index
    %c0_2 = arith.constant 0 : index
    %0 = vector.load %arg1[%c0, %c0_0, %c0_1, %c0_2] : memref<4x8x8x26xf32, #tpu.memory_space<vmem>>, vector<4x8x8x26xf32>
    %c0_3 = arith.constant 0 : index
    %c0_4 = arith.constant 0 : index
    %c0_5 = arith.constant 0 : index
    %c0_6 = arith.constant 0 : index
    %1 = vector.load %arg2[%c0_3, %c0_4, %c0_5, %c0_6] : memref<4x8x8x8xf32, #tpu.memory_space<vmem>>, vector<4x8x8x8xf32>
    %c0_7 = arith.constant 0 : index
    %c0_8 = arith.constant 0 : index
    %2 = vector.load %arg3[%c0_7, %c0_8] : memref<26x8xf32, #tpu.memory_space<vmem>>, vector<26x8xf32>
    %c0_9 = arith.constant 0 : index
    %c0_10 = arith.constant 0 : index
    %3 = vector.load %arg4[%c0_9, %c0_10] : memref<1x8xf32, #tpu.memory_space<vmem>>, vector<1x8xf32>
    %c0_11 = arith.constant 0 : index
    %c0_12 = arith.constant 0 : index
    %4 = vector.load %arg5[%c0_11, %c0_12] : memref<72x8xf32, #tpu.memory_space<vmem>>, vector<72x8xf32>
    %c0_13 = arith.constant 0 : index
    %c0_14 = arith.constant 0 : index
    %5 = vector.load %arg6[%c0_13, %c0_14] : memref<1x8xf32, #tpu.memory_space<vmem>>, vector<1x8xf32>
    %6 = vector.shape_cast %0 : vector<4x8x8x26xf32> to vector<256x26xf32>
    %cst = arith.constant dense<0.000000e+00> : vector<256x8xf32>
    %7 = tpu.matmul %6, %2, %cst {dimension_numbers = #tpu.dot_dimension_numbers<[1], [0], [0], [1], [0, 0, 1, 1], [], []>} : vector<256x26xf32>, vector<26x8xf32>, vector<256x8xf32> -> vector<256x8xf32>
    %8 = vector.broadcast %3 : vector<1x8xf32> to vector<256x8xf32>
    %9 = arith.addf %7, %8 : vector<256x8xf32>
    %cst_15 = arith.constant 0.000000e+00 : f32
    %10 = vector.broadcast %cst_15 : f32 to vector<256x8xf32>
    %11 = arith.cmpf ogt, %9, %10 : vector<256x8xf32>
    %cst_16 = arith.constant 2.000000e-01 : f32
    %12 = vector.broadcast %cst_16 : f32 to vector<256x8xf32>
    %13 = arith.mulf %12, %9 : vector<256x8xf32>
    %14 = arith.select %11, %9, %13 : vector<256x8xi1>, vector<256x8xf32>
    %15 = vector.shape_cast %14 : vector<256x8xf32> to vector<4x8x8x8xf32>
    %cst_17 = arith.constant 0.000000e+00 : f32
    %16 = vector.broadcast %cst_17 : f32 to vector<4x8x1x8xf32>
    %17 = tpu.concatenate %16, %15, %16 in 2 : vector<4x8x1x8xf32>, vector<4x8x8x8xf32>, vector<4x8x1x8xf32> -> vector<4x8x10x8xf32>
    %cst_18 = arith.constant 0.000000e+00 : f32
    %18 = vector.broadcast %cst_18 : f32 to vector<4x1x10x8xf32>
    %19 = tpu.concatenate %18, %17, %18 in 1 : vector<4x1x10x8xf32>, vector<4x8x10x8xf32>, vector<4x1x10x8xf32> -> vector<4x10x10x8xf32>
    %20 = vector.extract_strided_slice %19 {offsets = [0, 0, 0, 0], sizes = [4, 8, 8, 8], strides = [1, 1, 1, 1]} : vector<4x10x10x8xf32> to vector<4x8x8x8xf32>
    %21 = vector.shape_cast %20 : vector<4x8x8x8xf32> to vector<256x8xf32>
    %22 = vector.extract_strided_slice %19 {offsets = [0, 0, 1, 0], sizes = [4, 8, 8, 8], strides = [1, 1, 1, 1]} : vector<4x10x10x8xf32> to vector<4x8x8x8xf32>
    %23 = vector.shape_cast %22 : vector<4x8x8x8xf32> to vector<256x8xf32>
    %24 = vector.extract_strided_slice %19 {offsets = [0, 0, 2, 0], sizes = [4, 8, 8, 8], strides = [1, 1, 1, 1]} : vector<4x10x10x8xf32> to vector<4x8x8x8xf32>
    %25 = vector.shape_cast %24 : vector<4x8x8x8xf32> to vector<256x8xf32>
    %26 = vector.extract_strided_slice %19 {offsets = [0, 1, 0, 0], sizes = [4, 8, 8, 8], strides = [1, 1, 1, 1]} : vector<4x10x10x8xf32> to vector<4x8x8x8xf32>
    %27 = vector.shape_cast %26 : vector<4x8x8x8xf32> to vector<256x8xf32>
    %28 = vector.extract_strided_slice %19 {offsets = [0, 1, 1, 0], sizes = [4, 8, 8, 8], strides = [1, 1, 1, 1]} : vector<4x10x10x8xf32> to vector<4x8x8x8xf32>
    %29 = vector.shape_cast %28 : vector<4x8x8x8xf32> to vector<256x8xf32>
    %30 = vector.extract_strided_slice %19 {offsets = [0, 1, 2, 0], sizes = [4, 8, 8, 8], strides = [1, 1, 1, 1]} : vector<4x10x10x8xf32> to vector<4x8x8x8xf32>
    %31 = vector.shape_cast %30 : vector<4x8x8x8xf32> to vector<256x8xf32>
    %32 = vector.extract_strided_slice %19 {offsets = [0, 2, 0, 0], sizes = [4, 8, 8, 8], strides = [1, 1, 1, 1]} : vector<4x10x10x8xf32> to vector<4x8x8x8xf32>
    %33 = vector.shape_cast %32 : vector<4x8x8x8xf32> to vector<256x8xf32>
    %34 = vector.extract_strided_slice %19 {offsets = [0, 2, 1, 0], sizes = [4, 8, 8, 8], strides = [1, 1, 1, 1]} : vector<4x10x10x8xf32> to vector<4x8x8x8xf32>
    %35 = vector.shape_cast %34 : vector<4x8x8x8xf32> to vector<256x8xf32>
    %36 = vector.extract_strided_slice %19 {offsets = [0, 2, 2, 0], sizes = [4, 8, 8, 8], strides = [1, 1, 1, 1]} : vector<4x10x10x8xf32> to vector<4x8x8x8xf32>
    %37 = vector.shape_cast %36 : vector<4x8x8x8xf32> to vector<256x8xf32>
    %38 = tpu.concatenate %21, %23, %25, %27, %29, %31, %33, %35, %37 in 1 : vector<256x8xf32>, vector<256x8xf32>, vector<256x8xf32>, vector<256x8xf32>, vector<256x8xf32>, vector<256x8xf32>, vector<256x8xf32>, vector<256x8xf32>, vector<256x8xf32> -> vector<256x72xf32>
    %cst_19 = arith.constant dense<0.000000e+00> : vector<256x8xf32>
    %39 = tpu.matmul %38, %4, %cst_19 {dimension_numbers = #tpu.dot_dimension_numbers<[1], [0], [0], [1], [0, 0, 1, 1], [], []>} : vector<256x72xf32>, vector<72x8xf32>, vector<256x8xf32> -> vector<256x8xf32>
    %40 = vector.broadcast %5 : vector<1x8xf32> to vector<256x8xf32>
    %41 = arith.addf %39, %40 : vector<256x8xf32>
    %42 = vector.shape_cast %41 : vector<256x8xf32> to vector<4x8x8x8xf32>
    %43 = arith.addf %42, %1 : vector<4x8x8x8xf32>
    %c0_20 = arith.constant 0 : index
    %c0_21 = arith.constant 0 : index
    %c0_22 = arith.constant 0 : index
    %c0_23 = arith.constant 0 : index
    %44 = vector.load %arg7[%c0_20, %c0_21, %c0_22, %c0_23] : memref<4x8x8x8xf32, #tpu.memory_space<vmem>>, vector<4x8x8x8xf32>
    tpu.vector_store %arg7[%c0_20, %c0_21, %c0_22, %c0_23], %43 {strides = array<i32>} : memref<4x8x8x8xf32, #tpu.memory_space<vmem>>, vector<4x8x8x8xf32>,
    return
  }
  func.func @transform_0(%arg0: i32) -> (i32, i32, i32, i32) {
    %c0_i32 = arith.constant 0 : i32
    %c0_i32_0 = arith.constant 0 : i32
    %c0_i32_1 = arith.constant 0 : i32
    %c0_i32_2 = arith.constant 0 : i32
    return %arg0, %c0_i32, %c0_i32_0, %c0_i32_1 : i32, i32, i32, i32
  }
  func.func @transform_1(%arg0: i32) -> (i32, i32, i32, i32) {
    %c0_i32 = arith.constant 0 : i32
    %c0_i32_0 = arith.constant 0 : i32
    %c0_i32_1 = arith.constant 0 : i32
    %c0_i32_2 = arith.constant 0 : i32
    return %arg0, %c0_i32, %c0_i32_0, %c0_i32_1 : i32, i32, i32, i32
  }
  func.func @transform_2(%arg0: i32) -> (i32, i32) {
    %c0_i32 = arith.constant 0 : i32
    %c0_i32_0 = arith.constant 0 : i32
    %c0_i32_1 = arith.constant 0 : i32
    return %c0_i32, %c0_i32_0 : i32, i32
  }
  func.func @transform_3(%arg0: i32) -> (i32, i32) {
    %c0_i32 = arith.constant 0 : i32
    %c0_i32_0 = arith.constant 0 : i32
    %c0_i32_1 = arith.constant 0 : i32
    return %c0_i32, %c0_i32_0 : i32, i32
  }
  func.func @transform_4(%arg0: i32) -> (i32, i32) {
    %c0_i32 = arith.constant 0 : i32
    %c0_i32_0 = arith.constant 0 : i32
    %c0_i32_1 = arith.constant 0 : i32
    return %c0_i32, %c0_i32_0 : i32, i32
  }
  func.func @transform_5(%arg0: i32) -> (i32, i32) {
    %c0_i32 = arith.constant 0 : i32
    %c0_i32_0 = arith.constant 0 : i32
    %c0_i32_1 = arith.constant 0 : i32
    return %c0_i32, %c0_i32_0 : i32, i32
  }
  func.func @transform_6(%arg0: i32) -> (i32, i32, i32, i32) {
    %c0_i32 = arith.constant 0 : i32
    %c0_i32_0 = arith.constant 0 : i32
    %c0_i32_1 = arith.constant 0 : i32
    %c0_i32_2 = arith.constant 0 : i32
    return %arg0, %c0_i32, %c0_i32_0, %c0_i32_1 : i32, i32, i32, i32
  }
}

</mosaic_0001>

<llo_original>
// kernel: _lambda_.6
$region0: #{_lambda_.6}
  #allocation0 [shape = 'u32[]', space=smem, size = 0x4, offset = 0x4, fixed_abs, tag = 'smem constant byte address 0x4 - core index']
  #allocation1 [shape = 'u32[144,128]{1,0:T(1,128)}', space=vmem, size = 0x12000, scoped, tag = 'internal scratch']
  %s0 = inlined_call_operand.vmem [shape: f32[128,32], index: 0, kind: input, shape index: {}]
  %s1 = inlined_call_operand.vmem [shape: f32[32,2], index: 1, kind: input, shape index: {}]
  %s2 = inlined_call_operand.vmem [shape: f32[2,8], index: 2, kind: input, shape index: {}]
  %s3 = inlined_call_operand.vmem [shape: f32[128,8], index: 3, kind: output, shape index: {}]
  %s4 = sld [smem:[#allocation0]]
  $region45: #{_lambda_.6} parent=0
    _
  %s6 = ssub.s32 1, %s4
  %s7 = scalar_select 0, %s6, %s4
  loop: start=0, step=1, limit=4
  $region2: #{_lambda_.6} parent=0 // loop_pre_header
    _
  $region3: #{_lambda_.6} parent=0 // loop_header
    %s9 = sphi 0, %s13
    %p10 = scmp.ge.s32.totalorder %s9, 4
    %s19 = sphi 0, %s21
    %s22 = sphi 0, %s19
    %s23 = sphi 0, %s22
    %s39 = sphi 0, %s23
    %s43 = sphi 0, %s43
    %s45 = sphi 0, %s43
    %s46 = sphi 0, %s45
    %s60 = sphi 0, %s46
    %s64 = sphi 0, %s64
    %s66 = sphi 0, %s64
    %s67 = sphi 0, %s66
    %s81 = sphi 0, %s67
    %s87 = sphi 0, %s89
    %s90 = sphi 0, %s87
    %s91 = sphi 0, %s90
    %s107 = sphi 0, %s91
  $region4: #{_lambda_.6} parent=0 // loop_header_branch
    %12 = sbr.rel (%p10) target = $region8
  $region5: #{_lambda_.6} parent=0 // loop_body
    %s14 = ssub.s32 %s9, 1
    %s15 = ssub.s32 %s9, 2
    %s16 = sadd.s32 %s9, 1
    %s17 = ssub.s32 %s9, %s16
    %p18 = scmp.eq.s32.totalorder %s17, 0
    %s20 = sadd.s32 %s19, 1
    %s21 = scalar_select %p18, %s19, %s20
    %p24 = pneg %p18
    %p25 = scmp.eq.s32.totalorder %s9, 1
    %p26 = por %p24, %p25
    %p27 = scmp.ne.s32.totalorder %s19, %s22
    %p28 = scmp.eq.s32.totalorder %s9, 0
    %p29 = por %p27, %p28
    %p30 = scmp.ne.s32.totalorder %s19, %s22
    %p31 = scmp.eq.s32.totalorder %s14, 1
    %p32 = por %p30, %p31
    %p33 = scmp.ne.s32.totalorder %s22, %s23
    %p34 = scmp.eq.s32.totalorder %s14, 0
    %p35 = por %p33, %p34
    %p36 = scmp.ne.s32.totalorder %s22, %s23
    %p37 = scmp.eq.s32.totalorder %s15, 1
    %p38 = por %p36, %p37
    %p40 = scmp.ne.s32.totalorder %s23, %s39
    %p41 = scmp.eq.s32.totalorder %s15, 0
    %p42 = por %p40, %p41
    %s44 = sadd.s32 %s43, 1
    %p47 = scmp.eq.s32.totalorder %s9, 1
    %p48 = scmp.ne.s32.totalorder %s43, %s45
    %p49 = scmp.eq.s32.totalorder %s9, 0
    %p50 = por %p48, %p49
    %p51 = scmp.ne.s32.totalorder %s43, %s45
    %p52 = scmp.eq.s32.totalorder %s14, 1
    %p53 = por %p51, %p52
    %p54 = scmp.ne.s32.totalorder %s45, %s46
    %p55 = scmp.eq.s32.totalorder %s14, 0
    %p56 = por %p54, %p55
    %p57 = scmp.ne.s32.totalorder %s45, %s46
    %p58 = scmp.eq.s32.totalorder %s15, 1
    %p59 = por %p57, %p58
    %p61 = scmp.ne.s32.totalorder %s46, %s60
    %p62 = scmp.eq.s32.totalorder %s15, 0
    %p63 = por %p61, %p62
    %s65 = sadd.s32 %s64, 1
    %p68 = scmp.eq.s32.totalorder %s9, 1
    %p69 = scmp.ne.s32.totalorder %s64, %s66
    %p70 = scmp.eq.s32.totalorder %s9, 0
    %p71 = por %p69, %p70
    %p72 = scmp.ne.s32.totalorder %s64, %s66
    %p73 = scmp.eq.s32.totalorder %s14, 1
    %p74 = por %p72, %p73
    %p75 = scmp.ne.s32.totalorder %s66, %s67
    %p76 = scmp.eq.s32.totalorder %s14, 0
    %p77 = por %p75, %p76
    %p78 = scmp.ne.s32.totalorder %s66, %s67
    %p79 = scmp.eq.s32.totalorder %s15, 1
    %p80 = por %p78, %p79
    %p82 = scmp.ne.s32.totalorder %s67, %s81
    %p83 = scmp.eq.s32.totalorder %s15, 0
    %p84 = por %p82, %p83
    %s85 = ssub.s32 %s9, %s16
    %p86 = scmp.eq.s32.totalorder %s85, 0
    %s88 = sadd.s32 %s87, 1
    %s89 = scalar_select %p86, %s87, %s88
    %p92 = pneg %p86
    %p93 = scmp.eq.s32.totalorder %s9, 1
    %p94 = por %p92, %p93
    %p95 = scmp.ne.s32.totalorder %s87, %s90
    %p96 = scmp.eq.s32.totalorder %s9, 0
    %p97 = por %p95, %p96
    %p98 = scmp.ne.s32.totalorder %s87, %s90
    %p99 = scmp.eq.s32.totalorder %s14, 1
    %p100 = por %p98, %p99
    %p101 = scmp.ne.s32.totalorder %s90, %s91
    %p102 = scmp.eq.s32.totalorder %s14, 0
    %p103 = por %p101, %p102
    %p104 = scmp.ne.s32.totalorder %s90, %s91
    %p105 = scmp.eq.s32.totalorder %s15, 1
    %p106 = por %p104, %p105
    %p108 = scmp.ne.s32.totalorder %s91, %s107
    %p109 = scmp.eq.s32.totalorder %s15, 0
    %p110 = por %p108, %p109
    %p111 = scmp.le.s32.totalorder 1, %s9
    %p112 = scmp.lt.s32.totalorder %s9, 3
    %p113 = pnand %p111, %p112
    %p114 = pneg %p113
    // Predicated region
    $region9: #{_lambda_.6} parent=5 // pred_check
      _
    $region10: #{_lambda_.6} parent=5 // pred_check_branch
      %116 = sbr.rel (%p113) target = $region12
    $region11: #{_lambda_.6} parent=5 // pred_region
      %s117 = ssub.s32 %s9, 1
      // Predicated region
      $region13: #{_lambda_.6} parent=11 // pred_check
        %p118 = pneg %p56
      $region14: #{_lambda_.6} parent=11 // pred_check_branch
        %120 = sbr.rel (%p118) target = $region16
      $region15: #{_lambda_.6} parent=11 // pred_region
        _
      $region16: #{_lambda_.6} parent=11 // pred_fallthru
        _
      // Predicated region
      $region17: #{_lambda_.6} parent=11 // pred_check
        %p121 = pneg %p77
      $region18: #{_lambda_.6} parent=11 // pred_check_branch
        %123 = sbr.rel (%p121) target = $region20
      $region19: #{_lambda_.6} parent=11 // pred_region
        _
      $region20: #{_lambda_.6} parent=11 // pred_fallthru
        _
    $region12: #{_lambda_.6} parent=5 // pred_fallthru
      _
    %p124 = scmp.lt.s32.totalorder %s9, 2
    // Predicated region
    $region21: #{_lambda_.6} parent=5 // pred_check
      %p125 = pneg %p124
    $region22: #{_lambda_.6} parent=5 // pred_check_branch
      %127 = sbr.rel (%p125) target = $region24
    $region23: #{_lambda_.6} parent=5 // pred_region
      // Predicated region
      $region25: #{_lambda_.6} parent=23 // pred_check
        %p128 = pneg %p29
      $region26: #{_lambda_.6} parent=23 // pred_check_branch
        %130 = sbr.rel (%p128) target = $region28
      $region27: #{_lambda_.6} parent=23 // pred_region
        %s131 = smul.u32 8, %s9
        %p132 = scmp.lt.s32.totalorder %s131, 15
        %s133 = scalar_select %p132, %s131, 15
        %s134 = smul.addr %s133, 8
        %s135 = scalar_lea.vmem %s0, %s134
        %s136 = smul.u32 8, %s9
      $region28: #{_lambda_.6} parent=23 // pred_fallthru
        _
    $region24: #{_lambda_.6} parent=5 // pred_fallthru
      _
    %p137 = scmp.le.s32.totalorder 1, %s9
    %p138 = scmp.lt.s32.totalorder %s9, 3
    %p139 = pnand %p137, %p138
    %p140 = pneg %p139
    // Predicated region
    $region29: #{_lambda_.6} parent=5 // pred_check
      _
    $region30: #{_lambda_.6} parent=5 // pred_check_branch
      %142 = sbr.rel (%p139) target = $region32
    $region31: #{_lambda_.6} parent=5 // pred_region
      %s143 = ssub.s32 %s9, 1
      %s144 = smul.u32 8, %s14
      %p145 = scmp.lt.s32.totalorder %s144, 15
      %s146 = scalar_select %p145, %s144, 15
      %s147 = smul.addr %s146, 8
      %s148 = scalar_lea.vmem %s0, %s147
      %p149 = pneg %p35
      %p150 = pneg %p32
      %p151 = pneg %p56
      %p152 = pneg %p53
      %p153 = pneg %p77
      %p154 = pneg %p74
      %p155 = pneg %p103
      %p156 = pneg %p100
      %s157 = smul.u32 8, %s14
      %p158 = scmp.lt.s32.totalorder %s157, 15
      %s159 = scalar_select %p158, %s157, 15
      %s160 = smul.addr %s159, 8
      %s161 = scalar_lea.vmem %s3, %s160
      %s162 = smul.u32 8, %s14
      %p163 = scmp.lt.s32.totalorder %s162, 15
      %s164 = scalar_select %p163, %s162, 15
      %s165 = smul.addr %s164, 8
      %s166 = scalar_lea.vmem %s0, %s165
      %s167 = smul.u32 8, %s14
      %s168 = smul.u32 8, %s14
      %p169 = scmp.lt.s32.totalorder %s168, 15
      %s170 = scalar_select %p169, %s168, 15
      %s171 = smul.addr %s170, 8
      %s172 = scalar_lea.vmem %s3, %s171
      %s173 = smul.u32 8, %s14
      %v174 = vld [vmem:[%s166] sm:$0xff]
      %v175 = vld [vmem:[%s166 + $0x8] sm:$0xff]
      %v176 = vld [vmem:[%s166 + $0x10] sm:$0xff]
      %v177 = vld [vmem:[%s166 + $0x18] sm:$0xff]
      %v178 = vld [vmem:[%s166 + $0x20] sm:$0xff]
      %v179 = vld [vmem:[%s166 + $0x28] sm:$0xff]
      %v180 = vld [vmem:[%s166 + $0x30] sm:$0xff]
      %v181 = vld [vmem:[%s166 + $0x38] sm:$0xff]
      %v182 = vld [vmem:[%s1] sm:$0xff]
      %v183 = vld [vmem:[%s1 + $0x8] sm:$0xff]
      %v184 = vld [vmem:[%s1 + $0x10] sm:$0xff]
      %v185 = vld [vmem:[%s1 + $0x18] sm:$0xff]
      %v186 = vld [vmem:[%s2] sm:$0x3]
      %vm187 = vcmask 261120
      %v189 = vsel %vm187, %v174, 0
      %v192 = vsel %vm187, %v175, 0
      %v195 = vsel %vm187, %v176, 0
      %v198 = vsel %vm187, %v177, 0
      %v201 = vsel %vm187, %v178, 0
      %v204 = vsel %vm187, %v179, 0
      %v207 = vsel %vm187, %v180, 0
      %v210 = vsel %vm187, %v181, 0
      %212 = vmatprep.subr.mxu0 0.0
      %213 = vmatpush1.msra.mxu0 %v182
      %214 = vmatprep.subr.mxu0 0.0
      %215 = vmatpush1.msra.mxu0 %v183
      %216 = vmatprep.subr.mxu0 0.0
      %217 = vmatpush1.msra.mxu0 %v184
      %218 = vmatprep.subr.mxu0 0.0
      %219 = vmatpush1.msra.mxu0 %v185
      %220 = vmatprep.subr.mxu0 0.0
      %221 = vmatpush1.msra.mxu0 0.0
      %222 = vmatprep.subr.mxu0 0.0
      %223 = vmatpush1.msra.mxu0 0.0
      %224 = vmatprep.subr.mxu0 0.0
      %225 = vmatpush1.msra.mxu0 0.0
      %226 = vmatprep.subr.mxu0 0.0
      %227 = vmatpush1.msra.mxu0 0.0
      %228 = vmatprep.subr.mxu0 0.0
      %229 = vmatpush1.msra.mxu0 0.0
      %230 = vmatprep.subr.mxu0 0.0
      %231 = vmatpush1.msra.mxu0 0.0
      %232 = vmatprep.subr.mxu0 0.0
      %233 = vmatpush1.msra.mxu0 0.0
      %234 = vmatprep.subr.mxu0 0.0
      %235 = vmatpush1.msra.mxu0 0.0
      %236 = vmatprep.subr.mxu0 0.0
      %237 = vmatpush1.msra.mxu0 0.0
      %238 = vmatprep.subr.mxu0 0.0
      %239 = vmatpush1.msra.mxu0 0.0
      %240 = vmatprep.subr.mxu0 0.0
      %241 = vmatpush1.msra.mxu0 0.0
      %242 = vmatprep.subr.mxu0 0.0
      %243 = vmatpush1.msra.mxu0 0.0
      %244 = vmatprep.subr.mxu0 0.0
      %245 = vmatpush1.msra.mxu0 0.0
      %246 = vmatprep.subr.mxu0 0.0
      %247 = vmatpush1.msra.mxu0 0.0
      %248 = vmatprep.subr.mxu0 0.0
      %249 = vmatpush1.msra.mxu0 0.0
      %250 = vmatprep.subr.mxu0 0.0
      %251 = vmatpush1.msra.mxu0 0.0
      %252 = vmatprep.subr.mxu0 0.0
      %253 = vmatpush1.msra.mxu0 0.0
      %254 = vmatprep.subr.mxu0 0.0
      %255 = vmatpush1.msra.mxu0 0.0
      %256 = vmatprep.subr.mxu0 0.0
      %257 = vmatpush1.msra.mxu0 0.0
      %258 = vmatprep.subr.mxu0 0.0
      %259 = vmatpush1.msra.mxu0 0.0
      %260 = vmatprep.subr.mxu0 0.0
      %261 = vmatpush1.msra.mxu0 0.0
      %262 = vmatprep.subr.mxu0 0.0
      %263 = vmatpush1.msra.mxu0 0.0
      %264 = vmatprep.subr.mxu0 0.0
      %265 = vmatpush1.msra.mxu0 0.0
      %266 = vmatprep.subr.mxu0 0.0
      %267 = vmatpush1.msra.mxu0 0.0
      %268 = vmatprep.subr.mxu0 0.0
      %269 = vmatpush1.msra.mxu0 0.0
      %270 = vmatprep.subr.mxu0 0.0
      %271 = vmatpush1.msra.mxu0 0.0
      %272 = vmatprep.subr.mxu0 0.0
      %273 = vmatpush1.msra.mxu0 0.0
      %274 = vmatprep.subr.mxu0 0.0
      %275 = vmatpush1.msra.mxu0 0.0
      %276 = vmatprep.mubr.f32.mxu0 0.0
      %277 = vmatmul.mubr.f32.gmra.mrb[0].mxu0 %v189
      %v278 = vpop.f32.mrb[0].mxu0
      %v279 = vadd.f32 0.0, %v278
      %v280 = vpop.f32.mrb[0].mxu0
      %281 = vmatprep.mubr.f32.mxu0 0.0
      %282 = vmatmul.mubr.f32.gmra.mrb[0].mxu0 %v192
      %v283 = vpop.f32.mrb[0].mxu0
      %v284 = vadd.f32 0.0, %v283
      %v285 = vpop.f32.mrb[0].mxu0
      %286 = vmatprep.mubr.f32.mxu0 0.0
      %287 = vmatmul.mubr.f32.gmra.mrb[0].mxu0 %v195
      %v288 = vpop.f32.mrb[0].mxu0
      %v289 = vadd.f32 0.0, %v288
      %v290 = vpop.f32.mrb[0].mxu0
      %291 = vmatprep.mubr.f32.mxu0 0.0
      %292 = vmatmul.mubr.f32.gmra.mrb[0].mxu0 %v198
      %v293 = vpop.f32.mrb[0].mxu0
      %v294 = vadd.f32 0.0, %v293
      %v295 = vpop.f32.mrb[0].mxu0
      %296 = vmatprep.mubr.f32.mxu0 0.0
      %297 = vmatmul.mubr.f32.gmra.mrb[0].mxu0 %v201
      %v298 = vpop.f32.mrb[0].mxu0
      %v299 = vadd.f32 0.0, %v298
      %v300 = vpop.f32.mrb[0].mxu0
      %301 = vmatprep.mubr.f32.mxu0 0.0
      %302 = vmatmul.mubr.f32.gmra.mrb[0].mxu0 %v204
      %v303 = vpop.f32.mrb[0].mxu0
      %v304 = vadd.f32 0.0, %v303
      %v305 = vpop.f32.mrb[0].mxu0
      %306 = vmatprep.mubr.f32.mxu0 0.0
      %307 = vmatmul.mubr.f32.gmra.mrb[0].mxu0 %v207
      %v308 = vpop.f32.mrb[0].mxu0
      %v309 = vadd.f32 0.0, %v308
      %v310 = vpop.f32.mrb[0].mxu0
      %311 = vmatprep.mubr.f32.mxu0 0.0
      %312 = vmatmul.mubr.f32.gmra.mrb[0].mxu0 %v210
      %v313 = vpop.f32.mrb[0].mxu0
      %v314 = vadd.f32 0.0, %v313
      %v315 = vpop.f32.mrb[0].mxu0
      %316 = vdwg.mxu0
      %vm317 = vcmp.gt.f32.partialorder %v279, 0.0
      %vm318 = vcmp.gt.f32.partialorder %v284, 0.0
      %vm319 = vcmp.gt.f32.partialorder %v289, 0.0
      %vm320 = vcmp.gt.f32.partialorder %v294, 0.0
      %vm321 = vcmp.gt.f32.partialorder %v299, 0.0
      %vm322 = vcmp.gt.f32.partialorder %v304, 0.0
      %vm323 = vcmp.gt.f32.partialorder %v309, 0.0
      %vm324 = vcmp.gt.f32.partialorder %v314, 0.0
      %v325 = vmul.f32 %v279, 0.2
      %v326 = vmul.f32 %v284, 0.2
      %v327 = vmul.f32 %v289, 0.2
      %v328 = vmul.f32 %v294, 0.2
      %v329 = vmul.f32 %v299, 0.2
      %v330 = vmul.f32 %v304, 0.2
      %v331 = vmul.f32 %v309, 0.2
      %v332 = vmul.f32 %v314, 0.2
      %v333 = vsel %vm317, %v279, %v325
      %v334 = vsel %vm318, %v284, %v326
      %v335 = vsel %vm319, %v289, %v327
      %v336 = vsel %vm320, %v294, %v328
      %v337 = vsel %vm321, %v299, %v329
      %v338 = vsel %vm322, %v304, %v330
      %v339 = vsel %vm323, %v309, %v331
      %v340 = vsel %vm324, %v314, %v332
      %vm341 = vcmask 15360
      %v343 = vsel %vm341, %v333, 0
      %v346 = vsel %vm341, %v334, 0
      %v349 = vsel %vm341, %v335, 0
      %v352 = vsel %vm341, %v336, 0
      %v355 = vsel %vm341, %v337, 0
      %v358 = vsel %vm341, %v338, 0
      %v361 = vsel %vm341, %v339, 0
      %v364 = vsel %vm341, %v340, 0
      %vm366 = vcmask 1041408
      %v368 = vsel %vm366, %v186, 0
      %370 = vmatprep.subr.mxu0 0.0
      %371 = vmatpush1.msra.mxu0 %v368
      %372 = vmatprep.subr.mxu0 0.0
      %373 = vmatpush1.msra.mxu0 0.0
      %374 = vmatprep.subr.mxu0 0.0
      %375 = vmatpush1.msra.mxu0 0.0
      %376 = vmatprep.subr.mxu0 0.0
      %377 = vmatpush1.msra.mxu0 0.0
      %378 = vmatprep.subr.mxu0 0.0
      %379 = vmatpush1.msra.mxu0 0.0
      %380 = vmatprep.subr.mxu0 0.0
      %381 = vmatpush1.msra.mxu0 0.0
      %382 = vmatprep.subr.mxu0 0.0
      %383 = vmatpush1.msra.mxu0 0.0
      %384 = vmatprep.subr.mxu0 0.0
      %385 = vmatpush1.msra.mxu0 0.0
      %386 = vmatprep.subr.mxu0 0.0
      %387 = vmatpush1.msra.mxu0 0.0
      %388 = vmatprep.subr.mxu0 0.0
      %389 = vmatpush1.msra.mxu0 0.0
      %390 = vmatprep.subr.mxu0 0.0
      %391 = vmatpush1.msra.mxu0 0.0
      %392 = vmatprep.subr.mxu0 0.0
      %393 = vmatpush1.msra.mxu0 0.0
      %394 = vmatprep.subr.mxu0 0.0
      %395 = vmatpush1.msra.mxu0 0.0
      %396 = vmatprep.subr.mxu0 0.0
      %397 = vmatpush1.msra.mxu0 0.0
      %398 = vmatprep.subr.mxu0 0.0
      %399 = vmatpush1.msra.mxu0 0.0
      %400 = vmatprep.subr.mxu0 0.0
      %401 = vmatpush1.msra.mxu0 0.0
      %402 = vmatprep.subr.mxu0 0.0
      %403 = vmatpush1.msra.mxu0 0.0
      %404 = vmatprep.subr.mxu0 0.0
      %405 = vmatpush1.msra.mxu0 0.0
      %406 = vmatprep.subr.mxu0 0.0
      %407 = vmatpush1.msra.mxu0 0.0
      %408 = vmatprep.subr.mxu0 0.0
      %409 = vmatpush1.msra.mxu0 0.0
      %410 = vmatprep.subr.mxu0 0.0
      %411 = vmatpush1.msra.mxu0 0.0
      %412 = vmatprep.subr.mxu0 0.0
      %413 = vmatpush1.msra.mxu0 0.0
      %414 = vmatprep.subr.mxu0 0.0
      %415 = vmatpush1.msra.mxu0 0.0
      %416 = vmatprep.subr.mxu0 0.0
      %417 = vmatpush1.msra.mxu0 0.0
      %418 = vmatprep.subr.mxu0 0.0
      %419 = vmatpush1.msra.mxu0 0.0
      %420 = vmatprep.subr.mxu0 0.0
      %421 = vmatpush1.msra.mxu0 0.0
      %422 = vmatprep.subr.mxu0 0.0
      %423 = vmatpush1.msra.mxu0 0.0
      %424 = vmatprep.subr.mxu0 0.0
      %425 = vmatpush1.msra.mxu0 0.0
      %426 = vmatprep.subr.mxu0 0.0
      %427 = vmatpush1.msra.mxu0 0.0
      %428 = vmatprep.subr.mxu0 0.0
      %429 = vmatpush1.msra.mxu0 0.0
      %430 = vmatprep.subr.mxu0 0.0
      %431 = vmatpush1.msra.mxu0 0.0
      %432 = vmatprep.subr.mxu0 0.0
      %433 = vmatpush1.msra.mxu0 0.0
      %434 = vmatprep.mubr.f32.mxu0 0.0
      %435 = vmatmul.mubr.f32.gmra.mrb[0].mxu0 %v343
      %v436 = vpop.f32.mrb[0].mxu0
      %v437 = vadd.f32 0.0, %v436
      %v438 = vpop.f32.mrb[0].mxu0
      %439 = vmatprep.mubr.f32.mxu0 0.0
      %440 = vmatmul.mubr.f32.gmra.mrb[0].mxu0 %v346
      %v441 = vpop.f32.mrb[0].mxu0
      %v442 = vadd.f32 0.0, %v441
      %v443 = vpop.f32.mrb[0].mxu0
      %444 = vmatprep.mubr.f32.mxu0 0.0
      %445 = vmatmul.mubr.f32.gmra.mrb[0].mxu0 %v349
      %v446 = vpop.f32.mrb[0].mxu0
      %v447 = vadd.f32 0.0, %v446
      %v448 = vpop.f32.mrb[0].mxu0
      %449 = vmatprep.mubr.f32.mxu0 0.0
      %450 = vmatmul.mubr.f32.gmra.mrb[0].mxu0 %v352
      %v451 = vpop.f32.mrb[0].mxu0
      %v452 = vadd.f32 0.0, %v451
      %v453 = vpop.f32.mrb[0].mxu0
      %454 = vmatprep.mubr.f32.mxu0 0.0
      %455 = vmatmul.mubr.f32.gmra.mrb[0].mxu0 %v355
      %v456 = vpop.f32.mrb[0].mxu0
      %v457 = vadd.f32 0.0, %v456
      %v458 = vpop.f32.mrb[0].mxu0
      %459 = vmatprep.mubr.f32.mxu0 0.0
      %460 = vmatmul.mubr.f32.gmra.mrb[0].mxu0 %v358
      %v461 = vpop.f32.mrb[0].mxu0
      %v462 = vadd.f32 0.0, %v461
      %v463 = vpop.f32.mrb[0].mxu0
      %464 = vmatprep.mubr.f32.mxu0 0.0
      %465 = vmatmul.mubr.f32.gmra.mrb[0].mxu0 %v361
      %v466 = vpop.f32.mrb[0].mxu0
      %v467 = vadd.f32 0.0, %v466
      %v468 = vpop.f32.mrb[0].mxu0
      %469 = vmatprep.mubr.f32.mxu0 0.0
      %470 = vmatmul.mubr.f32.gmra.mrb[0].mxu0 %v364
      %v471 = vpop.f32.mrb[0].mxu0
      %v472 = vadd.f32 0.0, %v471
      %v473 = vpop.f32.mrb[0].mxu0
      %474 = vdwg.mxu0
      %vm475 = vcmp.gt.f32.partialorder %v437, 0.0
      %vm476 = vcmp.gt.f32.partialorder %v442, 0.0
      %vm477 = vcmp.gt.f32.partialorder %v447, 0.0
      %vm478 = vcmp.gt.f32.partialorder %v452, 0.0
      %vm479 = vcmp.gt.f32.partialorder %v457, 0.0
      %vm480 = vcmp.gt.f32.partialorder %v462, 0.0
      %vm481 = vcmp.gt.f32.partialorder %v467, 0.0
      %vm482 = vcmp.gt.f32.partialorder %v472, 0.0
      %v483 = vmul.f32 %v437, 0.2
      %v484 = vmul.f32 %v442, 0.2
      %v485 = vmul.f32 %v447, 0.2
      %v486 = vmul.f32 %v452, 0.2
      %v487 = vmul.f32 %v457, 0.2
      %v488 = vmul.f32 %v462, 0.2
      %v489 = vmul.f32 %v467, 0.2
      %v490 = vmul.f32 %v472, 0.2
      %v491 = vsel %vm475, %v437, %v483
      %v492 = vsel %vm476, %v442, %v484
      %v493 = vsel %vm477, %v447, %v485
      %v494 = vsel %vm478, %v452, %v486
      %v495 = vsel %vm479, %v457, %v487
      %v496 = vsel %vm480, %v462, %v488
      %v497 = vsel %vm481, %v467, %v489
      %v498 = vsel %vm482, %v472, %v490
      %vm499 = vcmask 64512
      %500 = vst.msk [vmem:[%s172] sm:$0xff] %vm499, %v491
      %501 = vst.msk [vmem:[%s172 + $0x8] sm:$0xff] %vm499, %v492
      %502 = vst.msk [vmem:[%s172 + $0x10] sm:$0xff] %vm499, %v493
      %503 = vst.msk [vmem:[%s172 + $0x18] sm:$0xff] %vm499, %v494
      %504 = vst.msk [vmem:[%s172 + $0x20] sm:$0xff] %vm499, %v495
      %505 = vst.msk [vmem:[%s172 + $0x28] sm:$0xff] %vm499, %v496
      %506 = vst.msk [vmem:[%s172 + $0x30] sm:$0xff] %vm499, %v497
      %507 = vst.msk [vmem:[%s172 + $0x38] sm:$0xff] %vm499, %v498
      %s508 = smul.u32 8, %s14
      %p509 = scmp.lt.s32.totalorder %s508, 15
      %s510 = scalar_select %p509, %s508, 15
      %s511 = smul.addr %s510, 8
      %s512 = scalar_lea.vmem %s3, %s511
      // Predicated region
      $region33: #{_lambda_.6} parent=31 // pred_check
        %p513 = pneg %p100
      $region34: #{_lambda_.6} parent=31 // pred_check_branch
        %515 = sbr.rel (%p513) target = $region36
      $region35: #{_lambda_.6} parent=31 // pred_region
        %s516 = smul.u32 8, %s14
      $region36: #{_lambda_.6} parent=31 // pred_fallthru
        _
    $region32: #{_lambda_.6} parent=5 // pred_fallthru
      _
    %p517 = scmp.le.s32.totalorder 2, %s9
    // Predicated region
    $region37: #{_lambda_.6} parent=5 // pred_check
      %p518 = pneg %p517
    $region38: #{_lambda_.6} parent=5 // pred_check_branch
      %520 = sbr.rel (%p518) target = $region40
    $region39: #{_lambda_.6} parent=5 // pred_region
      %s521 = ssub.s32 %s9, 2
      // Predicated region
      $region41: #{_lambda_.6} parent=39 // pred_check
        %p522 = pneg %p106
      $region42: #{_lambda_.6} parent=39 // pred_check_branch
        %524 = sbr.rel (%p522) target = $region44
      $region43: #{_lambda_.6} parent=39 // pred_region
        %s525 = smul.u32 8, %s15
        %p526 = scmp.lt.s32.totalorder %s525, 15
        %s527 = scalar_select %p526, %s525, 15
        %s528 = smul.addr %s527, 8
        %s529 = scalar_lea.vmem %s3, %s528
      $region44: #{_lambda_.6} parent=39 // pred_fallthru
        _
    $region40: #{_lambda_.6} parent=5 // pred_fallthru
      _
  $region6: #{_lambda_.6} parent=0 // loop_footer
    %s13 = sadd.s32 1, %s9
  $region7: #{_lambda_.6} parent=0 // loop_footer_branch
    %8 = sbr.rel target = $region3
  $region8: #{_lambda_.6} parent=0 // loop_exit
    _

// kernel: _lambda_.5
$region0: #{_lambda_.5}
  #allocation0 [shape = 'u32[]', space=smem, size = 0x4, offset = 0x4, fixed_abs, tag = 'smem constant byte address 0x4 - core index']
  #allocation1 [shape = 'u32[144,128]{1,0:T(1,128)}', space=vmem, size = 0x12000, scoped, tag = 'internal scratch']
  %s0 = inlined_call_operand.vmem [shape: f32[8,8,8,8], index: 0, kind: input, shape index: {}]
  %s1 = inlined_call_operand.vmem [shape: f32[72,8], index: 1, kind: input, shape index: {}]
  %s2 = inlined_call_operand.vmem [shape: f32[1,8], index: 2, kind: input, shape index: {}]
  %s3 = inlined_call_operand.vmem [shape: f32[72,8], index: 3, kind: input, shape index: {}]
  %s4 = inlined_call_operand.vmem [shape: f32[1,8], index: 4, kind: input, shape index: {}]
  %s5 = inlined_call_operand.vmem [shape: f32[8,8,8,8], index: 5, kind: output, shape index: {}]
  %s6 = sld [smem:[#allocation0]]
  $region53: #{_lambda_.5} parent=0
    _
  %s8 = ssub.s32 1, %s6
  %s9 = scalar_select 0, %s8, %s6
  loop: start=0, step=1, limit=4
  $region2: #{_lambda_.5} parent=0 // loop_pre_header
    _
  $region3: #{_lambda_.5} parent=0 // loop_header
    %s11 = sphi 0, %s15
    %p12 = scmp.ge.s32.totalorder %s11, 4
    %s21 = sphi 0, %s23
    %s24 = sphi 0, %s21
    %s25 = sphi 0, %s24
    %s41 = sphi 0, %s25
    %s45 = sphi 0, %s45
    %s47 = sphi 0, %s45
    %s48 = sphi 0, %s47
    %s62 = sphi 0, %s48
    %s66 = sphi 0, %s66
    %s68 = sphi 0, %s66
    %s69 = sphi 0, %s68
    %s83 = sphi 0, %s69
    %s87 = sphi 0, %s87
    %s89 = sphi 0, %s87
    %s90 = sphi 0, %s89
    %s104 = sphi 0, %s90
    %s108 = sphi 0, %s108
    %s110 = sphi 0, %s108
    %s111 = sphi 0, %s110
    %s125 = sphi 0, %s111
    %s131 = sphi 0, %s133
    %s134 = sphi 0, %s131
    %s135 = sphi 0, %s134
    %s151 = sphi 0, %s135
  $region4: #{_lambda_.5} parent=0 // loop_header_branch
    %14 = sbr.rel (%p12) target = $region8
  $region5: #{_lambda_.5} parent=0 // loop_body
    %s16 = ssub.s32 %s11, 1
    %s17 = ssub.s32 %s11, 2
    %s18 = sadd.s32 %s11, 1
    %s19 = ssub.s32 %s11, %s18
    %p20 = scmp.eq.s32.totalorder %s19, 0
    %s22 = sadd.s32 %s21, 1
    %s23 = scalar_select %p20, %s21, %s22
    %p26 = pneg %p20
    %p27 = scmp.eq.s32.totalorder %s11, 1
    %p28 = por %p26, %p27
    %p29 = scmp.ne.s32.totalorder %s21, %s24
    %p30 = scmp.eq.s32.totalorder %s11, 0
    %p31 = por %p29, %p30
    %p32 = scmp.ne.s32.totalorder %s21, %s24
    %p33 = scmp.eq.s32.totalorder %s16, 1
    %p34 = por %p32, %p33
    %p35 = scmp.ne.s32.totalorder %s24, %s25
    %p36 = scmp.eq.s32.totalorder %s16, 0
    %p37 = por %p35, %p36
    %p38 = scmp.ne.s32.totalorder %s24, %s25
    %p39 = scmp.eq.s32.totalorder %s17, 1
    %p40 = por %p38, %p39
    %p42 = scmp.ne.s32.totalorder %s25, %s41
    %p43 = scmp.eq.s32.totalorder %s17, 0
    %p44 = por %p42, %p43
    %s46 = sadd.s32 %s45, 1
    %p49 = scmp.eq.s32.totalorder %s11, 1
    %p50 = scmp.ne.s32.totalorder %s45, %s47
    %p51 = scmp.eq.s32.totalorder %s11, 0
    %p52 = por %p50, %p51
    %p53 = scmp.ne.s32.totalorder %s45, %s47
    %p54 = scmp.eq.s32.totalorder %s16, 1
    %p55 = por %p53, %p54
    %p56 = scmp.ne.s32.totalorder %s47, %s48
    %p57 = scmp.eq.s32.totalorder %s16, 0
    %p58 = por %p56, %p57
    %p59 = scmp.ne.s32.totalorder %s47, %s48
    %p60 = scmp.eq.s32.totalorder %s17, 1
    %p61 = por %p59, %p60
    %p63 = scmp.ne.s32.totalorder %s48, %s62
    %p64 = scmp.eq.s32.totalorder %s17, 0
    %p65 = por %p63, %p64
    %s67 = sadd.s32 %s66, 1
    %p70 = scmp.eq.s32.totalorder %s11, 1
    %p71 = scmp.ne.s32.totalorder %s66, %s68
    %p72 = scmp.eq.s32.totalorder %s11, 0
    %p73 = por %p71, %p72
    %p74 = scmp.ne.s32.totalorder %s66, %s68
    %p75 = scmp.eq.s32.totalorder %s16, 1
    %p76 = por %p74, %p75
    %p77 = scmp.ne.s32.totalorder %s68, %s69
    %p78 = scmp.eq.s32.totalorder %s16, 0
    %p79 = por %p77, %p78
    %p80 = scmp.ne.s32.totalorder %s68, %s69
    %p81 = scmp.eq.s32.totalorder %s17, 1
    %p82 = por %p80, %p81
    %p84 = scmp.ne.s32.totalorder %s69, %s83
    %p85 = scmp.eq.s32.totalorder %s17, 0
    %p86 = por %p84, %p85
    %s88 = sadd.s32 %s87, 1
    %p91 = scmp.eq.s32.totalorder %s11, 1
    %p92 = scmp.ne.s32.totalorder %s87, %s89
    %p93 = scmp.eq.s32.totalorder %s11, 0
    %p94 = por %p92, %p93
    %p95 = scmp.ne.s32.totalorder %s87, %s89
    %p96 = scmp.eq.s32.totalorder %s16, 1
    %p97 = por %p95, %p96
    %p98 = scmp.ne.s32.totalorder %s89, %s90
    %p99 = scmp.eq.s32.totalorder %s16, 0
    %p100 = por %p98, %p99
    %p101 = scmp.ne.s32.totalorder %s89, %s90
    %p102 = scmp.eq.s32.totalorder %s17, 1
    %p103 = por %p101, %p102
    %p105 = scmp.ne.s32.totalorder %s90, %s104
    %p106 = scmp.eq.s32.totalorder %s17, 0
    %p107 = por %p105, %p106
    %s109 = sadd.s32 %s108, 1
    %p112 = scmp.eq.s32.totalorder %s11, 1
    %p113 = scmp.ne.s32.totalorder %s108, %s110
    %p114 = scmp.eq.s32.totalorder %s11, 0
    %p115 = por %p113, %p114
    %p116 = scmp.ne.s32.totalorder %s108, %s110
    %p117 = scmp.eq.s32.totalorder %s16, 1
    %p118 = por %p116, %p117
    %p119 = scmp.ne.s32.totalorder %s110, %s111
    %p120 = scmp.eq.s32.totalorder %s16, 0
    %p121 = por %p119, %p120
    %p122 = scmp.ne.s32.totalorder %s110, %s111
    %p123 = scmp.eq.s32.totalorder %s17, 1
    %p124 = por %p122, %p123
    %p126 = scmp.ne.s32.totalorder %s111, %s125
    %p127 = scmp.eq.s32.totalorder %s17, 0
    %p128 = por %p126, %p127
    %s129 = ssub.s32 %s11, %s18
    %p130 = scmp.eq.s32.totalorder %s129, 0
    %s132 = sadd.s32 %s131, 1
    %s133 = scalar_select %p130, %s131, %s132
    %p136 = pneg %p130
    %p137 = scmp.eq.s32.totalorder %s11, 1
    %p138 = por %p136, %p137
    %p139 = scmp.ne.s32.totalorder %s131, %s134
    %p140 = scmp.eq.s32.totalorder %s11, 0
    %p141 = por %p139, %p140
    %p142 = scmp.ne.s32.totalorder %s131, %s134
    %p143 = scmp.eq.s32.totalorder %s16, 1
    %p144 = por %p142, %p143
    %p145 = scmp.ne.s32.totalorder %s134, %s135
    %p146 = scmp.eq.s32.totalorder %s16, 0
    %p147 = por %p145, %p146
    %p148 = scmp.ne.s32.totalorder %s134, %s135
    %p149 = scmp.eq.s32.totalorder %s17, 1
    %p150 = por %p148, %p149
    %p152 = scmp.ne.s32.totalorder %s135, %s151
    %p153 = scmp.eq.s32.totalorder %s17, 0
    %p154 = por %p152, %p153
    %p155 = scmp.le.s32.totalorder 1, %s11
    %p156 = scmp.lt.s32.totalorder %s11, 3
    %p157 = pnand %p155, %p156
    %p158 = pneg %p157
    // Predicated region
    $region9: #{_lambda_.5} parent=5 // pred_check
      _
    $region10: #{_lambda_.5} parent=5 // pred_check_branch
      %160 = sbr.rel (%p157) target = $region12
    $region11: #{_lambda_.5} parent=5 // pred_region
      %s161 = ssub.s32 %s11, 1
      // Predicated region
      $region13: #{_lambda_.5} parent=11 // pred_check
        %p162 = pneg %p58
      $region14: #{_lambda_.5} parent=11 // pred_check_branch
        %164 = sbr.rel (%p162) target = $region16
      $region15: #{_lambda_.5} parent=11 // pred_region
        _
      $region16: #{_lambda_.5} parent=11 // pred_fallthru
        _
      // Predicated region
      $region17: #{_lambda_.5} parent=11 // pred_check
        %p165 = pneg %p79
      $region18: #{_lambda_.5} parent=11 // pred_check_branch
        %167 = sbr.rel (%p165) target = $region20
      $region19: #{_lambda_.5} parent=11 // pred_region
        _
      $region20: #{_lambda_.5} parent=11 // pred_fallthru
        _
      // Predicated region
      $region21: #{_lambda_.5} parent=11 // pred_check
        %p168 = pneg %p100
      $region22: #{_lambda_.5} parent=11 // pred_check_branch
        %170 = sbr.rel (%p168) target = $region24
      $region23: #{_lambda_.5} parent=11 // pred_region
        _
      $region24: #{_lambda_.5} parent=11 // pred_fallthru
        _
      // Predicated region
      $region25: #{_lambda_.5} parent=11 // pred_check
        %p171 = pneg %p121
      $region26: #{_lambda_.5} parent=11 // pred_check_branch
        %173 = sbr.rel (%p171) target = $region28
      $region27: #{_lambda_.5} parent=11 // pred_region
        _
      $region28: #{_lambda_.5} parent=11 // pred_fallthru
        _
    $region12: #{_lambda_.5} parent=5 // pred_fallthru
      _
    %p174 = scmp.lt.s32.totalorder %s11, 2
    // Predicated region
    $region29: #{_lambda_.5} parent=5 // pred_check
      %p175 = pneg %p174
    $region30: #{_lambda_.5} parent=5 // pred_check_branch
      %177 = sbr.rel (%p175) target = $region32
    $region31: #{_lambda_.5} parent=5 // pred_region
      // Predicated region
      $region33: #{_lambda_.5} parent=31 // pred_check
        %p178 = pneg %p31
      $region34: #{_lambda_.5} parent=31 // pred_check_branch
        %180 = sbr.rel (%p178) target = $region36
      $region35: #{_lambda_.5} parent=31 // pred_region
        %s181 = smul.u32 4, %s11
        %p182 = scmp.lt.s32.totalorder %s181, 7
        %s183 = scalar_select %p182, %s181, 7
        %s184 = smul.addr %s183, 8
        %s185 = smul.addr %s184, 8
        %s186 = scalar_lea.vmem %s0, %s185
        %s187 = smul.u32 4, %s11
      $region36: #{_lambda_.5} parent=31 // pred_fallthru
        _
    $region32: #{_lambda_.5} parent=5 // pred_fallthru
      _
    %p188 = scmp.le.s32.totalorder 1, %s11
    %p189 = scmp.lt.s32.totalorder %s11, 3
    %p190 = pnand %p188, %p189
    %p191 = pneg %p190
    // Predicated region
    $region37: #{_lambda_.5} parent=5 // pred_check
      _
    $region38: #{_lambda_.5} parent=5 // pred_check_branch
      %193 = sbr.rel (%p190) target = $region40
    $region39: #{_lambda_.5} parent=5 // pred_region
      %s194 = ssub.s32 %s11, 1
      %s195 = smul.u32 4, %s16
      %p196 = scmp.lt.s32.totalorder %s195, 7
      %s197 = scalar_select %p196, %s195, 7
      %s198 = smul.addr %s197, 8
      %s199 = smul.addr %s198, 8
      %s200 = scalar_lea.vmem %s0, %s199
      %p201 = pneg %p37
      %p202 = pneg %p34
      %p203 = pneg %p58
      %p204 = pneg %p55
      %p205 = pneg %p79
      %p206 = pneg %p76
      %p207 = pneg %p100
      %p208 = pneg %p97
      %p209 = pneg %p121
      %p210 = pneg %p118
      %p211 = pneg %p147
      %p212 = pneg %p144
      %s213 = smul.u32 4, %s16
      %p214 = scmp.lt.s32.totalorder %s213, 7
      %s215 = scalar_select %p214, %s213, 7
      %s216 = smul.addr %s215, 8
      %s217 = smul.addr %s216, 8
      %s218 = scalar_lea.vmem %s5, %s217
      %s219 = smul.u32 4, %s16
      %p220 = scmp.lt.s32.totalorder %s219, 7
      %s221 = scalar_select %p220, %s219, 7
      %s222 = smul.addr %s221, 8
      %s223 = smul.addr %s222, 8
      %s224 = scalar_lea.vmem %s0, %s223
      %s225 = smul.u32 4, %s16
      %s226 = smul.u32 4, %s16
      %p227 = scmp.lt.s32.totalorder %s226, 7
      %s228 = scalar_select %p227, %s226, 7
      %s229 = smul.addr %s228, 8
      %s230 = smul.addr %s229, 8
      %s231 = scalar_lea.vmem %s5, %s230
      %s232 = smul.u32 4, %s16
      %v233 = vld [vmem:[%s224] sm:$0xff]
      %v234 = vld [vmem:[%s224 + $0x8] sm:$0xff]
      %v235 = vld [vmem:[%s224 + $0x10] sm:$0xff]
      %v236 = vld [vmem:[%s224 + $0x18] sm:$0xff]
      %v237 = vld [vmem:[%s224 + $0x20] sm:$0xff]
      %v238 = vld [vmem:[%s224 + $0x28] sm:$0xff]
      %v239 = vld [vmem:[%s224 + $0x30] sm:$0xff]
      %v240 = vld [vmem:[%s224 + $0x38] sm:$0xff]
      %v241 = vld [vmem:[%s224 + $0x40] sm:$0xff]
      %v242 = vld [vmem:[%s224 + $0x48] sm:$0xff]
      %v243 = vld [vmem:[%s224 + $0x50] sm:$0xff]
      %v244 = vld [vmem:[%s224 + $0x58] sm:$0xff]
      %v245 = vld [vmem:[%s224 + $0x60] sm:$0xff]
      %v246 = vld [vmem:[%s224 + $0x68] sm:$0xff]
      %v247 = vld [vmem:[%s224 + $0x70] sm:$0xff]
      %v248 = vld [vmem:[%s224 + $0x78] sm:$0xff]
      %v249 = vld [vmem:[%s224 + $0x80] sm:$0xff]
      %v250 = vld [vmem:[%s224 + $0x88] sm:$0xff]
      %v251 = vld [vmem:[%s224 + $0x90] sm:$0xff]
      %v252 = vld [vmem:[%s224 + $0x98] sm:$0xff]
      %v253 = vld [vmem:[%s224 + $0xa0] sm:$0xff]
      %v254 = vld [vmem:[%s224 + $0xa8] sm:$0xff]
      %v255 = vld [vmem:[%s224 + $0xb0] sm:$0xff]
      %v256 = vld [vmem:[%s224 + $0xb8] sm:$0xff]
      %v257 = vld [vmem:[%s224 + $0xc0] sm:$0xff]
      %v258 = vld [vmem:[%s224 + $0xc8] sm:$0xff]
      %v259 = vld [vmem:[%s224 + $0xd0] sm:$0xff]
      %v260 = vld [vmem:[%s224 + $0xd8] sm:$0xff]
      %v261 = vld [vmem:[%s224 + $0xe0] sm:$0xff]
      %v262 = vld [vmem:[%s224 + $0xe8] sm:$0xff]
      %v263 = vld [vmem:[%s224 + $0xf0] sm:$0xff]
      %v264 = vld [vmem:[%s224 + $0xf8] sm:$0xff]
      %v265 = vld [vmem:[%s1] sm:$0xff]
      %v266 = vld [vmem:[%s1 + $0x8] sm:$0xff]
      %v267 = vld [vmem:[%s1 + $0x10] sm:$0xff]
      %v268 = vld [vmem:[%s1 + $0x18] sm:$0xff]
      %v269 = vld [vmem:[%s1 + $0x20] sm:$0xff]
      %v270 = vld [vmem:[%s1 + $0x28] sm:$0xff]
      %v271 = vld [vmem:[%s1 + $0x30] sm:$0xff]
      %v272 = vld [vmem:[%s1 + $0x38] sm:$0xff]
      %v273 = vld [vmem:[%s1 + $0x40] sm:$0xff]
      %v274 = vld [vmem:[%s2] sm:$0x1]
      %v275 = vld [vmem:[%s3] sm:$0xff]
      %v276 = vld [vmem:[%s3 + $0x8] sm:$0xff]
      %v277 = vld [vmem:[%s3 + $0x10] sm:$0xff]
      %v278 = vld [vmem:[%s3 + $0x18] sm:$0xff]
      %v279 = vld [vmem:[%s3 + $0x20] sm:$0xff]
      %v280 = vld [vmem:[%s3 + $0x28] sm:$0xff]
      %v281 = vld [vmem:[%s3 + $0x30] sm:$0xff]
      %v282 = vld [vmem:[%s3 + $0x38] sm:$0xff]
      %v283 = vld [vmem:[%s3 + $0x40] sm:$0xff]
      %v284 = vld [vmem:[%s4] sm:$0x1]
      %v317 = vrot.slane %v233, 7
      %v318 = vrot.slane %v234, 7
      %v319 = vrot.slane %v235, 7
      %v320 = vrot.slane %v236, 7
      %v321 = vrot.slane %v237, 7
      %v322 = vrot.slane %v238, 7
      %v323 = vrot.slane %v239, 7
      %v324 = vrot.slane %v240, 7
      %v325 = vrot.slane %v241, 7
      %v326 = vrot.slane %v242, 7
      %v327 = vrot.slane %v243, 7
      %v328 = vrot.slane %v244, 7
      %v329 = vrot.slane %v245, 7
      %v330 = vrot.slane %v246, 7
      %v331 = vrot.slane %v247, 7
      %v332 = vrot.slane %v248, 7
      %v333 = vrot.slane %v249, 7
      %v334 = vrot.slane %v250, 7
      %v335 = vrot.slane %v251, 7
      %v336 = vrot.slane %v252, 7
      %v337 = vrot.slane %v253, 7
      %v338 = vrot.slane %v254, 7
      %v339 = vrot.slane %v255, 7
      %v340 = vrot.slane %v256, 7
      %v341 = vrot.slane %v257, 7
      %v342 = vrot.slane %v258, 7
      %v343 = vrot.slane %v259, 7
      %v344 = vrot.slane %v260, 7
      %v345 = vrot.slane %v261, 7
      %v346 = vrot.slane %v262, 7
      %v347 = vrot.slane %v263, 7
      %v348 = vrot.slane %v264, 7
      %vm381 = vcmask 1040384
      %v382 = vsel %vm381, 0.0, %v317
      %v383 = vsel %vm381, 0.0, %v318
      %v384 = vsel %vm381, 0.0, %v319
      %v385 = vsel %vm381, 0.0, %v320
      %v386 = vsel %vm381, 0.0, %v321
      %v387 = vsel %vm381, 0.0, %v322
      %v388 = vsel %vm381, 0.0, %v323
      %v389 = vsel %vm381, 0.0, %v324
      %v390 = vsel %vm381, 0.0, %v325
      %v391 = vsel %vm381, 0.0, %v326
      %v392 = vsel %vm381, 0.0, %v327
      %v393 = vsel %vm381, 0.0, %v328
      %v394 = vsel %vm381, 0.0, %v329
      %v395 = vsel %vm381, 0.0, %v330
      %v396 = vsel %vm381, 0.0, %v331
      %v397 = vsel %vm381, 0.0, %v332
      %v398 = vsel %vm381, 0.0, %v333
      %v399 = vsel %vm381, 0.0, %v334
      %v400 = vsel %vm381, 0.0, %v335
      %v401 = vsel %vm381, 0.0, %v336
      %v402 = vsel %vm381, 0.0, %v337
      %v403 = vsel %vm381, 0.0, %v338
      %v404 = vsel %vm381, 0.0, %v339
      %v405 = vsel %vm381, 0.0, %v340
      %v406 = vsel %vm381, 0.0, %v341
      %v407 = vsel %vm381, 0.0, %v342
      %v408 = vsel %vm381, 0.0, %v343
      %v409 = vsel %vm381, 0.0, %v344
      %v410 = vsel %vm381, 0.0, %v345
      %v411 = vsel %vm381, 0.0, %v346
      %v412 = vsel %vm381, 0.0, %v347
      %v413 = vsel %vm381, 0.0, %v348
      %v414 = vsel %vm381, %v317, 0.0
      %v415 = vsel %vm381, %v318, 0.0
      %v416 = vsel %vm381, %v319, 0.0
      %v417 = vsel %vm381, %v320, 0.0
      %v418 = vsel %vm381, %v321, 0.0
      %v419 = vsel %vm381, %v322, 0.0
      %v420 = vsel %vm381, %v323, 0.0
      %v421 = vsel %vm381, %v324, 0.0
      %v422 = vsel %vm381, %v325, 0.0
      %v423 = vsel %vm381, %v326, 0.0
      %v424 = vsel %vm381, %v327, 0.0
      %v425 = vsel %vm381, %v328, 0.0
      %v426 = vsel %vm381, %v329, 0.0
      %v427 = vsel %vm381, %v330, 0.0
      %v428 = vsel %vm381, %v331, 0.0
      %v429 = vsel %vm381, %v332, 0.0
      %v430 = vsel %vm381, %v333, 0.0
      %v431 = vsel %vm381, %v334, 0.0
      %v432 = vsel %vm381, %v335, 0.0
      %v433 = vsel %vm381, %v336, 0.0
      %v434 = vsel %vm381, %v337, 0.0
      %v435 = vsel %vm381, %v338, 0.0
      %v436 = vsel %vm381, %v339, 0.0
      %v437 = vsel %vm381, %v340, 0.0
      %v438 = vsel %vm381, %v341, 0.0
      %v439 = vsel %vm381, %v342, 0.0
      %v440 = vsel %vm381, %v343, 0.0
      %v441 = vsel %vm381, %v344, 0.0
      %v442 = vsel %vm381, %v345, 0.0
      %v443 = vsel %vm381, %v346, 0.0
      %v444 = vsel %vm381, %v347, 0.0
      %v445 = vsel %vm381, %v348, 0.0
      %vm503 = vcmask 1046528
      %v504 = vrot.slane 0.0, 1
      %v505 = vsel %vm503, %v504, %v504
      %v506 = vrot.slane %v382, 1
      %v507 = vrot.slane %v414, 1
      %v508 = vsel %vm503, %v506, %v507
      %v509 = vrot.slane %v383, 1
      %v510 = vrot.slane %v415, 1
      %v511 = vsel %vm503, %v509, %v510
      %v512 = vrot.slane %v384, 1
      %v513 = vrot.slane %v416, 1
      %v514 = vsel %vm503, %v512, %v513
      %v515 = vrot.slane %v385, 1
      %v516 = vrot.slane %v417, 1
      %v517 = vsel %vm503, %v515, %v516
      %v518 = vrot.slane %v386, 1
      %v519 = vrot.slane %v418, 1
      %v520 = vsel %vm503, %v518, %v519
      %v521 = vrot.slane %v387, 1
      %v522 = vrot.slane %v419, 1
      %v523 = vsel %vm503, %v521, %v522
      %v524 = vrot.slane %v388, 1
      %v525 = vrot.slane %v420, 1
      %v526 = vsel %vm503, %v524, %v525
      %v527 = vrot.slane %v390, 1
      %v528 = vrot.slane %v422, 1
      %v529 = vsel %vm503, %v527, %v528
      %v530 = vrot.slane %v391, 1
      %v531 = vrot.slane %v423, 1
      %v532 = vsel %vm503, %v530, %v531
      %v533 = vrot.slane %v392, 1
      %v534 = vrot.slane %v424, 1
      %v535 = vsel %vm503, %v533, %v534
      %v536 = vrot.slane %v393, 1
      %v537 = vrot.slane %v425, 1
      %v538 = vsel %vm503, %v536, %v537
      %v539 = vrot.slane %v394, 1
      %v540 = vrot.slane %v426, 1
      %v541 = vsel %vm503, %v539, %v540
      %v542 = vrot.slane %v395, 1
      %v543 = vrot.slane %v427, 1
      %v544 = vsel %vm503, %v542, %v543
      %v545 = vrot.slane %v396, 1
      %v546 = vrot.slane %v428, 1
      %v547 = vsel %vm503, %v545, %v546
      %v548 = vrot.slane %v398, 1
      %v549 = vrot.slane %v430, 1
      %v550 = vsel %vm503, %v548, %v549
      %v551 = vrot.slane %v399, 1
      %v552 = vrot.slane %v431, 1
      %v553 = vsel %vm503, %v551, %v552
      %v554 = vrot.slane %v400, 1
      %v555 = vrot.slane %v432, 1
      %v556 = vsel %vm503, %v554, %v555
      %v557 = vrot.slane %v401, 1
      %v558 = vrot.slane %v433, 1
      %v559 = vsel %vm503, %v557, %v558
      %v560 = vrot.slane %v402, 1
      %v561 = vrot.slane %v434, 1
      %v562 = vsel %vm503, %v560, %v561
      %v563 = vrot.slane %v403, 1
      %v564 = vrot.slane %v435, 1
      %v565 = vsel %vm503, %v563, %v564
      %v566 = vrot.slane %v404, 1
      %v567 = vrot.slane %v436, 1
      %v568 = vsel %vm503, %v566, %v567
      %v569 = vrot.slane %v406, 1
      %v570 = vrot.slane %v438, 1
      %v571 = vsel %vm503, %v569, %v570
      %v572 = vrot.slane %v407, 1
      %v573 = vrot.slane %v439, 1
      %v574 = vsel %vm503, %v572, %v573
      %v575 = vrot.slane %v408, 1
      %v576 = vrot.slane %v440, 1
      %v577 = vsel %vm503, %v575, %v576
      %v578 = vrot.slane %v409, 1
      %v579 = vrot.slane %v441, 1
      %v580 = vsel %vm503, %v578, %v579
      %v581 = vrot.slane %v410, 1
      %v582 = vrot.slane %v442, 1
      %v583 = vsel %vm503, %v581, %v582
      %v584 = vrot.slane %v411, 1
      %v585 = vrot.slane %v443, 1
      %v586 = vsel %vm503, %v584, %v585
      %v587 = vrot.slane %v412, 1
      %v588 = vrot.slane %v444, 1
      %v589 = vsel %vm503, %v587, %v588
      %vm590 = vcmask 1045504
      %v591 = vrot.slane 0.0, 2
      %v592 = vsel %vm590, %v591, %v591
      %v593 = vrot.slane %v382, 2
      %v594 = vrot.slane %v414, 2
      %v595 = vsel %vm590, %v593, %v594
      %v596 = vrot.slane %v383, 2
      %v597 = vrot.slane %v415, 2
      %v598 = vsel %vm590, %v596, %v597
      %v599 = vrot.slane %v384, 2
      %v600 = vrot.slane %v416, 2
      %v601 = vsel %vm590, %v599, %v600
      %v602 = vrot.slane %v385, 2
      %v603 = vrot.slane %v417, 2
      %v604 = vsel %vm590, %v602, %v603
      %v605 = vrot.slane %v386, 2
      %v606 = vrot.slane %v418, 2
      %v607 = vsel %vm590, %v605, %v606
      %v608 = vrot.slane %v387, 2
      %v609 = vrot.slane %v419, 2
      %v610 = vsel %vm590, %v608, %v609
      %v611 = vrot.slane %v388, 2
      %v612 = vrot.slane %v420, 2
      %v613 = vsel %vm590, %v611, %v612
      %v614 = vrot.slane %v390, 2
      %v615 = vrot.slane %v422, 2
      %v616 = vsel %vm590, %v614, %v615
      %v617 = vrot.slane %v391, 2
      %v618 = vrot.slane %v423, 2
      %v619 = vsel %vm590, %v617, %v618
      %v620 = vrot.slane %v392, 2
      %v621 = vrot.slane %v424, 2
      %v622 = vsel %vm590, %v620, %v621
      %v623 = vrot.slane %v393, 2
      %v624 = vrot.slane %v425, 2
      %v625 = vsel %vm590, %v623, %v624
      %v626 = vrot.slane %v394, 2
      %v627 = vrot.slane %v426, 2
      %v628 = vsel %vm590, %v626, %v627
      %v629 = vrot.slane %v395, 2
      %v630 = vrot.slane %v427, 2
      %v631 = vsel %vm590, %v629, %v630
      %v632 = vrot.slane %v396, 2
      %v633 = vrot.slane %v428, 2
      %v634 = vsel %vm590, %v632, %v633
      %v635 = vrot.slane %v398, 2
      %v636 = vrot.slane %v430, 2
      %v637 = vsel %vm590, %v635, %v636
      %v638 = vrot.slane %v399, 2
      %v639 = vrot.slane %v431, 2
      %v640 = vsel %vm590, %v638, %v639
      %v641 = vrot.slane %v400, 2
      %v642 = vrot.slane %v432, 2
      %v643 = vsel %vm590, %v641, %v642
      %v644 = vrot.slane %v401, 2
      %v645 = vrot.slane %v433, 2
      %v646 = vsel %vm590, %v644, %v645
      %v647 = vrot.slane %v402, 2
      %v648 = vrot.slane %v434, 2
      %v649 = vsel %vm590, %v647, %v648
      %v650 = vrot.slane %v403, 2
      %v651 = vrot.slane %v435, 2
      %v652 = vsel %vm590, %v650, %v651
      %v653 = vrot.slane %v404, 2
      %v654 = vrot.slane %v436, 2
      %v655 = vsel %vm590, %v653, %v654
      %v656 = vrot.slane %v406, 2
      %v657 = vrot.slane %v438, 2
      %v658 = vsel %vm590, %v656, %v657
      %v659 = vrot.slane %v407, 2
      %v660 = vrot.slane %v439, 2
      %v661 = vsel %vm590, %v659, %v660
      %v662 = vrot.slane %v408, 2
      %v663 = vrot.slane %v440, 2
      %v664 = vsel %vm590, %v662, %v663
      %v665 = vrot.slane %v409, 2
      %v666 = vrot.slane %v441, 2
      %v667 = vsel %vm590, %v665, %v666
      %v668 = vrot.slane %v410, 2
      %v669 = vrot.slane %v442, 2
      %v670 = vsel %vm590, %v668, %v669
      %v671 = vrot.slane %v411, 2
      %v672 = vrot.slane %v443, 2
      %v673 = vsel %vm590, %v671, %v672
      %v674 = vrot.slane %v412, 2
      %v675 = vrot.slane %v444, 2
      %v676 = vsel %vm590, %v674, %v675
      %v685 = vrot.slane %v389, 1
      %v686 = vrot.slane %v421, 1
      %v687 = vsel %vm503, %v685, %v686
      %v688 = vrot.slane %v397, 1
      %v689 = vrot.slane %v429, 1
      %v690 = vsel %vm503, %v688, %v689
      %v691 = vrot.slane %v405, 1
      %v692 = vrot.slane %v437, 1
      %v693 = vsel %vm503, %v691, %v692
      %v694 = vrot.slane %v413, 1
      %v695 = vrot.slane %v445, 1
      %v696 = vsel %vm503, %v694, %v695
      %v697 = vrot.slane %v389, 2
      %v698 = vrot.slane %v421, 2
      %v699 = vsel %vm590, %v697, %v698
      %v700 = vrot.slane %v397, 2
      %v701 = vrot.slane %v429, 2
      %v702 = vsel %vm590, %v700, %v701
      %v703 = vrot.slane %v405, 2
      %v704 = vrot.slane %v437, 2
      %v705 = vsel %vm590, %v703, %v704
      %v706 = vrot.slane %v413, 2
      %v707 = vrot.slane %v445, 2
      %v708 = vsel %vm590, %v706, %v707
      %709 = vrot.lane.b32.xlu0 %v505, 8
      %v710 = vpop.permute.xlu0 %709
      %711 = vrot.lane.b32.xlu0 %v508, 8
      %v712 = vpop.permute.xlu0 %711
      %713 = vrot.lane.b32.xlu0 %v511, 8
      %v714 = vpop.permute.xlu0 %713
      %715 = vrot.lane.b32.xlu0 %v514, 8
      %v716 = vpop.permute.xlu0 %715
      %717 = vrot.lane.b32.xlu0 %v517, 8
      %v718 = vpop.permute.xlu0 %717
      %719 = vrot.lane.b32.xlu0 %v520, 8
      %v720 = vpop.permute.xlu0 %719
      %721 = vrot.lane.b32.xlu0 %v523, 8
      %v722 = vpop.permute.xlu0 %721
      %723 = vrot.lane.b32.xlu0 %v526, 8
      %v724 = vpop.permute.xlu0 %723
      %725 = vrot.lane.b32.xlu0 %v529, 8
      %v726 = vpop.permute.xlu0 %725
      %727 = vrot.lane.b32.xlu0 %v532, 8
      %v728 = vpop.permute.xlu0 %727
      %729 = vrot.lane.b32.xlu0 %v535, 8
      %v730 = vpop.permute.xlu0 %729
      %731 = vrot.lane.b32.xlu0 %v538, 8
      %v732 = vpop.permute.xlu0 %731
      %733 = vrot.lane.b32.xlu0 %v541, 8
      %v734 = vpop.permute.xlu0 %733
      %735 = vrot.lane.b32.xlu0 %v544, 8
      %v736 = vpop.permute.xlu0 %735
      %737 = vrot.lane.b32.xlu0 %v547, 8
      %v738 = vpop.permute.xlu0 %737
      %739 = vrot.lane.b32.xlu0 %v550, 8
      %v740 = vpop.permute.xlu0 %739
      %741 = vrot.lane.b32.xlu0 %v553, 8
      %v742 = vpop.permute.xlu0 %741
      %743 = vrot.lane.b32.xlu0 %v556, 8
      %v744 = vpop.permute.xlu0 %743
      %745 = vrot.lane.b32.xlu0 %v559, 8
      %v746 = vpop.permute.xlu0 %745
      %747 = vrot.lane.b32.xlu0 %v562, 8
      %v748 = vpop.permute.xlu0 %747
      %749 = vrot.lane.b32.xlu0 %v565, 8
      %v750 = vpop.permute.xlu0 %749
      %751 = vrot.lane.b32.xlu0 %v568, 8
      %v752 = vpop.permute.xlu0 %751
      %753 = vrot.lane.b32.xlu0 %v571, 8
      %v754 = vpop.permute.xlu0 %753
      %755 = vrot.lane.b32.xlu0 %v574, 8
      %v756 = vpop.permute.xlu0 %755
      %757 = vrot.lane.b32.xlu0 %v577, 8
      %v758 = vpop.permute.xlu0 %757
      %759 = vrot.lane.b32.xlu0 %v580, 8
      %v760 = vpop.permute.xlu0 %759
      %761 = vrot.lane.b32.xlu0 %v583, 8
      %v762 = vpop.permute.xlu0 %761
      %763 = vrot.lane.b32.xlu0 %v586, 8
      %v764 = vpop.permute.xlu0 %763
      %765 = vrot.lane.b32.xlu0 %v589, 8
      %v766 = vpop.permute.xlu0 %765
      %796 = vrot.lane.b32.xlu0 %v592, 16
      %v797 = vpop.permute.xlu0 %796
      %798 = vrot.lane.b32.xlu0 %v595, 16
      %v799 = vpop.permute.xlu0 %798
      %800 = vrot.lane.b32.xlu0 %v598, 16
      %v801 = vpop.permute.xlu0 %800
      %802 = vrot.lane.b32.xlu0 %v601, 16
      %v803 = vpop.permute.xlu0 %802
      %804 = vrot.lane.b32.xlu0 %v604, 16
      %v805 = vpop.permute.xlu0 %804
      %806 = vrot.lane.b32.xlu0 %v607, 16
      %v807 = vpop.permute.xlu0 %806
      %808 = vrot.lane.b32.xlu0 %v610, 16
      %v809 = vpop.permute.xlu0 %808
      %810 = vrot.lane.b32.xlu0 %v613, 16
      %v811 = vpop.permute.xlu0 %810
      %812 = vrot.lane.b32.xlu0 %v616, 16
      %v813 = vpop.permute.xlu0 %812
      %814 = vrot.lane.b32.xlu0 %v619, 16
      %v815 = vpop.permute.xlu0 %814
      %816 = vrot.lane.b32.xlu0 %v622, 16
      %v817 = vpop.permute.xlu0 %816
      %818 = vrot.lane.b32.xlu0 %v625, 16
      %v819 = vpop.permute.xlu0 %818
      %820 = vrot.lane.b32.xlu0 %v628, 16
      %v821 = vpop.permute.xlu0 %820
      %822 = vrot.lane.b32.xlu0 %v631, 16
      %v823 = vpop.permute.xlu0 %822
      %824 = vrot.lane.b32.xlu0 %v634, 16
      %v825 = vpop.permute.xlu0 %824
      %826 = vrot.lane.b32.xlu0 %v637, 16
      %v827 = vpop.permute.xlu0 %826
      %828 = vrot.lane.b32.xlu0 %v640, 16
      %v829 = vpop.permute.xlu0 %828
      %830 = vrot.lane.b32.xlu0 %v643, 16
      %v831 = vpop.permute.xlu0 %830
      %832 = vrot.lane.b32.xlu0 %v646, 16
      %v833 = vpop.permute.xlu0 %832
      %834 = vrot.lane.b32.xlu0 %v649, 16
      %v835 = vpop.permute.xlu0 %834
      %836 = vrot.lane.b32.xlu0 %v652, 16
      %v837 = vpop.permute.xlu0 %836
      %838 = vrot.lane.b32.xlu0 %v655, 16
      %v839 = vpop.permute.xlu0 %838
      %840 = vrot.lane.b32.xlu0 %v658, 16
      %v841 = vpop.permute.xlu0 %840
      %842 = vrot.lane.b32.xlu0 %v661, 16
      %v843 = vpop.permute.xlu0 %842
      %844 = vrot.lane.b32.xlu0 %v664, 16
      %v845 = vpop.permute.xlu0 %844
      %846 = vrot.lane.b32.xlu0 %v667, 16
      %v847 = vpop.permute.xlu0 %846
      %848 = vrot.lane.b32.xlu0 %v670, 16
      %v849 = vpop.permute.xlu0 %848
      %850 = vrot.lane.b32.xlu0 %v673, 16
      %v851 = vpop.permute.xlu0 %850
      %852 = vrot.lane.b32.xlu0 %v676, 16
      %v853 = vpop.permute.xlu0 %852
      %883 = vrot.lane.b32.xlu0 %v382, 24
      %v884 = vpop.permute.xlu0 %883
      %885 = vrot.lane.b32.xlu0 %v383, 24
      %v886 = vpop.permute.xlu0 %885
      %887 = vrot.lane.b32.xlu0 %v384, 24
      %v888 = vpop.permute.xlu0 %887
      %889 = vrot.lane.b32.xlu0 %v385, 24
      %v890 = vpop.permute.xlu0 %889
      %891 = vrot.lane.b32.xlu0 %v386, 24
      %v892 = vpop.permute.xlu0 %891
      %893 = vrot.lane.b32.xlu0 %v387, 24
      %v894 = vpop.permute.xlu0 %893
      %895 = vrot.lane.b32.xlu0 %v388, 24
      %v896 = vpop.permute.xlu0 %895
      %897 = vrot.lane.b32.xlu0 %v389, 24
      %v898 = vpop.permute.xlu0 %897
      %899 = vrot.lane.b32.xlu0 %v390, 24
      %v900 = vpop.permute.xlu0 %899
      %901 = vrot.lane.b32.xlu0 %v391, 24
      %v902 = vpop.permute.xlu0 %901
      %903 = vrot.lane.b32.xlu0 %v392, 24
      %v904 = vpop.permute.xlu0 %903
      %905 = vrot.lane.b32.xlu0 %v393, 24
      %v906 = vpop.permute.xlu0 %905
      %907 = vrot.lane.b32.xlu0 %v394, 24
      %v908 = vpop.permute.xlu0 %907
      %909 = vrot.lane.b32.xlu0 %v395, 24
      %v910 = vpop.permute.xlu0 %909
      %911 = vrot.lane.b32.xlu0 %v396, 24
      %v912 = vpop.permute.xlu0 %911
      %913 = vrot.lane.b32.xlu0 %v397, 24
      %v914 = vpop.permute.xlu0 %913
      %915 = vrot.lane.b32.xlu0 %v398, 24
      %v916 = vpop.permute.xlu0 %915
      %917 = vrot.lane.b32.xlu0 %v399, 24
      %v918 = vpop.permute.xlu0 %917
      %919 = vrot.lane.b32.xlu0 %v400, 24
      %v920 = vpop.permute.xlu0 %919
      %921 = vrot.lane.b32.xlu0 %v401, 24
      %v922 = vpop.permute.xlu0 %921
      %923 = vrot.lane.b32.xlu0 %v402, 24
      %v924 = vpop.permute.xlu0 %923
      %925 = vrot.lane.b32.xlu0 %v403, 24
      %v926 = vpop.permute.xlu0 %925
      %927 = vrot.lane.b32.xlu0 %v404, 24
      %v928 = vpop.permute.xlu0 %927
      %929 = vrot.lane.b32.xlu0 %v405, 24
      %v930 = vpop.permute.xlu0 %929
      %931 = vrot.lane.b32.xlu0 %v406, 24
      %v932 = vpop.permute.xlu0 %931
      %933 = vrot.lane.b32.xlu0 %v407, 24
      %v934 = vpop.permute.xlu0 %933
      %935 = vrot.lane.b32.xlu0 %v408, 24
      %v936 = vpop.permute.xlu0 %935
      %937 = vrot.lane.b32.xlu0 %v409, 24
      %v938 = vpop.permute.xlu0 %937
      %939 = vrot.lane.b32.xlu0 %v410, 24
      %v940 = vpop.permute.xlu0 %939
      %941 = vrot.lane.b32.xlu0 %v411, 24
      %v942 = vpop.permute.xlu0 %941
      %943 = vrot.lane.b32.xlu0 %v412, 24
      %v944 = vpop.permute.xlu0 %943
      %945 = vrot.lane.b32.xlu0 %v413, 24
      %v946 = vpop.permute.xlu0 %945
      %979 = vrot.lane.b32.xlu0 %v508, 32
      %v980 = vpop.permute.xlu0 %979
      %981 = vrot.lane.b32.xlu0 %v511, 32
      %v982 = vpop.permute.xlu0 %981
      %983 = vrot.lane.b32.xlu0 %v514, 32
      %v984 = vpop.permute.xlu0 %983
      %985 = vrot.lane.b32.xlu0 %v517, 32
      %v986 = vpop.permute.xlu0 %985
      %987 = vrot.lane.b32.xlu0 %v520, 32
      %v988 = vpop.permute.xlu0 %987
      %989 = vrot.lane.b32.xlu0 %v523, 32
      %v990 = vpop.permute.xlu0 %989
      %991 = vrot.lane.b32.xlu0 %v526, 32
      %v992 = vpop.permute.xlu0 %991
      %993 = vrot.lane.b32.xlu0 %v687, 32
      %v994 = vpop.permute.xlu0 %993
      %995 = vrot.lane.b32.xlu0 %v529, 32
      %v996 = vpop.permute.xlu0 %995
      %997 = vrot.lane.b32.xlu0 %v532, 32
      %v998 = vpop.permute.xlu0 %997
      %999 = vrot.lane.b32.xlu0 %v535, 32
      %v1000 = vpop.permute.xlu0 %999
      %1001 = vrot.lane.b32.xlu0 %v538, 32
      %v1002 = vpop.permute.xlu0 %1001
      %1003 = vrot.lane.b32.xlu0 %v541, 32
      %v1004 = vpop.permute.xlu0 %1003
      %1005 = vrot.lane.b32.xlu0 %v544, 32
      %v1006 = vpop.permute.xlu0 %1005
      %1007 = vrot.lane.b32.xlu0 %v547, 32
      %v1008 = vpop.permute.xlu0 %1007
      %1009 = vrot.lane.b32.xlu0 %v690, 32
      %v1010 = vpop.permute.xlu0 %1009
      %1011 = vrot.lane.b32.xlu0 %v550, 32
      %v1012 = vpop.permute.xlu0 %1011
      %1013 = vrot.lane.b32.xlu0 %v553, 32
      %v1014 = vpop.permute.xlu0 %1013
      %1015 = vrot.lane.b32.xlu0 %v556, 32
      %v1016 = vpop.permute.xlu0 %1015
      %1017 = vrot.lane.b32.xlu0 %v559, 32
      %v1018 = vpop.permute.xlu0 %1017
      %1019 = vrot.lane.b32.xlu0 %v562, 32
      %v1020 = vpop.permute.xlu0 %1019
      %1021 = vrot.lane.b32.xlu0 %v565, 32
      %v1022 = vpop.permute.xlu0 %1021
      %1023 = vrot.lane.b32.xlu0 %v568, 32
      %v1024 = vpop.permute.xlu0 %1023
      %1025 = vrot.lane.b32.xlu0 %v693, 32
      %v1026 = vpop.permute.xlu0 %1025
      %1027 = vrot.lane.b32.xlu0 %v571, 32
      %v1028 = vpop.permute.xlu0 %1027
      %1029 = vrot.lane.b32.xlu0 %v574, 32
      %v1030 = vpop.permute.xlu0 %1029
      %1031 = vrot.lane.b32.xlu0 %v577, 32
      %v1032 = vpop.permute.xlu0 %1031
      %1033 = vrot.lane.b32.xlu0 %v580, 32
      %v1034 = vpop.permute.xlu0 %1033
      %1035 = vrot.lane.b32.xlu0 %v583, 32
      %v1036 = vpop.permute.xlu0 %1035
      %1037 = vrot.lane.b32.xlu0 %v586, 32
      %v1038 = vpop.permute.xlu0 %1037
      %1039 = vrot.lane.b32.xlu0 %v589, 32
      %v1040 = vpop.permute.xlu0 %1039
      %1041 = vrot.lane.b32.xlu0 %v696, 32
      %v1042 = vpop.permute.xlu0 %1041
      %1075 = vrot.lane.b32.xlu0 %v595, 40
      %v1076 = vpop.permute.xlu0 %1075
      %1077 = vrot.lane.b32.xlu0 %v598, 40
      %v1078 = vpop.permute.xlu0 %1077
      %1079 = vrot.lane.b32.xlu0 %v601, 40
      %v1080 = vpop.permute.xlu0 %1079
      %1081 = vrot.lane.b32.xlu0 %v604, 40
      %v1082 = vpop.permute.xlu0 %1081
      %1083 = vrot.lane.b32.xlu0 %v607, 40
      %v1084 = vpop.permute.xlu0 %1083
      %1085 = vrot.lane.b32.xlu0 %v610, 40
      %v1086 = vpop.permute.xlu0 %1085
      %1087 = vrot.lane.b32.xlu0 %v613, 40
      %v1088 = vpop.permute.xlu0 %1087
      %1089 = vrot.lane.b32.xlu0 %v699, 40
      %v1090 = vpop.permute.xlu0 %1089
      %1091 = vrot.lane.b32.xlu0 %v616, 40
      %v1092 = vpop.permute.xlu0 %1091
      %1093 = vrot.lane.b32.xlu0 %v619, 40
      %v1094 = vpop.permute.xlu0 %1093
      %1095 = vrot.lane.b32.xlu0 %v622, 40
      %v1096 = vpop.permute.xlu0 %1095
      %1097 = vrot.lane.b32.xlu0 %v625, 40
      %v1098 = vpop.permute.xlu0 %1097
      %1099 = vrot.lane.b32.xlu0 %v628, 40
      %v1100 = vpop.permute.xlu0 %1099
      %1101 = vrot.lane.b32.xlu0 %v631, 40
      %v1102 = vpop.permute.xlu0 %1101
      %1103 = vrot.lane.b32.xlu0 %v634, 40
      %v1104 = vpop.permute.xlu0 %1103
      %1105 = vrot.lane.b32.xlu0 %v702, 40
      %v1106 = vpop.permute.xlu0 %1105
      %1107 = vrot.lane.b32.xlu0 %v637, 40
      %v1108 = vpop.permute.xlu0 %1107
      %1109 = vrot.lane.b32.xlu0 %v640, 40
      %v1110 = vpop.permute.xlu0 %1109
      %1111 = vrot.lane.b32.xlu0 %v643, 40
      %v1112 = vpop.permute.xlu0 %1111
      %1113 = vrot.lane.b32.xlu0 %v646, 40
      %v1114 = vpop.permute.xlu0 %1113
      %1115 = vrot.lane.b32.xlu0 %v649, 40
      %v1116 = vpop.permute.xlu0 %1115
      %1117 = vrot.lane.b32.xlu0 %v652, 40
      %v1118 = vpop.permute.xlu0 %1117
      %1119 = vrot.lane.b32.xlu0 %v655, 40
      %v1120 = vpop.permute.xlu0 %1119
      %1121 = vrot.lane.b32.xlu0 %v705, 40
      %v1122 = vpop.permute.xlu0 %1121
      %1123 = vrot.lane.b32.xlu0 %v658, 40
      %v1124 = vpop.permute.xlu0 %1123
      %1125 = vrot.lane.b32.xlu0 %v661, 40
      %v1126 = vpop.permute.xlu0 %1125
      %1127 = vrot.lane.b32.xlu0 %v664, 40
      %v1128 = vpop.permute.xlu0 %1127
      %1129 = vrot.lane.b32.xlu0 %v667, 40
      %v1130 = vpop.permute.xlu0 %1129
      %1131 = vrot.lane.b32.xlu0 %v670, 40
      %v1132 = vpop.permute.xlu0 %1131
      %1133 = vrot.lane.b32.xlu0 %v673, 40
      %v1134 = vpop.permute.xlu0 %1133
      %1135 = vrot.lane.b32.xlu0 %v676, 40
      %v1136 = vpop.permute.xlu0 %1135
      %1137 = vrot.lane.b32.xlu0 %v708, 40
      %v1138 = vpop.permute.xlu0 %1137
      %1171 = vrot.lane.b32.xlu0 %v383, 48
      %v1172 = vpop.permute.xlu0 %1171
      %1173 = vrot.lane.b32.xlu0 %v384, 48
      %v1174 = vpop.permute.xlu0 %1173
      %1175 = vrot.lane.b32.xlu0 %v385, 48
      %v1176 = vpop.permute.xlu0 %1175
      %1177 = vrot.lane.b32.xlu0 %v386, 48
      %v1178 = vpop.permute.xlu0 %1177
      %1179 = vrot.lane.b32.xlu0 %v387, 48
      %v1180 = vpop.permute.xlu0 %1179
      %1181 = vrot.lane.b32.xlu0 %v388, 48
      %v1182 = vpop.permute.xlu0 %1181
      %1183 = vrot.lane.b32.xlu0 %v389, 48
      %v1184 = vpop.permute.xlu0 %1183
      %1185 = vrot.lane.b32.xlu0 0.0, 48
      %v1186 = vpop.permute.xlu0 %1185
      %1187 = vrot.lane.b32.xlu0 %v391, 48
      %v1188 = vpop.permute.xlu0 %1187
      %1189 = vrot.lane.b32.xlu0 %v392, 48
      %v1190 = vpop.permute.xlu0 %1189
      %1191 = vrot.lane.b32.xlu0 %v393, 48
      %v1192 = vpop.permute.xlu0 %1191
      %1193 = vrot.lane.b32.xlu0 %v394, 48
      %v1194 = vpop.permute.xlu0 %1193
      %1195 = vrot.lane.b32.xlu0 %v395, 48
      %v1196 = vpop.permute.xlu0 %1195
      %1197 = vrot.lane.b32.xlu0 %v396, 48
      %v1198 = vpop.permute.xlu0 %1197
      %1199 = vrot.lane.b32.xlu0 %v397, 48
      %v1200 = vpop.permute.xlu0 %1199
      %1201 = vrot.lane.b32.xlu0 %v399, 48
      %v1202 = vpop.permute.xlu0 %1201
      %1203 = vrot.lane.b32.xlu0 %v400, 48
      %v1204 = vpop.permute.xlu0 %1203
      %1205 = vrot.lane.b32.xlu0 %v401, 48
      %v1206 = vpop.permute.xlu0 %1205
      %1207 = vrot.lane.b32.xlu0 %v402, 48
      %v1208 = vpop.permute.xlu0 %1207
      %1209 = vrot.lane.b32.xlu0 %v403, 48
      %v1210 = vpop.permute.xlu0 %1209
      %1211 = vrot.lane.b32.xlu0 %v404, 48
      %v1212 = vpop.permute.xlu0 %1211
      %1213 = vrot.lane.b32.xlu0 %v405, 48
      %v1214 = vpop.permute.xlu0 %1213
      %1215 = vrot.lane.b32.xlu0 %v407, 48
      %v1216 = vpop.permute.xlu0 %1215
      %1217 = vrot.lane.b32.xlu0 %v408, 48
      %v1218 = vpop.permute.xlu0 %1217
      %1219 = vrot.lane.b32.xlu0 %v409, 48
      %v1220 = vpop.permute.xlu0 %1219
      %1221 = vrot.lane.b32.xlu0 %v410, 48
      %v1222 = vpop.permute.xlu0 %1221
      %1223 = vrot.lane.b32.xlu0 %v411, 48
      %v1224 = vpop.permute.xlu0 %1223
      %1225 = vrot.lane.b32.xlu0 %v412, 48
      %v1226 = vpop.permute.xlu0 %1225
      %1227 = vrot.lane.b32.xlu0 %v413, 48
      %v1228 = vpop.permute.xlu0 %1227
      %1258 = vrot.lane.b32.xlu0 %v511, 56
      %v1259 = vpop.permute.xlu0 %1258
      %1260 = vrot.lane.b32.xlu0 %v514, 56
      %v1261 = vpop.permute.xlu0 %1260
      %1262 = vrot.lane.b32.xlu0 %v517, 56
      %v1263 = vpop.permute.xlu0 %1262
      %1264 = vrot.lane.b32.xlu0 %v520, 56
      %v1265 = vpop.permute.xlu0 %1264
      %1266 = vrot.lane.b32.xlu0 %v523, 56
      %v1267 = vpop.permute.xlu0 %1266
      %1268 = vrot.lane.b32.xlu0 %v526, 56
      %v1269 = vpop.permute.xlu0 %1268
      %1270 = vrot.lane.b32.xlu0 %v687, 56
      %v1271 = vpop.permute.xlu0 %1270
      %1272 = vrot.lane.b32.xlu0 %v505, 56
      %v1273 = vpop.permute.xlu0 %1272
      %1274 = vrot.lane.b32.xlu0 %v532, 56
      %v1275 = vpop.permute.xlu0 %1274
      %1276 = vrot.lane.b32.xlu0 %v535, 56
      %v1277 = vpop.permute.xlu0 %1276
      %1278 = vrot.lane.b32.xlu0 %v538, 56
      %v1279 = vpop.permute.xlu0 %1278
      %1280 = vrot.lane.b32.xlu0 %v541, 56
      %v1281 = vpop.permute.xlu0 %1280
      %1282 = vrot.lane.b32.xlu0 %v544, 56
      %v1283 = vpop.permute.xlu0 %1282
      %1284 = vrot.lane.b32.xlu0 %v547, 56
      %v1285 = vpop.permute.xlu0 %1284
      %1286 = vrot.lane.b32.xlu0 %v690, 56
      %v1287 = vpop.permute.xlu0 %1286
      %1288 = vrot.lane.b32.xlu0 %v553, 56
      %v1289 = vpop.permute.xlu0 %1288
      %1290 = vrot.lane.b32.xlu0 %v556, 56
      %v1291 = vpop.permute.xlu0 %1290
      %1292 = vrot.lane.b32.xlu0 %v559, 56
      %v1293 = vpop.permute.xlu0 %1292
      %1294 = vrot.lane.b32.xlu0 %v562, 56
      %v1295 = vpop.permute.xlu0 %1294
      %1296 = vrot.lane.b32.xlu0 %v565, 56
      %v1297 = vpop.permute.xlu0 %1296
      %1298 = vrot.lane.b32.xlu0 %v568, 56
      %v1299 = vpop.permute.xlu0 %1298
      %1300 = vrot.lane.b32.xlu0 %v693, 56
      %v1301 = vpop.permute.xlu0 %1300
      %1302 = vrot.lane.b32.xlu0 %v574, 56
      %v1303 = vpop.permute.xlu0 %1302
      %1304 = vrot.lane.b32.xlu0 %v577, 56
      %v1305 = vpop.permute.xlu0 %1304
      %1306 = vrot.lane.b32.xlu0 %v580, 56
      %v1307 = vpop.permute.xlu0 %1306
      %1308 = vrot.lane.b32.xlu0 %v583, 56
      %v1309 = vpop.permute.xlu0 %1308
      %1310 = vrot.lane.b32.xlu0 %v586, 56
      %v1311 = vpop.permute.xlu0 %1310
      %1312 = vrot.lane.b32.xlu0 %v589, 56
      %v1313 = vpop.permute.xlu0 %1312
      %1314 = vrot.lane.b32.xlu0 %v696, 56
      %v1315 = vpop.permute.xlu0 %1314
      %1345 = vrot.lane.b32.xlu0 %v598, 64
      %v1346 = vpop.permute.xlu0 %1345
      %1347 = vrot.lane.b32.xlu0 %v601, 64
      %v1348 = vpop.permute.xlu0 %1347
      %1349 = vrot.lane.b32.xlu0 %v604, 64
      %v1350 = vpop.permute.xlu0 %1349
      %1351 = vrot.lane.b32.xlu0 %v607, 64
      %v1352 = vpop.permute.xlu0 %1351
      %1353 = vrot.lane.b32.xlu0 %v610, 64
      %v1354 = vpop.permute.xlu0 %1353
      %1355 = vrot.lane.b32.xlu0 %v613, 64
      %v1356 = vpop.permute.xlu0 %1355
      %1357 = vrot.lane.b32.xlu0 %v699, 64
      %v1358 = vpop.permute.xlu0 %1357
      %1359 = vrot.lane.b32.xlu0 %v592, 64
      %v1360 = vpop.permute.xlu0 %1359
      %1361 = vrot.lane.b32.xlu0 %v619, 64
      %v1362 = vpop.permute.xlu0 %1361
      %1363 = vrot.lane.b32.xlu0 %v622, 64
      %v1364 = vpop.permute.xlu0 %1363
      %1365 = vrot.lane.b32.xlu0 %v625, 64
      %v1366 = vpop.permute.xlu0 %1365
      %1367 = vrot.lane.b32.xlu0 %v628, 64
      %v1368 = vpop.permute.xlu0 %1367
      %1369 = vrot.lane.b32.xlu0 %v631, 64
      %v1370 = vpop.permute.xlu0 %1369
      %1371 = vrot.lane.b32.xlu0 %v634, 64
      %v1372 = vpop.permute.xlu0 %1371
      %1373 = vrot.lane.b32.xlu0 %v702, 64
      %v1374 = vpop.permute.xlu0 %1373
      %1375 = vrot.lane.b32.xlu0 %v640, 64
      %v1376 = vpop.permute.xlu0 %1375
      %1377 = vrot.lane.b32.xlu0 %v643, 64
      %v1378 = vpop.permute.xlu0 %1377
      %1379 = vrot.lane.b32.xlu0 %v646, 64
      %v1380 = vpop.permute.xlu0 %1379
      %1381 = vrot.lane.b32.xlu0 %v649, 64
      %v1382 = vpop.permute.xlu0 %1381
      %1383 = vrot.lane.b32.xlu0 %v652, 64
      %v1384 = vpop.permute.xlu0 %1383
      %1385 = vrot.lane.b32.xlu0 %v655, 64
      %v1386 = vpop.permute.xlu0 %1385
      %1387 = vrot.lane.b32.xlu0 %v705, 64
      %v1388 = vpop.permute.xlu0 %1387
      %1389 = vrot.lane.b32.xlu0 %v661, 64
      %v1390 = vpop.permute.xlu0 %1389
      %1391 = vrot.lane.b32.xlu0 %v664, 64
      %v1392 = vpop.permute.xlu0 %1391
      %1393 = vrot.lane.b32.xlu0 %v667, 64
      %v1394 = vpop.permute.xlu0 %1393
      %1395 = vrot.lane.b32.xlu0 %v670, 64
      %v1396 = vpop.permute.xlu0 %1395
      %1397 = vrot.lane.b32.xlu0 %v673, 64
      %v1398 = vpop.permute.xlu0 %1397
      %1399 = vrot.lane.b32.xlu0 %v676, 64
      %v1400 = vpop.permute.xlu0 %1399
      %1401 = vrot.lane.b32.xlu0 %v708, 64
      %v1402 = vpop.permute.xlu0 %1401
      %vm1432 = vcmask 64512
      %v1433 = vsel %vm1432, 0.0, %v710
      %v1434 = vsel %vm1432, %v382, %v712
      %v1435 = vsel %vm1432, %v383, %v714
      %v1436 = vsel %vm1432, %v384, %v716
      %v1437 = vsel %vm1432, %v385, %v718
      %v1438 = vsel %vm1432, %v386, %v720
      %v1439 = vsel %vm1432, %v387, %v722
      %v1440 = vsel %vm1432, %v388, %v724
      %v1441 = vsel %vm1432, %v390, %v726
      %v1442 = vsel %vm1432, %v391, %v728
      %v1443 = vsel %vm1432, %v392, %v730
      %v1444 = vsel %vm1432, %v393, %v732
      %v1445 = vsel %vm1432, %v394, %v734
      %v1446 = vsel %vm1432, %v395, %v736
      %v1447 = vsel %vm1432, %v396, %v738
      %v1448 = vsel %vm1432, %v398, %v740
      %v1449 = vsel %vm1432, %v399, %v742
      %v1450 = vsel %vm1432, %v400, %v744
      %v1451 = vsel %vm1432, %v401, %v746
      %v1452 = vsel %vm1432, %v402, %v748
      %v1453 = vsel %vm1432, %v403, %v750
      %v1454 = vsel %vm1432, %v404, %v752
      %v1455 = vsel %vm1432, %v406, %v754
      %v1456 = vsel %vm1432, %v407, %v756
      %v1457 = vsel %vm1432, %v408, %v758
      %v1458 = vsel %vm1432, %v409, %v760
      %v1459 = vsel %vm1432, %v410, %v762
      %v1460 = vsel %vm1432, %v411, %v764
      %v1461 = vsel %vm1432, %v412, %v766
      %vm1462 = vcmask 130048
      %v1463 = vsel %vm1462, %v1433, %v797
      %v1464 = vsel %vm1462, %v1434, %v799
      %v1465 = vsel %vm1462, %v1435, %v801
      %v1466 = vsel %vm1462, %v1436, %v803
      %v1467 = vsel %vm1462, %v1437, %v805
      %v1468 = vsel %vm1462, %v1438, %v807
      %v1469 = vsel %vm1462, %v1439, %v809
      %v1470 = vsel %vm1462, %v1440, %v811
      %v1471 = vsel %vm1462, %v1441, %v813
      %v1472 = vsel %vm1462, %v1442, %v815
      %v1473 = vsel %vm1462, %v1443, %v817
      %v1474 = vsel %vm1462, %v1444, %v819
      %v1475 = vsel %vm1462, %v1445, %v821
      %v1476 = vsel %vm1462, %v1446, %v823
      %v1477 = vsel %vm1462, %v1447, %v825
      %v1478 = vsel %vm1462, %v1448, %v827
      %v1479 = vsel %vm1462, %v1449, %v829
      %v1480 = vsel %vm1462, %v1450, %v831
      %v1481 = vsel %vm1462, %v1451, %v833
      %v1482 = vsel %vm1462, %v1452, %v835
      %v1483 = vsel %vm1462, %v1453, %v837
      %v1484 = vsel %vm1462, %v1454, %v839
      %v1485 = vsel %vm1462, %v1455, %v841
      %v1486 = vsel %vm1462, %v1456, %v843
      %v1487 = vsel %vm1462, %v1457, %v845
      %v1488 = vsel %vm1462, %v1458, %v847
      %v1489 = vsel %vm1462, %v1459, %v849
      %v1490 = vsel %vm1462, %v1460, %v851
      %v1491 = vsel %vm1462, %v1461, %v853
      %vm1492 = vcmask 195584
      %v1493 = vsel %vm1492, %v1463, %v884
      %v1494 = vsel %vm1492, %v1464, %v886
      %v1495 = vsel %vm1492, %v1465, %v888
      %v1496 = vsel %vm1492, %v1466, %v890
      %v1497 = vsel %vm1492, %v1467, %v892
      %v1498 = vsel %vm1492, %v1468, %v894
      %v1499 = vsel %vm1492, %v1469, %v896
      %v1500 = vsel %vm1492, %v1470, %v898
      %v1501 = vsel %vm1492, %v1463, %v900
      %v1502 = vsel %vm1492, %v1471, %v902
      %v1503 = vsel %vm1492, %v1472, %v904
      %v1504 = vsel %vm1492, %v1473, %v906
      %v1505 = vsel %vm1492, %v1474, %v908
      %v1506 = vsel %vm1492, %v1475, %v910
      %v1507 = vsel %vm1492, %v1476, %v912
      %v1508 = vsel %vm1492, %v1477, %v914
      %v1509 = vsel %vm1492, %v1463, %v916
      %v1510 = vsel %vm1492, %v1478, %v918
      %v1511 = vsel %vm1492, %v1479, %v920
      %v1512 = vsel %vm1492, %v1480, %v922
      %v1513 = vsel %vm1492, %v1481, %v924
      %v1514 = vsel %vm1492, %v1482, %v926
      %v1515 = vsel %vm1492, %v1483, %v928
      %v1516 = vsel %vm1492, %v1484, %v930
      %v1517 = vsel %vm1492, %v1463, %v932
      %v1518 = vsel %vm1492, %v1485, %v934
      %v1519 = vsel %vm1492, %v1486, %v936
      %v1520 = vsel %vm1492, %v1487, %v938
      %v1521 = vsel %vm1492, %v1488, %v940
      %v1522 = vsel %vm1492, %v1489, %v942
      %v1523 = vsel %vm1492, %v1490, %v944
      %v1524 = vsel %vm1492, %v1491, %v946
      %vm1525 = vcmask 261120
      %v1526 = vsel %vm1525, %v1493, %v980
      %v1527 = vsel %vm1525, %v1494, %v982
      %v1528 = vsel %vm1525, %v1495, %v984
      %v1529 = vsel %vm1525, %v1496, %v986
      %v1530 = vsel %vm1525, %v1497, %v988
      %v1531 = vsel %vm1525, %v1498, %v990
      %v1532 = vsel %vm1525, %v1499, %v992
      %v1533 = vsel %vm1525, %v1500, %v994
      %v1534 = vsel %vm1525, %v1501, %v996
      %v1535 = vsel %vm1525, %v1502, %v998
      %v1536 = vsel %vm1525, %v1503, %v1000
      %v1537 = vsel %vm1525, %v1504, %v1002
      %v1538 = vsel %vm1525, %v1505, %v1004
      %v1539 = vsel %vm1525, %v1506, %v1006
      %v1540 = vsel %vm1525, %v1507, %v1008
      %v1541 = vsel %vm1525, %v1508, %v1010
      %v1542 = vsel %vm1525, %v1509, %v1012
      %v1543 = vsel %vm1525, %v1510, %v1014
      %v1544 = vsel %vm1525, %v1511, %v1016
      %v1545 = vsel %vm1525, %v1512, %v1018
      %v1546 = vsel %vm1525, %v1513, %v1020
      %v1547 = vsel %vm1525, %v1514, %v1022
      %v1548 = vsel %vm1525, %v1515, %v1024
      %v1549 = vsel %vm1525, %v1516, %v1026
      %v1550 = vsel %vm1525, %v1517, %v1028
      %v1551 = vsel %vm1525, %v1518, %v1030
      %v1552 = vsel %vm1525, %v1519, %v1032
      %v1553 = vsel %vm1525, %v1520, %v1034
      %v1554 = vsel %vm1525, %v1521, %v1036
      %v1555 = vsel %vm1525, %v1522, %v1038
      %v1556 = vsel %vm1525, %v1523, %v1040
      %v1557 = vsel %vm1525, %v1524, %v1042
      %vm1558 = vcmask 326656
      %v1559 = vsel %vm1558, %v1526, %v1076
      %v1560 = vsel %vm1558, %v1527, %v1078
      %v1561 = vsel %vm1558, %v1528, %v1080
      %v1562 = vsel %vm1558, %v1529, %v1082
      %v1563 = vsel %vm1558, %v1530, %v1084
      %v1564 = vsel %vm1558, %v1531, %v1086
      %v1565 = vsel %vm1558, %v1532, %v1088
      %v1566 = vsel %vm1558, %v1533, %v1090
      %v1567 = vsel %vm1558, %v1534, %v1092
      %v1568 = vsel %vm1558, %v1535, %v1094
      %v1569 = vsel %vm1558, %v1536, %v1096
      %v1570 = vsel %vm1558, %v1537, %v1098
      %v1571 = vsel %vm1558, %v1538, %v1100
      %v1572 = vsel %vm1558, %v1539, %v1102
      %v1573 = vsel %vm1558, %v1540, %v1104
      %v1574 = vsel %vm1558, %v1541, %v1106
      %v1575 = vsel %vm1558, %v1542, %v1108
      %v1576 = vsel %vm1558, %v1543, %v1110
      %v1577 = vsel %vm1558, %v1544, %v1112
      %v1578 = vsel %vm1558, %v1545, %v1114
      %v1579 = vsel %vm1558, %v1546, %v1116
      %v1580 = vsel %vm1558, %v1547, %v1118
      %v1581 = vsel %vm1558, %v1548, %v1120
      %v1582 = vsel %vm1558, %v1549, %v1122
      %v1583 = vsel %vm1558, %v1550, %v1124
      %v1584 = vsel %vm1558, %v1551, %v1126
      %v1585 = vsel %vm1558, %v1552, %v1128
      %v1586 = vsel %vm1558, %v1553, %v1130
      %v1587 = vsel %vm1558, %v1554, %v1132
      %v1588 = vsel %vm1558, %v1555, %v1134
      %v1589 = vsel %vm1558, %v1556, %v1136
      %v1590 = vsel %vm1558, %v1557, %v1138
      %vm1591 = vcmask 392192
      %v1592 = vsel %vm1591, %v1559, %v1172
      %v1593 = vsel %vm1591, %v1560, %v1174
      %v1594 = vsel %vm1591, %v1561, %v1176
      %v1595 = vsel %vm1591, %v1562, %v1178
      %v1596 = vsel %vm1591, %v1563, %v1180
      %v1597 = vsel %vm1591, %v1564, %v1182
      %v1598 = vsel %vm1591, %v1565, %v1184
      %v1599 = vsel %vm1591, %v1566, %v1186
      %v1600 = vsel %vm1591, %v1567, %v1188
      %v1601 = vsel %vm1591, %v1568, %v1190
      %v1602 = vsel %vm1591, %v1569, %v1192
      %v1603 = vsel %vm1591, %v1570, %v1194
      %v1604 = vsel %vm1591, %v1571, %v1196
      %v1605 = vsel %vm1591, %v1572, %v1198
      %v1606 = vsel %vm1591, %v1573, %v1200
      %v1607 = vsel %vm1591, %v1574, %v1186
      %v1608 = vsel %vm1591, %v1575, %v1202
      %v1609 = vsel %vm1591, %v1576, %v1204
      %v1610 = vsel %vm1591, %v1577, %v1206
      %v1611 = vsel %vm1591, %v1578, %v1208
      %v1612 = vsel %vm1591, %v1579, %v1210
      %v1613 = vsel %vm1591, %v1580, %v1212
      %v1614 = vsel %vm1591, %v1581, %v1214
      %v1615 = vsel %vm1591, %v1582, %v1186
      %v1616 = vsel %vm1591, %v1583, %v1216
      %v1617 = vsel %vm1591, %v1584, %v1218
      %v1618 = vsel %vm1591, %v1585, %v1220
      %v1619 = vsel %vm1591, %v1586, %v1222
      %v1620 = vsel %vm1591, %v1587, %v1224
      %v1621 = vsel %vm1591, %v1588, %v1226
      %v1622 = vsel %vm1591, %v1589, %v1228
      %v1623 = vsel %vm1591, %v1590, %v1186
      %vm1624 = vcmask 457728
      %v1625 = vsel %vm1624, %v1592, %v1259
      %v1626 = vsel %vm1624, %v1593, %v1261
      %v1627 = vsel %vm1624, %v1594, %v1263
      %v1628 = vsel %vm1624, %v1595, %v1265
      %v1629 = vsel %vm1624, %v1596, %v1267
      %v1630 = vsel %vm1624, %v1597, %v1269
      %v1631 = vsel %vm1624, %v1598, %v1271
      %v1632 = vsel %vm1624, %v1599, %v1273
      %v1633 = vsel %vm1624, %v1600, %v1275
      %v1634 = vsel %vm1624, %v1601, %v1277
      %v1635 = vsel %vm1624, %v1602, %v1279
      %v1636 = vsel %vm1624, %v1603, %v1281
      %v1637 = vsel %vm1624, %v1604, %v1283
      %v1638 = vsel %vm1624, %v1605, %v1285
      %v1639 = vsel %vm1624, %v1606, %v1287
      %v1640 = vsel %vm1624, %v1607, %v1273
      %v1641 = vsel %vm1624, %v1608, %v1289
      %v1642 = vsel %vm1624, %v1609, %v1291
      %v1643 = vsel %vm1624, %v1610, %v1293
      %v1644 = vsel %vm1624, %v1611, %v1295
      %v1645 = vsel %vm1624, %v1612, %v1297
      %v1646 = vsel %vm1624, %v1613, %v1299
      %v1647 = vsel %vm1624, %v1614, %v1301
      %v1648 = vsel %vm1624, %v1615, %v1273
      %v1649 = vsel %vm1624, %v1616, %v1303
      %v1650 = vsel %vm1624, %v1617, %v1305
      %v1651 = vsel %vm1624, %v1618, %v1307
      %v1652 = vsel %vm1624, %v1619, %v1309
      %v1653 = vsel %vm1624, %v1620, %v1311
      %v1654 = vsel %vm1624, %v1621, %v1313
      %v1655 = vsel %vm1624, %v1622, %v1315
      %v1656 = vsel %vm1624, %v1623, %v1273
      %vm1657 = vcmask 523264
      %v1658 = vsel %vm1657, %v1625, %v1346
      %v1659 = vsel %vm1657, %v1626, %v1348
      %v1660 = vsel %vm1657, %v1627, %v1350
      %v1661 = vsel %vm1657, %v1628, %v1352
      %v1662 = vsel %vm1657, %v1629, %v1354
      %v1663 = vsel %vm1657, %v1630, %v1356
      %v1664 = vsel %vm1657, %v1631, %v1358
      %v1665 = vsel %vm1657, %v1632, %v1360
      %v1666 = vsel %vm1657, %v1633, %v1362
      %v1667 = vsel %vm1657, %v1634, %v1364
      %v1668 = vsel %vm1657, %v1635, %v1366
      %v1669 = vsel %vm1657, %v1636, %v1368
      %v1670 = vsel %vm1657, %v1637, %v1370
      %v1671 = vsel %vm1657, %v1638, %v1372
      %v1672 = vsel %vm1657, %v1639, %v1374
      %v1673 = vsel %vm1657, %v1640, %v1360
      %v1674 = vsel %vm1657, %v1641, %v1376
      %v1675 = vsel %vm1657, %v1642, %v1378
      %v1676 = vsel %vm1657, %v1643, %v1380
      %v1677 = vsel %vm1657, %v1644, %v1382
      %v1678 = vsel %vm1657, %v1645, %v1384
      %v1679 = vsel %vm1657, %v1646, %v1386
      %v1680 = vsel %vm1657, %v1647, %v1388
      %v1681 = vsel %vm1657, %v1648, %v1360
      %v1682 = vsel %vm1657, %v1649, %v1390
      %v1683 = vsel %vm1657, %v1650, %v1392
      %v1684 = vsel %vm1657, %v1651, %v1394
      %v1685 = vsel %vm1657, %v1652, %v1396
      %v1686 = vsel %vm1657, %v1653, %v1398
      %v1687 = vsel %vm1657, %v1654, %v1400
      %v1688 = vsel %vm1657, %v1655, %v1402
      %v1689 = vsel %vm1657, %v1656, %v1360
      %v1691 = vlaneseq
      %v1692 = vshrl.u32 %v1691, 7
      %v1693 = vsub.s32 0, %v1692
      %v1694 = vrot.slane %v274, %v1693
      %vm1696 = vcmask 588800
      %v1698 = vsel %vm1696, %v1658, 0
      %v1701 = vsel %vm1696, %v1659, 0
      %v1704 = vsel %vm1696, %v1660, 0
      %v1707 = vsel %vm1696, %v1661, 0
      %v1710 = vsel %vm1696, %v1662, 0
      %v1713 = vsel %vm1696, %v1663, 0
      %v1716 = vsel %vm1696, %v1664, 0
      %v1719 = vsel %vm1696, %v1665, 0
      %v1722 = vsel %vm1696, %v1666, 0
      %v1725 = vsel %vm1696, %v1667, 0
      %v1728 = vsel %vm1696, %v1668, 0
      %v1731 = vsel %vm1696, %v1669, 0
      %v1734 = vsel %vm1696, %v1670, 0
      %v1737 = vsel %vm1696, %v1671, 0
      %v1740 = vsel %vm1696, %v1672, 0
      %v1743 = vsel %vm1696, %v1673, 0
      %v1746 = vsel %vm1696, %v1674, 0
      %v1749 = vsel %vm1696, %v1675, 0
      %v1752 = vsel %vm1696, %v1676, 0
      %v1755 = vsel %vm1696, %v1677, 0
      %v1758 = vsel %vm1696, %v1678, 0
      %v1761 = vsel %vm1696, %v1679, 0
      %v1764 = vsel %vm1696, %v1680, 0
      %v1767 = vsel %vm1696, %v1681, 0
      %v1770 = vsel %vm1696, %v1682, 0
      %v1773 = vsel %vm1696, %v1683, 0
      %v1776 = vsel %vm1696, %v1684, 0
      %v1779 = vsel %vm1696, %v1685, 0
      %v1782 = vsel %vm1696, %v1686, 0
      %v1785 = vsel %vm1696, %v1687, 0
      %v1788 = vsel %vm1696, %v1688, 0
      %v1791 = vsel %vm1696, %v1689, 0
      %1793 = vmatprep.subr.mxu0 0.0
      %1794 = vmatpush1.msra.mxu0 %v265
      %1795 = vmatprep.subr.mxu0 0.0
      %1796 = vmatpush1.msra.mxu0 %v266
      %1797 = vmatprep.subr.mxu0 0.0
      %1798 = vmatpush1.msra.mxu0 %v267
      %1799 = vmatprep.subr.mxu0 0.0
      %1800 = vmatpush1.msra.mxu0 %v268
      %1801 = vmatprep.subr.mxu0 0.0
      %1802 = vmatpush1.msra.mxu0 %v269
      %1803 = vmatprep.subr.mxu0 0.0
      %1804 = vmatpush1.msra.mxu0 %v270
      %1805 = vmatprep.subr.mxu0 0.0
      %1806 = vmatpush1.msra.mxu0 %v271
      %1807 = vmatprep.subr.mxu0 0.0
      %1808 = vmatpush1.msra.mxu0 %v272
      %1809 = vmatprep.subr.mxu0 0.0
      %1810 = vmatpush1.msra.mxu0 %v273
      %1811 = vmatprep.subr.mxu0 0.0
      %1812 = vmatpush1.msra.mxu0 0.0
      %1813 = vmatprep.subr.mxu0 0.0
      %1814 = vmatpush1.msra.mxu0 0.0
      %1815 = vmatprep.subr.mxu0 0.0
      %1816 = vmatpush1.msra.mxu0 0.0
      %1817 = vmatprep.subr.mxu0 0.0
      %1818 = vmatpush1.msra.mxu0 0.0
      %1819 = vmatprep.subr.mxu0 0.0
      %1820 = vmatpush1.msra.mxu0 0.0
      %1821 = vmatprep.subr.mxu0 0.0
      %1822 = vmatpush1.msra.mxu0 0.0
      %1823 = vmatprep.subr.mxu0 0.0
      %1824 = vmatpush1.msra.mxu0 0.0
      %1825 = vmatprep.subr.mxu0 0.0
      %1826 = vmatpush1.msra.mxu0 0.0
      %1827 = vmatprep.subr.mxu0 0.0
      %1828 = vmatpush1.msra.mxu0 0.0
      %1829 = vmatprep.subr.mxu0 0.0
      %1830 = vmatpush1.msra.mxu0 0.0
      %1831 = vmatprep.subr.mxu0 0.0
      %1832 = vmatpush1.msra.mxu0 0.0
      %1833 = vmatprep.subr.mxu0 0.0
      %1834 = vmatpush1.msra.mxu0 0.0
      %1835 = vmatprep.subr.mxu0 0.0
      %1836 = vmatpush1.msra.mxu0 0.0
      %1837 = vmatprep.subr.mxu0 0.0
      %1838 = vmatpush1.msra.mxu0 0.0
      %1839 = vmatprep.subr.mxu0 0.0
      %1840 = vmatpush1.msra.mxu0 0.0
      %1841 = vmatprep.subr.mxu0 0.0
      %1842 = vmatpush1.msra.mxu0 0.0
      %1843 = vmatprep.subr.mxu0 0.0
      %1844 = vmatpush1.msra.mxu0 0.0
      %1845 = vmatprep.subr.mxu0 0.0
      %1846 = vmatpush1.msra.mxu0 0.0
      %1847 = vmatprep.subr.mxu0 0.0
      %1848 = vmatpush1.msra.mxu0 0.0
      %1849 = vmatprep.subr.mxu0 0.0
      %1850 = vmatpush1.msra.mxu0 0.0
      %1851 = vmatprep.subr.mxu0 0.0
      %1852 = vmatpush1.msra.mxu0 0.0
      %1853 = vmatprep.subr.mxu0 0.0
      %1854 = vmatpush1.msra.mxu0 0.0
      %1855 = vmatprep.subr.mxu0 0.0
      %1856 = vmatpush1.msra.mxu0 0.0
      %1857 = vmatprep.mubr.f32.mxu0 0.0
      %1858 = vmatmul.mubr.f32.gmra.mrb[0].mxu0 %v1698
      %v1859 = vpop.f32.mrb[0].mxu0
      %v1860 = vadd.f32 %v1694, %v1859
      %v1861 = vpop.f32.mrb[0].mxu0
      %1862 = vmatprep.mubr.f32.mxu0 0.0
      %1863 = vmatmul.mubr.f32.gmra.mrb[0].mxu0 %v1701
      %v1864 = vpop.f32.mrb[0].mxu0
      %v1865 = vadd.f32 %v1694, %v1864
      %v1866 = vpop.f32.mrb[0].mxu0
      %1867 = vmatprep.mubr.f32.mxu0 0.0
      %1868 = vmatmul.mubr.f32.gmra.mrb[0].mxu0 %v1704
      %v1869 = vpop.f32.mrb[0].mxu0
      %v1870 = vadd.f32 %v1694, %v1869
      %v1871 = vpop.f32.mrb[0].mxu0
      %1872 = vmatprep.mubr.f32.mxu0 0.0
      %1873 = vmatmul.mubr.f32.gmra.mrb[0].mxu0 %v1707
      %v1874 = vpop.f32.mrb[0].mxu0
      %v1875 = vadd.f32 %v1694, %v1874
      %v1876 = vpop.f32.mrb[0].mxu0
      %1877 = vmatprep.mubr.f32.mxu0 0.0
      %1878 = vmatmul.mubr.f32.gmra.mrb[0].mxu0 %v1710
      %v1879 = vpop.f32.mrb[0].mxu0
      %v1880 = vadd.f32 %v1694, %v1879
      %v1881 = vpop.f32.mrb[0].mxu0
      %1882 = vmatprep.mubr.f32.mxu0 0.0
      %1883 = vmatmul.mubr.f32.gmra.mrb[0].mxu0 %v1713
      %v1884 = vpop.f32.mrb[0].mxu0
      %v1885 = vadd.f32 %v1694, %v1884
      %v1886 = vpop.f32.mrb[0].mxu0
      %1887 = vmatprep.mubr.f32.mxu0 0.0
      %1888 = vmatmul.mubr.f32.gmra.mrb[0].mxu0 %v1716
      %v1889 = vpop.f32.mrb[0].mxu0
      %v1890 = vadd.f32 %v1694, %v1889
      %v1891 = vpop.f32.mrb[0].mxu0
      %1892 = vmatprep.mubr.f32.mxu0 0.0
      %1893 = vmatmul.mubr.f32.gmra.mrb[0].mxu0 %v1719
      %v1894 = vpop.f32.mrb[0].mxu0
      %v1895 = vadd.f32 %v1694, %v1894
      %v1896 = vpop.f32.mrb[0].mxu0
      %1897 = vmatprep.mubr.f32.mxu0 0.0
      %1898 = vmatmul.mubr.f32.gmra.mrb[0].mxu0 %v1722
      %v1899 = vpop.f32.mrb[0].mxu0
      %v1900 = vadd.f32 %v1694, %v1899
      %v1901 = vpop.f32.mrb[0].mxu0
      %1902 = vmatprep.mubr.f32.mxu0 0.0
      %1903 = vmatmul.mubr.f32.gmra.mrb[0].mxu0 %v1725
      %v1904 = vpop.f32.mrb[0].mxu0
      %v1905 = vadd.f32 %v1694, %v1904
      %v1906 = vpop.f32.mrb[0].mxu0
      %1907 = vmatprep.mubr.f32.mxu0 0.0
      %1908 = vmatmul.mubr.f32.gmra.mrb[0].mxu0 %v1728
      %v1909 = vpop.f32.mrb[0].mxu0
      %v1910 = vadd.f32 %v1694, %v1909
      %v1911 = vpop.f32.mrb[0].mxu0
      %1912 = vmatprep.mubr.f32.mxu0 0.0
      %1913 = vmatmul.mubr.f32.gmra.mrb[0].mxu0 %v1731
      %v1914 = vpop.f32.mrb[0].mxu0
      %v1915 = vadd.f32 %v1694, %v1914
      %v1916 = vpop.f32.mrb[0].mxu0
      %1917 = vmatprep.mubr.f32.mxu0 0.0
      %1918 = vmatmul.mubr.f32.gmra.mrb[0].mxu0 %v1734
      %v1919 = vpop.f32.mrb[0].mxu0
      %v1920 = vadd.f32 %v1694, %v1919
      %v1921 = vpop.f32.mrb[0].mxu0
      %1922 = vmatprep.mubr.f32.mxu0 0.0
      %1923 = vmatmul.mubr.f32.gmra.mrb[0].mxu0 %v1737
      %v1924 = vpop.f32.mrb[0].mxu0
      %v1925 = vadd.f32 %v1694, %v1924
      %v1926 = vpop.f32.mrb[0].mxu0
      %1927 = vmatprep.mubr.f32.mxu0 0.0
      %1928 = vmatmul.mubr.f32.gmra.mrb[0].mxu0 %v1740
      %v1929 = vpop.f32.mrb[0].mxu0
      %v1930 = vadd.f32 %v1694, %v1929
      %v1931 = vpop.f32.mrb[0].mxu0
      %1932 = vmatprep.mubr.f32.mxu0 0.0
      %1933 = vmatmul.mubr.f32.gmra.mrb[0].mxu0 %v1743
      %v1934 = vpop.f32.mrb[0].mxu0
      %v1935 = vadd.f32 %v1694, %v1934
      %v1936 = vpop.f32.mrb[0].mxu0
      %1937 = vmatprep.mubr.f32.mxu0 0.0
      %1938 = vmatmul.mubr.f32.gmra.mrb[0].mxu0 %v1746
      %v1939 = vpop.f32.mrb[0].mxu0
      %v1940 = vadd.f32 %v1694, %v1939
      %v1941 = vpop.f32.mrb[0].mxu0
      %1942 = vmatprep.mubr.f32.mxu0 0.0
      %1943 = vmatmul.mubr.f32.gmra.mrb[0].mxu0 %v1749
      %v1944 = vpop.f32.mrb[0].mxu0
      %v1945 = vadd.f32 %v1694, %v1944
      %v1946 = vpop.f32.mrb[0].mxu0
      %1947 = vmatprep.mubr.f32.mxu0 0.0
      %1948 = vmatmul.mubr.f32.gmra.mrb[0].mxu0 %v1752
      %v1949 = vpop.f32.mrb[0].mxu0
      %v1950 = vadd.f32 %v1694, %v1949
      %v1951 = vpop.f32.mrb[0].mxu0
      %1952 = vmatprep.mubr.f32.mxu0 0.0
      %1953 = vmatmul.mubr.f32.gmra.mrb[0].mxu0 %v1755
      %v1954 = vpop.f32.mrb[0].mxu0
      %v1955 = vadd.f32 %v1694, %v1954
      %v1956 = vpop.f32.mrb[0].mxu0
      %1957 = vmatprep.mubr.f32.mxu0 0.0
      %1958 = vmatmul.mubr.f32.gmra.mrb[0].mxu0 %v1758
      %v1959 = vpop.f32.mrb[0].mxu0
      %v1960 = vadd.f32 %v1694, %v1959
      %v1961 = vpop.f32.mrb[0].mxu0
      %1962 = vmatprep.mubr.f32.mxu0 0.0
      %1963 = vmatmul.mubr.f32.gmra.mrb[0].mxu0 %v1761
      %v1964 = vpop.f32.mrb[0].mxu0
      %v1965 = vadd.f32 %v1694, %v1964
      %v1966 = vpop.f32.mrb[0].mxu0
      %1967 = vmatprep.mubr.f32.mxu0 0.0
      %1968 = vmatmul.mubr.f32.gmra.mrb[0].mxu0 %v1764
      %v1969 = vpop.f32.mrb[0].mxu0
      %v1970 = vadd.f32 %v1694, %v1969
      %v1971 = vpop.f32.mrb[0].mxu0
      %1972 = vmatprep.mubr.f32.mxu0 0.0
      %1973 = vmatmul.mubr.f32.gmra.mrb[0].mxu0 %v1767
      %v1974 = vpop.f32.mrb[0].mxu0
      %v1975 = vadd.f32 %v1694, %v1974
      %v1976 = vpop.f32.mrb[0].mxu0
      %1977 = vmatprep.mubr.f32.mxu0 0.0
      %1978 = vmatmul.mubr.f32.gmra.mrb[0].mxu0 %v1770
      %v1979 = vpop.f32.mrb[0].mxu0
      %v1980 = vadd.f32 %v1694, %v1979
      %v1981 = vpop.f32.mrb[0].mxu0
      %1982 = vmatprep.mubr.f32.mxu0 0.0
      %1983 = vmatmul.mubr.f32.gmra.mrb[0].mxu0 %v1773
      %v1984 = vpop.f32.mrb[0].mxu0
      %v1985 = vadd.f32 %v1694, %v1984
      %v1986 = vpop.f32.mrb[0].mxu0
      %1987 = vmatprep.mubr.f32.mxu0 0.0
      %1988 = vmatmul.mubr.f32.gmra.mrb[0].mxu0 %v1776
      %v1989 = vpop.f32.mrb[0].mxu0
      %v1990 = vadd.f32 %v1694, %v1989
      %v1991 = vpop.f32.mrb[0].mxu0
      %1992 = vmatprep.mubr.f32.mxu0 0.0
      %1993 = vmatmul.mubr.f32.gmra.mrb[0].mxu0 %v1779
      %v1994 = vpop.f32.mrb[0].mxu0
      %v1995 = vadd.f32 %v1694, %v1994
      %v1996 = vpop.f32.mrb[0].mxu0
      %1997 = vmatprep.mubr.f32.mxu0 0.0
      %1998 = vmatmul.mubr.f32.gmra.mrb[0].mxu0 %v1782
      %v1999 = vpop.f32.mrb[0].mxu0
      %v2000 = vadd.f32 %v1694, %v1999
      %v2001 = vpop.f32.mrb[0].mxu0
      %2002 = vmatprep.mubr.f32.mxu0 0.0
      %2003 = vmatmul.mubr.f32.gmra.mrb[0].mxu0 %v1785
      %v2004 = vpop.f32.mrb[0].mxu0
      %v2005 = vadd.f32 %v1694, %v2004
      %v2006 = vpop.f32.mrb[0].mxu0
      %2007 = vmatprep.mubr.f32.mxu0 0.0
      %2008 = vmatmul.mubr.f32.gmra.mrb[0].mxu0 %v1788
      %v2009 = vpop.f32.mrb[0].mxu0
      %v2010 = vadd.f32 %v1694, %v2009
      %v2011 = vpop.f32.mrb[0].mxu0
      %2012 = vmatprep.mubr.f32.mxu0 0.0
      %2013 = vmatmul.mubr.f32.gmra.mrb[0].mxu0 %v1791
      %v2014 = vpop.f32.mrb[0].mxu0
      %v2015 = vadd.f32 %v1694, %v2014
      %v2016 = vpop.f32.mrb[0].mxu0
      %2017 = vdwg.mxu0
      %vm2018 = vcmp.gt.f32.partialorder %v1860, 0.0
      %vm2019 = vcmp.gt.f32.partialorder %v1865, 0.0
      %vm2020 = vcmp.gt.f32.partialorder %v1870, 0.0
      %vm2021 = vcmp.gt.f32.partialorder %v1875, 0.0
      %vm2022 = vcmp.gt.f32.partialorder %v1880, 0.0
      %vm2023 = vcmp.gt.f32.partialorder %v1885, 0.0
      %vm2024 = vcmp.gt.f32.partialorder %v1890, 0.0
      %vm2025 = vcmp.gt.f32.partialorder %v1895, 0.0
      %vm2026 = vcmp.gt.f32.partialorder %v1900, 0.0
      %vm2027 = vcmp.gt.f32.partialorder %v1905, 0.0
      %vm2028 = vcmp.gt.f32.partialorder %v1910, 0.0
      %vm2029 = vcmp.gt.f32.partialorder %v1915, 0.0
      %vm2030 = vcmp.gt.f32.partialorder %v1920, 0.0
      %vm2031 = vcmp.gt.f32.partialorder %v1925, 0.0
      %vm2032 = vcmp.gt.f32.partialorder %v1930, 0.0
      %vm2033 = vcmp.gt.f32.partialorder %v1935, 0.0
      %vm2034 = vcmp.gt.f32.partialorder %v1940, 0.0
      %vm2035 = vcmp.gt.f32.partialorder %v1945, 0.0
      %vm2036 = vcmp.gt.f32.partialorder %v1950, 0.0
      %vm2037 = vcmp.gt.f32.partialorder %v1955, 0.0
      %vm2038 = vcmp.gt.f32.partialorder %v1960, 0.0
      %vm2039 = vcmp.gt.f32.partialorder %v1965, 0.0
      %vm2040 = vcmp.gt.f32.partialorder %v1970, 0.0
      %vm2041 = vcmp.gt.f32.partialorder %v1975, 0.0
      %vm2042 = vcmp.gt.f32.partialorder %v1980, 0.0
      %vm2043 = vcmp.gt.f32.partialorder %v1985, 0.0
      %vm2044 = vcmp.gt.f32.partialorder %v1990, 0.0
      %vm2045 = vcmp.gt.f32.partialorder %v1995, 0.0
      %vm2046 = vcmp.gt.f32.partialorder %v2000, 0.0
      %vm2047 = vcmp.gt.f32.partialorder %v2005, 0.0
      %vm2048 = vcmp.gt.f32.partialorder %v2010, 0.0
      %vm2049 = vcmp.gt.f32.partialorder %v2015, 0.0
      %v2050 = vmul.f32 %v1860, 0.2
      %v2051 = vmul.f32 %v1865, 0.2
      %v2052 = vmul.f32 %v1870, 0.2
      %v2053 = vmul.f32 %v1875, 0.2
      %v2054 = vmul.f32 %v1880, 0.2
      %v2055 = vmul.f32 %v1885, 0.2
      %v2056 = vmul.f32 %v1890, 0.2
      %v2057 = vmul.f32 %v1895, 0.2
      %v2058 = vmul.f32 %v1900, 0.2
      %v2059 = vmul.f32 %v1905, 0.2
      %v2060 = vmul.f32 %v1910, 0.2
      %v2061 = vmul.f32 %v1915, 0.2
      %v2062 = vmul.f32 %v1920, 0.2
      %v2063 = vmul.f32 %v1925, 0.2
      %v2064 = vmul.f32 %v1930, 0.2
      %v2065 = vmul.f32 %v1935, 0.2
      %v2066 = vmul.f32 %v1940, 0.2
      %v2067 = vmul.f32 %v1945, 0.2
      %v2068 = vmul.f32 %v1950, 0.2
      %v2069 = vmul.f32 %v1955, 0.2
      %v2070 = vmul.f32 %v1960, 0.2
      %v2071 = vmul.f32 %v1965, 0.2
      %v2072 = vmul.f32 %v1970, 0.2
      %v2073 = vmul.f32 %v1975, 0.2
      %v2074 = vmul.f32 %v1980, 0.2
      %v2075 = vmul.f32 %v1985, 0.2
      %v2076 = vmul.f32 %v1990, 0.2
      %v2077 = vmul.f32 %v1995, 0.2
      %v2078 = vmul.f32 %v2000, 0.2
      %v2079 = vmul.f32 %v2005, 0.2
      %v2080 = vmul.f32 %v2010, 0.2
      %v2081 = vmul.f32 %v2015, 0.2
      %v2082 = vsel %vm2018, %v1860, %v2050
      %v2083 = vsel %vm2019, %v1865, %v2051
      %v2084 = vsel %vm2020, %v1870, %v2052
      %v2085 = vsel %vm2021, %v1875, %v2053
      %v2086 = vsel %vm2022, %v1880, %v2054
      %v2087 = vsel %vm2023, %v1885, %v2055
      %v2088 = vsel %vm2024, %v1890, %v2056
      %v2089 = vsel %vm2025, %v1895, %v2057
      %v2090 = vsel %vm2026, %v1900, %v2058
      %v2091 = vsel %vm2027, %v1905, %v2059
      %v2092 = vsel %vm2028, %v1910, %v2060
      %v2093 = vsel %vm2029, %v1915, %v2061
      %v2094 = vsel %vm2030, %v1920, %v2062
      %v2095 = vsel %vm2031, %v1925, %v2063
      %v2096 = vsel %vm2032, %v1930, %v2064
      %v2097 = vsel %vm2033, %v1935, %v2065
      %v2098 = vsel %vm2034, %v1940, %v2066
      %v2099 = vsel %vm2035, %v1945, %v2067
      %v2100 = vsel %vm2036, %v1950, %v2068
      %v2101 = vsel %vm2037, %v1955, %v2069
      %v2102 = vsel %vm2038, %v1960, %v2070
      %v2103 = vsel %vm2039, %v1965, %v2071
      %v2104 = vsel %vm2040, %v1970, %v2072
      %v2105 = vsel %vm2041, %v1975, %v2073
      %v2106 = vsel %vm2042, %v1980, %v2074
      %v2107 = vsel %vm2043, %v1985, %v2075
      %v2108 = vsel %vm2044, %v1990, %v2076
      %v2109 = vsel %vm2045, %v1995, %v2077
      %v2110 = vsel %vm2046, %v2000, %v2078
      %v2111 = vsel %vm2047, %v2005, %v2079
      %v2112 = vsel %vm2048, %v2010, %v2080
      %v2113 = vsel %vm2049, %v2015, %v2081
      %v2146 = vrot.slane %v2082, 7
      %v2147 = vrot.slane %v2083, 7
      %v2148 = vrot.slane %v2084, 7
      %v2149 = vrot.slane %v2085, 7
      %v2150 = vrot.slane %v2086, 7
      %v2151 = vrot.slane %v2087, 7
      %v2152 = vrot.slane %v2088, 7
      %v2153 = vrot.slane %v2089, 7
      %v2154 = vrot.slane %v2090, 7
      %v2155 = vrot.slane %v2091, 7
      %v2156 = vrot.slane %v2092, 7
      %v2157 = vrot.slane %v2093, 7
      %v2158 = vrot.slane %v2094, 7
      %v2159 = vrot.slane %v2095, 7
      %v2160 = vrot.slane %v2096, 7
      %v2161 = vrot.slane %v2097, 7
      %v2162 = vrot.slane %v2098, 7
      %v2163 = vrot.slane %v2099, 7
      %v2164 = vrot.slane %v2100, 7
      %v2165 = vrot.slane %v2101, 7
      %v2166 = vrot.slane %v2102, 7
      %v2167 = vrot.slane %v2103, 7
      %v2168 = vrot.slane %v2104, 7
      %v2169 = vrot.slane %v2105, 7
      %v2170 = vrot.slane %v2106, 7
      %v2171 = vrot.slane %v2107, 7
      %v2172 = vrot.slane %v2108, 7
      %v2173 = vrot.slane %v2109, 7
      %v2174 = vrot.slane %v2110, 7
      %v2175 = vrot.slane %v2111, 7
      %v2176 = vrot.slane %v2112, 7
      %v2177 = vrot.slane %v2113, 7
      %v2210 = vsel %vm381, 0.0, %v2146
      %v2211 = vsel %vm381, 0.0, %v2147
      %v2212 = vsel %vm381, 0.0, %v2148
      %v2213 = vsel %vm381, 0.0, %v2149
      %v2214 = vsel %vm381, 0.0, %v2150
      %v2215 = vsel %vm381, 0.0, %v2151
      %v2216 = vsel %vm381, 0.0, %v2152
      %v2217 = vsel %vm381, 0.0, %v2153
      %v2218 = vsel %vm381, 0.0, %v2154
      %v2219 = vsel %vm381, 0.0, %v2155
      %v2220 = vsel %vm381, 0.0, %v2156
      %v2221 = vsel %vm381, 0.0, %v2157
      %v2222 = vsel %vm381, 0.0, %v2158
      %v2223 = vsel %vm381, 0.0, %v2159
      %v2224 = vsel %vm381, 0.0, %v2160
      %v2225 = vsel %vm381, 0.0, %v2161
      %v2226 = vsel %vm381, 0.0, %v2162
      %v2227 = vsel %vm381, 0.0, %v2163
      %v2228 = vsel %vm381, 0.0, %v2164
      %v2229 = vsel %vm381, 0.0, %v2165
      %v2230 = vsel %vm381, 0.0, %v2166
      %v2231 = vsel %vm381, 0.0, %v2167
      %v2232 = vsel %vm381, 0.0, %v2168
      %v2233 = vsel %vm381, 0.0, %v2169
      %v2234 = vsel %vm381, 0.0, %v2170
      %v2235 = vsel %vm381, 0.0, %v2171
      %v2236 = vsel %vm381, 0.0, %v2172
      %v2237 = vsel %vm381, 0.0, %v2173
      %v2238 = vsel %vm381, 0.0, %v2174
      %v2239 = vsel %vm381, 0.0, %v2175
      %v2240 = vsel %vm381, 0.0, %v2176
      %v2241 = vsel %vm381, 0.0, %v2177
      %v2242 = vsel %vm381, %v2146, 0.0
      %v2243 = vsel %vm381, %v2147, 0.0
      %v2244 = vsel %vm381, %v2148, 0.0
      %v2245 = vsel %vm381, %v2149, 0.0
      %v2246 = vsel %vm381, %v2150, 0.0
      %v2247 = vsel %vm381, %v2151, 0.0
      %v2248 = vsel %vm381, %v2152, 0.0
      %v2249 = vsel %vm381, %v2153, 0.0
      %v2250 = vsel %vm381, %v2154, 0.0
      %v2251 = vsel %vm381, %v2155, 0.0
      %v2252 = vsel %vm381, %v2156, 0.0
      %v2253 = vsel %vm381, %v2157, 0.0
      %v2254 = vsel %vm381, %v2158, 0.0
      %v2255 = vsel %vm381, %v2159, 0.0
      %v2256 = vsel %vm381, %v2160, 0.0
      %v2257 = vsel %vm381, %v2161, 0.0
      %v2258 = vsel %vm381, %v2162, 0.0
      %v2259 = vsel %vm381, %v2163, 0.0
      %v2260 = vsel %vm381, %v2164, 0.0
      %v2261 = vsel %vm381, %v2165, 0.0
      %v2262 = vsel %vm381, %v2166, 0.0
      %v2263 = vsel %vm381, %v2167, 0.0
      %v2264 = vsel %vm381, %v2168, 0.0
      %v2265 = vsel %vm381, %v2169, 0.0
      %v2266 = vsel %vm381, %v2170, 0.0
      %v2267 = vsel %vm381, %v2171, 0.0
      %v2268 = vsel %vm381, %v2172, 0.0
      %v2269 = vsel %vm381, %v2173, 0.0
      %v2270 = vsel %vm381, %v2174, 0.0
      %v2271 = vsel %vm381, %v2175, 0.0
      %v2272 = vsel %vm381, %v2176, 0.0
      %v2273 = vsel %vm381, %v2177, 0.0
      %v2330 = vrot.slane %v2210, 1
      %v2331 = vrot.slane %v2242, 1
      %v2332 = vsel %vm503, %v2330, %v2331
      %v2333 = vrot.slane %v2211, 1
      %v2334 = vrot.slane %v2243, 1
      %v2335 = vsel %vm503, %v2333, %v2334
      %v2336 = vrot.slane %v2212, 1
      %v2337 = vrot.slane %v2244, 1
      %v2338 = vsel %vm503, %v2336, %v2337
      %v2339 = vrot.slane %v2213, 1
      %v2340 = vrot.slane %v2245, 1
      %v2341 = vsel %vm503, %v2339, %v2340
      %v2342 = vrot.slane %v2214, 1
      %v2343 = vrot.slane %v2246, 1
      %v2344 = vsel %vm503, %v2342, %v2343
      %v2345 = vrot.slane %v2215, 1
      %v2346 = vrot.slane %v2247, 1
      %v2347 = vsel %vm503, %v2345, %v2346
      %v2348 = vrot.slane %v2216, 1
      %v2349 = vrot.slane %v2248, 1
      %v2350 = vsel %vm503, %v2348, %v2349
      %v2351 = vrot.slane %v2218, 1
      %v2352 = vrot.slane %v2250, 1
      %v2353 = vsel %vm503, %v2351, %v2352
      %v2354 = vrot.slane %v2219, 1
      %v2355 = vrot.slane %v2251, 1
      %v2356 = vsel %vm503, %v2354, %v2355
      %v2357 = vrot.slane %v2220, 1
      %v2358 = vrot.slane %v2252, 1
      %v2359 = vsel %vm503, %v2357, %v2358
      %v2360 = vrot.slane %v2221, 1
      %v2361 = vrot.slane %v2253, 1
      %v2362 = vsel %vm503, %v2360, %v2361
      %v2363 = vrot.slane %v2222, 1
      %v2364 = vrot.slane %v2254, 1
      %v2365 = vsel %vm503, %v2363, %v2364
      %v2366 = vrot.slane %v2223, 1
      %v2367 = vrot.slane %v2255, 1
      %v2368 = vsel %vm503, %v2366, %v2367
      %v2369 = vrot.slane %v2224, 1
      %v2370 = vrot.slane %v2256, 1
      %v2371 = vsel %vm503, %v2369, %v2370
      %v2372 = vrot.slane %v2226, 1
      %v2373 = vrot.slane %v2258, 1
      %v2374 = vsel %vm503, %v2372, %v2373
      %v2375 = vrot.slane %v2227, 1
      %v2376 = vrot.slane %v2259, 1
      %v2377 = vsel %vm503, %v2375, %v2376
      %v2378 = vrot.slane %v2228, 1
      %v2379 = vrot.slane %v2260, 1
      %v2380 = vsel %vm503, %v2378, %v2379
      %v2381 = vrot.slane %v2229, 1
      %v2382 = vrot.slane %v2261, 1
      %v2383 = vsel %vm503, %v2381, %v2382
      %v2384 = vrot.slane %v2230, 1
      %v2385 = vrot.slane %v2262, 1
      %v2386 = vsel %vm503, %v2384, %v2385
      %v2387 = vrot.slane %v2231, 1
      %v2388 = vrot.slane %v2263, 1
      %v2389 = vsel %vm503, %v2387, %v2388
      %v2390 = vrot.slane %v2232, 1
      %v2391 = vrot.slane %v2264, 1
      %v2392 = vsel %vm503, %v2390, %v2391
      %v2393 = vrot.slane %v2234, 1
      %v2394 = vrot.slane %v2266, 1
      %v2395 = vsel %vm503, %v2393, %v2394
      %v2396 = vrot.slane %v2235, 1
      %v2397 = vrot.slane %v2267, 1
      %v2398 = vsel %vm503, %v2396, %v2397
      %v2399 = vrot.slane %v2236, 1
      %v2400 = vrot.slane %v2268, 1
      %v2401 = vsel %vm503, %v2399, %v2400
      %v2402 = vrot.slane %v2237, 1
      %v2403 = vrot.slane %v2269, 1
      %v2404 = vsel %vm503, %v2402, %v2403
      %v2405 = vrot.slane %v2238, 1
      %v2406 = vrot.slane %v2270, 1
      %v2407 = vsel %vm503, %v2405, %v2406
      %v2408 = vrot.slane %v2239, 1
      %v2409 = vrot.slane %v2271, 1
      %v2410 = vsel %vm503, %v2408, %v2409
      %v2411 = vrot.slane %v2240, 1
      %v2412 = vrot.slane %v2272, 1
      %v2413 = vsel %vm503, %v2411, %v2412
      %v2414 = vrot.slane %v2210, 2
      %v2415 = vrot.slane %v2242, 2
      %v2416 = vsel %vm590, %v2414, %v2415
      %v2417 = vrot.slane %v2211, 2
      %v2418 = vrot.slane %v2243, 2
      %v2419 = vsel %vm590, %v2417, %v2418
      %v2420 = vrot.slane %v2212, 2
      %v2421 = vrot.slane %v2244, 2
      %v2422 = vsel %vm590, %v2420, %v2421
      %v2423 = vrot.slane %v2213, 2
      %v2424 = vrot.slane %v2245, 2
      %v2425 = vsel %vm590, %v2423, %v2424
      %v2426 = vrot.slane %v2214, 2
      %v2427 = vrot.slane %v2246, 2
      %v2428 = vsel %vm590, %v2426, %v2427
      %v2429 = vrot.slane %v2215, 2
      %v2430 = vrot.slane %v2247, 2
      %v2431 = vsel %vm590, %v2429, %v2430
      %v2432 = vrot.slane %v2216, 2
      %v2433 = vrot.slane %v2248, 2
      %v2434 = vsel %vm590, %v2432, %v2433
      %v2435 = vrot.slane %v2218, 2
      %v2436 = vrot.slane %v2250, 2
      %v2437 = vsel %vm590, %v2435, %v2436
      %v2438 = vrot.slane %v2219, 2
      %v2439 = vrot.slane %v2251, 2
      %v2440 = vsel %vm590, %v2438, %v2439
      %v2441 = vrot.slane %v2220, 2
      %v2442 = vrot.slane %v2252, 2
      %v2443 = vsel %vm590, %v2441, %v2442
      %v2444 = vrot.slane %v2221, 2
      %v2445 = vrot.slane %v2253, 2
      %v2446 = vsel %vm590, %v2444, %v2445
      %v2447 = vrot.slane %v2222, 2
      %v2448 = vrot.slane %v2254, 2
      %v2449 = vsel %vm590, %v2447, %v2448
      %v2450 = vrot.slane %v2223, 2
      %v2451 = vrot.slane %v2255, 2
      %v2452 = vsel %vm590, %v2450, %v2451
      %v2453 = vrot.slane %v2224, 2
      %v2454 = vrot.slane %v2256, 2
      %v2455 = vsel %vm590, %v2453, %v2454
      %v2456 = vrot.slane %v2226, 2
      %v2457 = vrot.slane %v2258, 2
      %v2458 = vsel %vm590, %v2456, %v2457
      %v2459 = vrot.slane %v2227, 2
      %v2460 = vrot.slane %v2259, 2
      %v2461 = vsel %vm590, %v2459, %v2460
      %v2462 = vrot.slane %v2228, 2
      %v2463 = vrot.slane %v2260, 2
      %v2464 = vsel %vm590, %v2462, %v2463
      %v2465 = vrot.slane %v2229, 2
      %v2466 = vrot.slane %v2261, 2
      %v2467 = vsel %vm590, %v2465, %v2466
      %v2468 = vrot.slane %v2230, 2
      %v2469 = vrot.slane %v2262, 2
      %v2470 = vsel %vm590, %v2468, %v2469
      %v2471 = vrot.slane %v2231, 2
      %v2472 = vrot.slane %v2263, 2
      %v2473 = vsel %vm590, %v2471, %v2472
      %v2474 = vrot.slane %v2232, 2
      %v2475 = vrot.slane %v2264, 2
      %v2476 = vsel %vm590, %v2474, %v2475
      %v2477 = vrot.slane %v2234, 2
      %v2478 = vrot.slane %v2266, 2
      %v2479 = vsel %vm590, %v2477, %v2478
      %v2480 = vrot.slane %v2235, 2
      %v2481 = vrot.slane %v2267, 2
      %v2482 = vsel %vm590, %v2480, %v2481
      %v2483 = vrot.slane %v2236, 2
      %v2484 = vrot.slane %v2268, 2
      %v2485 = vsel %vm590, %v2483, %v2484
      %v2486 = vrot.slane %v2237, 2
      %v2487 = vrot.slane %v2269, 2
      %v2488 = vsel %vm590, %v2486, %v2487
      %v2489 = vrot.slane %v2238, 2
      %v2490 = vrot.slane %v2270, 2
      %v2491 = vsel %vm590, %v2489, %v2490
      %v2492 = vrot.slane %v2239, 2
      %v2493 = vrot.slane %v2271, 2
      %v2494 = vsel %vm590, %v2492, %v2493
      %v2495 = vrot.slane %v2240, 2
      %v2496 = vrot.slane %v2272, 2
      %v2497 = vsel %vm590, %v2495, %v2496
      %v2506 = vrot.slane %v2217, 1
      %v2507 = vrot.slane %v2249, 1
      %v2508 = vsel %vm503, %v2506, %v2507
      %v2509 = vrot.slane %v2225, 1
      %v2510 = vrot.slane %v2257, 1
      %v2511 = vsel %vm503, %v2509, %v2510
      %v2512 = vrot.slane %v2233, 1
      %v2513 = vrot.slane %v2265, 1
      %v2514 = vsel %vm503, %v2512, %v2513
      %v2515 = vrot.slane %v2241, 1
      %v2516 = vrot.slane %v2273, 1
      %v2517 = vsel %vm503, %v2515, %v2516
      %v2518 = vrot.slane %v2217, 2
      %v2519 = vrot.slane %v2249, 2
      %v2520 = vsel %vm590, %v2518, %v2519
      %v2521 = vrot.slane %v2225, 2
      %v2522 = vrot.slane %v2257, 2
      %v2523 = vsel %vm590, %v2521, %v2522
      %v2524 = vrot.slane %v2233, 2
      %v2525 = vrot.slane %v2265, 2
      %v2526 = vsel %vm590, %v2524, %v2525
      %v2527 = vrot.slane %v2241, 2
      %v2528 = vrot.slane %v2273, 2
      %v2529 = vsel %vm590, %v2527, %v2528
      %2530 = vrot.lane.b32.xlu0 %v2332, 8
      %v2531 = vpop.permute.xlu0 %2530
      %2532 = vrot.lane.b32.xlu0 %v2335, 8
      %v2533 = vpop.permute.xlu0 %2532
      %2534 = vrot.lane.b32.xlu0 %v2338, 8
      %v2535 = vpop.permute.xlu0 %2534
      %2536 = vrot.lane.b32.xlu0 %v2341, 8
      %v2537 = vpop.permute.xlu0 %2536
      %2538 = vrot.lane.b32.xlu0 %v2344, 8
      %v2539 = vpop.permute.xlu0 %2538
      %2540 = vrot.lane.b32.xlu0 %v2347, 8
      %v2541 = vpop.permute.xlu0 %2540
      %2542 = vrot.lane.b32.xlu0 %v2350, 8
      %v2543 = vpop.permute.xlu0 %2542
      %2544 = vrot.lane.b32.xlu0 %v2353, 8
      %v2545 = vpop.permute.xlu0 %2544
      %2546 = vrot.lane.b32.xlu0 %v2356, 8
      %v2547 = vpop.permute.xlu0 %2546
      %2548 = vrot.lane.b32.xlu0 %v2359, 8
      %v2549 = vpop.permute.xlu0 %2548
      %2550 = vrot.lane.b32.xlu0 %v2362, 8
      %v2551 = vpop.permute.xlu0 %2550
      %2552 = vrot.lane.b32.xlu0 %v2365, 8
      %v2553 = vpop.permute.xlu0 %2552
      %2554 = vrot.lane.b32.xlu0 %v2368, 8
      %v2555 = vpop.permute.xlu0 %2554
      %2556 = vrot.lane.b32.xlu0 %v2371, 8
      %v2557 = vpop.permute.xlu0 %2556
      %2558 = vrot.lane.b32.xlu0 %v2374, 8
      %v2559 = vpop.permute.xlu0 %2558
      %2560 = vrot.lane.b32.xlu0 %v2377, 8
      %v2561 = vpop.permute.xlu0 %2560
      %2562 = vrot.lane.b32.xlu0 %v2380, 8
      %v2563 = vpop.permute.xlu0 %2562
      %2564 = vrot.lane.b32.xlu0 %v2383, 8
      %v2565 = vpop.permute.xlu0 %2564
      %2566 = vrot.lane.b32.xlu0 %v2386, 8
      %v2567 = vpop.permute.xlu0 %2566
      %2568 = vrot.lane.b32.xlu0 %v2389, 8
      %v2569 = vpop.permute.xlu0 %2568
      %2570 = vrot.lane.b32.xlu0 %v2392, 8
      %v2571 = vpop.permute.xlu0 %2570
      %2572 = vrot.lane.b32.xlu0 %v2395, 8
      %v2573 = vpop.permute.xlu0 %2572
      %2574 = vrot.lane.b32.xlu0 %v2398, 8
      %v2575 = vpop.permute.xlu0 %2574
      %2576 = vrot.lane.b32.xlu0 %v2401, 8
      %v2577 = vpop.permute.xlu0 %2576
      %2578 = vrot.lane.b32.xlu0 %v2404, 8
      %v2579 = vpop.permute.xlu0 %2578
      %2580 = vrot.lane.b32.xlu0 %v2407, 8
      %v2581 = vpop.permute.xlu0 %2580
      %2582 = vrot.lane.b32.xlu0 %v2410, 8
      %v2583 = vpop.permute.xlu0 %2582
      %2584 = vrot.lane.b32.xlu0 %v2413, 8
      %v2585 = vpop.permute.xlu0 %2584
      %2614 = vrot.lane.b32.xlu0 %v2416, 16
      %v2615 = vpop.permute.xlu0 %2614
      %2616 = vrot.lane.b32.xlu0 %v2419, 16
      %v2617 = vpop.permute.xlu0 %2616
      %2618 = vrot.lane.b32.xlu0 %v2422, 16
      %v2619 = vpop.permute.xlu0 %2618
      %2620 = vrot.lane.b32.xlu0 %v2425, 16
      %v2621 = vpop.permute.xlu0 %2620
      %2622 = vrot.lane.b32.xlu0 %v2428, 16
      %v2623 = vpop.permute.xlu0 %2622
      %2624 = vrot.lane.b32.xlu0 %v2431, 16
      %v2625 = vpop.permute.xlu0 %2624
      %2626 = vrot.lane.b32.xlu0 %v2434, 16
      %v2627 = vpop.permute.xlu0 %2626
      %2628 = vrot.lane.b32.xlu0 %v2437, 16
      %v2629 = vpop.permute.xlu0 %2628
      %2630 = vrot.lane.b32.xlu0 %v2440, 16
      %v2631 = vpop.permute.xlu0 %2630
      %2632 = vrot.lane.b32.xlu0 %v2443, 16
      %v2633 = vpop.permute.xlu0 %2632
      %2634 = vrot.lane.b32.xlu0 %v2446, 16
      %v2635 = vpop.permute.xlu0 %2634
      %2636 = vrot.lane.b32.xlu0 %v2449, 16
      %v2637 = vpop.permute.xlu0 %2636
      %2638 = vrot.lane.b32.xlu0 %v2452, 16
      %v2639 = vpop.permute.xlu0 %2638
      %2640 = vrot.lane.b32.xlu0 %v2455, 16
      %v2641 = vpop.permute.xlu0 %2640
      %2642 = vrot.lane.b32.xlu0 %v2458, 16
      %v2643 = vpop.permute.xlu0 %2642
      %2644 = vrot.lane.b32.xlu0 %v2461, 16
      %v2645 = vpop.permute.xlu0 %2644
      %2646 = vrot.lane.b32.xlu0 %v2464, 16
      %v2647 = vpop.permute.xlu0 %2646
      %2648 = vrot.lane.b32.xlu0 %v2467, 16
      %v2649 = vpop.permute.xlu0 %2648
      %2650 = vrot.lane.b32.xlu0 %v2470, 16
      %v2651 = vpop.permute.xlu0 %2650
      %2652 = vrot.lane.b32.xlu0 %v2473, 16
      %v2653 = vpop.permute.xlu0 %2652
      %2654 = vrot.lane.b32.xlu0 %v2476, 16
      %v2655 = vpop.permute.xlu0 %2654
      %2656 = vrot.lane.b32.xlu0 %v2479, 16
      %v2657 = vpop.permute.xlu0 %2656
      %2658 = vrot.lane.b32.xlu0 %v2482, 16
      %v2659 = vpop.permute.xlu0 %2658
      %2660 = vrot.lane.b32.xlu0 %v2485, 16
      %v2661 = vpop.permute.xlu0 %2660
      %2662 = vrot.lane.b32.xlu0 %v2488, 16
      %v2663 = vpop.permute.xlu0 %2662
      %2664 = vrot.lane.b32.xlu0 %v2491, 16
      %v2665 = vpop.permute.xlu0 %2664
      %2666 = vrot.lane.b32.xlu0 %v2494, 16
      %v2667 = vpop.permute.xlu0 %2666
      %2668 = vrot.lane.b32.xlu0 %v2497, 16
      %v2669 = vpop.permute.xlu0 %2668
      %2698 = vrot.lane.b32.xlu0 %v2210, 24
      %v2699 = vpop.permute.xlu0 %2698
      %2700 = vrot.lane.b32.xlu0 %v2211, 24
      %v2701 = vpop.permute.xlu0 %2700
      %2702 = vrot.lane.b32.xlu0 %v2212, 24
      %v2703 = vpop.permute.xlu0 %2702
      %2704 = vrot.lane.b32.xlu0 %v2213, 24
      %v2705 = vpop.permute.xlu0 %2704
      %2706 = vrot.lane.b32.xlu0 %v2214, 24
      %v2707 = vpop.permute.xlu0 %2706
      %2708 = vrot.lane.b32.xlu0 %v2215, 24
      %v2709 = vpop.permute.xlu0 %2708
      %2710 = vrot.lane.b32.xlu0 %v2216, 24
      %v2711 = vpop.permute.xlu0 %2710
      %2712 = vrot.lane.b32.xlu0 %v2217, 24
      %v2713 = vpop.permute.xlu0 %2712
      %2714 = vrot.lane.b32.xlu0 %v2218, 24
      %v2715 = vpop.permute.xlu0 %2714
      %2716 = vrot.lane.b32.xlu0 %v2219, 24
      %v2717 = vpop.permute.xlu0 %2716
      %2718 = vrot.lane.b32.xlu0 %v2220, 24
      %v2719 = vpop.permute.xlu0 %2718
      %2720 = vrot.lane.b32.xlu0 %v2221, 24
      %v2721 = vpop.permute.xlu0 %2720
      %2722 = vrot.lane.b32.xlu0 %v2222, 24
      %v2723 = vpop.permute.xlu0 %2722
      %2724 = vrot.lane.b32.xlu0 %v2223, 24
      %v2725 = vpop.permute.xlu0 %2724
      %2726 = vrot.lane.b32.xlu0 %v2224, 24
      %v2727 = vpop.permute.xlu0 %2726
      %2728 = vrot.lane.b32.xlu0 %v2225, 24
      %v2729 = vpop.permute.xlu0 %2728
      %2730 = vrot.lane.b32.xlu0 %v2226, 24
      %v2731 = vpop.permute.xlu0 %2730
      %2732 = vrot.lane.b32.xlu0 %v2227, 24
      %v2733 = vpop.permute.xlu0 %2732
      %2734 = vrot.lane.b32.xlu0 %v2228, 24
      %v2735 = vpop.permute.xlu0 %2734
      %2736 = vrot.lane.b32.xlu0 %v2229, 24
      %v2737 = vpop.permute.xlu0 %2736
      %2738 = vrot.lane.b32.xlu0 %v2230, 24
      %v2739 = vpop.permute.xlu0 %2738
      %2740 = vrot.lane.b32.xlu0 %v2231, 24
      %v2741 = vpop.permute.xlu0 %2740
      %2742 = vrot.lane.b32.xlu0 %v2232, 24
      %v2743 = vpop.permute.xlu0 %2742
      %2744 = vrot.lane.b32.xlu0 %v2233, 24
      %v2745 = vpop.permute.xlu0 %2744
      %2746 = vrot.lane.b32.xlu0 %v2234, 24
      %v2747 = vpop.permute.xlu0 %2746
      %2748 = vrot.lane.b32.xlu0 %v2235, 24
      %v2749 = vpop.permute.xlu0 %2748
      %2750 = vrot.lane.b32.xlu0 %v2236, 24
      %v2751 = vpop.permute.xlu0 %2750
      %2752 = vrot.lane.b32.xlu0 %v2237, 24
      %v2753 = vpop.permute.xlu0 %2752
      %2754 = vrot.lane.b32.xlu0 %v2238, 24
      %v2755 = vpop.permute.xlu0 %2754
      %2756 = vrot.lane.b32.xlu0 %v2239, 24
      %v2757 = vpop.permute.xlu0 %2756
      %2758 = vrot.lane.b32.xlu0 %v2240, 24
      %v2759 = vpop.permute.xlu0 %2758
      %2760 = vrot.lane.b32.xlu0 %v2241, 24
      %v2761 = vpop.permute.xlu0 %2760
      %2794 = vrot.lane.b32.xlu0 %v2332, 32
      %v2795 = vpop.permute.xlu0 %2794
      %2796 = vrot.lane.b32.xlu0 %v2335, 32
      %v2797 = vpop.permute.xlu0 %2796
      %2798 = vrot.lane.b32.xlu0 %v2338, 32
      %v2799 = vpop.permute.xlu0 %2798
      %2800 = vrot.lane.b32.xlu0 %v2341, 32
      %v2801 = vpop.permute.xlu0 %2800
      %2802 = vrot.lane.b32.xlu0 %v2344, 32
      %v2803 = vpop.permute.xlu0 %2802
      %2804 = vrot.lane.b32.xlu0 %v2347, 32
      %v2805 = vpop.permute.xlu0 %2804
      %2806 = vrot.lane.b32.xlu0 %v2350, 32
      %v2807 = vpop.permute.xlu0 %2806
      %2808 = vrot.lane.b32.xlu0 %v2508, 32
      %v2809 = vpop.permute.xlu0 %2808
      %2810 = vrot.lane.b32.xlu0 %v2353, 32
      %v2811 = vpop.permute.xlu0 %2810
      %2812 = vrot.lane.b32.xlu0 %v2356, 32
      %v2813 = vpop.permute.xlu0 %2812
      %2814 = vrot.lane.b32.xlu0 %v2359, 32
      %v2815 = vpop.permute.xlu0 %2814
      %2816 = vrot.lane.b32.xlu0 %v2362, 32
      %v2817 = vpop.permute.xlu0 %2816
      %2818 = vrot.lane.b32.xlu0 %v2365, 32
      %v2819 = vpop.permute.xlu0 %2818
      %2820 = vrot.lane.b32.xlu0 %v2368, 32
      %v2821 = vpop.permute.xlu0 %2820
      %2822 = vrot.lane.b32.xlu0 %v2371, 32
      %v2823 = vpop.permute.xlu0 %2822
      %2824 = vrot.lane.b32.xlu0 %v2511, 32
      %v2825 = vpop.permute.xlu0 %2824
      %2826 = vrot.lane.b32.xlu0 %v2374, 32
      %v2827 = vpop.permute.xlu0 %2826
      %2828 = vrot.lane.b32.xlu0 %v2377, 32
      %v2829 = vpop.permute.xlu0 %2828
      %2830 = vrot.lane.b32.xlu0 %v2380, 32
      %v2831 = vpop.permute.xlu0 %2830
      %2832 = vrot.lane.b32.xlu0 %v2383, 32
      %v2833 = vpop.permute.xlu0 %2832
      %2834 = vrot.lane.b32.xlu0 %v2386, 32
      %v2835 = vpop.permute.xlu0 %2834
      %2836 = vrot.lane.b32.xlu0 %v2389, 32
      %v2837 = vpop.permute.xlu0 %2836
      %2838 = vrot.lane.b32.xlu0 %v2392, 32
      %v2839 = vpop.permute.xlu0 %2838
      %2840 = vrot.lane.b32.xlu0 %v2514, 32
      %v2841 = vpop.permute.xlu0 %2840
      %2842 = vrot.lane.b32.xlu0 %v2395, 32
      %v2843 = vpop.permute.xlu0 %2842
      %2844 = vrot.lane.b32.xlu0 %v2398, 32
      %v2845 = vpop.permute.xlu0 %2844
      %2846 = vrot.lane.b32.xlu0 %v2401, 32
      %v2847 = vpop.permute.xlu0 %2846
      %2848 = vrot.lane.b32.xlu0 %v2404, 32
      %v2849 = vpop.permute.xlu0 %2848
      %2850 = vrot.lane.b32.xlu0 %v2407, 32
      %v2851 = vpop.permute.xlu0 %2850
      %2852 = vrot.lane.b32.xlu0 %v2410, 32
      %v2853 = vpop.permute.xlu0 %2852
      %2854 = vrot.lane.b32.xlu0 %v2413, 32
      %v2855 = vpop.permute.xlu0 %2854
      %2856 = vrot.lane.b32.xlu0 %v2517, 32
      %v2857 = vpop.permute.xlu0 %2856
      %2890 = vrot.lane.b32.xlu0 %v2416, 40
      %v2891 = vpop.permute.xlu0 %2890
      %2892 = vrot.lane.b32.xlu0 %v2419, 40
      %v2893 = vpop.permute.xlu0 %2892
      %2894 = vrot.lane.b32.xlu0 %v2422, 40
      %v2895 = vpop.permute.xlu0 %2894
      %2896 = vrot.lane.b32.xlu0 %v2425, 40
      %v2897 = vpop.permute.xlu0 %2896
      %2898 = vrot.lane.b32.xlu0 %v2428, 40
      %v2899 = vpop.permute.xlu0 %2898
      %2900 = vrot.lane.b32.xlu0 %v2431, 40
      %v2901 = vpop.permute.xlu0 %2900
      %2902 = vrot.lane.b32.xlu0 %v2434, 40
      %v2903 = vpop.permute.xlu0 %2902
      %2904 = vrot.lane.b32.xlu0 %v2520, 40
      %v2905 = vpop.permute.xlu0 %2904
      %2906 = vrot.lane.b32.xlu0 %v2437, 40
      %v2907 = vpop.permute.xlu0 %2906
      %2908 = vrot.lane.b32.xlu0 %v2440, 40
      %v2909 = vpop.permute.xlu0 %2908
      %2910 = vrot.lane.b32.xlu0 %v2443, 40
      %v2911 = vpop.permute.xlu0 %2910
      %2912 = vrot.lane.b32.xlu0 %v2446, 40
      %v2913 = vpop.permute.xlu0 %2912
      %2914 = vrot.lane.b32.xlu0 %v2449, 40
      %v2915 = vpop.permute.xlu0 %2914
      %2916 = vrot.lane.b32.xlu0 %v2452, 40
      %v2917 = vpop.permute.xlu0 %2916
      %2918 = vrot.lane.b32.xlu0 %v2455, 40
      %v2919 = vpop.permute.xlu0 %2918
      %2920 = vrot.lane.b32.xlu0 %v2523, 40
      %v2921 = vpop.permute.xlu0 %2920
      %2922 = vrot.lane.b32.xlu0 %v2458, 40
      %v2923 = vpop.permute.xlu0 %2922
      %2924 = vrot.lane.b32.xlu0 %v2461, 40
      %v2925 = vpop.permute.xlu0 %2924
      %2926 = vrot.lane.b32.xlu0 %v2464, 40
      %v2927 = vpop.permute.xlu0 %2926
      %2928 = vrot.lane.b32.xlu0 %v2467, 40
      %v2929 = vpop.permute.xlu0 %2928
      %2930 = vrot.lane.b32.xlu0 %v2470, 40
      %v2931 = vpop.permute.xlu0 %2930
      %2932 = vrot.lane.b32.xlu0 %v2473, 40
      %v2933 = vpop.permute.xlu0 %2932
      %2934 = vrot.lane.b32.xlu0 %v2476, 40
      %v2935 = vpop.permute.xlu0 %2934
      %2936 = vrot.lane.b32.xlu0 %v2526, 40
      %v2937 = vpop.permute.xlu0 %2936
      %2938 = vrot.lane.b32.xlu0 %v2479, 40
      %v2939 = vpop.permute.xlu0 %2938
      %2940 = vrot.lane.b32.xlu0 %v2482, 40
      %v2941 = vpop.permute.xlu0 %2940
      %2942 = vrot.lane.b32.xlu0 %v2485, 40
      %v2943 = vpop.permute.xlu0 %2942
      %2944 = vrot.lane.b32.xlu0 %v2488, 40
      %v2945 = vpop.permute.xlu0 %2944
      %2946 = vrot.lane.b32.xlu0 %v2491, 40
      %v2947 = vpop.permute.xlu0 %2946
      %2948 = vrot.lane.b32.xlu0 %v2494, 40
      %v2949 = vpop.permute.xlu0 %2948
      %2950 = vrot.lane.b32.xlu0 %v2497, 40
      %v2951 = vpop.permute.xlu0 %2950
      %2952 = vrot.lane.b32.xlu0 %v2529, 40
      %v2953 = vpop.permute.xlu0 %2952
      %2986 = vrot.lane.b32.xlu0 %v2211, 48
      %v2987 = vpop.permute.xlu0 %2986
      %2988 = vrot.lane.b32.xlu0 %v2212, 48
      %v2989 = vpop.permute.xlu0 %2988
      %2990 = vrot.lane.b32.xlu0 %v2213, 48
      %v2991 = vpop.permute.xlu0 %2990
      %2992 = vrot.lane.b32.xlu0 %v2214, 48
      %v2993 = vpop.permute.xlu0 %2992
      %2994 = vrot.lane.b32.xlu0 %v2215, 48
      %v2995 = vpop.permute.xlu0 %2994
      %2996 = vrot.lane.b32.xlu0 %v2216, 48
      %v2997 = vpop.permute.xlu0 %2996
      %2998 = vrot.lane.b32.xlu0 %v2217, 48
      %v2999 = vpop.permute.xlu0 %2998
      %3000 = vrot.lane.b32.xlu0 %v2219, 48
      %v3001 = vpop.permute.xlu0 %3000
      %3002 = vrot.lane.b32.xlu0 %v2220, 48
      %v3003 = vpop.permute.xlu0 %3002
      %3004 = vrot.lane.b32.xlu0 %v2221, 48
      %v3005 = vpop.permute.xlu0 %3004
      %3006 = vrot.lane.b32.xlu0 %v2222, 48
      %v3007 = vpop.permute.xlu0 %3006
      %3008 = vrot.lane.b32.xlu0 %v2223, 48
      %v3009 = vpop.permute.xlu0 %3008
      %3010 = vrot.lane.b32.xlu0 %v2224, 48
      %v3011 = vpop.permute.xlu0 %3010
      %3012 = vrot.lane.b32.xlu0 %v2225, 48
      %v3013 = vpop.permute.xlu0 %3012
      %3014 = vrot.lane.b32.xlu0 %v2227, 48
      %v3015 = vpop.permute.xlu0 %3014
      %3016 = vrot.lane.b32.xlu0 %v2228, 48
      %v3017 = vpop.permute.xlu0 %3016
      %3018 = vrot.lane.b32.xlu0 %v2229, 48
      %v3019 = vpop.permute.xlu0 %3018
      %3020 = vrot.lane.b32.xlu0 %v2230, 48
      %v3021 = vpop.permute.xlu0 %3020
      %3022 = vrot.lane.b32.xlu0 %v2231, 48
      %v3023 = vpop.permute.xlu0 %3022
      %3024 = vrot.lane.b32.xlu0 %v2232, 48
      %v3025 = vpop.permute.xlu0 %3024
      %3026 = vrot.lane.b32.xlu0 %v2233, 48
      %v3027 = vpop.permute.xlu0 %3026
      %3028 = vrot.lane.b32.xlu0 %v2235, 48
      %v3029 = vpop.permute.xlu0 %3028
      %3030 = vrot.lane.b32.xlu0 %v2236, 48
      %v3031 = vpop.permute.xlu0 %3030
      %3032 = vrot.lane.b32.xlu0 %v2237, 48
      %v3033 = vpop.permute.xlu0 %3032
      %3034 = vrot.lane.b32.xlu0 %v2238, 48
      %v3035 = vpop.permute.xlu0 %3034
      %3036 = vrot.lane.b32.xlu0 %v2239, 48
      %v3037 = vpop.permute.xlu0 %3036
      %3038 = vrot.lane.b32.xlu0 %v2240, 48
      %v3039 = vpop.permute.xlu0 %3038
      %3040 = vrot.lane.b32.xlu0 %v2241, 48
      %v3041 = vpop.permute.xlu0 %3040
      %3070 = vrot.lane.b32.xlu0 %v2335, 56
      %v3071 = vpop.permute.xlu0 %3070
      %3072 = vrot.lane.b32.xlu0 %v2338, 56
      %v3073 = vpop.permute.xlu0 %3072
      %3074 = vrot.lane.b32.xlu0 %v2341, 56
      %v3075 = vpop.permute.xlu0 %3074
      %3076 = vrot.lane.b32.xlu0 %v2344, 56
      %v3077 = vpop.permute.xlu0 %3076
      %3078 = vrot.lane.b32.xlu0 %v2347, 56
      %v3079 = vpop.permute.xlu0 %3078
      %3080 = vrot.lane.b32.xlu0 %v2350, 56
      %v3081 = vpop.permute.xlu0 %3080
      %3082 = vrot.lane.b32.xlu0 %v2508, 56
      %v3083 = vpop.permute.xlu0 %3082
      %3084 = vrot.lane.b32.xlu0 %v2356, 56
      %v3085 = vpop.permute.xlu0 %3084
      %3086 = vrot.lane.b32.xlu0 %v2359, 56
      %v3087 = vpop.permute.xlu0 %3086
      %3088 = vrot.lane.b32.xlu0 %v2362, 56
      %v3089 = vpop.permute.xlu0 %3088
      %3090 = vrot.lane.b32.xlu0 %v2365, 56
      %v3091 = vpop.permute.xlu0 %3090
      %3092 = vrot.lane.b32.xlu0 %v2368, 56
      %v3093 = vpop.permute.xlu0 %3092
      %3094 = vrot.lane.b32.xlu0 %v2371, 56
      %v3095 = vpop.permute.xlu0 %3094
      %3096 = vrot.lane.b32.xlu0 %v2511, 56
      %v3097 = vpop.permute.xlu0 %3096
      %3098 = vrot.lane.b32.xlu0 %v2377, 56
      %v3099 = vpop.permute.xlu0 %3098
      %3100 = vrot.lane.b32.xlu0 %v2380, 56
      %v3101 = vpop.permute.xlu0 %3100
      %3102 = vrot.lane.b32.xlu0 %v2383, 56
      %v3103 = vpop.permute.xlu0 %3102
      %3104 = vrot.lane.b32.xlu0 %v2386, 56
      %v3105 = vpop.permute.xlu0 %3104
      %3106 = vrot.lane.b32.xlu0 %v2389, 56
      %v3107 = vpop.permute.xlu0 %3106
      %3108 = vrot.lane.b32.xlu0 %v2392, 56
      %v3109 = vpop.permute.xlu0 %3108
      %3110 = vrot.lane.b32.xlu0 %v2514, 56
      %v3111 = vpop.permute.xlu0 %3110
      %3112 = vrot.lane.b32.xlu0 %v2398, 56
      %v3113 = vpop.permute.xlu0 %3112
      %3114 = vrot.lane.b32.xlu0 %v2401, 56
      %v3115 = vpop.permute.xlu0 %3114
      %3116 = vrot.lane.b32.xlu0 %v2404, 56
      %v3117 = vpop.permute.xlu0 %3116
      %3118 = vrot.lane.b32.xlu0 %v2407, 56
      %v3119 = vpop.permute.xlu0 %3118
      %3120 = vrot.lane.b32.xlu0 %v2410, 56
      %v3121 = vpop.permute.xlu0 %3120
      %3122 = vrot.lane.b32.xlu0 %v2413, 56
      %v3123 = vpop.permute.xlu0 %3122
      %3124 = vrot.lane.b32.xlu0 %v2517, 56
      %v3125 = vpop.permute.xlu0 %3124
      %3154 = vrot.lane.b32.xlu0 %v2419, 64
      %v3155 = vpop.permute.xlu0 %3154
      %3156 = vrot.lane.b32.xlu0 %v2422, 64
      %v3157 = vpop.permute.xlu0 %3156
      %3158 = vrot.lane.b32.xlu0 %v2425, 64
      %v3159 = vpop.permute.xlu0 %3158
      %3160 = vrot.lane.b32.xlu0 %v2428, 64
      %v3161 = vpop.permute.xlu0 %3160
      %3162 = vrot.lane.b32.xlu0 %v2431, 64
      %v3163 = vpop.permute.xlu0 %3162
      %3164 = vrot.lane.b32.xlu0 %v2434, 64
      %v3165 = vpop.permute.xlu0 %3164
      %3166 = vrot.lane.b32.xlu0 %v2520, 64
      %v3167 = vpop.permute.xlu0 %3166
      %3168 = vrot.lane.b32.xlu0 %v2440, 64
      %v3169 = vpop.permute.xlu0 %3168
      %3170 = vrot.lane.b32.xlu0 %v2443, 64
      %v3171 = vpop.permute.xlu0 %3170
      %3172 = vrot.lane.b32.xlu0 %v2446, 64
      %v3173 = vpop.permute.xlu0 %3172
      %3174 = vrot.lane.b32.xlu0 %v2449, 64
      %v3175 = vpop.permute.xlu0 %3174
      %3176 = vrot.lane.b32.xlu0 %v2452, 64
      %v3177 = vpop.permute.xlu0 %3176
      %3178 = vrot.lane.b32.xlu0 %v2455, 64
      %v3179 = vpop.permute.xlu0 %3178
      %3180 = vrot.lane.b32.xlu0 %v2523, 64
      %v3181 = vpop.permute.xlu0 %3180
      %3182 = vrot.lane.b32.xlu0 %v2461, 64
      %v3183 = vpop.permute.xlu0 %3182
      %3184 = vrot.lane.b32.xlu0 %v2464, 64
      %v3185 = vpop.permute.xlu0 %3184
      %3186 = vrot.lane.b32.xlu0 %v2467, 64
      %v3187 = vpop.permute.xlu0 %3186
      %3188 = vrot.lane.b32.xlu0 %v2470, 64
      %v3189 = vpop.permute.xlu0 %3188
      %3190 = vrot.lane.b32.xlu0 %v2473, 64
      %v3191 = vpop.permute.xlu0 %3190
      %3192 = vrot.lane.b32.xlu0 %v2476, 64
      %v3193 = vpop.permute.xlu0 %3192
      %3194 = vrot.lane.b32.xlu0 %v2526, 64
      %v3195 = vpop.permute.xlu0 %3194
      %3196 = vrot.lane.b32.xlu0 %v2482, 64
      %v3197 = vpop.permute.xlu0 %3196
      %3198 = vrot.lane.b32.xlu0 %v2485, 64
      %v3199 = vpop.permute.xlu0 %3198
      %3200 = vrot.lane.b32.xlu0 %v2488, 64
      %v3201 = vpop.permute.xlu0 %3200
      %3202 = vrot.lane.b32.xlu0 %v2491, 64
      %v3203 = vpop.permute.xlu0 %3202
      %3204 = vrot.lane.b32.xlu0 %v2494, 64
      %v3205 = vpop.permute.xlu0 %3204
      %3206 = vrot.lane.b32.xlu0 %v2497, 64
      %v3207 = vpop.permute.xlu0 %3206
      %3208 = vrot.lane.b32.xlu0 %v2529, 64
      %v3209 = vpop.permute.xlu0 %3208
      %v3238 = vsel %vm1432, %v2210, %v2531
      %v3239 = vsel %vm1432, %v2211, %v2533
      %v3240 = vsel %vm1432, %v2212, %v2535
      %v3241 = vsel %vm1432, %v2213, %v2537
      %v3242 = vsel %vm1432, %v2214, %v2539
      %v3243 = vsel %vm1432, %v2215, %v2541
      %v3244 = vsel %vm1432, %v2216, %v2543
      %v3245 = vsel %vm1432, %v2218, %v2545
      %v3246 = vsel %vm1432, %v2219, %v2547
      %v3247 = vsel %vm1432, %v2220, %v2549
      %v3248 = vsel %vm1432, %v2221, %v2551
      %v3249 = vsel %vm1432, %v2222, %v2553
      %v3250 = vsel %vm1432, %v2223, %v2555
      %v3251 = vsel %vm1432, %v2224, %v2557
      %v3252 = vsel %vm1432, %v2226, %v2559
      %v3253 = vsel %vm1432, %v2227, %v2561
      %v3254 = vsel %vm1432, %v2228, %v2563
      %v3255 = vsel %vm1432, %v2229, %v2565
      %v3256 = vsel %vm1432, %v2230, %v2567
      %v3257 = vsel %vm1432, %v2231, %v2569
      %v3258 = vsel %vm1432, %v2232, %v2571
      %v3259 = vsel %vm1432, %v2234, %v2573
      %v3260 = vsel %vm1432, %v2235, %v2575
      %v3261 = vsel %vm1432, %v2236, %v2577
      %v3262 = vsel %vm1432, %v2237, %v2579
      %v3263 = vsel %vm1432, %v2238, %v2581
      %v3264 = vsel %vm1432, %v2239, %v2583
      %v3265 = vsel %vm1432, %v2240, %v2585
      %v3266 = vsel %vm1462, %v3238, %v2615
      %v3267 = vsel %vm1462, %v3239, %v2617
      %v3268 = vsel %vm1462, %v3240, %v2619
      %v3269 = vsel %vm1462, %v3241, %v2621
      %v3270 = vsel %vm1462, %v3242, %v2623
      %v3271 = vsel %vm1462, %v3243, %v2625
      %v3272 = vsel %vm1462, %v3244, %v2627
      %v3273 = vsel %vm1462, %v3245, %v2629
      %v3274 = vsel %vm1462, %v3246, %v2631
      %v3275 = vsel %vm1462, %v3247, %v2633
      %v3276 = vsel %vm1462, %v3248, %v2635
      %v3277 = vsel %vm1462, %v3249, %v2637
      %v3278 = vsel %vm1462, %v3250, %v2639
      %v3279 = vsel %vm1462, %v3251, %v2641
      %v3280 = vsel %vm1462, %v3252, %v2643
      %v3281 = vsel %vm1462, %v3253, %v2645
      %v3282 = vsel %vm1462, %v3254, %v2647
      %v3283 = vsel %vm1462, %v3255, %v2649
      %v3284 = vsel %vm1462, %v3256, %v2651
      %v3285 = vsel %vm1462, %v3257, %v2653
      %v3286 = vsel %vm1462, %v3258, %v2655
      %v3287 = vsel %vm1462, %v3259, %v2657
      %v3288 = vsel %vm1462, %v3260, %v2659
      %v3289 = vsel %vm1462, %v3261, %v2661
      %v3290 = vsel %vm1462, %v3262, %v2663
      %v3291 = vsel %vm1462, %v3263, %v2665
      %v3292 = vsel %vm1462, %v3264, %v2667
      %v3293 = vsel %vm1462, %v3265, %v2669
      %v3294 = vsel %vm1492, %v1463, %v2699
      %v3295 = vsel %vm1492, %v3266, %v2701
      %v3296 = vsel %vm1492, %v3267, %v2703
      %v3297 = vsel %vm1492, %v3268, %v2705
      %v3298 = vsel %vm1492, %v3269, %v2707
      %v3299 = vsel %vm1492, %v3270, %v2709
      %v3300 = vsel %vm1492, %v3271, %v2711
      %v3301 = vsel %vm1492, %v3272, %v2713
      %v3302 = vsel %vm1492, %v1463, %v2715
      %v3303 = vsel %vm1492, %v3273, %v2717
      %v3304 = vsel %vm1492, %v3274, %v2719
      %v3305 = vsel %vm1492, %v3275, %v2721
      %v3306 = vsel %vm1492, %v3276, %v2723
      %v3307 = vsel %vm1492, %v3277, %v2725
      %v3308 = vsel %vm1492, %v3278, %v2727
      %v3309 = vsel %vm1492, %v3279, %v2729
      %v3310 = vsel %vm1492, %v1463, %v2731
      %v3311 = vsel %vm1492, %v3280, %v2733
      %v3312 = vsel %vm1492, %v3281, %v2735
      %v3313 = vsel %vm1492, %v3282, %v2737
      %v3314 = vsel %vm1492, %v3283, %v2739
      %v3315 = vsel %vm1492, %v3284, %v2741
      %v3316 = vsel %vm1492, %v3285, %v2743
      %v3317 = vsel %vm1492, %v3286, %v2745
      %v3318 = vsel %vm1492, %v1463, %v2747
      %v3319 = vsel %vm1492, %v3287, %v2749
      %v3320 = vsel %vm1492, %v3288, %v2751
      %v3321 = vsel %vm1492, %v3289, %v2753
      %v3322 = vsel %vm1492, %v3290, %v2755
      %v3323 = vsel %vm1492, %v3291, %v2757
      %v3324 = vsel %vm1492, %v3292, %v2759
      %v3325 = vsel %vm1492, %v3293, %v2761
      %v3326 = vsel %vm1525, %v3294, %v2795
      %v3327 = vsel %vm1525, %v3295, %v2797
      %v3328 = vsel %vm1525, %v3296, %v2799
      %v3329 = vsel %vm1525, %v3297, %v2801
      %v3330 = vsel %vm1525, %v3298, %v2803
      %v3331 = vsel %vm1525, %v3299, %v2805
      %v3332 = vsel %vm1525, %v3300, %v2807
      %v3333 = vsel %vm1525, %v3301, %v2809
      %v3334 = vsel %vm1525, %v3302, %v2811
      %v3335 = vsel %vm1525, %v3303, %v2813
      %v3336 = vsel %vm1525, %v3304, %v2815
      %v3337 = vsel %vm1525, %v3305, %v2817
      %v3338 = vsel %vm1525, %v3306, %v2819
      %v3339 = vsel %vm1525, %v3307, %v2821
      %v3340 = vsel %vm1525, %v3308, %v2823
      %v3341 = vsel %vm1525, %v3309, %v2825
      %v3342 = vsel %vm1525, %v3310, %v2827
      %v3343 = vsel %vm1525, %v3311, %v2829
      %v3344 = vsel %vm1525, %v3312, %v2831
      %v3345 = vsel %vm1525, %v3313, %v2833
      %v3346 = vsel %vm1525, %v3314, %v2835
      %v3347 = vsel %vm1525, %v3315, %v2837
      %v3348 = vsel %vm1525, %v3316, %v2839
      %v3349 = vsel %vm1525, %v3317, %v2841
      %v3350 = vsel %vm1525, %v3318, %v2843
      %v3351 = vsel %vm1525, %v3319, %v2845
      %v3352 = vsel %vm1525, %v3320, %v2847
      %v3353 = vsel %vm1525, %v3321, %v2849
      %v3354 = vsel %vm1525, %v3322, %v2851
      %v3355 = vsel %vm1525, %v3323, %v2853
      %v3356 = vsel %vm1525, %v3324, %v2855
      %v3357 = vsel %vm1525, %v3325, %v2857
      %v3358 = vsel %vm1558, %v3326, %v2891
      %v3359 = vsel %vm1558, %v3327, %v2893
      %v3360 = vsel %vm1558, %v3328, %v2895
      %v3361 = vsel %vm1558, %v3329, %v2897
      %v3362 = vsel %vm1558, %v3330, %v2899
      %v3363 = vsel %vm1558, %v3331, %v2901
      %v3364 = vsel %vm1558, %v3332, %v2903
      %v3365 = vsel %vm1558, %v3333, %v2905
      %v3366 = vsel %vm1558, %v3334, %v2907
      %v3367 = vsel %vm1558, %v3335, %v2909
      %v3368 = vsel %vm1558, %v3336, %v2911
      %v3369 = vsel %vm1558, %v3337, %v2913
      %v3370 = vsel %vm1558, %v3338, %v2915
      %v3371 = vsel %vm1558, %v3339, %v2917
      %v3372 = vsel %vm1558, %v3340, %v2919
      %v3373 = vsel %vm1558, %v3341, %v2921
      %v3374 = vsel %vm1558, %v3342, %v2923
      %v3375 = vsel %vm1558, %v3343, %v2925
      %v3376 = vsel %vm1558, %v3344, %v2927
      %v3377 = vsel %vm1558, %v3345, %v2929
      %v3378 = vsel %vm1558, %v3346, %v2931
      %v3379 = vsel %vm1558, %v3347, %v2933
      %v3380 = vsel %vm1558, %v3348, %v2935
      %v3381 = vsel %vm1558, %v3349, %v2937
      %v3382 = vsel %vm1558, %v3350, %v2939
      %v3383 = vsel %vm1558, %v3351, %v2941
      %v3384 = vsel %vm1558, %v3352, %v2943
      %v3385 = vsel %vm1558, %v3353, %v2945
      %v3386 = vsel %vm1558, %v3354, %v2947
      %v3387 = vsel %vm1558, %v3355, %v2949
      %v3388 = vsel %vm1558, %v3356, %v2951
      %v3389 = vsel %vm1558, %v3357, %v2953
      %v3390 = vsel %vm1591, %v3358, %v2987
      %v3391 = vsel %vm1591, %v3359, %v2989
      %v3392 = vsel %vm1591, %v3360, %v2991
      %v3393 = vsel %vm1591, %v3361, %v2993
      %v3394 = vsel %vm1591, %v3362, %v2995
      %v3395 = vsel %vm1591, %v3363, %v2997
      %v3396 = vsel %vm1591, %v3364, %v2999
      %v3397 = vsel %vm1591, %v3365, %v1186
      %v3398 = vsel %vm1591, %v3366, %v3001
      %v3399 = vsel %vm1591, %v3367, %v3003
      %v3400 = vsel %vm1591, %v3368, %v3005
      %v3401 = vsel %vm1591, %v3369, %v3007
      %v3402 = vsel %vm1591, %v3370, %v3009
      %v3403 = vsel %vm1591, %v3371, %v3011
      %v3404 = vsel %vm1591, %v3372, %v3013
      %v3405 = vsel %vm1591, %v3373, %v1186
      %v3406 = vsel %vm1591, %v3374, %v3015
      %v3407 = vsel %vm1591, %v3375, %v3017
      %v3408 = vsel %vm1591, %v3376, %v3019
      %v3409 = vsel %vm1591, %v3377, %v3021
      %v3410 = vsel %vm1591, %v3378, %v3023
      %v3411 = vsel %vm1591, %v3379, %v3025
      %v3412 = vsel %vm1591, %v3380, %v3027
      %v3413 = vsel %vm1591, %v3381, %v1186
      %v3414 = vsel %vm1591, %v3382, %v3029
      %v3415 = vsel %vm1591, %v3383, %v3031
      %v3416 = vsel %vm1591, %v3384, %v3033
      %v3417 = vsel %vm1591, %v3385, %v3035
      %v3418 = vsel %vm1591, %v3386, %v3037
      %v3419 = vsel %vm1591, %v3387, %v3039
      %v3420 = vsel %vm1591, %v3388, %v3041
      %v3421 = vsel %vm1591, %v3389, %v1186
      %v3422 = vsel %vm1624, %v3390, %v3071
      %v3423 = vsel %vm1624, %v3391, %v3073
      %v3424 = vsel %vm1624, %v3392, %v3075
      %v3425 = vsel %vm1624, %v3393, %v3077
      %v3426 = vsel %vm1624, %v3394, %v3079
      %v3427 = vsel %vm1624, %v3395, %v3081
      %v3428 = vsel %vm1624, %v3396, %v3083
      %v3429 = vsel %vm1624, %v3397, %v1273
      %v3430 = vsel %vm1624, %v3398, %v3085
      %v3431 = vsel %vm1624, %v3399, %v3087
      %v3432 = vsel %vm1624, %v3400, %v3089
      %v3433 = vsel %vm1624, %v3401, %v3091
      %v3434 = vsel %vm1624, %v3402, %v3093
      %v3435 = vsel %vm1624, %v3403, %v3095
      %v3436 = vsel %vm1624, %v3404, %v3097
      %v3437 = vsel %vm1624, %v3405, %v1273
      %v3438 = vsel %vm1624, %v3406, %v3099
      %v3439 = vsel %vm1624, %v3407, %v3101
      %v3440 = vsel %vm1624, %v3408, %v3103
      %v3441 = vsel %vm1624, %v3409, %v3105
      %v3442 = vsel %vm1624, %v3410, %v3107
      %v3443 = vsel %vm1624, %v3411, %v3109
      %v3444 = vsel %vm1624, %v3412, %v3111
      %v3445 = vsel %vm1624, %v3413, %v1273
      %v3446 = vsel %vm1624, %v3414, %v3113
      %v3447 = vsel %vm1624, %v3415, %v3115
      %v3448 = vsel %vm1624, %v3416, %v3117
      %v3449 = vsel %vm1624, %v3417, %v3119
      %v3450 = vsel %vm1624, %v3418, %v3121
      %v3451 = vsel %vm1624, %v3419, %v3123
      %v3452 = vsel %vm1624, %v3420, %v3125
      %v3453 = vsel %vm1624, %v3421, %v1273
      %v3454 = vsel %vm1657, %v3422, %v3155
      %v3455 = vsel %vm1657, %v3423, %v3157
      %v3456 = vsel %vm1657, %v3424, %v3159
      %v3457 = vsel %vm1657, %v3425, %v3161
      %v3458 = vsel %vm1657, %v3426, %v3163
      %v3459 = vsel %vm1657, %v3427, %v3165
      %v3460 = vsel %vm1657, %v3428, %v3167
      %v3461 = vsel %vm1657, %v3429, %v1360
      %v3462 = vsel %vm1657, %v3430, %v3169
      %v3463 = vsel %vm1657, %v3431, %v3171
      %v3464 = vsel %vm1657, %v3432, %v3173
      %v3465 = vsel %vm1657, %v3433, %v3175
      %v3466 = vsel %vm1657, %v3434, %v3177
      %v3467 = vsel %vm1657, %v3435, %v3179
      %v3468 = vsel %vm1657, %v3436, %v3181
      %v3469 = vsel %vm1657, %v3437, %v1360
      %v3470 = vsel %vm1657, %v3438, %v3183
      %v3471 = vsel %vm1657, %v3439, %v3185
      %v3472 = vsel %vm1657, %v3440, %v3187
      %v3473 = vsel %vm1657, %v3441, %v3189
      %v3474 = vsel %vm1657, %v3442, %v3191
      %v3475 = vsel %vm1657, %v3443, %v3193
      %v3476 = vsel %vm1657, %v3444, %v3195
      %v3477 = vsel %vm1657, %v3445, %v1360
      %v3478 = vsel %vm1657, %v3446, %v3197
      %v3479 = vsel %vm1657, %v3447, %v3199
      %v3480 = vsel %vm1657, %v3448, %v3201
      %v3481 = vsel %vm1657, %v3449, %v3203
      %v3482 = vsel %vm1657, %v3450, %v3205
      %v3483 = vsel %vm1657, %v3451, %v3207
      %v3484 = vsel %vm1657, %v3452, %v3209
      %v3485 = vsel %vm1657, %v3453, %v1360
      %v3487 = vlaneseq
      %v3488 = vshrl.u32 %v3487, 7
      %v3489 = vsub.s32 0, %v3488
      %v3490 = vrot.slane %v284, %v3489
      %v3493 = vsel %vm1696, %v3454, 0
      %v3496 = vsel %vm1696, %v3455, 0
      %v3499 = vsel %vm1696, %v3456, 0
      %v3502 = vsel %vm1696, %v3457, 0
      %v3505 = vsel %vm1696, %v3458, 0
      %v3508 = vsel %vm1696, %v3459, 0
      %v3511 = vsel %vm1696, %v3460, 0
      %v3514 = vsel %vm1696, %v3461, 0
      %v3517 = vsel %vm1696, %v3462, 0
      %v3520 = vsel %vm1696, %v3463, 0
      %v3523 = vsel %vm1696, %v3464, 0
      %v3526 = vsel %vm1696, %v3465, 0
      %v3529 = vsel %vm1696, %v3466, 0
      %v3532 = vsel %vm1696, %v3467, 0
      %v3535 = vsel %vm1696, %v3468, 0
      %v3538 = vsel %vm1696, %v3469, 0
      %v3541 = vsel %vm1696, %v3470, 0
      %v3544 = vsel %vm1696, %v3471, 0
      %v3547 = vsel %vm1696, %v3472, 0
      %v3550 = vsel %vm1696, %v3473, 0
      %v3553 = vsel %vm1696, %v3474, 0
      %v3556 = vsel %vm1696, %v3475, 0
      %v3559 = vsel %vm1696, %v3476, 0
      %v3562 = vsel %vm1696, %v3477, 0
      %v3565 = vsel %vm1696, %v3478, 0
      %v3568 = vsel %vm1696, %v3479, 0
      %v3571 = vsel %vm1696, %v3480, 0
      %v3574 = vsel %vm1696, %v3481, 0
      %v3577 = vsel %vm1696, %v3482, 0
      %v3580 = vsel %vm1696, %v3483, 0
      %v3583 = vsel %vm1696, %v3484, 0
      %v3586 = vsel %vm1696, %v3485, 0
      %3588 = vmatprep.subr.mxu0 0.0
      %3589 = vmatpush1.msra.mxu0 %v275
      %3590 = vmatprep.subr.mxu0 0.0
      %3591 = vmatpush1.msra.mxu0 %v276
      %3592 = vmatprep.subr.mxu0 0.0
      %3593 = vmatpush1.msra.mxu0 %v277
      %3594 = vmatprep.subr.mxu0 0.0
      %3595 = vmatpush1.msra.mxu0 %v278
      %3596 = vmatprep.subr.mxu0 0.0
      %3597 = vmatpush1.msra.mxu0 %v279
      %3598 = vmatprep.subr.mxu0 0.0
      %3599 = vmatpush1.msra.mxu0 %v280
      %3600 = vmatprep.subr.mxu0 0.0
      %3601 = vmatpush1.msra.mxu0 %v281
      %3602 = vmatprep.subr.mxu0 0.0
      %3603 = vmatpush1.msra.mxu0 %v282
      %3604 = vmatprep.subr.mxu0 0.0
      %3605 = vmatpush1.msra.mxu0 %v283
      %3606 = vmatprep.subr.mxu0 0.0
      %3607 = vmatpush1.msra.mxu0 0.0
      %3608 = vmatprep.subr.mxu0 0.0
      %3609 = vmatpush1.msra.mxu0 0.0
      %3610 = vmatprep.subr.mxu0 0.0
      %3611 = vmatpush1.msra.mxu0 0.0
      %3612 = vmatprep.subr.mxu0 0.0
      %3613 = vmatpush1.msra.mxu0 0.0
      %3614 = vmatprep.subr.mxu0 0.0
      %3615 = vmatpush1.msra.mxu0 0.0
      %3616 = vmatprep.subr.mxu0 0.0
      %3617 = vmatpush1.msra.mxu0 0.0
      %3618 = vmatprep.subr.mxu0 0.0
      %3619 = vmatpush1.msra.mxu0 0.0
      %3620 = vmatprep.subr.mxu0 0.0
      %3621 = vmatpush1.msra.mxu0 0.0
      %3622 = vmatprep.subr.mxu0 0.0
      %3623 = vmatpush1.msra.mxu0 0.0
      %3624 = vmatprep.subr.mxu0 0.0
      %3625 = vmatpush1.msra.mxu0 0.0
      %3626 = vmatprep.subr.mxu0 0.0
      %3627 = vmatpush1.msra.mxu0 0.0
      %3628 = vmatprep.subr.mxu0 0.0
      %3629 = vmatpush1.msra.mxu0 0.0
      %3630 = vmatprep.subr.mxu0 0.0
      %3631 = vmatpush1.msra.mxu0 0.0
      %3632 = vmatprep.subr.mxu0 0.0
      %3633 = vmatpush1.msra.mxu0 0.0
      %3634 = vmatprep.subr.mxu0 0.0
      %3635 = vmatpush1.msra.mxu0 0.0
      %3636 = vmatprep.subr.mxu0 0.0
      %3637 = vmatpush1.msra.mxu0 0.0
      %3638 = vmatprep.subr.mxu0 0.0
      %3639 = vmatpush1.msra.mxu0 0.0
      %3640 = vmatprep.subr.mxu0 0.0
      %3641 = vmatpush1.msra.mxu0 0.0
      %3642 = vmatprep.subr.mxu0 0.0
      %3643 = vmatpush1.msra.mxu0 0.0
      %3644 = vmatprep.subr.mxu0 0.0
      %3645 = vmatpush1.msra.mxu0 0.0
      %3646 = vmatprep.subr.mxu0 0.0
      %3647 = vmatpush1.msra.mxu0 0.0
      %3648 = vmatprep.subr.mxu0 0.0
      %3649 = vmatpush1.msra.mxu0 0.0
      %3650 = vmatprep.subr.mxu0 0.0
      %3651 = vmatpush1.msra.mxu0 0.0
      %3652 = vmatprep.mubr.f32.mxu0 0.0
      %3653 = vmatmul.mubr.f32.gmra.mrb[0].mxu0 %v3493
      %v3654 = vpop.f32.mrb[0].mxu0
      %v3655 = vadd.f32 %v3490, %v3654
      %v3656 = vpop.f32.mrb[0].mxu0
      %3657 = vmatprep.mubr.f32.mxu0 0.0
      %3658 = vmatmul.mubr.f32.gmra.mrb[0].mxu0 %v3496
      %v3659 = vpop.f32.mrb[0].mxu0
      %v3660 = vadd.f32 %v3490, %v3659
      %v3661 = vpop.f32.mrb[0].mxu0
      %3662 = vmatprep.mubr.f32.mxu0 0.0
      %3663 = vmatmul.mubr.f32.gmra.mrb[0].mxu0 %v3499
      %v3664 = vpop.f32.mrb[0].mxu0
      %v3665 = vadd.f32 %v3490, %v3664
      %v3666 = vpop.f32.mrb[0].mxu0
      %3667 = vmatprep.mubr.f32.mxu0 0.0
      %3668 = vmatmul.mubr.f32.gmra.mrb[0].mxu0 %v3502
      %v3669 = vpop.f32.mrb[0].mxu0
      %v3670 = vadd.f32 %v3490, %v3669
      %v3671 = vpop.f32.mrb[0].mxu0
      %3672 = vmatprep.mubr.f32.mxu0 0.0
      %3673 = vmatmul.mubr.f32.gmra.mrb[0].mxu0 %v3505
      %v3674 = vpop.f32.mrb[0].mxu0
      %v3675 = vadd.f32 %v3490, %v3674
      %v3676 = vpop.f32.mrb[0].mxu0
      %3677 = vmatprep.mubr.f32.mxu0 0.0
      %3678 = vmatmul.mubr.f32.gmra.mrb[0].mxu0 %v3508
      %v3679 = vpop.f32.mrb[0].mxu0
      %v3680 = vadd.f32 %v3490, %v3679
      %v3681 = vpop.f32.mrb[0].mxu0
      %3682 = vmatprep.mubr.f32.mxu0 0.0
      %3683 = vmatmul.mubr.f32.gmra.mrb[0].mxu0 %v3511
      %v3684 = vpop.f32.mrb[0].mxu0
      %v3685 = vadd.f32 %v3490, %v3684
      %v3686 = vpop.f32.mrb[0].mxu0
      %3687 = vmatprep.mubr.f32.mxu0 0.0
      %3688 = vmatmul.mubr.f32.gmra.mrb[0].mxu0 %v3514
      %v3689 = vpop.f32.mrb[0].mxu0
      %v3690 = vadd.f32 %v3490, %v3689
      %v3691 = vpop.f32.mrb[0].mxu0
      %3692 = vmatprep.mubr.f32.mxu0 0.0
      %3693 = vmatmul.mubr.f32.gmra.mrb[0].mxu0 %v3517
      %v3694 = vpop.f32.mrb[0].mxu0
      %v3695 = vadd.f32 %v3490, %v3694
      %v3696 = vpop.f32.mrb[0].mxu0
      %3697 = vmatprep.mubr.f32.mxu0 0.0
      %3698 = vmatmul.mubr.f32.gmra.mrb[0].mxu0 %v3520
      %v3699 = vpop.f32.mrb[0].mxu0
      %v3700 = vadd.f32 %v3490, %v3699
      %v3701 = vpop.f32.mrb[0].mxu0
      %3702 = vmatprep.mubr.f32.mxu0 0.0
      %3703 = vmatmul.mubr.f32.gmra.mrb[0].mxu0 %v3523
      %v3704 = vpop.f32.mrb[0].mxu0
      %v3705 = vadd.f32 %v3490, %v3704
      %v3706 = vpop.f32.mrb[0].mxu0
      %3707 = vmatprep.mubr.f32.mxu0 0.0
      %3708 = vmatmul.mubr.f32.gmra.mrb[0].mxu0 %v3526
      %v3709 = vpop.f32.mrb[0].mxu0
      %v3710 = vadd.f32 %v3490, %v3709
      %v3711 = vpop.f32.mrb[0].mxu0
      %3712 = vmatprep.mubr.f32.mxu0 0.0
      %3713 = vmatmul.mubr.f32.gmra.mrb[0].mxu0 %v3529
      %v3714 = vpop.f32.mrb[0].mxu0
      %v3715 = vadd.f32 %v3490, %v3714
      %v3716 = vpop.f32.mrb[0].mxu0
      %3717 = vmatprep.mubr.f32.mxu0 0.0
      %3718 = vmatmul.mubr.f32.gmra.mrb[0].mxu0 %v3532
      %v3719 = vpop.f32.mrb[0].mxu0
      %v3720 = vadd.f32 %v3490, %v3719
      %v3721 = vpop.f32.mrb[0].mxu0
      %3722 = vmatprep.mubr.f32.mxu0 0.0
      %3723 = vmatmul.mubr.f32.gmra.mrb[0].mxu0 %v3535
      %v3724 = vpop.f32.mrb[0].mxu0
      %v3725 = vadd.f32 %v3490, %v3724
      %v3726 = vpop.f32.mrb[0].mxu0
      %3727 = vmatprep.mubr.f32.mxu0 0.0
      %3728 = vmatmul.mubr.f32.gmra.mrb[0].mxu0 %v3538
      %v3729 = vpop.f32.mrb[0].mxu0
      %v3730 = vadd.f32 %v3490, %v3729
      %v3731 = vpop.f32.mrb[0].mxu0
      %3732 = vmatprep.mubr.f32.mxu0 0.0
      %3733 = vmatmul.mubr.f32.gmra.mrb[0].mxu0 %v3541
      %v3734 = vpop.f32.mrb[0].mxu0
      %v3735 = vadd.f32 %v3490, %v3734
      %v3736 = vpop.f32.mrb[0].mxu0
      %3737 = vmatprep.mubr.f32.mxu0 0.0
      %3738 = vmatmul.mubr.f32.gmra.mrb[0].mxu0 %v3544
      %v3739 = vpop.f32.mrb[0].mxu0
      %v3740 = vadd.f32 %v3490, %v3739
      %v3741 = vpop.f32.mrb[0].mxu0
      %3742 = vmatprep.mubr.f32.mxu0 0.0
      %3743 = vmatmul.mubr.f32.gmra.mrb[0].mxu0 %v3547
      %v3744 = vpop.f32.mrb[0].mxu0
      %v3745 = vadd.f32 %v3490, %v3744
      %v3746 = vpop.f32.mrb[0].mxu0
      %3747 = vmatprep.mubr.f32.mxu0 0.0
      %3748 = vmatmul.mubr.f32.gmra.mrb[0].mxu0 %v3550
      %v3749 = vpop.f32.mrb[0].mxu0
      %v3750 = vadd.f32 %v3490, %v3749
      %v3751 = vpop.f32.mrb[0].mxu0
      %3752 = vmatprep.mubr.f32.mxu0 0.0
      %3753 = vmatmul.mubr.f32.gmra.mrb[0].mxu0 %v3553
      %v3754 = vpop.f32.mrb[0].mxu0
      %v3755 = vadd.f32 %v3490, %v3754
      %v3756 = vpop.f32.mrb[0].mxu0
      %3757 = vmatprep.mubr.f32.mxu0 0.0
      %3758 = vmatmul.mubr.f32.gmra.mrb[0].mxu0 %v3556
      %v3759 = vpop.f32.mrb[0].mxu0
      %v3760 = vadd.f32 %v3490, %v3759
      %v3761 = vpop.f32.mrb[0].mxu0
      %3762 = vmatprep.mubr.f32.mxu0 0.0
      %3763 = vmatmul.mubr.f32.gmra.mrb[0].mxu0 %v3559
      %v3764 = vpop.f32.mrb[0].mxu0
      %v3765 = vadd.f32 %v3490, %v3764
      %v3766 = vpop.f32.mrb[0].mxu0
      %3767 = vmatprep.mubr.f32.mxu0 0.0
      %3768 = vmatmul.mubr.f32.gmra.mrb[0].mxu0 %v3562
      %v3769 = vpop.f32.mrb[0].mxu0
      %v3770 = vadd.f32 %v3490, %v3769
      %v3771 = vpop.f32.mrb[0].mxu0
      %3772 = vmatprep.mubr.f32.mxu0 0.0
      %3773 = vmatmul.mubr.f32.gmra.mrb[0].mxu0 %v3565
      %v3774 = vpop.f32.mrb[0].mxu0
      %v3775 = vadd.f32 %v3490, %v3774
      %v3776 = vpop.f32.mrb[0].mxu0
      %3777 = vmatprep.mubr.f32.mxu0 0.0
      %3778 = vmatmul.mubr.f32.gmra.mrb[0].mxu0 %v3568
      %v3779 = vpop.f32.mrb[0].mxu0
      %v3780 = vadd.f32 %v3490, %v3779
      %v3781 = vpop.f32.mrb[0].mxu0
      %3782 = vmatprep.mubr.f32.mxu0 0.0
      %3783 = vmatmul.mubr.f32.gmra.mrb[0].mxu0 %v3571
      %v3784 = vpop.f32.mrb[0].mxu0
      %v3785 = vadd.f32 %v3490, %v3784
      %v3786 = vpop.f32.mrb[0].mxu0
      %3787 = vmatprep.mubr.f32.mxu0 0.0
      %3788 = vmatmul.mubr.f32.gmra.mrb[0].mxu0 %v3574
      %v3789 = vpop.f32.mrb[0].mxu0
      %v3790 = vadd.f32 %v3490, %v3789
      %v3791 = vpop.f32.mrb[0].mxu0
      %3792 = vmatprep.mubr.f32.mxu0 0.0
      %3793 = vmatmul.mubr.f32.gmra.mrb[0].mxu0 %v3577
      %v3794 = vpop.f32.mrb[0].mxu0
      %v3795 = vadd.f32 %v3490, %v3794
      %v3796 = vpop.f32.mrb[0].mxu0
      %3797 = vmatprep.mubr.f32.mxu0 0.0
      %3798 = vmatmul.mubr.f32.gmra.mrb[0].mxu0 %v3580
      %v3799 = vpop.f32.mrb[0].mxu0
      %v3800 = vadd.f32 %v3490, %v3799
      %v3801 = vpop.f32.mrb[0].mxu0
      %3802 = vmatprep.mubr.f32.mxu0 0.0
      %3803 = vmatmul.mubr.f32.gmra.mrb[0].mxu0 %v3583
      %v3804 = vpop.f32.mrb[0].mxu0
      %v3805 = vadd.f32 %v3490, %v3804
      %v3806 = vpop.f32.mrb[0].mxu0
      %3807 = vmatprep.mubr.f32.mxu0 0.0
      %3808 = vmatmul.mubr.f32.gmra.mrb[0].mxu0 %v3586
      %v3809 = vpop.f32.mrb[0].mxu0
      %v3810 = vadd.f32 %v3490, %v3809
      %v3811 = vpop.f32.mrb[0].mxu0
      %3812 = vdwg.mxu0
      %vm3813 = vcmp.gt.f32.partialorder %v3655, 0.0
      %vm3814 = vcmp.gt.f32.partialorder %v3660, 0.0
      %vm3815 = vcmp.gt.f32.partialorder %v3665, 0.0
      %vm3816 = vcmp.gt.f32.partialorder %v3670, 0.0
      %vm3817 = vcmp.gt.f32.partialorder %v3675, 0.0
      %vm3818 = vcmp.gt.f32.partialorder %v3680, 0.0
      %vm3819 = vcmp.gt.f32.partialorder %v3685, 0.0
      %vm3820 = vcmp.gt.f32.partialorder %v3690, 0.0
      %vm3821 = vcmp.gt.f32.partialorder %v3695, 0.0
      %vm3822 = vcmp.gt.f32.partialorder %v3700, 0.0
      %vm3823 = vcmp.gt.f32.partialorder %v3705, 0.0
      %vm3824 = vcmp.gt.f32.partialorder %v3710, 0.0
      %vm3825 = vcmp.gt.f32.partialorder %v3715, 0.0
      %vm3826 = vcmp.gt.f32.partialorder %v3720, 0.0
      %vm3827 = vcmp.gt.f32.partialorder %v3725, 0.0
      %vm3828 = vcmp.gt.f32.partialorder %v3730, 0.0
      %vm3829 = vcmp.gt.f32.partialorder %v3735, 0.0
      %vm3830 = vcmp.gt.f32.partialorder %v3740, 0.0
      %vm3831 = vcmp.gt.f32.partialorder %v3745, 0.0
      %vm3832 = vcmp.gt.f32.partialorder %v3750, 0.0
      %vm3833 = vcmp.gt.f32.partialorder %v3755, 0.0
      %vm3834 = vcmp.gt.f32.partialorder %v3760, 0.0
      %vm3835 = vcmp.gt.f32.partialorder %v3765, 0.0
      %vm3836 = vcmp.gt.f32.partialorder %v3770, 0.0
      %vm3837 = vcmp.gt.f32.partialorder %v3775, 0.0
      %vm3838 = vcmp.gt.f32.partialorder %v3780, 0.0
      %vm3839 = vcmp.gt.f32.partialorder %v3785, 0.0
      %vm3840 = vcmp.gt.f32.partialorder %v3790, 0.0
      %vm3841 = vcmp.gt.f32.partialorder %v3795, 0.0
      %vm3842 = vcmp.gt.f32.partialorder %v3800, 0.0
      %vm3843 = vcmp.gt.f32.partialorder %v3805, 0.0
      %vm3844 = vcmp.gt.f32.partialorder %v3810, 0.0
      %v3845 = vmul.f32 %v3655, 0.2
      %v3846 = vmul.f32 %v3660, 0.2
      %v3847 = vmul.f32 %v3665, 0.2
      %v3848 = vmul.f32 %v3670, 0.2
      %v3849 = vmul.f32 %v3675, 0.2
      %v3850 = vmul.f32 %v3680, 0.2
      %v3851 = vmul.f32 %v3685, 0.2
      %v3852 = vmul.f32 %v3690, 0.2
      %v3853 = vmul.f32 %v3695, 0.2
      %v3854 = vmul.f32 %v3700, 0.2
      %v3855 = vmul.f32 %v3705, 0.2
      %v3856 = vmul.f32 %v3710, 0.2
      %v3857 = vmul.f32 %v3715, 0.2
      %v3858 = vmul.f32 %v3720, 0.2
      %v3859 = vmul.f32 %v3725, 0.2
      %v3860 = vmul.f32 %v3730, 0.2
      %v3861 = vmul.f32 %v3735, 0.2
      %v3862 = vmul.f32 %v3740, 0.2
      %v3863 = vmul.f32 %v3745, 0.2
      %v3864 = vmul.f32 %v3750, 0.2
      %v3865 = vmul.f32 %v3755, 0.2
      %v3866 = vmul.f32 %v3760, 0.2
      %v3867 = vmul.f32 %v3765, 0.2
      %v3868 = vmul.f32 %v3770, 0.2
      %v3869 = vmul.f32 %v3775, 0.2
      %v3870 = vmul.f32 %v3780, 0.2
      %v3871 = vmul.f32 %v3785, 0.2
      %v3872 = vmul.f32 %v3790, 0.2
      %v3873 = vmul.f32 %v3795, 0.2
      %v3874 = vmul.f32 %v3800, 0.2
      %v3875 = vmul.f32 %v3805, 0.2
      %v3876 = vmul.f32 %v3810, 0.2
      %v3877 = vsel %vm3813, %v3655, %v3845
      %v3878 = vsel %vm3814, %v3660, %v3846
      %v3879 = vsel %vm3815, %v3665, %v3847
      %v3880 = vsel %vm3816, %v3670, %v3848
      %v3881 = vsel %vm3817, %v3675, %v3849
      %v3882 = vsel %vm3818, %v3680, %v3850
      %v3883 = vsel %vm3819, %v3685, %v3851
      %v3884 = vsel %vm3820, %v3690, %v3852
      %v3885 = vsel %vm3821, %v3695, %v3853
      %v3886 = vsel %vm3822, %v3700, %v3854
      %v3887 = vsel %vm3823, %v3705, %v3855
      %v3888 = vsel %vm3824, %v3710, %v3856
      %v3889 = vsel %vm3825, %v3715, %v3857
      %v3890 = vsel %vm3826, %v3720, %v3858
      %v3891 = vsel %vm3827, %v3725, %v3859
      %v3892 = vsel %vm3828, %v3730, %v3860
      %v3893 = vsel %vm3829, %v3735, %v3861
      %v3894 = vsel %vm3830, %v3740, %v3862
      %v3895 = vsel %vm3831, %v3745, %v3863
      %v3896 = vsel %vm3832, %v3750, %v3864
      %v3897 = vsel %vm3833, %v3755, %v3865
      %v3898 = vsel %vm3834, %v3760, %v3866
      %v3899 = vsel %vm3835, %v3765, %v3867
      %v3900 = vsel %vm3836, %v3770, %v3868
      %v3901 = vsel %vm3837, %v3775, %v3869
      %v3902 = vsel %vm3838, %v3780, %v3870
      %v3903 = vsel %vm3839, %v3785, %v3871
      %v3904 = vsel %vm3840, %v3790, %v3872
      %v3905 = vsel %vm3841, %v3795, %v3873
      %v3906 = vsel %vm3842, %v3800, %v3874
      %v3907 = vsel %vm3843, %v3805, %v3875
      %v3908 = vsel %vm3844, %v3810, %v3876
      %3909 = vst.msk [vmem:[%s231] sm:$0xff] %vm1432, %v3877
      %3910 = vst.msk [vmem:[%s231 + $0x8] sm:$0xff] %vm1432, %v3878
      %3911 = vst.msk [vmem:[%s231 + $0x10] sm:$0xff] %vm1432, %v3879
      %3912 = vst.msk [vmem:[%s231 + $0x18] sm:$0xff] %vm1432, %v3880
      %3913 = vst.msk [vmem:[%s231 + $0x20] sm:$0xff] %vm1432, %v3881
      %3914 = vst.msk [vmem:[%s231 + $0x28] sm:$0xff] %vm1432, %v3882
      %3915 = vst.msk [vmem:[%s231 + $0x30] sm:$0xff] %vm1432, %v3883
      %3916 = vst.msk [vmem:[%s231 + $0x38] sm:$0xff] %vm1432, %v3884
      %3917 = vst.msk [vmem:[%s231 + $0x40] sm:$0xff] %vm1432, %v3885
      %3918 = vst.msk [vmem:[%s231 + $0x48] sm:$0xff] %vm1432, %v3886
      %3919 = vst.msk [vmem:[%s231 + $0x50] sm:$0xff] %vm1432, %v3887
      %3920 = vst.msk [vmem:[%s231 + $0x58] sm:$0xff] %vm1432, %v3888
      %3921 = vst.msk [vmem:[%s231 + $0x60] sm:$0xff] %vm1432, %v3889
      %3922 = vst.msk [vmem:[%s231 + $0x68] sm:$0xff] %vm1432, %v3890
      %3923 = vst.msk [vmem:[%s231 + $0x70] sm:$0xff] %vm1432, %v3891
      %3924 = vst.msk [vmem:[%s231 + $0x78] sm:$0xff] %vm1432, %v3892
      %3925 = vst.msk [vmem:[%s231 + $0x80] sm:$0xff] %vm1432, %v3893
      %3926 = vst.msk [vmem:[%s231 + $0x88] sm:$0xff] %vm1432, %v3894
      %3927 = vst.msk [vmem:[%s231 + $0x90] sm:$0xff] %vm1432, %v3895
      %3928 = vst.msk [vmem:[%s231 + $0x98] sm:$0xff] %vm1432, %v3896
      %3929 = vst.msk [vmem:[%s231 + $0xa0] sm:$0xff] %vm1432, %v3897
      %3930 = vst.msk [vmem:[%s231 + $0xa8] sm:$0xff] %vm1432, %v3898
      %3931 = vst.msk [vmem:[%s231 + $0xb0] sm:$0xff] %vm1432, %v3899
      %3932 = vst.msk [vmem:[%s231 + $0xb8] sm:$0xff] %vm1432, %v3900
      %3933 = vst.msk [vmem:[%s231 + $0xc0] sm:$0xff] %vm1432, %v3901
      %3934 = vst.msk [vmem:[%s231 + $0xc8] sm:$0xff] %vm1432, %v3902
      %3935 = vst.msk [vmem:[%s231 + $0xd0] sm:$0xff] %vm1432, %v3903
      %3936 = vst.msk [vmem:[%s231 + $0xd8] sm:$0xff] %vm1432, %v3904
      %3937 = vst.msk [vmem:[%s231 + $0xe0] sm:$0xff] %vm1432, %v3905
      %3938 = vst.msk [vmem:[%s231 + $0xe8] sm:$0xff] %vm1432, %v3906
      %3939 = vst.msk [vmem:[%s231 + $0xf0] sm:$0xff] %vm1432, %v3907
      %3940 = vst.msk [vmem:[%s231 + $0xf8] sm:$0xff] %vm1432, %v3908
      %s3941 = smul.u32 4, %s16
      %p3942 = scmp.lt.s32.totalorder %s3941, 7
      %s3943 = scalar_select %p3942, %s3941, 7
      %s3944 = smul.addr %s3943, 8
      %s3945 = smul.addr %s3944, 8
      %s3946 = scalar_lea.vmem %s5, %s3945
      // Predicated region
      $region41: #{_lambda_.5} parent=39 // pred_check
        %p3947 = pneg %p144
      $region42: #{_lambda_.5} parent=39 // pred_check_branch
        %3949 = sbr.rel (%p3947) target = $region44
      $region43: #{_lambda_.5} parent=39 // pred_region
        %s3950 = smul.u32 4, %s16
      $region44: #{_lambda_.5} parent=39 // pred_fallthru
        _
    $region40: #{_lambda_.5} parent=5 // pred_fallthru
      _
    %p3951 = scmp.le.s32.totalorder 2, %s11
    // Predicated region
    $region45: #{_lambda_.5} parent=5 // pred_check
      %p3952 = pneg %p3951
    $region46: #{_lambda_.5} parent=5 // pred_check_branch
      %3954 = sbr.rel (%p3952) target = $region48
    $region47: #{_lambda_.5} parent=5 // pred_region
      %s3955 = ssub.s32 %s11, 2
      // Predicated region
      $region49: #{_lambda_.5} parent=47 // pred_check
        %p3956 = pneg %p150
      $region50: #{_lambda_.5} parent=47 // pred_check_branch
        %3958 = sbr.rel (%p3956) target = $region52
      $region51: #{_lambda_.5} parent=47 // pred_region
        %s3959 = smul.u32 4, %s17
        %p3960 = scmp.lt.s32.totalorder %s3959, 7
        %s3961 = scalar_select %p3960, %s3959, 7
        %s3962 = smul.addr %s3961, 8
        %s3963 = smul.addr %s3962, 8
        %s3964 = scalar_lea.vmem %s5, %s3963
      $region52: #{_lambda_.5} parent=47 // pred_fallthru
        _
    $region48: #{_lambda_.5} parent=5 // pred_fallthru
      _
  $region6: #{_lambda_.5} parent=0 // loop_footer
    %s15 = sadd.s32 1, %s11
  $region7: #{_lambda_.5} parent=0 // loop_footer_branch
    %10 = sbr.rel target = $region3
  $region8: #{_lambda_.5} parent=0 // loop_exit
    _

// kernel: _lambda_.7
$region0: #{_lambda_.7}
  #allocation0 [shape = 'u32[]', space=smem, size = 0x4, offset = 0x4, fixed_abs, tag = 'smem constant byte address 0x4 - core index']
  #allocation1 [shape = 'u32[144,128]{1,0:T(1,128)}', space=vmem, size = 0x12000, scoped, tag = 'internal scratch']
  %s0 = inlined_call_operand.vmem [shape: f32[64,2,8,8], index: 0, kind: input, shape index: {}]
  %s1 = inlined_call_operand.vmem [shape: f32[2,48,4], index: 1, kind: input, shape index: {}]
  %s2 = inlined_call_operand.vmem [shape: f32[2,4,8], index: 2, kind: input, shape index: {}]
  %s3 = inlined_call_operand.vmem [shape: f32[64,8,8], index: 3, kind: output, shape index: {}]
  %s4 = sld [smem:[#allocation0]]
  $region45: #{_lambda_.7} parent=0
    _
  %s6 = ssub.s32 1, %s4
  %s7 = scalar_select 0, %s6, %s4
  loop: start=0, step=1, limit=4
  $region2: #{_lambda_.7} parent=0 // loop_pre_header
    _
  $region3: #{_lambda_.7} parent=0 // loop_header
    %s9 = sphi 0, %s13
    %p10 = scmp.ge.s32.totalorder %s9, 4
    %s19 = sphi 0, %s21
    %s22 = sphi 0, %s19
    %s23 = sphi 0, %s22
    %s39 = sphi 0, %s23
    %s45 = sphi 0, %s47
    %s48 = sphi 0, %s45
    %s49 = sphi 0, %s48
    %s65 = sphi 0, %s49
    %s71 = sphi 0, %s73
    %s74 = sphi 0, %s71
    %s75 = sphi 0, %s74
    %s91 = sphi 0, %s75
    %s97 = sphi 0, %s99
    %s100 = sphi 0, %s97
    %s101 = sphi 0, %s100
    %s117 = sphi 0, %s101
  $region4: #{_lambda_.7} parent=0 // loop_header_branch
    %12 = sbr.rel (%p10) target = $region8
  $region5: #{_lambda_.7} parent=0 // loop_body
    %s14 = ssub.s32 %s9, 1
    %s15 = ssub.s32 %s9, 2
    %s16 = sadd.s32 %s9, 1
    %s17 = ssub.s32 %s9, %s16
    %p18 = scmp.eq.s32.totalorder %s17, 0
    %s20 = sadd.s32 %s19, 1
    %s21 = scalar_select %p18, %s19, %s20
    %p24 = pneg %p18
    %p25 = scmp.eq.s32.totalorder %s9, 1
    %p26 = por %p24, %p25
    %p27 = scmp.ne.s32.totalorder %s19, %s22
    %p28 = scmp.eq.s32.totalorder %s9, 0
    %p29 = por %p27, %p28
    %p30 = scmp.ne.s32.totalorder %s19, %s22
    %p31 = scmp.eq.s32.totalorder %s14, 1
    %p32 = por %p30, %p31
    %p33 = scmp.ne.s32.totalorder %s22, %s23
    %p34 = scmp.eq.s32.totalorder %s14, 0
    %p35 = por %p33, %p34
    %p36 = scmp.ne.s32.totalorder %s22, %s23
    %p37 = scmp.eq.s32.totalorder %s15, 1
    %p38 = por %p36, %p37
    %p40 = scmp.ne.s32.totalorder %s23, %s39
    %p41 = scmp.eq.s32.totalorder %s15, 0
    %p42 = por %p40, %p41
    %s43 = ssub.s32 %s9, %s16
    %p44 = scmp.eq.s32.totalorder %s43, 0
    %s46 = sadd.s32 %s45, 1
    %s47 = scalar_select %p44, %s45, %s46
    %p50 = pneg %p44
    %p51 = scmp.eq.s32.totalorder %s9, 1
    %p52 = por %p50, %p51
    %p53 = scmp.ne.s32.totalorder %s45, %s48
    %p54 = scmp.eq.s32.totalorder %s9, 0
    %p55 = por %p53, %p54
    %p56 = scmp.ne.s32.totalorder %s45, %s48
    %p57 = scmp.eq.s32.totalorder %s14, 1
    %p58 = por %p56, %p57
    %p59 = scmp.ne.s32.totalorder %s48, %s49
    %p60 = scmp.eq.s32.totalorder %s14, 0
    %p61 = por %p59, %p60
    %p62 = scmp.ne.s32.totalorder %s48, %s49
    %p63 = scmp.eq.s32.totalorder %s15, 1
    %p64 = por %p62, %p63
    %p66 = scmp.ne.s32.totalorder %s49, %s65
    %p67 = scmp.eq.s32.totalorder %s15, 0
    %p68 = por %p66, %p67
    %s69 = ssub.s32 %s9, %s16
    %p70 = scmp.eq.s32.totalorder %s69, 0
    %s72 = sadd.s32 %s71, 1
    %s73 = scalar_select %p70, %s71, %s72
    %p76 = pneg %p70
    %p77 = scmp.eq.s32.totalorder %s9, 1
    %p78 = por %p76, %p77
    %p79 = scmp.ne.s32.totalorder %s71, %s74
    %p80 = scmp.eq.s32.totalorder %s9, 0
    %p81 = por %p79, %p80
    %p82 = scmp.ne.s32.totalorder %s71, %s74
    %p83 = scmp.eq.s32.totalorder %s14, 1
    %p84 = por %p82, %p83
    %p85 = scmp.ne.s32.totalorder %s74, %s75
    %p86 = scmp.eq.s32.totalorder %s14, 0
    %p87 = por %p85, %p86
    %p88 = scmp.ne.s32.totalorder %s74, %s75
    %p89 = scmp.eq.s32.totalorder %s15, 1
    %p90 = por %p88, %p89
    %p92 = scmp.ne.s32.totalorder %s75, %s91
    %p93 = scmp.eq.s32.totalorder %s15, 0
    %p94 = por %p92, %p93
    %s95 = ssub.s32 %s9, %s16
    %p96 = scmp.eq.s32.totalorder %s95, 0
    %s98 = sadd.s32 %s97, 1
    %s99 = scalar_select %p96, %s97, %s98
    %p102 = pneg %p96
    %p103 = scmp.eq.s32.totalorder %s9, 1
    %p104 = por %p102, %p103
    %p105 = scmp.ne.s32.totalorder %s97, %s100
    %p106 = scmp.eq.s32.totalorder %s9, 0
    %p107 = por %p105, %p106
    %p108 = scmp.ne.s32.totalorder %s97, %s100
    %p109 = scmp.eq.s32.totalorder %s14, 1
    %p110 = por %p108, %p109
    %p111 = scmp.ne.s32.totalorder %s100, %s101
    %p112 = scmp.eq.s32.totalorder %s14, 0
    %p113 = por %p111, %p112
    %p114 = scmp.ne.s32.totalorder %s100, %s101
    %p115 = scmp.eq.s32.totalorder %s15, 1
    %p116 = por %p114, %p115
    %p118 = scmp.ne.s32.totalorder %s101, %s117
    %p119 = scmp.eq.s32.totalorder %s15, 0
    %p120 = por %p118, %p119
    %p121 = scmp.le.s32.totalorder 1, %s9
    %p122 = scmp.lt.s32.totalorder %s9, 3
    %p123 = pnand %p121, %p122
    %p124 = pneg %p123
    // Predicated region
    $region9: #{_lambda_.7} parent=5 // pred_check
      _
    $region10: #{_lambda_.7} parent=5 // pred_check_branch
      %126 = sbr.rel (%p123) target = $region12
    $region11: #{_lambda_.7} parent=5 // pred_region
      %s127 = ssub.s32 %s9, 1
    $region12: #{_lambda_.7} parent=5 // pred_fallthru
      _
    %p128 = scmp.lt.s32.totalorder %s9, 2
    // Predicated region
    $region13: #{_lambda_.7} parent=5 // pred_check
      %p129 = pneg %p128
    $region14: #{_lambda_.7} parent=5 // pred_check_branch
      %131 = sbr.rel (%p129) target = $region16
    $region15: #{_lambda_.7} parent=5 // pred_region
      // Predicated region
      $region17: #{_lambda_.7} parent=15 // pred_check
        %p132 = pneg %p29
      $region18: #{_lambda_.7} parent=15 // pred_check_branch
        %134 = sbr.rel (%p132) target = $region20
      $region19: #{_lambda_.7} parent=15 // pred_region
        %s135 = smul.u32 32, %s9
        %p136 = scmp.lt.s32.totalorder %s135, 63
        %s137 = scalar_select %p136, %s135, 63
        %s138 = smul.addr %s137, 2
        %s139 = smul.addr %s138, 8
        %s140 = scalar_lea.vmem %s0, %s139
        %s141 = smul.u32 32, %s9
      $region20: #{_lambda_.7} parent=15 // pred_fallthru
        _
      // Predicated region
      $region21: #{_lambda_.7} parent=15 // pred_check
        %p142 = pneg %p55
      $region22: #{_lambda_.7} parent=15 // pred_check_branch
        %144 = sbr.rel (%p142) target = $region24
      $region23: #{_lambda_.7} parent=15 // pred_region
        %p145 = scmp.lt.s32.totalorder %s9, 1
        %s146 = scalar_select %p145, %s9, 1
        %s147 = smul.addr %s146, 6
        %s148 = smul.addr %s147, 8
        %s149 = scalar_lea.vmem %s1, %s148
      $region24: #{_lambda_.7} parent=15 // pred_fallthru
        _
      // Predicated region
      $region25: #{_lambda_.7} parent=15 // pred_check
        %p150 = pneg %p81
      $region26: #{_lambda_.7} parent=15 // pred_check_branch
        %152 = sbr.rel (%p150) target = $region28
      $region27: #{_lambda_.7} parent=15 // pred_region
        %p153 = scmp.lt.s32.totalorder %s9, 1
        %s154 = scalar_select %p153, %s9, 1
        %s155 = smul.addr %s154, 4
        %s156 = scalar_lea.vmem %s2, %s155
      $region28: #{_lambda_.7} parent=15 // pred_fallthru
        _
    $region16: #{_lambda_.7} parent=5 // pred_fallthru
      _
    %p157 = scmp.le.s32.totalorder 1, %s9
    %p158 = scmp.lt.s32.totalorder %s9, 3
    %p159 = pnand %p157, %p158
    %p160 = pneg %p159
    // Predicated region
    $region29: #{_lambda_.7} parent=5 // pred_check
      _
    $region30: #{_lambda_.7} parent=5 // pred_check_branch
      %162 = sbr.rel (%p159) target = $region32
    $region31: #{_lambda_.7} parent=5 // pred_region
      %s163 = ssub.s32 %s9, 1
      %s164 = smul.u32 32, %s14
      %p165 = scmp.lt.s32.totalorder %s164, 63
      %s166 = scalar_select %p165, %s164, 63
      %s167 = smul.addr %s166, 2
      %s168 = smul.addr %s167, 8
      %s169 = scalar_lea.vmem %s0, %s168
      %p170 = pneg %p35
      %p171 = pneg %p32
      %p172 = scmp.lt.s32.totalorder %s14, 1
      %s173 = scalar_select %p172, %s14, 1
      %s174 = smul.addr %s173, 6
      %s175 = smul.addr %s174, 8
      %s176 = scalar_lea.vmem %s1, %s175
      %p177 = pneg %p61
      %p178 = pneg %p58
      %p179 = scmp.lt.s32.totalorder %s14, 1
      %s180 = scalar_select %p179, %s14, 1
      %s181 = smul.addr %s180, 4
      %s182 = scalar_lea.vmem %s2, %s181
      %p183 = pneg %p87
      %p184 = pneg %p84
      %p185 = pneg %p113
      %p186 = pneg %p110
      %s187 = smul.u32 32, %s14
      %p188 = scmp.lt.s32.totalorder %s187, 63
      %s189 = scalar_select %p188, %s187, 63
      %s190 = smul.addr %s189, 8
      %s191 = scalar_lea.vmem %s3, %s190
      %s192 = smul.u32 32, %s14
      %p193 = scmp.lt.s32.totalorder %s192, 63
      %s194 = scalar_select %p193, %s192, 63
      %s195 = smul.addr %s194, 2
      %s196 = smul.addr %s195, 8
      %s197 = scalar_lea.vmem %s0, %s196
      %s198 = smul.u32 32, %s14
      %p199 = scmp.lt.s32.totalorder %s14, 1
      %s200 = scalar_select %p199, %s14, 1
      %s201 = smul.addr %s200, 6
      %s202 = smul.addr %s201, 8
      %s203 = scalar_lea.vmem %s1, %s202
      %p204 = scmp.lt.s32.totalorder %s14, 1
      %s205 = scalar_select %p204, %s14, 1
      %s206 = smul.addr %s205, 4
      %s207 = scalar_lea.vmem %s2, %s206
      %s208 = smul.u32 32, %s14
      %p209 = scmp.lt.s32.totalorder %s208, 63
      %s210 = scalar_select %p209, %s208, 63
      %s211 = smul.addr %s210, 8
      %s212 = scalar_lea.vmem %s3, %s211
      %s213 = smul.u32 32, %s14
      %v214 = vld [vmem:[%s197] sm:$0xff]
      %v215 = vld [vmem:[%s197 + $0x8] sm:$0xff]
      %v216 = vld [vmem:[%s197 + $0x10] sm:$0xff]
      %v217 = vld [vmem:[%s197 + $0x18] sm:$0xff]
      %v218 = vld [vmem:[%s197 + $0x20] sm:$0xff]
      %v219 = vld [vmem:[%s197 + $0x28] sm:$0xff]
      %v220 = vld [vmem:[%s197 + $0x30] sm:$0xff]
      %v221 = vld [vmem:[%s197 + $0x38] sm:$0xff]
      %v222 = vld [vmem:[%s197 + $0x40] sm:$0xff]
      %v223 = vld [vmem:[%s197 + $0x48] sm:$0xff]
      %v224 = vld [vmem:[%s197 + $0x50] sm:$0xff]
      %v225 = vld [vmem:[%s197 + $0x58] sm:$0xff]
      %v226 = vld [vmem:[%s197 + $0x60] sm:$0xff]
      %v227 = vld [vmem:[%s197 + $0x68] sm:$0xff]
      %v228 = vld [vmem:[%s197 + $0x70] sm:$0xff]
      %v229 = vld [vmem:[%s197 + $0x78] sm:$0xff]
      %v230 = vld [vmem:[%s197 + $0x80] sm:$0xff]
      %v231 = vld [vmem:[%s197 + $0x88] sm:$0xff]
      %v232 = vld [vmem:[%s197 + $0x90] sm:$0xff]
      %v233 = vld [vmem:[%s197 + $0x98] sm:$0xff]
      %v234 = vld [vmem:[%s197 + $0xa0] sm:$0xff]
      %v235 = vld [vmem:[%s197 + $0xa8] sm:$0xff]
      %v236 = vld [vmem:[%s197 + $0xb0] sm:$0xff]
      %v237 = vld [vmem:[%s197 + $0xb8] sm:$0xff]
      %v238 = vld [vmem:[%s197 + $0xc0] sm:$0xff]
      %v239 = vld [vmem:[%s197 + $0xc8] sm:$0xff]
      %v240 = vld [vmem:[%s197 + $0xd0] sm:$0xff]
      %v241 = vld [vmem:[%s197 + $0xd8] sm:$0xff]
      %v242 = vld [vmem:[%s197 + $0xe0] sm:$0xff]
      %v243 = vld [vmem:[%s197 + $0xe8] sm:$0xff]
      %v244 = vld [vmem:[%s197 + $0xf0] sm:$0xff]
      %v245 = vld [vmem:[%s197 + $0xf8] sm:$0xff]
      %v246 = vld [vmem:[%s197 + $0x100] sm:$0xff]
      %v247 = vld [vmem:[%s197 + $0x108] sm:$0xff]
      %v248 = vld [vmem:[%s197 + $0x110] sm:$0xff]
      %v249 = vld [vmem:[%s197 + $0x118] sm:$0xff]
      %v250 = vld [vmem:[%s197 + $0x120] sm:$0xff]
      %v251 = vld [vmem:[%s197 + $0x128] sm:$0xff]
      %v252 = vld [vmem:[%s197 + $0x130] sm:$0xff]
      %v253 = vld [vmem:[%s197 + $0x138] sm:$0xff]
      %v254 = vld [vmem:[%s197 + $0x140] sm:$0xff]
      %v255 = vld [vmem:[%s197 + $0x148] sm:$0xff]
      %v256 = vld [vmem:[%s197 + $0x150] sm:$0xff]
      %v257 = vld [vmem:[%s197 + $0x158] sm:$0xff]
      %v258 = vld [vmem:[%s197 + $0x160] sm:$0xff]
      %v259 = vld [vmem:[%s197 + $0x168] sm:$0xff]
      %v260 = vld [vmem:[%s197 + $0x170] sm:$0xff]
      %v261 = vld [vmem:[%s197 + $0x178] sm:$0xff]
      %v262 = vld [vmem:[%s197 + $0x180] sm:$0xff]
      %v263 = vld [vmem:[%s197 + $0x188] sm:$0xff]
      %v264 = vld [vmem:[%s197 + $0x190] sm:$0xff]
      %v265 = vld [vmem:[%s197 + $0x198] sm:$0xff]
      %v266 = vld [vmem:[%s197 + $0x1a0] sm:$0xff]
      %v267 = vld [vmem:[%s197 + $0x1a8] sm:$0xff]
      %v268 = vld [vmem:[%s197 + $0x1b0] sm:$0xff]
      %v269 = vld [vmem:[%s197 + $0x1b8] sm:$0xff]
      %v270 = vld [vmem:[%s197 + $0x1c0] sm:$0xff]
      %v271 = vld [vmem:[%s197 + $0x1c8] sm:$0xff]
      %v272 = vld [vmem:[%s197 + $0x1d0] sm:$0xff]
      %v273 = vld [vmem:[%s197 + $0x1d8] sm:$0xff]
      %v274 = vld [vmem:[%s197 + $0x1e0] sm:$0xff]
      %v275 = vld [vmem:[%s197 + $0x1e8] sm:$0xff]
      %v276 = vld [vmem:[%s197 + $0x1f0] sm:$0xff]
      %v277 = vld [vmem:[%s197 + $0x1f8] sm:$0xff]
      %v278 = vld [vmem:[%s203] sm:$0xff]
      %v279 = vld [vmem:[%s203 + $0x8] sm:$0xff]
      %v280 = vld [vmem:[%s203 + $0x10] sm:$0xff]
      %v281 = vld [vmem:[%s203 + $0x18] sm:$0xff]
      %v282 = vld [vmem:[%s203 + $0x20] sm:$0xff]
      %v283 = vld [vmem:[%s203 + $0x28] sm:$0xff]
      %v284 = vld [vmem:[%s207] sm:$0xf]
      %v349 = vrot.slane %v214, 7
      %v350 = vrot.slane %v215, 7
      %v351 = vrot.slane %v216, 7
      %v352 = vrot.slane %v217, 7
      %v353 = vrot.slane %v218, 7
      %v354 = vrot.slane %v219, 7
      %v355 = vrot.slane %v220, 7
      %v356 = vrot.slane %v221, 7
      %v357 = vrot.slane %v222, 7
      %v358 = vrot.slane %v223, 7
      %v359 = vrot.slane %v224, 7
      %v360 = vrot.slane %v225, 7
      %v361 = vrot.slane %v226, 7
      %v362 = vrot.slane %v227, 7
      %v363 = vrot.slane %v228, 7
      %v364 = vrot.slane %v229, 7
      %v365 = vrot.slane %v230, 7
      %v366 = vrot.slane %v231, 7
      %v367 = vrot.slane %v232, 7
      %v368 = vrot.slane %v233, 7
      %v369 = vrot.slane %v234, 7
      %v370 = vrot.slane %v235, 7
      %v371 = vrot.slane %v236, 7
      %v372 = vrot.slane %v237, 7
      %v373 = vrot.slane %v238, 7
      %v374 = vrot.slane %v239, 7
      %v375 = vrot.slane %v240, 7
      %v376 = vrot.slane %v241, 7
      %v377 = vrot.slane %v242, 7
      %v378 = vrot.slane %v243, 7
      %v379 = vrot.slane %v244, 7
      %v380 = vrot.slane %v245, 7
      %v381 = vrot.slane %v246, 7
      %v382 = vrot.slane %v247, 7
      %v383 = vrot.slane %v248, 7
      %v384 = vrot.slane %v249, 7
      %v385 = vrot.slane %v250, 7
      %v386 = vrot.slane %v251, 7
      %v387 = vrot.slane %v252, 7
      %v388 = vrot.slane %v253, 7
      %v389 = vrot.slane %v254, 7
      %v390 = vrot.slane %v255, 7
      %v391 = vrot.slane %v256, 7
      %v392 = vrot.slane %v257, 7
      %v393 = vrot.slane %v258, 7
      %v394 = vrot.slane %v259, 7
      %v395 = vrot.slane %v260, 7
      %v396 = vrot.slane %v261, 7
      %v397 = vrot.slane %v262, 7
      %v398 = vrot.slane %v263, 7
      %v399 = vrot.slane %v264, 7
      %v400 = vrot.slane %v265, 7
      %v401 = vrot.slane %v266, 7
      %v402 = vrot.slane %v267, 7
      %v403 = vrot.slane %v268, 7
      %v404 = vrot.slane %v269, 7
      %v405 = vrot.slane %v270, 7
      %v406 = vrot.slane %v271, 7
      %v407 = vrot.slane %v272, 7
      %v408 = vrot.slane %v273, 7
      %v409 = vrot.slane %v274, 7
      %v410 = vrot.slane %v275, 7
      %v411 = vrot.slane %v276, 7
      %v412 = vrot.slane %v277, 7
      %vm477 = vcmask 1040384
      %v478 = vsel %vm477, 0.0, %v349
      %v479 = vsel %vm477, 0.0, %v350
      %v480 = vsel %vm477, 0.0, %v351
      %v481 = vsel %vm477, 0.0, %v352
      %v482 = vsel %vm477, 0.0, %v353
      %v483 = vsel %vm477, 0.0, %v354
      %v484 = vsel %vm477, 0.0, %v355
      %v485 = vsel %vm477, 0.0, %v356
      %v486 = vsel %vm477, 0.0, %v357
      %v487 = vsel %vm477, 0.0, %v358
      %v488 = vsel %vm477, 0.0, %v359
      %v489 = vsel %vm477, 0.0, %v360
      %v490 = vsel %vm477, 0.0, %v361
      %v491 = vsel %vm477, 0.0, %v362
      %v492 = vsel %vm477, 0.0, %v363
      %v493 = vsel %vm477, 0.0, %v364
      %v494 = vsel %vm477, 0.0, %v365
      %v495 = vsel %vm477, 0.0, %v366
      %v496 = vsel %vm477, 0.0, %v367
      %v497 = vsel %vm477, 0.0, %v368
      %v498 = vsel %vm477, 0.0, %v369
      %v499 = vsel %vm477, 0.0, %v370
      %v500 = vsel %vm477, 0.0, %v371
      %v501 = vsel %vm477, 0.0, %v372
      %v502 = vsel %vm477, 0.0, %v373
      %v503 = vsel %vm477, 0.0, %v374
      %v504 = vsel %vm477, 0.0, %v375
      %v505 = vsel %vm477, 0.0, %v376
      %v506 = vsel %vm477, 0.0, %v377
      %v507 = vsel %vm477, 0.0, %v378
      %v508 = vsel %vm477, 0.0, %v379
      %v509 = vsel %vm477, 0.0, %v380
      %v510 = vsel %vm477, 0.0, %v381
      %v511 = vsel %vm477, 0.0, %v382
      %v512 = vsel %vm477, 0.0, %v383
      %v513 = vsel %vm477, 0.0, %v384
      %v514 = vsel %vm477, 0.0, %v385
      %v515 = vsel %vm477, 0.0, %v386
      %v516 = vsel %vm477, 0.0, %v387
      %v517 = vsel %vm477, 0.0, %v388
      %v518 = vsel %vm477, 0.0, %v389
      %v519 = vsel %vm477, 0.0, %v390
      %v520 = vsel %vm477, 0.0, %v391
      %v521 = vsel %vm477, 0.0, %v392
      %v522 = vsel %vm477, 0.0, %v393
      %v523 = vsel %vm477, 0.0, %v394
      %v524 = vsel %vm477, 0.0, %v395
      %v525 = vsel %vm477, 0.0, %v396
      %v526 = vsel %vm477, 0.0, %v397
      %v527 = vsel %vm477, 0.0, %v398
      %v528 = vsel %vm477, 0.0, %v399
      %v529 = vsel %vm477, 0.0, %v400
      %v530 = vsel %vm477, 0.0, %v401
      %v531 = vsel %vm477, 0.0, %v402
      %v532 = vsel %vm477, 0.0, %v403
      %v533 = vsel %vm477, 0.0, %v404
      %v534 = vsel %vm477, 0.0, %v405
      %v535 = vsel %vm477, 0.0, %v406
      %v536 = vsel %vm477, 0.0, %v407
      %v537 = vsel %vm477, 0.0, %v408
      %v538 = vsel %vm477, 0.0, %v409
      %v539 = vsel %vm477, 0.0, %v410
      %v540 = vsel %vm477, 0.0, %v411
      %v541 = vsel %vm477, 0.0, %v412
      %v542 = vsel %vm477, %v349, 0.0
      %v543 = vsel %vm477, %v350, 0.0
      %v544 = vsel %vm477, %v351, 0.0
      %v545 = vsel %vm477, %v352, 0.0
      %v546 = vsel %vm477, %v353, 0.0
      %v547 = vsel %vm477, %v354, 0.0
      %v548 = vsel %vm477, %v355, 0.0
      %v549 = vsel %vm477, %v356, 0.0
      %v550 = vsel %vm477, %v357, 0.0
      %v551 = vsel %vm477, %v358, 0.0
      %v552 = vsel %vm477, %v359, 0.0
      %v553 = vsel %vm477, %v360, 0.0
      %v554 = vsel %vm477, %v361, 0.0
      %v555 = vsel %vm477, %v362, 0.0
      %v556 = vsel %vm477, %v363, 0.0
      %v557 = vsel %vm477, %v364, 0.0
      %v558 = vsel %vm477, %v365, 0.0
      %v559 = vsel %vm477, %v366, 0.0
      %v560 = vsel %vm477, %v367, 0.0
      %v561 = vsel %vm477, %v368, 0.0
      %v562 = vsel %vm477, %v369, 0.0
      %v563 = vsel %vm477, %v370, 0.0
      %v564 = vsel %vm477, %v371, 0.0
      %v565 = vsel %vm477, %v372, 0.0
      %v566 = vsel %vm477, %v373, 0.0
      %v567 = vsel %vm477, %v374, 0.0
      %v568 = vsel %vm477, %v375, 0.0
      %v569 = vsel %vm477, %v376, 0.0
      %v570 = vsel %vm477, %v377, 0.0
      %v571 = vsel %vm477, %v378, 0.0
      %v572 = vsel %vm477, %v379, 0.0
      %v573 = vsel %vm477, %v380, 0.0
      %v574 = vsel %vm477, %v381, 0.0
      %v575 = vsel %vm477, %v382, 0.0
      %v576 = vsel %vm477, %v383, 0.0
      %v577 = vsel %vm477, %v384, 0.0
      %v578 = vsel %vm477, %v385, 0.0
      %v579 = vsel %vm477, %v386, 0.0
      %v580 = vsel %vm477, %v387, 0.0
      %v581 = vsel %vm477, %v388, 0.0
      %v582 = vsel %vm477, %v389, 0.0
      %v583 = vsel %vm477, %v390, 0.0
      %v584 = vsel %vm477, %v391, 0.0
      %v585 = vsel %vm477, %v392, 0.0
      %v586 = vsel %vm477, %v393, 0.0
      %v587 = vsel %vm477, %v394, 0.0
      %v588 = vsel %vm477, %v395, 0.0
      %v589 = vsel %vm477, %v396, 0.0
      %v590 = vsel %vm477, %v397, 0.0
      %v591 = vsel %vm477, %v398, 0.0
      %v592 = vsel %vm477, %v399, 0.0
      %v593 = vsel %vm477, %v400, 0.0
      %v594 = vsel %vm477, %v401, 0.0
      %v595 = vsel %vm477, %v402, 0.0
      %v596 = vsel %vm477, %v403, 0.0
      %v597 = vsel %vm477, %v404, 0.0
      %v598 = vsel %vm477, %v405, 0.0
      %v599 = vsel %vm477, %v406, 0.0
      %v600 = vsel %vm477, %v407, 0.0
      %v601 = vsel %vm477, %v408, 0.0
      %v602 = vsel %vm477, %v409, 0.0
      %v603 = vsel %vm477, %v410, 0.0
      %v604 = vsel %vm477, %v411, 0.0
      %v605 = vsel %vm477, %v412, 0.0
      %vm670 = vcmask 1046528
      %v671 = vrot.slane %v478, 1
      %v672 = vrot.slane %v542, 1
      %v673 = vsel %vm670, %v671, %v672
      %v674 = vrot.slane %v480, 1
      %v675 = vrot.slane %v544, 1
      %v676 = vsel %vm670, %v674, %v675
      %v677 = vrot.slane %v482, 1
      %v678 = vrot.slane %v546, 1
      %v679 = vsel %vm670, %v677, %v678
      %v680 = vrot.slane %v484, 1
      %v681 = vrot.slane %v548, 1
      %v682 = vsel %vm670, %v680, %v681
      %v683 = vrot.slane %v486, 1
      %v684 = vrot.slane %v550, 1
      %v685 = vsel %vm670, %v683, %v684
      %v686 = vrot.slane %v488, 1
      %v687 = vrot.slane %v552, 1
      %v688 = vsel %vm670, %v686, %v687
      %v689 = vrot.slane %v490, 1
      %v690 = vrot.slane %v554, 1
      %v691 = vsel %vm670, %v689, %v690
      %v692 = vrot.slane %v492, 1
      %v693 = vrot.slane %v556, 1
      %v694 = vsel %vm670, %v692, %v693
      %v695 = vrot.slane %v494, 1
      %v696 = vrot.slane %v558, 1
      %v697 = vsel %vm670, %v695, %v696
      %v698 = vrot.slane %v496, 1
      %v699 = vrot.slane %v560, 1
      %v700 = vsel %vm670, %v698, %v699
      %v701 = vrot.slane %v498, 1
      %v702 = vrot.slane %v562, 1
      %v703 = vsel %vm670, %v701, %v702
      %v704 = vrot.slane %v500, 1
      %v705 = vrot.slane %v564, 1
      %v706 = vsel %vm670, %v704, %v705
      %v707 = vrot.slane %v502, 1
      %v708 = vrot.slane %v566, 1
      %v709 = vsel %vm670, %v707, %v708
      %v710 = vrot.slane %v504, 1
      %v711 = vrot.slane %v568, 1
      %v712 = vsel %vm670, %v710, %v711
      %v713 = vrot.slane %v506, 1
      %v714 = vrot.slane %v570, 1
      %v715 = vsel %vm670, %v713, %v714
      %v716 = vrot.slane %v508, 1
      %v717 = vrot.slane %v572, 1
      %v718 = vsel %vm670, %v716, %v717
      %v719 = vrot.slane %v510, 1
      %v720 = vrot.slane %v574, 1
      %v721 = vsel %vm670, %v719, %v720
      %v722 = vrot.slane %v512, 1
      %v723 = vrot.slane %v576, 1
      %v724 = vsel %vm670, %v722, %v723
      %v725 = vrot.slane %v514, 1
      %v726 = vrot.slane %v578, 1
      %v727 = vsel %vm670, %v725, %v726
      %v728 = vrot.slane %v516, 1
      %v729 = vrot.slane %v580, 1
      %v730 = vsel %vm670, %v728, %v729
      %v731 = vrot.slane %v518, 1
      %v732 = vrot.slane %v582, 1
      %v733 = vsel %vm670, %v731, %v732
      %v734 = vrot.slane %v520, 1
      %v735 = vrot.slane %v584, 1
      %v736 = vsel %vm670, %v734, %v735
      %v737 = vrot.slane %v522, 1
      %v738 = vrot.slane %v586, 1
      %v739 = vsel %vm670, %v737, %v738
      %v740 = vrot.slane %v524, 1
      %v741 = vrot.slane %v588, 1
      %v742 = vsel %vm670, %v740, %v741
      %v743 = vrot.slane %v526, 1
      %v744 = vrot.slane %v590, 1
      %v745 = vsel %vm670, %v743, %v744
      %v746 = vrot.slane %v528, 1
      %v747 = vrot.slane %v592, 1
      %v748 = vsel %vm670, %v746, %v747
      %v749 = vrot.slane %v530, 1
      %v750 = vrot.slane %v594, 1
      %v751 = vsel %vm670, %v749, %v750
      %v752 = vrot.slane %v532, 1
      %v753 = vrot.slane %v596, 1
      %v754 = vsel %vm670, %v752, %v753
      %v755 = vrot.slane %v534, 1
      %v756 = vrot.slane %v598, 1
      %v757 = vsel %vm670, %v755, %v756
      %v758 = vrot.slane %v536, 1
      %v759 = vrot.slane %v600, 1
      %v760 = vsel %vm670, %v758, %v759
      %v761 = vrot.slane %v538, 1
      %v762 = vrot.slane %v602, 1
      %v763 = vsel %vm670, %v761, %v762
      %v764 = vrot.slane %v540, 1
      %v765 = vrot.slane %v604, 1
      %v766 = vsel %vm670, %v764, %v765
      %vm767 = vcmask 1045504
      %v768 = vrot.slane %v478, 2
      %v769 = vrot.slane %v542, 2
      %v770 = vsel %vm767, %v768, %v769
      %v771 = vrot.slane %v480, 2
      %v772 = vrot.slane %v544, 2
      %v773 = vsel %vm767, %v771, %v772
      %v774 = vrot.slane %v482, 2
      %v775 = vrot.slane %v546, 2
      %v776 = vsel %vm767, %v774, %v775
      %v777 = vrot.slane %v484, 2
      %v778 = vrot.slane %v548, 2
      %v779 = vsel %vm767, %v777, %v778
      %v780 = vrot.slane %v486, 2
      %v781 = vrot.slane %v550, 2
      %v782 = vsel %vm767, %v780, %v781
      %v783 = vrot.slane %v488, 2
      %v784 = vrot.slane %v552, 2
      %v785 = vsel %vm767, %v783, %v784
      %v786 = vrot.slane %v490, 2
      %v787 = vrot.slane %v554, 2
      %v788 = vsel %vm767, %v786, %v787
      %v789 = vrot.slane %v492, 2
      %v790 = vrot.slane %v556, 2
      %v791 = vsel %vm767, %v789, %v790
      %v792 = vrot.slane %v494, 2
      %v793 = vrot.slane %v558, 2
      %v794 = vsel %vm767, %v792, %v793
      %v795 = vrot.slane %v496, 2
      %v796 = vrot.slane %v560, 2
      %v797 = vsel %vm767, %v795, %v796
      %v798 = vrot.slane %v498, 2
      %v799 = vrot.slane %v562, 2
      %v800 = vsel %vm767, %v798, %v799
      %v801 = vrot.slane %v500, 2
      %v802 = vrot.slane %v564, 2
      %v803 = vsel %vm767, %v801, %v802
      %v804 = vrot.slane %v502, 2
      %v805 = vrot.slane %v566, 2
      %v806 = vsel %vm767, %v804, %v805
      %v807 = vrot.slane %v504, 2
      %v808 = vrot.slane %v568, 2
      %v809 = vsel %vm767, %v807, %v808
      %v810 = vrot.slane %v506, 2
      %v811 = vrot.slane %v570, 2
      %v812 = vsel %vm767, %v810, %v811
      %v813 = vrot.slane %v508, 2
      %v814 = vrot.slane %v572, 2
      %v815 = vsel %vm767, %v813, %v814
      %v816 = vrot.slane %v510, 2
      %v817 = vrot.slane %v574, 2
      %v818 = vsel %vm767, %v816, %v817
      %v819 = vrot.slane %v512, 2
      %v820 = vrot.slane %v576, 2
      %v821 = vsel %vm767, %v819, %v820
      %v822 = vrot.slane %v514, 2
      %v823 = vrot.slane %v578, 2
      %v824 = vsel %vm767, %v822, %v823
      %v825 = vrot.slane %v516, 2
      %v826 = vrot.slane %v580, 2
      %v827 = vsel %vm767, %v825, %v826
      %v828 = vrot.slane %v518, 2
      %v829 = vrot.slane %v582, 2
      %v830 = vsel %vm767, %v828, %v829
      %v831 = vrot.slane %v520, 2
      %v832 = vrot.slane %v584, 2
      %v833 = vsel %vm767, %v831, %v832
      %v834 = vrot.slane %v522, 2
      %v835 = vrot.slane %v586, 2
      %v836 = vsel %vm767, %v834, %v835
      %v837 = vrot.slane %v524, 2
      %v838 = vrot.slane %v588, 2
      %v839 = vsel %vm767, %v837, %v838
      %v840 = vrot.slane %v526, 2
      %v841 = vrot.slane %v590, 2
      %v842 = vsel %vm767, %v840, %v841
      %v843 = vrot.slane %v528, 2
      %v844 = vrot.slane %v592, 2
      %v845 = vsel %vm767, %v843, %v844
      %v846 = vrot.slane %v530, 2
      %v847 = vrot.slane %v594, 2
      %v848 = vsel %vm767, %v846, %v847
      %v849 = vrot.slane %v532, 2
      %v850 = vrot.slane %v596, 2
      %v851 = vsel %vm767, %v849, %v850
      %v852 = vrot.slane %v534, 2
      %v853 = vrot.slane %v598, 2
      %v854 = vsel %vm767, %v852, %v853
      %v855 = vrot.slane %v536, 2
      %v856 = vrot.slane %v600, 2
      %v857 = vsel %vm767, %v855, %v856
      %v858 = vrot.slane %v538, 2
      %v859 = vrot.slane %v602, 2
      %v860 = vsel %vm767, %v858, %v859
      %v861 = vrot.slane %v540, 2
      %v862 = vrot.slane %v604, 2
      %v863 = vsel %vm767, %v861, %v862
      %v928 = vrot.slane %v479, 1
      %v929 = vrot.slane %v543, 1
      %v930 = vsel %vm670, %v928, %v929
      %v931 = vrot.slane %v481, 1
      %v932 = vrot.slane %v545, 1
      %v933 = vsel %vm670, %v931, %v932
      %v934 = vrot.slane %v483, 1
      %v935 = vrot.slane %v547, 1
      %v936 = vsel %vm670, %v934, %v935
      %v937 = vrot.slane %v485, 1
      %v938 = vrot.slane %v549, 1
      %v939 = vsel %vm670, %v937, %v938
      %v940 = vrot.slane %v487, 1
      %v941 = vrot.slane %v551, 1
      %v942 = vsel %vm670, %v940, %v941
      %v943 = vrot.slane %v489, 1
      %v944 = vrot.slane %v553, 1
      %v945 = vsel %vm670, %v943, %v944
      %v946 = vrot.slane %v491, 1
      %v947 = vrot.slane %v555, 1
      %v948 = vsel %vm670, %v946, %v947
      %v949 = vrot.slane %v493, 1
      %v950 = vrot.slane %v557, 1
      %v951 = vsel %vm670, %v949, %v950
      %v952 = vrot.slane %v495, 1
      %v953 = vrot.slane %v559, 1
      %v954 = vsel %vm670, %v952, %v953
      %v955 = vrot.slane %v497, 1
      %v956 = vrot.slane %v561, 1
      %v957 = vsel %vm670, %v955, %v956
      %v958 = vrot.slane %v499, 1
      %v959 = vrot.slane %v563, 1
      %v960 = vsel %vm670, %v958, %v959
      %v961 = vrot.slane %v501, 1
      %v962 = vrot.slane %v565, 1
      %v963 = vsel %vm670, %v961, %v962
      %v964 = vrot.slane %v503, 1
      %v965 = vrot.slane %v567, 1
      %v966 = vsel %vm670, %v964, %v965
      %v967 = vrot.slane %v505, 1
      %v968 = vrot.slane %v569, 1
      %v969 = vsel %vm670, %v967, %v968
      %v970 = vrot.slane %v507, 1
      %v971 = vrot.slane %v571, 1
      %v972 = vsel %vm670, %v970, %v971
      %v973 = vrot.slane %v509, 1
      %v974 = vrot.slane %v573, 1
      %v975 = vsel %vm670, %v973, %v974
      %v976 = vrot.slane %v511, 1
      %v977 = vrot.slane %v575, 1
      %v978 = vsel %vm670, %v976, %v977
      %v979 = vrot.slane %v513, 1
      %v980 = vrot.slane %v577, 1
      %v981 = vsel %vm670, %v979, %v980
      %v982 = vrot.slane %v515, 1
      %v983 = vrot.slane %v579, 1
      %v984 = vsel %vm670, %v982, %v983
      %v985 = vrot.slane %v517, 1
      %v986 = vrot.slane %v581, 1
      %v987 = vsel %vm670, %v985, %v986
      %v988 = vrot.slane %v519, 1
      %v989 = vrot.slane %v583, 1
      %v990 = vsel %vm670, %v988, %v989
      %v991 = vrot.slane %v521, 1
      %v992 = vrot.slane %v585, 1
      %v993 = vsel %vm670, %v991, %v992
      %v994 = vrot.slane %v523, 1
      %v995 = vrot.slane %v587, 1
      %v996 = vsel %vm670, %v994, %v995
      %v997 = vrot.slane %v525, 1
      %v998 = vrot.slane %v589, 1
      %v999 = vsel %vm670, %v997, %v998
      %v1000 = vrot.slane %v527, 1
      %v1001 = vrot.slane %v591, 1
      %v1002 = vsel %vm670, %v1000, %v1001
      %v1003 = vrot.slane %v529, 1
      %v1004 = vrot.slane %v593, 1
      %v1005 = vsel %vm670, %v1003, %v1004
      %v1006 = vrot.slane %v531, 1
      %v1007 = vrot.slane %v595, 1
      %v1008 = vsel %vm670, %v1006, %v1007
      %v1009 = vrot.slane %v533, 1
      %v1010 = vrot.slane %v597, 1
      %v1011 = vsel %vm670, %v1009, %v1010
      %v1012 = vrot.slane %v535, 1
      %v1013 = vrot.slane %v599, 1
      %v1014 = vsel %vm670, %v1012, %v1013
      %v1015 = vrot.slane %v537, 1
      %v1016 = vrot.slane %v601, 1
      %v1017 = vsel %vm670, %v1015, %v1016
      %v1018 = vrot.slane %v539, 1
      %v1019 = vrot.slane %v603, 1
      %v1020 = vsel %vm670, %v1018, %v1019
      %v1021 = vrot.slane %v541, 1
      %v1022 = vrot.slane %v605, 1
      %v1023 = vsel %vm670, %v1021, %v1022
      %v1024 = vrot.slane %v479, 2
      %v1025 = vrot.slane %v543, 2
      %v1026 = vsel %vm767, %v1024, %v1025
      %v1027 = vrot.slane %v481, 2
      %v1028 = vrot.slane %v545, 2
      %v1029 = vsel %vm767, %v1027, %v1028
      %v1030 = vrot.slane %v483, 2
      %v1031 = vrot.slane %v547, 2
      %v1032 = vsel %vm767, %v1030, %v1031
      %v1033 = vrot.slane %v485, 2
      %v1034 = vrot.slane %v549, 2
      %v1035 = vsel %vm767, %v1033, %v1034
      %v1036 = vrot.slane %v487, 2
      %v1037 = vrot.slane %v551, 2
      %v1038 = vsel %vm767, %v1036, %v1037
      %v1039 = vrot.slane %v489, 2
      %v1040 = vrot.slane %v553, 2
      %v1041 = vsel %vm767, %v1039, %v1040
      %v1042 = vrot.slane %v491, 2
      %v1043 = vrot.slane %v555, 2
      %v1044 = vsel %vm767, %v1042, %v1043
      %v1045 = vrot.slane %v493, 2
      %v1046 = vrot.slane %v557, 2
      %v1047 = vsel %vm767, %v1045, %v1046
      %v1048 = vrot.slane %v495, 2
      %v1049 = vrot.slane %v559, 2
      %v1050 = vsel %vm767, %v1048, %v1049
      %v1051 = vrot.slane %v497, 2
      %v1052 = vrot.slane %v561, 2
      %v1053 = vsel %vm767, %v1051, %v1052
      %v1054 = vrot.slane %v499, 2
      %v1055 = vrot.slane %v563, 2
      %v1056 = vsel %vm767, %v1054, %v1055
      %v1057 = vrot.slane %v501, 2
      %v1058 = vrot.slane %v565, 2
      %v1059 = vsel %vm767, %v1057, %v1058
      %v1060 = vrot.slane %v503, 2
      %v1061 = vrot.slane %v567, 2
      %v1062 = vsel %vm767, %v1060, %v1061
      %v1063 = vrot.slane %v505, 2
      %v1064 = vrot.slane %v569, 2
      %v1065 = vsel %vm767, %v1063, %v1064
      %v1066 = vrot.slane %v507, 2
      %v1067 = vrot.slane %v571, 2
      %v1068 = vsel %vm767, %v1066, %v1067
      %v1069 = vrot.slane %v509, 2
      %v1070 = vrot.slane %v573, 2
      %v1071 = vsel %vm767, %v1069, %v1070
      %v1072 = vrot.slane %v511, 2
      %v1073 = vrot.slane %v575, 2
      %v1074 = vsel %vm767, %v1072, %v1073
      %v1075 = vrot.slane %v513, 2
      %v1076 = vrot.slane %v577, 2
      %v1077 = vsel %vm767, %v1075, %v1076
      %v1078 = vrot.slane %v515, 2
      %v1079 = vrot.slane %v579, 2
      %v1080 = vsel %vm767, %v1078, %v1079
      %v1081 = vrot.slane %v517, 2
      %v1082 = vrot.slane %v581, 2
      %v1083 = vsel %vm767, %v1081, %v1082
      %v1084 = vrot.slane %v519, 2
      %v1085 = vrot.slane %v583, 2
      %v1086 = vsel %vm767, %v1084, %v1085
      %v1087 = vrot.slane %v521, 2
      %v1088 = vrot.slane %v585, 2
      %v1089 = vsel %vm767, %v1087, %v1088
      %v1090 = vrot.slane %v523, 2
      %v1091 = vrot.slane %v587, 2
      %v1092 = vsel %vm767, %v1090, %v1091
      %v1093 = vrot.slane %v525, 2
      %v1094 = vrot.slane %v589, 2
      %v1095 = vsel %vm767, %v1093, %v1094
      %v1096 = vrot.slane %v527, 2
      %v1097 = vrot.slane %v591, 2
      %v1098 = vsel %vm767, %v1096, %v1097
      %v1099 = vrot.slane %v529, 2
      %v1100 = vrot.slane %v593, 2
      %v1101 = vsel %vm767, %v1099, %v1100
      %v1102 = vrot.slane %v531, 2
      %v1103 = vrot.slane %v595, 2
      %v1104 = vsel %vm767, %v1102, %v1103
      %v1105 = vrot.slane %v533, 2
      %v1106 = vrot.slane %v597, 2
      %v1107 = vsel %vm767, %v1105, %v1106
      %v1108 = vrot.slane %v535, 2
      %v1109 = vrot.slane %v599, 2
      %v1110 = vsel %vm767, %v1108, %v1109
      %v1111 = vrot.slane %v537, 2
      %v1112 = vrot.slane %v601, 2
      %v1113 = vsel %vm767, %v1111, %v1112
      %v1114 = vrot.slane %v539, 2
      %v1115 = vrot.slane %v603, 2
      %v1116 = vsel %vm767, %v1114, %v1115
      %v1117 = vrot.slane %v541, 2
      %v1118 = vrot.slane %v605, 2
      %v1119 = vsel %vm767, %v1117, %v1118
      %1120 = vrot.lane.b32.xlu0 %v673, 8
      %v1121 = vpop.permute.xlu0 %1120
      %1122 = vrot.lane.b32.xlu0 %v676, 8
      %v1123 = vpop.permute.xlu0 %1122
      %1124 = vrot.lane.b32.xlu0 %v679, 8
      %v1125 = vpop.permute.xlu0 %1124
      %1126 = vrot.lane.b32.xlu0 %v682, 8
      %v1127 = vpop.permute.xlu0 %1126
      %1128 = vrot.lane.b32.xlu0 %v685, 8
      %v1129 = vpop.permute.xlu0 %1128
      %1130 = vrot.lane.b32.xlu0 %v688, 8
      %v1131 = vpop.permute.xlu0 %1130
      %1132 = vrot.lane.b32.xlu0 %v691, 8
      %v1133 = vpop.permute.xlu0 %1132
      %1134 = vrot.lane.b32.xlu0 %v694, 8
      %v1135 = vpop.permute.xlu0 %1134
      %1136 = vrot.lane.b32.xlu0 %v697, 8
      %v1137 = vpop.permute.xlu0 %1136
      %1138 = vrot.lane.b32.xlu0 %v700, 8
      %v1139 = vpop.permute.xlu0 %1138
      %1140 = vrot.lane.b32.xlu0 %v703, 8
      %v1141 = vpop.permute.xlu0 %1140
      %1142 = vrot.lane.b32.xlu0 %v706, 8
      %v1143 = vpop.permute.xlu0 %1142
      %1144 = vrot.lane.b32.xlu0 %v709, 8
      %v1145 = vpop.permute.xlu0 %1144
      %1146 = vrot.lane.b32.xlu0 %v712, 8
      %v1147 = vpop.permute.xlu0 %1146
      %1148 = vrot.lane.b32.xlu0 %v715, 8
      %v1149 = vpop.permute.xlu0 %1148
      %1150 = vrot.lane.b32.xlu0 %v718, 8
      %v1151 = vpop.permute.xlu0 %1150
      %1152 = vrot.lane.b32.xlu0 %v721, 8
      %v1153 = vpop.permute.xlu0 %1152
      %1154 = vrot.lane.b32.xlu0 %v724, 8
      %v1155 = vpop.permute.xlu0 %1154
      %1156 = vrot.lane.b32.xlu0 %v727, 8
      %v1157 = vpop.permute.xlu0 %1156
      %1158 = vrot.lane.b32.xlu0 %v730, 8
      %v1159 = vpop.permute.xlu0 %1158
      %1160 = vrot.lane.b32.xlu0 %v733, 8
      %v1161 = vpop.permute.xlu0 %1160
      %1162 = vrot.lane.b32.xlu0 %v736, 8
      %v1163 = vpop.permute.xlu0 %1162
      %1164 = vrot.lane.b32.xlu0 %v739, 8
      %v1165 = vpop.permute.xlu0 %1164
      %1166 = vrot.lane.b32.xlu0 %v742, 8
      %v1167 = vpop.permute.xlu0 %1166
      %1168 = vrot.lane.b32.xlu0 %v745, 8
      %v1169 = vpop.permute.xlu0 %1168
      %1170 = vrot.lane.b32.xlu0 %v748, 8
      %v1171 = vpop.permute.xlu0 %1170
      %1172 = vrot.lane.b32.xlu0 %v751, 8
      %v1173 = vpop.permute.xlu0 %1172
      %1174 = vrot.lane.b32.xlu0 %v754, 8
      %v1175 = vpop.permute.xlu0 %1174
      %1176 = vrot.lane.b32.xlu0 %v757, 8
      %v1177 = vpop.permute.xlu0 %1176
      %1178 = vrot.lane.b32.xlu0 %v760, 8
      %v1179 = vpop.permute.xlu0 %1178
      %1180 = vrot.lane.b32.xlu0 %v763, 8
      %v1181 = vpop.permute.xlu0 %1180
      %1182 = vrot.lane.b32.xlu0 %v766, 8
      %v1183 = vpop.permute.xlu0 %1182
      %1216 = vrot.lane.b32.xlu0 %v770, 16
      %v1217 = vpop.permute.xlu0 %1216
      %1218 = vrot.lane.b32.xlu0 %v773, 16
      %v1219 = vpop.permute.xlu0 %1218
      %1220 = vrot.lane.b32.xlu0 %v776, 16
      %v1221 = vpop.permute.xlu0 %1220
      %1222 = vrot.lane.b32.xlu0 %v779, 16
      %v1223 = vpop.permute.xlu0 %1222
      %1224 = vrot.lane.b32.xlu0 %v782, 16
      %v1225 = vpop.permute.xlu0 %1224
      %1226 = vrot.lane.b32.xlu0 %v785, 16
      %v1227 = vpop.permute.xlu0 %1226
      %1228 = vrot.lane.b32.xlu0 %v788, 16
      %v1229 = vpop.permute.xlu0 %1228
      %1230 = vrot.lane.b32.xlu0 %v791, 16
      %v1231 = vpop.permute.xlu0 %1230
      %1232 = vrot.lane.b32.xlu0 %v794, 16
      %v1233 = vpop.permute.xlu0 %1232
      %1234 = vrot.lane.b32.xlu0 %v797, 16
      %v1235 = vpop.permute.xlu0 %1234
      %1236 = vrot.lane.b32.xlu0 %v800, 16
      %v1237 = vpop.permute.xlu0 %1236
      %1238 = vrot.lane.b32.xlu0 %v803, 16
      %v1239 = vpop.permute.xlu0 %1238
      %1240 = vrot.lane.b32.xlu0 %v806, 16
      %v1241 = vpop.permute.xlu0 %1240
      %1242 = vrot.lane.b32.xlu0 %v809, 16
      %v1243 = vpop.permute.xlu0 %1242
      %1244 = vrot.lane.b32.xlu0 %v812, 16
      %v1245 = vpop.permute.xlu0 %1244
      %1246 = vrot.lane.b32.xlu0 %v815, 16
      %v1247 = vpop.permute.xlu0 %1246
      %1248 = vrot.lane.b32.xlu0 %v818, 16
      %v1249 = vpop.permute.xlu0 %1248
      %1250 = vrot.lane.b32.xlu0 %v821, 16
      %v1251 = vpop.permute.xlu0 %1250
      %1252 = vrot.lane.b32.xlu0 %v824, 16
      %v1253 = vpop.permute.xlu0 %1252
      %1254 = vrot.lane.b32.xlu0 %v827, 16
      %v1255 = vpop.permute.xlu0 %1254
      %1256 = vrot.lane.b32.xlu0 %v830, 16
      %v1257 = vpop.permute.xlu0 %1256
      %1258 = vrot.lane.b32.xlu0 %v833, 16
      %v1259 = vpop.permute.xlu0 %1258
      %1260 = vrot.lane.b32.xlu0 %v836, 16
      %v1261 = vpop.permute.xlu0 %1260
      %1262 = vrot.lane.b32.xlu0 %v839, 16
      %v1263 = vpop.permute.xlu0 %1262
      %1264 = vrot.lane.b32.xlu0 %v842, 16
      %v1265 = vpop.permute.xlu0 %1264
      %1266 = vrot.lane.b32.xlu0 %v845, 16
      %v1267 = vpop.permute.xlu0 %1266
      %1268 = vrot.lane.b32.xlu0 %v848, 16
      %v1269 = vpop.permute.xlu0 %1268
      %1270 = vrot.lane.b32.xlu0 %v851, 16
      %v1271 = vpop.permute.xlu0 %1270
      %1272 = vrot.lane.b32.xlu0 %v854, 16
      %v1273 = vpop.permute.xlu0 %1272
      %1274 = vrot.lane.b32.xlu0 %v857, 16
      %v1275 = vpop.permute.xlu0 %1274
      %1276 = vrot.lane.b32.xlu0 %v860, 16
      %v1277 = vpop.permute.xlu0 %1276
      %1278 = vrot.lane.b32.xlu0 %v863, 16
      %v1279 = vpop.permute.xlu0 %1278
      %1312 = vrot.lane.b32.xlu0 %v479, 24
      %v1313 = vpop.permute.xlu0 %1312
      %1314 = vrot.lane.b32.xlu0 %v481, 24
      %v1315 = vpop.permute.xlu0 %1314
      %1316 = vrot.lane.b32.xlu0 %v483, 24
      %v1317 = vpop.permute.xlu0 %1316
      %1318 = vrot.lane.b32.xlu0 %v485, 24
      %v1319 = vpop.permute.xlu0 %1318
      %1320 = vrot.lane.b32.xlu0 %v487, 24
      %v1321 = vpop.permute.xlu0 %1320
      %1322 = vrot.lane.b32.xlu0 %v489, 24
      %v1323 = vpop.permute.xlu0 %1322
      %1324 = vrot.lane.b32.xlu0 %v491, 24
      %v1325 = vpop.permute.xlu0 %1324
      %1326 = vrot.lane.b32.xlu0 %v493, 24
      %v1327 = vpop.permute.xlu0 %1326
      %1328 = vrot.lane.b32.xlu0 %v495, 24
      %v1329 = vpop.permute.xlu0 %1328
      %1330 = vrot.lane.b32.xlu0 %v497, 24
      %v1331 = vpop.permute.xlu0 %1330
      %1332 = vrot.lane.b32.xlu0 %v499, 24
      %v1333 = vpop.permute.xlu0 %1332
      %1334 = vrot.lane.b32.xlu0 %v501, 24
      %v1335 = vpop.permute.xlu0 %1334
      %1336 = vrot.lane.b32.xlu0 %v503, 24
      %v1337 = vpop.permute.xlu0 %1336
      %1338 = vrot.lane.b32.xlu0 %v505, 24
      %v1339 = vpop.permute.xlu0 %1338
      %1340 = vrot.lane.b32.xlu0 %v507, 24
      %v1341 = vpop.permute.xlu0 %1340
      %1342 = vrot.lane.b32.xlu0 %v509, 24
      %v1343 = vpop.permute.xlu0 %1342
      %1344 = vrot.lane.b32.xlu0 %v511, 24
      %v1345 = vpop.permute.xlu0 %1344
      %1346 = vrot.lane.b32.xlu0 %v513, 24
      %v1347 = vpop.permute.xlu0 %1346
      %1348 = vrot.lane.b32.xlu0 %v515, 24
      %v1349 = vpop.permute.xlu0 %1348
      %1350 = vrot.lane.b32.xlu0 %v517, 24
      %v1351 = vpop.permute.xlu0 %1350
      %1352 = vrot.lane.b32.xlu0 %v519, 24
      %v1353 = vpop.permute.xlu0 %1352
      %1354 = vrot.lane.b32.xlu0 %v521, 24
      %v1355 = vpop.permute.xlu0 %1354
      %1356 = vrot.lane.b32.xlu0 %v523, 24
      %v1357 = vpop.permute.xlu0 %1356
      %1358 = vrot.lane.b32.xlu0 %v525, 24
      %v1359 = vpop.permute.xlu0 %1358
      %1360 = vrot.lane.b32.xlu0 %v527, 24
      %v1361 = vpop.permute.xlu0 %1360
      %1362 = vrot.lane.b32.xlu0 %v529, 24
      %v1363 = vpop.permute.xlu0 %1362
      %1364 = vrot.lane.b32.xlu0 %v531, 24
      %v1365 = vpop.permute.xlu0 %1364
      %1366 = vrot.lane.b32.xlu0 %v533, 24
      %v1367 = vpop.permute.xlu0 %1366
      %1368 = vrot.lane.b32.xlu0 %v535, 24
      %v1369 = vpop.permute.xlu0 %1368
      %1370 = vrot.lane.b32.xlu0 %v537, 24
      %v1371 = vpop.permute.xlu0 %1370
      %1372 = vrot.lane.b32.xlu0 %v539, 24
      %v1373 = vpop.permute.xlu0 %1372
      %1374 = vrot.lane.b32.xlu0 %v541, 24
      %v1375 = vpop.permute.xlu0 %1374
      %1408 = vrot.lane.b32.xlu0 %v930, 32
      %v1409 = vpop.permute.xlu0 %1408
      %1410 = vrot.lane.b32.xlu0 %v933, 32
      %v1411 = vpop.permute.xlu0 %1410
      %1412 = vrot.lane.b32.xlu0 %v936, 32
      %v1413 = vpop.permute.xlu0 %1412
      %1414 = vrot.lane.b32.xlu0 %v939, 32
      %v1415 = vpop.permute.xlu0 %1414
      %1416 = vrot.lane.b32.xlu0 %v942, 32
      %v1417 = vpop.permute.xlu0 %1416
      %1418 = vrot.lane.b32.xlu0 %v945, 32
      %v1419 = vpop.permute.xlu0 %1418
      %1420 = vrot.lane.b32.xlu0 %v948, 32
      %v1421 = vpop.permute.xlu0 %1420
      %1422 = vrot.lane.b32.xlu0 %v951, 32
      %v1423 = vpop.permute.xlu0 %1422
      %1424 = vrot.lane.b32.xlu0 %v954, 32
      %v1425 = vpop.permute.xlu0 %1424
      %1426 = vrot.lane.b32.xlu0 %v957, 32
      %v1427 = vpop.permute.xlu0 %1426
      %1428 = vrot.lane.b32.xlu0 %v960, 32
      %v1429 = vpop.permute.xlu0 %1428
      %1430 = vrot.lane.b32.xlu0 %v963, 32
      %v1431 = vpop.permute.xlu0 %1430
      %1432 = vrot.lane.b32.xlu0 %v966, 32
      %v1433 = vpop.permute.xlu0 %1432
      %1434 = vrot.lane.b32.xlu0 %v969, 32
      %v1435 = vpop.permute.xlu0 %1434
      %1436 = vrot.lane.b32.xlu0 %v972, 32
      %v1437 = vpop.permute.xlu0 %1436
      %1438 = vrot.lane.b32.xlu0 %v975, 32
      %v1439 = vpop.permute.xlu0 %1438
      %1440 = vrot.lane.b32.xlu0 %v978, 32
      %v1441 = vpop.permute.xlu0 %1440
      %1442 = vrot.lane.b32.xlu0 %v981, 32
      %v1443 = vpop.permute.xlu0 %1442
      %1444 = vrot.lane.b32.xlu0 %v984, 32
      %v1445 = vpop.permute.xlu0 %1444
      %1446 = vrot.lane.b32.xlu0 %v987, 32
      %v1447 = vpop.permute.xlu0 %1446
      %1448 = vrot.lane.b32.xlu0 %v990, 32
      %v1449 = vpop.permute.xlu0 %1448
      %1450 = vrot.lane.b32.xlu0 %v993, 32
      %v1451 = vpop.permute.xlu0 %1450
      %1452 = vrot.lane.b32.xlu0 %v996, 32
      %v1453 = vpop.permute.xlu0 %1452
      %1454 = vrot.lane.b32.xlu0 %v999, 32
      %v1455 = vpop.permute.xlu0 %1454
      %1456 = vrot.lane.b32.xlu0 %v1002, 32
      %v1457 = vpop.permute.xlu0 %1456
      %1458 = vrot.lane.b32.xlu0 %v1005, 32
      %v1459 = vpop.permute.xlu0 %1458
      %1460 = vrot.lane.b32.xlu0 %v1008, 32
      %v1461 = vpop.permute.xlu0 %1460
      %1462 = vrot.lane.b32.xlu0 %v1011, 32
      %v1463 = vpop.permute.xlu0 %1462
      %1464 = vrot.lane.b32.xlu0 %v1014, 32
      %v1465 = vpop.permute.xlu0 %1464
      %1466 = vrot.lane.b32.xlu0 %v1017, 32
      %v1467 = vpop.permute.xlu0 %1466
      %1468 = vrot.lane.b32.xlu0 %v1020, 32
      %v1469 = vpop.permute.xlu0 %1468
      %1470 = vrot.lane.b32.xlu0 %v1023, 32
      %v1471 = vpop.permute.xlu0 %1470
      %1504 = vrot.lane.b32.xlu0 %v1026, 40
      %v1505 = vpop.permute.xlu0 %1504
      %1506 = vrot.lane.b32.xlu0 %v1029, 40
      %v1507 = vpop.permute.xlu0 %1506
      %1508 = vrot.lane.b32.xlu0 %v1032, 40
      %v1509 = vpop.permute.xlu0 %1508
      %1510 = vrot.lane.b32.xlu0 %v1035, 40
      %v1511 = vpop.permute.xlu0 %1510
      %1512 = vrot.lane.b32.xlu0 %v1038, 40
      %v1513 = vpop.permute.xlu0 %1512
      %1514 = vrot.lane.b32.xlu0 %v1041, 40
      %v1515 = vpop.permute.xlu0 %1514
      %1516 = vrot.lane.b32.xlu0 %v1044, 40
      %v1517 = vpop.permute.xlu0 %1516
      %1518 = vrot.lane.b32.xlu0 %v1047, 40
      %v1519 = vpop.permute.xlu0 %1518
      %1520 = vrot.lane.b32.xlu0 %v1050, 40
      %v1521 = vpop.permute.xlu0 %1520
      %1522 = vrot.lane.b32.xlu0 %v1053, 40
      %v1523 = vpop.permute.xlu0 %1522
      %1524 = vrot.lane.b32.xlu0 %v1056, 40
      %v1525 = vpop.permute.xlu0 %1524
      %1526 = vrot.lane.b32.xlu0 %v1059, 40
      %v1527 = vpop.permute.xlu0 %1526
      %1528 = vrot.lane.b32.xlu0 %v1062, 40
      %v1529 = vpop.permute.xlu0 %1528
      %1530 = vrot.lane.b32.xlu0 %v1065, 40
      %v1531 = vpop.permute.xlu0 %1530
      %1532 = vrot.lane.b32.xlu0 %v1068, 40
      %v1533 = vpop.permute.xlu0 %1532
      %1534 = vrot.lane.b32.xlu0 %v1071, 40
      %v1535 = vpop.permute.xlu0 %1534
      %1536 = vrot.lane.b32.xlu0 %v1074, 40
      %v1537 = vpop.permute.xlu0 %1536
      %1538 = vrot.lane.b32.xlu0 %v1077, 40
      %v1539 = vpop.permute.xlu0 %1538
      %1540 = vrot.lane.b32.xlu0 %v1080, 40
      %v1541 = vpop.permute.xlu0 %1540
      %1542 = vrot.lane.b32.xlu0 %v1083, 40
      %v1543 = vpop.permute.xlu0 %1542
      %1544 = vrot.lane.b32.xlu0 %v1086, 40
      %v1545 = vpop.permute.xlu0 %1544
      %1546 = vrot.lane.b32.xlu0 %v1089, 40
      %v1547 = vpop.permute.xlu0 %1546
      %1548 = vrot.lane.b32.xlu0 %v1092, 40
      %v1549 = vpop.permute.xlu0 %1548
      %1550 = vrot.lane.b32.xlu0 %v1095, 40
      %v1551 = vpop.permute.xlu0 %1550
      %1552 = vrot.lane.b32.xlu0 %v1098, 40
      %v1553 = vpop.permute.xlu0 %1552
      %1554 = vrot.lane.b32.xlu0 %v1101, 40
      %v1555 = vpop.permute.xlu0 %1554
      %1556 = vrot.lane.b32.xlu0 %v1104, 40
      %v1557 = vpop.permute.xlu0 %1556
      %1558 = vrot.lane.b32.xlu0 %v1107, 40
      %v1559 = vpop.permute.xlu0 %1558
      %1560 = vrot.lane.b32.xlu0 %v1110, 40
      %v1561 = vpop.permute.xlu0 %1560
      %1562 = vrot.lane.b32.xlu0 %v1113, 40
      %v1563 = vpop.permute.xlu0 %1562
      %1564 = vrot.lane.b32.xlu0 %v1116, 40
      %v1565 = vpop.permute.xlu0 %1564
      %1566 = vrot.lane.b32.xlu0 %v1119, 40
      %v1567 = vpop.permute.xlu0 %1566
      %vm1600 = vcmask 64512
      %v1601 = vsel %vm1600, %v478, %v1121
      %v1602 = vsel %vm1600, %v480, %v1123
      %v1603 = vsel %vm1600, %v482, %v1125
      %v1604 = vsel %vm1600, %v484, %v1127
      %v1605 = vsel %vm1600, %v486, %v1129
      %v1606 = vsel %vm1600, %v488, %v1131
      %v1607 = vsel %vm1600, %v490, %v1133
      %v1608 = vsel %vm1600, %v492, %v1135
      %v1609 = vsel %vm1600, %v494, %v1137
      %v1610 = vsel %vm1600, %v496, %v1139
      %v1611 = vsel %vm1600, %v498, %v1141
      %v1612 = vsel %vm1600, %v500, %v1143
      %v1613 = vsel %vm1600, %v502, %v1145
      %v1614 = vsel %vm1600, %v504, %v1147
      %v1615 = vsel %vm1600, %v506, %v1149
      %v1616 = vsel %vm1600, %v508, %v1151
      %v1617 = vsel %vm1600, %v510, %v1153
      %v1618 = vsel %vm1600, %v512, %v1155
      %v1619 = vsel %vm1600, %v514, %v1157
      %v1620 = vsel %vm1600, %v516, %v1159
      %v1621 = vsel %vm1600, %v518, %v1161
      %v1622 = vsel %vm1600, %v520, %v1163
      %v1623 = vsel %vm1600, %v522, %v1165
      %v1624 = vsel %vm1600, %v524, %v1167
      %v1625 = vsel %vm1600, %v526, %v1169
      %v1626 = vsel %vm1600, %v528, %v1171
      %v1627 = vsel %vm1600, %v530, %v1173
      %v1628 = vsel %vm1600, %v532, %v1175
      %v1629 = vsel %vm1600, %v534, %v1177
      %v1630 = vsel %vm1600, %v536, %v1179
      %v1631 = vsel %vm1600, %v538, %v1181
      %v1632 = vsel %vm1600, %v540, %v1183
      %vm1633 = vcmask 130048
      %v1634 = vsel %vm1633, %v1601, %v1217
      %v1635 = vsel %vm1633, %v1602, %v1219
      %v1636 = vsel %vm1633, %v1603, %v1221
      %v1637 = vsel %vm1633, %v1604, %v1223
      %v1638 = vsel %vm1633, %v1605, %v1225
      %v1639 = vsel %vm1633, %v1606, %v1227
      %v1640 = vsel %vm1633, %v1607, %v1229
      %v1641 = vsel %vm1633, %v1608, %v1231
      %v1642 = vsel %vm1633, %v1609, %v1233
      %v1643 = vsel %vm1633, %v1610, %v1235
      %v1644 = vsel %vm1633, %v1611, %v1237
      %v1645 = vsel %vm1633, %v1612, %v1239
      %v1646 = vsel %vm1633, %v1613, %v1241
      %v1647 = vsel %vm1633, %v1614, %v1243
      %v1648 = vsel %vm1633, %v1615, %v1245
      %v1649 = vsel %vm1633, %v1616, %v1247
      %v1650 = vsel %vm1633, %v1617, %v1249
      %v1651 = vsel %vm1633, %v1618, %v1251
      %v1652 = vsel %vm1633, %v1619, %v1253
      %v1653 = vsel %vm1633, %v1620, %v1255
      %v1654 = vsel %vm1633, %v1621, %v1257
      %v1655 = vsel %vm1633, %v1622, %v1259
      %v1656 = vsel %vm1633, %v1623, %v1261
      %v1657 = vsel %vm1633, %v1624, %v1263
      %v1658 = vsel %vm1633, %v1625, %v1265
      %v1659 = vsel %vm1633, %v1626, %v1267
      %v1660 = vsel %vm1633, %v1627, %v1269
      %v1661 = vsel %vm1633, %v1628, %v1271
      %v1662 = vsel %vm1633, %v1629, %v1273
      %v1663 = vsel %vm1633, %v1630, %v1275
      %v1664 = vsel %vm1633, %v1631, %v1277
      %v1665 = vsel %vm1633, %v1632, %v1279
      %vm1666 = vcmask 195584
      %v1667 = vsel %vm1666, %v1634, %v1313
      %v1668 = vsel %vm1666, %v1635, %v1315
      %v1669 = vsel %vm1666, %v1636, %v1317
      %v1670 = vsel %vm1666, %v1637, %v1319
      %v1671 = vsel %vm1666, %v1638, %v1321
      %v1672 = vsel %vm1666, %v1639, %v1323
      %v1673 = vsel %vm1666, %v1640, %v1325
      %v1674 = vsel %vm1666, %v1641, %v1327
      %v1675 = vsel %vm1666, %v1642, %v1329
      %v1676 = vsel %vm1666, %v1643, %v1331
      %v1677 = vsel %vm1666, %v1644, %v1333
      %v1678 = vsel %vm1666, %v1645, %v1335
      %v1679 = vsel %vm1666, %v1646, %v1337
      %v1680 = vsel %vm1666, %v1647, %v1339
      %v1681 = vsel %vm1666, %v1648, %v1341
      %v1682 = vsel %vm1666, %v1649, %v1343
      %v1683 = vsel %vm1666, %v1650, %v1345
      %v1684 = vsel %vm1666, %v1651, %v1347
      %v1685 = vsel %vm1666, %v1652, %v1349
      %v1686 = vsel %vm1666, %v1653, %v1351
      %v1687 = vsel %vm1666, %v1654, %v1353
      %v1688 = vsel %vm1666, %v1655, %v1355
      %v1689 = vsel %vm1666, %v1656, %v1357
      %v1690 = vsel %vm1666, %v1657, %v1359
      %v1691 = vsel %vm1666, %v1658, %v1361
      %v1692 = vsel %vm1666, %v1659, %v1363
      %v1693 = vsel %vm1666, %v1660, %v1365
      %v1694 = vsel %vm1666, %v1661, %v1367
      %v1695 = vsel %vm1666, %v1662, %v1369
      %v1696 = vsel %vm1666, %v1663, %v1371
      %v1697 = vsel %vm1666, %v1664, %v1373
      %v1698 = vsel %vm1666, %v1665, %v1375
      %vm1699 = vcmask 261120
      %v1700 = vsel %vm1699, %v1667, %v1409
      %v1701 = vsel %vm1699, %v1668, %v1411
      %v1702 = vsel %vm1699, %v1669, %v1413
      %v1703 = vsel %vm1699, %v1670, %v1415
      %v1704 = vsel %vm1699, %v1671, %v1417
      %v1705 = vsel %vm1699, %v1672, %v1419
      %v1706 = vsel %vm1699, %v1673, %v1421
      %v1707 = vsel %vm1699, %v1674, %v1423
      %v1708 = vsel %vm1699, %v1675, %v1425
      %v1709 = vsel %vm1699, %v1676, %v1427
      %v1710 = vsel %vm1699, %v1677, %v1429
      %v1711 = vsel %vm1699, %v1678, %v1431
      %v1712 = vsel %vm1699, %v1679, %v1433
      %v1713 = vsel %vm1699, %v1680, %v1435
      %v1714 = vsel %vm1699, %v1681, %v1437
      %v1715 = vsel %vm1699, %v1682, %v1439
      %v1716 = vsel %vm1699, %v1683, %v1441
      %v1717 = vsel %vm1699, %v1684, %v1443
      %v1718 = vsel %vm1699, %v1685, %v1445
      %v1719 = vsel %vm1699, %v1686, %v1447
      %v1720 = vsel %vm1699, %v1687, %v1449
      %v1721 = vsel %vm1699, %v1688, %v1451
      %v1722 = vsel %vm1699, %v1689, %v1453
      %v1723 = vsel %vm1699, %v1690, %v1455
      %v1724 = vsel %vm1699, %v1691, %v1457
      %v1725 = vsel %vm1699, %v1692, %v1459
      %v1726 = vsel %vm1699, %v1693, %v1461
      %v1727 = vsel %vm1699, %v1694, %v1463
      %v1728 = vsel %vm1699, %v1695, %v1465
      %v1729 = vsel %vm1699, %v1696, %v1467
      %v1730 = vsel %vm1699, %v1697, %v1469
      %v1731 = vsel %vm1699, %v1698, %v1471
      %vm1732 = vcmask 326656
      %v1733 = vsel %vm1732, %v1700, %v1505
      %v1734 = vsel %vm1732, %v1701, %v1507
      %v1735 = vsel %vm1732, %v1702, %v1509
      %v1736 = vsel %vm1732, %v1703, %v1511
      %v1737 = vsel %vm1732, %v1704, %v1513
      %v1738 = vsel %vm1732, %v1705, %v1515
      %v1739 = vsel %vm1732, %v1706, %v1517
      %v1740 = vsel %vm1732, %v1707, %v1519
      %v1741 = vsel %vm1732, %v1708, %v1521
      %v1742 = vsel %vm1732, %v1709, %v1523
      %v1743 = vsel %vm1732, %v1710, %v1525
      %v1744 = vsel %vm1732, %v1711, %v1527
      %v1745 = vsel %vm1732, %v1712, %v1529
      %v1746 = vsel %vm1732, %v1713, %v1531
      %v1747 = vsel %vm1732, %v1714, %v1533
      %v1748 = vsel %vm1732, %v1715, %v1535
      %v1749 = vsel %vm1732, %v1716, %v1537
      %v1750 = vsel %vm1732, %v1717, %v1539
      %v1751 = vsel %vm1732, %v1718, %v1541
      %v1752 = vsel %vm1732, %v1719, %v1543
      %v1753 = vsel %vm1732, %v1720, %v1545
      %v1754 = vsel %vm1732, %v1721, %v1547
      %v1755 = vsel %vm1732, %v1722, %v1549
      %v1756 = vsel %vm1732, %v1723, %v1551
      %v1757 = vsel %vm1732, %v1724, %v1553
      %v1758 = vsel %vm1732, %v1725, %v1555
      %v1759 = vsel %vm1732, %v1726, %v1557
      %v1760 = vsel %vm1732, %v1727, %v1559
      %v1761 = vsel %vm1732, %v1728, %v1561
      %v1762 = vsel %vm1732, %v1729, %v1563
      %v1763 = vsel %vm1732, %v1730, %v1565
      %v1764 = vsel %vm1732, %v1731, %v1567
      %vm1765 = vcmask 392192
      %v1767 = vsel %vm1765, %v1733, 0
      %v1770 = vsel %vm1765, %v1734, 0
      %v1773 = vsel %vm1765, %v1735, 0
      %v1776 = vsel %vm1765, %v1736, 0
      %v1779 = vsel %vm1765, %v1737, 0
      %v1782 = vsel %vm1765, %v1738, 0
      %v1785 = vsel %vm1765, %v1739, 0
      %v1788 = vsel %vm1765, %v1740, 0
      %v1791 = vsel %vm1765, %v1741, 0
      %v1794 = vsel %vm1765, %v1742, 0
      %v1797 = vsel %vm1765, %v1743, 0
      %v1800 = vsel %vm1765, %v1744, 0
      %v1803 = vsel %vm1765, %v1745, 0
      %v1806 = vsel %vm1765, %v1746, 0
      %v1809 = vsel %vm1765, %v1747, 0
      %v1812 = vsel %vm1765, %v1748, 0
      %v1815 = vsel %vm1765, %v1749, 0
      %v1818 = vsel %vm1765, %v1750, 0
      %v1821 = vsel %vm1765, %v1751, 0
      %v1824 = vsel %vm1765, %v1752, 0
      %v1827 = vsel %vm1765, %v1753, 0
      %v1830 = vsel %vm1765, %v1754, 0
      %v1833 = vsel %vm1765, %v1755, 0
      %v1836 = vsel %vm1765, %v1756, 0
      %v1839 = vsel %vm1765, %v1757, 0
      %v1842 = vsel %vm1765, %v1758, 0
      %v1845 = vsel %vm1765, %v1759, 0
      %v1848 = vsel %vm1765, %v1760, 0
      %v1851 = vsel %vm1765, %v1761, 0
      %v1854 = vsel %vm1765, %v1762, 0
      %v1857 = vsel %vm1765, %v1763, 0
      %v1860 = vsel %vm1765, %v1764, 0
      %1862 = vmatprep.subr.mxu0 0.0
      %1863 = vmatpush1.msra.mxu0 %v278
      %1864 = vmatprep.subr.mxu0 0.0
      %1865 = vmatpush1.msra.mxu0 %v279
      %1866 = vmatprep.subr.mxu0 0.0
      %1867 = vmatpush1.msra.mxu0 %v280
      %1868 = vmatprep.subr.mxu0 0.0
      %1869 = vmatpush1.msra.mxu0 %v281
      %1870 = vmatprep.subr.mxu0 0.0
      %1871 = vmatpush1.msra.mxu0 %v282
      %1872 = vmatprep.subr.mxu0 0.0
      %1873 = vmatpush1.msra.mxu0 %v283
      %1874 = vmatprep.subr.mxu0 0.0
      %1875 = vmatpush1.msra.mxu0 0.0
      %1876 = vmatprep.subr.mxu0 0.0
      %1877 = vmatpush1.msra.mxu0 0.0
      %1878 = vmatprep.subr.mxu0 0.0
      %1879 = vmatpush1.msra.mxu0 0.0
      %1880 = vmatprep.subr.mxu0 0.0
      %1881 = vmatpush1.msra.mxu0 0.0
      %1882 = vmatprep.subr.mxu0 0.0
      %1883 = vmatpush1.msra.mxu0 0.0
      %1884 = vmatprep.subr.mxu0 0.0
      %1885 = vmatpush1.msra.mxu0 0.0
      %1886 = vmatprep.subr.mxu0 0.0
      %1887 = vmatpush1.msra.mxu0 0.0
      %1888 = vmatprep.subr.mxu0 0.0
      %1889 = vmatpush1.msra.mxu0 0.0
      %1890 = vmatprep.subr.mxu0 0.0
      %1891 = vmatpush1.msra.mxu0 0.0
      %1892 = vmatprep.subr.mxu0 0.0
      %1893 = vmatpush1.msra.mxu0 0.0
      %1894 = vmatprep.subr.mxu0 0.0
      %1895 = vmatpush1.msra.mxu0 0.0
      %1896 = vmatprep.subr.mxu0 0.0
      %1897 = vmatpush1.msra.mxu0 0.0
      %1898 = vmatprep.subr.mxu0 0.0
      %1899 = vmatpush1.msra.mxu0 0.0
      %1900 = vmatprep.subr.mxu0 0.0
      %1901 = vmatpush1.msra.mxu0 0.0
      %1902 = vmatprep.subr.mxu0 0.0
      %1903 = vmatpush1.msra.mxu0 0.0
      %1904 = vmatprep.subr.mxu0 0.0
      %1905 = vmatpush1.msra.mxu0 0.0
      %1906 = vmatprep.subr.mxu0 0.0
      %1907 = vmatpush1.msra.mxu0 0.0
      %1908 = vmatprep.subr.mxu0 0.0
      %1909 = vmatpush1.msra.mxu0 0.0
      %1910 = vmatprep.subr.mxu0 0.0
      %1911 = vmatpush1.msra.mxu0 0.0
      %1912 = vmatprep.subr.mxu0 0.0
      %1913 = vmatpush1.msra.mxu0 0.0
      %1914 = vmatprep.subr.mxu0 0.0
      %1915 = vmatpush1.msra.mxu0 0.0
      %1916 = vmatprep.subr.mxu0 0.0
      %1917 = vmatpush1.msra.mxu0 0.0
      %1918 = vmatprep.subr.mxu0 0.0
      %1919 = vmatpush1.msra.mxu0 0.0
      %1920 = vmatprep.subr.mxu0 0.0
      %1921 = vmatpush1.msra.mxu0 0.0
      %1922 = vmatprep.subr.mxu0 0.0
      %1923 = vmatpush1.msra.mxu0 0.0
      %1924 = vmatprep.subr.mxu0 0.0
      %1925 = vmatpush1.msra.mxu0 0.0
      %1926 = vmatprep.mubr.f32.mxu0 0.0
      %1927 = vmatmul.mubr.f32.gmra.mrb[0].mxu0 %v1767
      %v1928 = vpop.f32.mrb[0].mxu0
      %v1929 = vadd.f32 0.0, %v1928
      %v1930 = vpop.f32.mrb[0].mxu0
      %1931 = vmatprep.mubr.f32.mxu0 0.0
      %1932 = vmatmul.mubr.f32.gmra.mrb[0].mxu0 %v1770
      %v1933 = vpop.f32.mrb[0].mxu0
      %v1934 = vadd.f32 0.0, %v1933
      %v1935 = vpop.f32.mrb[0].mxu0
      %1936 = vmatprep.mubr.f32.mxu0 0.0
      %1937 = vmatmul.mubr.f32.gmra.mrb[0].mxu0 %v1773
      %v1938 = vpop.f32.mrb[0].mxu0
      %v1939 = vadd.f32 0.0, %v1938
      %v1940 = vpop.f32.mrb[0].mxu0
      %1941 = vmatprep.mubr.f32.mxu0 0.0
      %1942 = vmatmul.mubr.f32.gmra.mrb[0].mxu0 %v1776
      %v1943 = vpop.f32.mrb[0].mxu0
      %v1944 = vadd.f32 0.0, %v1943
      %v1945 = vpop.f32.mrb[0].mxu0
      %1946 = vmatprep.mubr.f32.mxu0 0.0
      %1947 = vmatmul.mubr.f32.gmra.mrb[0].mxu0 %v1779
      %v1948 = vpop.f32.mrb[0].mxu0
      %v1949 = vadd.f32 0.0, %v1948
      %v1950 = vpop.f32.mrb[0].mxu0
      %1951 = vmatprep.mubr.f32.mxu0 0.0
      %1952 = vmatmul.mubr.f32.gmra.mrb[0].mxu0 %v1782
      %v1953 = vpop.f32.mrb[0].mxu0
      %v1954 = vadd.f32 0.0, %v1953
      %v1955 = vpop.f32.mrb[0].mxu0
      %1956 = vmatprep.mubr.f32.mxu0 0.0
      %1957 = vmatmul.mubr.f32.gmra.mrb[0].mxu0 %v1785
      %v1958 = vpop.f32.mrb[0].mxu0
      %v1959 = vadd.f32 0.0, %v1958
      %v1960 = vpop.f32.mrb[0].mxu0
      %1961 = vmatprep.mubr.f32.mxu0 0.0
      %1962 = vmatmul.mubr.f32.gmra.mrb[0].mxu0 %v1788
      %v1963 = vpop.f32.mrb[0].mxu0
      %v1964 = vadd.f32 0.0, %v1963
      %v1965 = vpop.f32.mrb[0].mxu0
      %1966 = vmatprep.mubr.f32.mxu0 0.0
      %1967 = vmatmul.mubr.f32.gmra.mrb[0].mxu0 %v1791
      %v1968 = vpop.f32.mrb[0].mxu0
      %v1969 = vadd.f32 0.0, %v1968
      %v1970 = vpop.f32.mrb[0].mxu0
      %1971 = vmatprep.mubr.f32.mxu0 0.0
      %1972 = vmatmul.mubr.f32.gmra.mrb[0].mxu0 %v1794
      %v1973 = vpop.f32.mrb[0].mxu0
      %v1974 = vadd.f32 0.0, %v1973
      %v1975 = vpop.f32.mrb[0].mxu0
      %1976 = vmatprep.mubr.f32.mxu0 0.0
      %1977 = vmatmul.mubr.f32.gmra.mrb[0].mxu0 %v1797
      %v1978 = vpop.f32.mrb[0].mxu0
      %v1979 = vadd.f32 0.0, %v1978
      %v1980 = vpop.f32.mrb[0].mxu0
      %1981 = vmatprep.mubr.f32.mxu0 0.0
      %1982 = vmatmul.mubr.f32.gmra.mrb[0].mxu0 %v1800
      %v1983 = vpop.f32.mrb[0].mxu0
      %v1984 = vadd.f32 0.0, %v1983
      %v1985 = vpop.f32.mrb[0].mxu0
      %1986 = vmatprep.mubr.f32.mxu0 0.0
      %1987 = vmatmul.mubr.f32.gmra.mrb[0].mxu0 %v1803
      %v1988 = vpop.f32.mrb[0].mxu0
      %v1989 = vadd.f32 0.0, %v1988
      %v1990 = vpop.f32.mrb[0].mxu0
      %1991 = vmatprep.mubr.f32.mxu0 0.0
      %1992 = vmatmul.mubr.f32.gmra.mrb[0].mxu0 %v1806
      %v1993 = vpop.f32.mrb[0].mxu0
      %v1994 = vadd.f32 0.0, %v1993
      %v1995 = vpop.f32.mrb[0].mxu0
      %1996 = vmatprep.mubr.f32.mxu0 0.0
      %1997 = vmatmul.mubr.f32.gmra.mrb[0].mxu0 %v1809
      %v1998 = vpop.f32.mrb[0].mxu0
      %v1999 = vadd.f32 0.0, %v1998
      %v2000 = vpop.f32.mrb[0].mxu0
      %2001 = vmatprep.mubr.f32.mxu0 0.0
      %2002 = vmatmul.mubr.f32.gmra.mrb[0].mxu0 %v1812
      %v2003 = vpop.f32.mrb[0].mxu0
      %v2004 = vadd.f32 0.0, %v2003
      %v2005 = vpop.f32.mrb[0].mxu0
      %2006 = vmatprep.mubr.f32.mxu0 0.0
      %2007 = vmatmul.mubr.f32.gmra.mrb[0].mxu0 %v1815
      %v2008 = vpop.f32.mrb[0].mxu0
      %v2009 = vadd.f32 0.0, %v2008
      %v2010 = vpop.f32.mrb[0].mxu0
      %2011 = vmatprep.mubr.f32.mxu0 0.0
      %2012 = vmatmul.mubr.f32.gmra.mrb[0].mxu0 %v1818
      %v2013 = vpop.f32.mrb[0].mxu0
      %v2014 = vadd.f32 0.0, %v2013
      %v2015 = vpop.f32.mrb[0].mxu0
      %2016 = vmatprep.mubr.f32.mxu0 0.0
      %2017 = vmatmul.mubr.f32.gmra.mrb[0].mxu0 %v1821
      %v2018 = vpop.f32.mrb[0].mxu0
      %v2019 = vadd.f32 0.0, %v2018
      %v2020 = vpop.f32.mrb[0].mxu0
      %2021 = vmatprep.mubr.f32.mxu0 0.0
      %2022 = vmatmul.mubr.f32.gmra.mrb[0].mxu0 %v1824
      %v2023 = vpop.f32.mrb[0].mxu0
      %v2024 = vadd.f32 0.0, %v2023
      %v2025 = vpop.f32.mrb[0].mxu0
      %2026 = vmatprep.mubr.f32.mxu0 0.0
      %2027 = vmatmul.mubr.f32.gmra.mrb[0].mxu0 %v1827
      %v2028 = vpop.f32.mrb[0].mxu0
      %v2029 = vadd.f32 0.0, %v2028
      %v2030 = vpop.f32.mrb[0].mxu0
      %2031 = vmatprep.mubr.f32.mxu0 0.0
      %2032 = vmatmul.mubr.f32.gmra.mrb[0].mxu0 %v1830
      %v2033 = vpop.f32.mrb[0].mxu0
      %v2034 = vadd.f32 0.0, %v2033
      %v2035 = vpop.f32.mrb[0].mxu0
      %2036 = vmatprep.mubr.f32.mxu0 0.0
      %2037 = vmatmul.mubr.f32.gmra.mrb[0].mxu0 %v1833
      %v2038 = vpop.f32.mrb[0].mxu0
      %v2039 = vadd.f32 0.0, %v2038
      %v2040 = vpop.f32.mrb[0].mxu0
      %2041 = vmatprep.mubr.f32.mxu0 0.0
      %2042 = vmatmul.mubr.f32.gmra.mrb[0].mxu0 %v1836
      %v2043 = vpop.f32.mrb[0].mxu0
      %v2044 = vadd.f32 0.0, %v2043
      %v2045 = vpop.f32.mrb[0].mxu0
      %2046 = vmatprep.mubr.f32.mxu0 0.0
      %2047 = vmatmul.mubr.f32.gmra.mrb[0].mxu0 %v1839
      %v2048 = vpop.f32.mrb[0].mxu0
      %v2049 = vadd.f32 0.0, %v2048
      %v2050 = vpop.f32.mrb[0].mxu0
      %2051 = vmatprep.mubr.f32.mxu0 0.0
      %2052 = vmatmul.mubr.f32.gmra.mrb[0].mxu0 %v1842
      %v2053 = vpop.f32.mrb[0].mxu0
      %v2054 = vadd.f32 0.0, %v2053
      %v2055 = vpop.f32.mrb[0].mxu0
      %2056 = vmatprep.mubr.f32.mxu0 0.0
      %2057 = vmatmul.mubr.f32.gmra.mrb[0].mxu0 %v1845
      %v2058 = vpop.f32.mrb[0].mxu0
      %v2059 = vadd.f32 0.0, %v2058
      %v2060 = vpop.f32.mrb[0].mxu0
      %2061 = vmatprep.mubr.f32.mxu0 0.0
      %2062 = vmatmul.mubr.f32.gmra.mrb[0].mxu0 %v1848
      %v2063 = vpop.f32.mrb[0].mxu0
      %v2064 = vadd.f32 0.0, %v2063
      %v2065 = vpop.f32.mrb[0].mxu0
      %2066 = vmatprep.mubr.f32.mxu0 0.0
      %2067 = vmatmul.mubr.f32.gmra.mrb[0].mxu0 %v1851
      %v2068 = vpop.f32.mrb[0].mxu0
      %v2069 = vadd.f32 0.0, %v2068
      %v2070 = vpop.f32.mrb[0].mxu0
      %2071 = vmatprep.mubr.f32.mxu0 0.0
      %2072 = vmatmul.mubr.f32.gmra.mrb[0].mxu0 %v1854
      %v2073 = vpop.f32.mrb[0].mxu0
      %v2074 = vadd.f32 0.0, %v2073
      %v2075 = vpop.f32.mrb[0].mxu0
      %2076 = vmatprep.mubr.f32.mxu0 0.0
      %2077 = vmatmul.mubr.f32.gmra.mrb[0].mxu0 %v1857
      %v2078 = vpop.f32.mrb[0].mxu0
      %v2079 = vadd.f32 0.0, %v2078
      %v2080 = vpop.f32.mrb[0].mxu0
      %2081 = vmatprep.mubr.f32.mxu0 0.0
      %2082 = vmatmul.mubr.f32.gmra.mrb[0].mxu0 %v1860
      %v2083 = vpop.f32.mrb[0].mxu0
      %v2084 = vadd.f32 0.0, %v2083
      %v2085 = vpop.f32.mrb[0].mxu0
      %2086 = vdwg.mxu0
      %vm2087 = vcmp.gt.f32.partialorder %v1929, 0.0
      %vm2088 = vcmp.gt.f32.partialorder %v1934, 0.0
      %vm2089 = vcmp.gt.f32.partialorder %v1939, 0.0
      %vm2090 = vcmp.gt.f32.partialorder %v1944, 0.0
      %vm2091 = vcmp.gt.f32.partialorder %v1949, 0.0
      %vm2092 = vcmp.gt.f32.partialorder %v1954, 0.0
      %vm2093 = vcmp.gt.f32.partialorder %v1959, 0.0
      %vm2094 = vcmp.gt.f32.partialorder %v1964, 0.0
      %vm2095 = vcmp.gt.f32.partialorder %v1969, 0.0
      %vm2096 = vcmp.gt.f32.partialorder %v1974, 0.0
      %vm2097 = vcmp.gt.f32.partialorder %v1979, 0.0
      %vm2098 = vcmp.gt.f32.partialorder %v1984, 0.0
      %vm2099 = vcmp.gt.f32.partialorder %v1989, 0.0
      %vm2100 = vcmp.gt.f32.partialorder %v1994, 0.0
      %vm2101 = vcmp.gt.f32.partialorder %v1999, 0.0
      %vm2102 = vcmp.gt.f32.partialorder %v2004, 0.0
      %vm2103 = vcmp.gt.f32.partialorder %v2009, 0.0
      %vm2104 = vcmp.gt.f32.partialorder %v2014, 0.0
      %vm2105 = vcmp.gt.f32.partialorder %v2019, 0.0
      %vm2106 = vcmp.gt.f32.partialorder %v2024, 0.0
      %vm2107 = vcmp.gt.f32.partialorder %v2029, 0.0
      %vm2108 = vcmp.gt.f32.partialorder %v2034, 0.0
      %vm2109 = vcmp.gt.f32.partialorder %v2039, 0.0
      %vm2110 = vcmp.gt.f32.partialorder %v2044, 0.0
      %vm2111 = vcmp.gt.f32.partialorder %v2049, 0.0
      %vm2112 = vcmp.gt.f32.partialorder %v2054, 0.0
      %vm2113 = vcmp.gt.f32.partialorder %v2059, 0.0
      %vm2114 = vcmp.gt.f32.partialorder %v2064, 0.0
      %vm2115 = vcmp.gt.f32.partialorder %v2069, 0.0
      %vm2116 = vcmp.gt.f32.partialorder %v2074, 0.0
      %vm2117 = vcmp.gt.f32.partialorder %v2079, 0.0
      %vm2118 = vcmp.gt.f32.partialorder %v2084, 0.0
      %v2119 = vmul.f32 %v1929, 0.2
      %v2120 = vmul.f32 %v1934, 0.2
      %v2121 = vmul.f32 %v1939, 0.2
      %v2122 = vmul.f32 %v1944, 0.2
      %v2123 = vmul.f32 %v1949, 0.2
      %v2124 = vmul.f32 %v1954, 0.2
      %v2125 = vmul.f32 %v1959, 0.2
      %v2126 = vmul.f32 %v1964, 0.2
      %v2127 = vmul.f32 %v1969, 0.2
      %v2128 = vmul.f32 %v1974, 0.2
      %v2129 = vmul.f32 %v1979, 0.2
      %v2130 = vmul.f32 %v1984, 0.2
      %v2131 = vmul.f32 %v1989, 0.2
      %v2132 = vmul.f32 %v1994, 0.2
      %v2133 = vmul.f32 %v1999, 0.2
      %v2134 = vmul.f32 %v2004, 0.2
      %v2135 = vmul.f32 %v2009, 0.2
      %v2136 = vmul.f32 %v2014, 0.2
      %v2137 = vmul.f32 %v2019, 0.2
      %v2138 = vmul.f32 %v2024, 0.2
      %v2139 = vmul.f32 %v2029, 0.2
      %v2140 = vmul.f32 %v2034, 0.2
      %v2141 = vmul.f32 %v2039, 0.2
      %v2142 = vmul.f32 %v2044, 0.2
      %v2143 = vmul.f32 %v2049, 0.2
      %v2144 = vmul.f32 %v2054, 0.2
      %v2145 = vmul.f32 %v2059, 0.2
      %v2146 = vmul.f32 %v2064, 0.2
      %v2147 = vmul.f32 %v2069, 0.2
      %v2148 = vmul.f32 %v2074, 0.2
      %v2149 = vmul.f32 %v2079, 0.2
      %v2150 = vmul.f32 %v2084, 0.2
      %v2151 = vsel %vm2087, %v1929, %v2119
      %v2152 = vsel %vm2088, %v1934, %v2120
      %v2153 = vsel %vm2089, %v1939, %v2121
      %v2154 = vsel %vm2090, %v1944, %v2122
      %v2155 = vsel %vm2091, %v1949, %v2123
      %v2156 = vsel %vm2092, %v1954, %v2124
      %v2157 = vsel %vm2093, %v1959, %v2125
      %v2158 = vsel %vm2094, %v1964, %v2126
      %v2159 = vsel %vm2095, %v1969, %v2127
      %v2160 = vsel %vm2096, %v1974, %v2128
      %v2161 = vsel %vm2097, %v1979, %v2129
      %v2162 = vsel %vm2098, %v1984, %v2130
      %v2163 = vsel %vm2099, %v1989, %v2131
      %v2164 = vsel %vm2100, %v1994, %v2132
      %v2165 = vsel %vm2101, %v1999, %v2133
      %v2166 = vsel %vm2102, %v2004, %v2134
      %v2167 = vsel %vm2103, %v2009, %v2135
      %v2168 = vsel %vm2104, %v2014, %v2136
      %v2169 = vsel %vm2105, %v2019, %v2137
      %v2170 = vsel %vm2106, %v2024, %v2138
      %v2171 = vsel %vm2107, %v2029, %v2139
      %v2172 = vsel %vm2108, %v2034, %v2140
      %v2173 = vsel %vm2109, %v2039, %v2141
      %v2174 = vsel %vm2110, %v2044, %v2142
      %v2175 = vsel %vm2111, %v2049, %v2143
      %v2176 = vsel %vm2112, %v2054, %v2144
      %v2177 = vsel %vm2113, %v2059, %v2145
      %v2178 = vsel %vm2114, %v2064, %v2146
      %v2179 = vsel %vm2115, %v2069, %v2147
      %v2180 = vsel %vm2116, %v2074, %v2148
      %v2181 = vsel %vm2117, %v2079, %v2149
      %v2182 = vsel %vm2118, %v2084, %v2150
      %vm2183 = vcmask 31744
      %v2185 = vsel %vm2183, %v2151, 0
      %v2188 = vsel %vm2183, %v2152, 0
      %v2191 = vsel %vm2183, %v2153, 0
      %v2194 = vsel %vm2183, %v2154, 0
      %v2197 = vsel %vm2183, %v2155, 0
      %v2200 = vsel %vm2183, %v2156, 0
      %v2203 = vsel %vm2183, %v2157, 0
      %v2206 = vsel %vm2183, %v2158, 0
      %v2209 = vsel %vm2183, %v2159, 0
      %v2212 = vsel %vm2183, %v2160, 0
      %v2215 = vsel %vm2183, %v2161, 0
      %v2218 = vsel %vm2183, %v2162, 0
      %v2221 = vsel %vm2183, %v2163, 0
      %v2224 = vsel %vm2183, %v2164, 0
      %v2227 = vsel %vm2183, %v2165, 0
      %v2230 = vsel %vm2183, %v2166, 0
      %v2233 = vsel %vm2183, %v2167, 0
      %v2236 = vsel %vm2183, %v2168, 0
      %v2239 = vsel %vm2183, %v2169, 0
      %v2242 = vsel %vm2183, %v2170, 0
      %v2245 = vsel %vm2183, %v2171, 0
      %v2248 = vsel %vm2183, %v2172, 0
      %v2251 = vsel %vm2183, %v2173, 0
      %v2254 = vsel %vm2183, %v2174, 0
      %v2257 = vsel %vm2183, %v2175, 0
      %v2260 = vsel %vm2183, %v2176, 0
      %v2263 = vsel %vm2183, %v2177, 0
      %v2266 = vsel %vm2183, %v2178, 0
      %v2269 = vsel %vm2183, %v2179, 0
      %v2272 = vsel %vm2183, %v2180, 0
      %v2275 = vsel %vm2183, %v2181, 0
      %v2278 = vsel %vm2183, %v2182, 0
      %vm2280 = vcmask 1043456
      %v2282 = vsel %vm2280, %v284, 0
      %2284 = vmatprep.subr.mxu0 0.0
      %2285 = vmatpush1.msra.mxu0 %v2282
      %2286 = vmatprep.subr.mxu0 0.0
      %2287 = vmatpush1.msra.mxu0 0.0
      %2288 = vmatprep.subr.mxu0 0.0
      %2289 = vmatpush1.msra.mxu0 0.0
      %2290 = vmatprep.subr.mxu0 0.0
      %2291 = vmatpush1.msra.mxu0 0.0
      %2292 = vmatprep.subr.mxu0 0.0
      %2293 = vmatpush1.msra.mxu0 0.0
      %2294 = vmatprep.subr.mxu0 0.0
      %2295 = vmatpush1.msra.mxu0 0.0
      %2296 = vmatprep.subr.mxu0 0.0
      %2297 = vmatpush1.msra.mxu0 0.0
      %2298 = vmatprep.subr.mxu0 0.0
      %2299 = vmatpush1.msra.mxu0 0.0
      %2300 = vmatprep.subr.mxu0 0.0
      %2301 = vmatpush1.msra.mxu0 0.0
      %2302 = vmatprep.subr.mxu0 0.0
      %2303 = vmatpush1.msra.mxu0 0.0
      %2304 = vmatprep.subr.mxu0 0.0
      %2305 = vmatpush1.msra.mxu0 0.0
      %2306 = vmatprep.subr.mxu0 0.0
      %2307 = vmatpush1.msra.mxu0 0.0
      %2308 = vmatprep.subr.mxu0 0.0
      %2309 = vmatpush1.msra.mxu0 0.0
      %2310 = vmatprep.subr.mxu0 0.0
      %2311 = vmatpush1.msra.mxu0 0.0
      %2312 = vmatprep.subr.mxu0 0.0
      %2313 = vmatpush1.msra.mxu0 0.0
      %2314 = vmatprep.subr.mxu0 0.0
      %2315 = vmatpush1.msra.mxu0 0.0
      %2316 = vmatprep.subr.mxu0 0.0
      %2317 = vmatpush1.msra.mxu0 0.0
      %2318 = vmatprep.subr.mxu0 0.0
      %2319 = vmatpush1.msra.mxu0 0.0
      %2320 = vmatprep.subr.mxu0 0.0
      %2321 = vmatpush1.msra.mxu0 0.0
      %2322 = vmatprep.subr.mxu0 0.0
      %2323 = vmatpush1.msra.mxu0 0.0
      %2324 = vmatprep.subr.mxu0 0.0
      %2325 = vmatpush1.msra.mxu0 0.0
      %2326 = vmatprep.subr.mxu0 0.0
      %2327 = vmatpush1.msra.mxu0 0.0
      %2328 = vmatprep.subr.mxu0 0.0
      %2329 = vmatpush1.msra.mxu0 0.0
      %2330 = vmatprep.subr.mxu0 0.0
      %2331 = vmatpush1.msra.mxu0 0.0
      %2332 = vmatprep.subr.mxu0 0.0
      %2333 = vmatpush1.msra.mxu0 0.0
      %2334 = vmatprep.subr.mxu0 0.0
      %2335 = vmatpush1.msra.mxu0 0.0
      %2336 = vmatprep.subr.mxu0 0.0
      %2337 = vmatpush1.msra.mxu0 0.0
      %2338 = vmatprep.subr.mxu0 0.0
      %2339 = vmatpush1.msra.mxu0 0.0
      %2340 = vmatprep.subr.mxu0 0.0
      %2341 = vmatpush1.msra.mxu0 0.0
      %2342 = vmatprep.subr.mxu0 0.0
      %2343 = vmatpush1.msra.mxu0 0.0
      %2344 = vmatprep.subr.mxu0 0.0
      %2345 = vmatpush1.msra.mxu0 0.0
      %2346 = vmatprep.subr.mxu0 0.0
      %2347 = vmatpush1.msra.mxu0 0.0
      %2348 = vmatprep.mubr.f32.mxu0 0.0
      %2349 = vmatmul.mubr.f32.gmra.mrb[0].mxu0 %v2185
      %v2350 = vpop.f32.mrb[0].mxu0
      %v2351 = vadd.f32 0.0, %v2350
      %v2352 = vpop.f32.mrb[0].mxu0
      %2353 = vmatprep.mubr.f32.mxu0 0.0
      %2354 = vmatmul.mubr.f32.gmra.mrb[0].mxu0 %v2188
      %v2355 = vpop.f32.mrb[0].mxu0
      %v2356 = vadd.f32 0.0, %v2355
      %v2357 = vpop.f32.mrb[0].mxu0
      %2358 = vmatprep.mubr.f32.mxu0 0.0
      %2359 = vmatmul.mubr.f32.gmra.mrb[0].mxu0 %v2191
      %v2360 = vpop.f32.mrb[0].mxu0
      %v2361 = vadd.f32 0.0, %v2360
      %v2362 = vpop.f32.mrb[0].mxu0
      %2363 = vmatprep.mubr.f32.mxu0 0.0
      %2364 = vmatmul.mubr.f32.gmra.mrb[0].mxu0 %v2194
      %v2365 = vpop.f32.mrb[0].mxu0
      %v2366 = vadd.f32 0.0, %v2365
      %v2367 = vpop.f32.mrb[0].mxu0
      %2368 = vmatprep.mubr.f32.mxu0 0.0
      %2369 = vmatmul.mubr.f32.gmra.mrb[0].mxu0 %v2197
      %v2370 = vpop.f32.mrb[0].mxu0
      %v2371 = vadd.f32 0.0, %v2370
      %v2372 = vpop.f32.mrb[0].mxu0
      %2373 = vmatprep.mubr.f32.mxu0 0.0
      %2374 = vmatmul.mubr.f32.gmra.mrb[0].mxu0 %v2200
      %v2375 = vpop.f32.mrb[0].mxu0
      %v2376 = vadd.f32 0.0, %v2375
      %v2377 = vpop.f32.mrb[0].mxu0
      %2378 = vmatprep.mubr.f32.mxu0 0.0
      %2379 = vmatmul.mubr.f32.gmra.mrb[0].mxu0 %v2203
      %v2380 = vpop.f32.mrb[0].mxu0
      %v2381 = vadd.f32 0.0, %v2380
      %v2382 = vpop.f32.mrb[0].mxu0
      %2383 = vmatprep.mubr.f32.mxu0 0.0
      %2384 = vmatmul.mubr.f32.gmra.mrb[0].mxu0 %v2206
      %v2385 = vpop.f32.mrb[0].mxu0
      %v2386 = vadd.f32 0.0, %v2385
      %v2387 = vpop.f32.mrb[0].mxu0
      %2388 = vmatprep.mubr.f32.mxu0 0.0
      %2389 = vmatmul.mubr.f32.gmra.mrb[0].mxu0 %v2209
      %v2390 = vpop.f32.mrb[0].mxu0
      %v2391 = vadd.f32 0.0, %v2390
      %v2392 = vpop.f32.mrb[0].mxu0
      %2393 = vmatprep.mubr.f32.mxu0 0.0
      %2394 = vmatmul.mubr.f32.gmra.mrb[0].mxu0 %v2212
      %v2395 = vpop.f32.mrb[0].mxu0
      %v2396 = vadd.f32 0.0, %v2395
      %v2397 = vpop.f32.mrb[0].mxu0
      %2398 = vmatprep.mubr.f32.mxu0 0.0
      %2399 = vmatmul.mubr.f32.gmra.mrb[0].mxu0 %v2215
      %v2400 = vpop.f32.mrb[0].mxu0
      %v2401 = vadd.f32 0.0, %v2400
      %v2402 = vpop.f32.mrb[0].mxu0
      %2403 = vmatprep.mubr.f32.mxu0 0.0
      %2404 = vmatmul.mubr.f32.gmra.mrb[0].mxu0 %v2218
      %v2405 = vpop.f32.mrb[0].mxu0
      %v2406 = vadd.f32 0.0, %v2405
      %v2407 = vpop.f32.mrb[0].mxu0
      %2408 = vmatprep.mubr.f32.mxu0 0.0
      %2409 = vmatmul.mubr.f32.gmra.mrb[0].mxu0 %v2221
      %v2410 = vpop.f32.mrb[0].mxu0
      %v2411 = vadd.f32 0.0, %v2410
      %v2412 = vpop.f32.mrb[0].mxu0
      %2413 = vmatprep.mubr.f32.mxu0 0.0
      %2414 = vmatmul.mubr.f32.gmra.mrb[0].mxu0 %v2224
      %v2415 = vpop.f32.mrb[0].mxu0
      %v2416 = vadd.f32 0.0, %v2415
      %v2417 = vpop.f32.mrb[0].mxu0
      %2418 = vmatprep.mubr.f32.mxu0 0.0
      %2419 = vmatmul.mubr.f32.gmra.mrb[0].mxu0 %v2227
      %v2420 = vpop.f32.mrb[0].mxu0
      %v2421 = vadd.f32 0.0, %v2420
      %v2422 = vpop.f32.mrb[0].mxu0
      %2423 = vmatprep.mubr.f32.mxu0 0.0
      %2424 = vmatmul.mubr.f32.gmra.mrb[0].mxu0 %v2230
      %v2425 = vpop.f32.mrb[0].mxu0
      %v2426 = vadd.f32 0.0, %v2425
      %v2427 = vpop.f32.mrb[0].mxu0
      %2428 = vmatprep.mubr.f32.mxu0 0.0
      %2429 = vmatmul.mubr.f32.gmra.mrb[0].mxu0 %v2233
      %v2430 = vpop.f32.mrb[0].mxu0
      %v2431 = vadd.f32 0.0, %v2430
      %v2432 = vpop.f32.mrb[0].mxu0
      %2433 = vmatprep.mubr.f32.mxu0 0.0
      %2434 = vmatmul.mubr.f32.gmra.mrb[0].mxu0 %v2236
      %v2435 = vpop.f32.mrb[0].mxu0
      %v2436 = vadd.f32 0.0, %v2435
      %v2437 = vpop.f32.mrb[0].mxu0
      %2438 = vmatprep.mubr.f32.mxu0 0.0
      %2439 = vmatmul.mubr.f32.gmra.mrb[0].mxu0 %v2239
      %v2440 = vpop.f32.mrb[0].mxu0
      %v2441 = vadd.f32 0.0, %v2440
      %v2442 = vpop.f32.mrb[0].mxu0
      %2443 = vmatprep.mubr.f32.mxu0 0.0
      %2444 = vmatmul.mubr.f32.gmra.mrb[0].mxu0 %v2242
      %v2445 = vpop.f32.mrb[0].mxu0
      %v2446 = vadd.f32 0.0, %v2445
      %v2447 = vpop.f32.mrb[0].mxu0
      %2448 = vmatprep.mubr.f32.mxu0 0.0
      %2449 = vmatmul.mubr.f32.gmra.mrb[0].mxu0 %v2245
      %v2450 = vpop.f32.mrb[0].mxu0
      %v2451 = vadd.f32 0.0, %v2450
      %v2452 = vpop.f32.mrb[0].mxu0
      %2453 = vmatprep.mubr.f32.mxu0 0.0
      %2454 = vmatmul.mubr.f32.gmra.mrb[0].mxu0 %v2248
      %v2455 = vpop.f32.mrb[0].mxu0
      %v2456 = vadd.f32 0.0, %v2455
      %v2457 = vpop.f32.mrb[0].mxu0
      %2458 = vmatprep.mubr.f32.mxu0 0.0
      %2459 = vmatmul.mubr.f32.gmra.mrb[0].mxu0 %v2251
      %v2460 = vpop.f32.mrb[0].mxu0
      %v2461 = vadd.f32 0.0, %v2460
      %v2462 = vpop.f32.mrb[0].mxu0
      %2463 = vmatprep.mubr.f32.mxu0 0.0
      %2464 = vmatmul.mubr.f32.gmra.mrb[0].mxu0 %v2254
      %v2465 = vpop.f32.mrb[0].mxu0
      %v2466 = vadd.f32 0.0, %v2465
      %v2467 = vpop.f32.mrb[0].mxu0
      %2468 = vmatprep.mubr.f32.mxu0 0.0
      %2469 = vmatmul.mubr.f32.gmra.mrb[0].mxu0 %v2257
      %v2470 = vpop.f32.mrb[0].mxu0
      %v2471 = vadd.f32 0.0, %v2470
      %v2472 = vpop.f32.mrb[0].mxu0
      %2473 = vmatprep.mubr.f32.mxu0 0.0
      %2474 = vmatmul.mubr.f32.gmra.mrb[0].mxu0 %v2260
      %v2475 = vpop.f32.mrb[0].mxu0
      %v2476 = vadd.f32 0.0, %v2475
      %v2477 = vpop.f32.mrb[0].mxu0
      %2478 = vmatprep.mubr.f32.mxu0 0.0
      %2479 = vmatmul.mubr.f32.gmra.mrb[0].mxu0 %v2263
      %v2480 = vpop.f32.mrb[0].mxu0
      %v2481 = vadd.f32 0.0, %v2480
      %v2482 = vpop.f32.mrb[0].mxu0
      %2483 = vmatprep.mubr.f32.mxu0 0.0
      %2484 = vmatmul.mubr.f32.gmra.mrb[0].mxu0 %v2266
      %v2485 = vpop.f32.mrb[0].mxu0
      %v2486 = vadd.f32 0.0, %v2485
      %v2487 = vpop.f32.mrb[0].mxu0
      %2488 = vmatprep.mubr.f32.mxu0 0.0
      %2489 = vmatmul.mubr.f32.gmra.mrb[0].mxu0 %v2269
      %v2490 = vpop.f32.mrb[0].mxu0
      %v2491 = vadd.f32 0.0, %v2490
      %v2492 = vpop.f32.mrb[0].mxu0
      %2493 = vmatprep.mubr.f32.mxu0 0.0
      %2494 = vmatmul.mubr.f32.gmra.mrb[0].mxu0 %v2272
      %v2495 = vpop.f32.mrb[0].mxu0
      %v2496 = vadd.f32 0.0, %v2495
      %v2497 = vpop.f32.mrb[0].mxu0
      %2498 = vmatprep.mubr.f32.mxu0 0.0
      %2499 = vmatmul.mubr.f32.gmra.mrb[0].mxu0 %v2275
      %v2500 = vpop.f32.mrb[0].mxu0
      %v2501 = vadd.f32 0.0, %v2500
      %v2502 = vpop.f32.mrb[0].mxu0
      %2503 = vmatprep.mubr.f32.mxu0 0.0
      %2504 = vmatmul.mubr.f32.gmra.mrb[0].mxu0 %v2278
      %v2505 = vpop.f32.mrb[0].mxu0
      %v2506 = vadd.f32 0.0, %v2505
      %v2507 = vpop.f32.mrb[0].mxu0
      %2508 = vdwg.mxu0
      %vm2509 = vcmp.gt.f32.partialorder %v2351, 0.0
      %vm2510 = vcmp.gt.f32.partialorder %v2356, 0.0
      %vm2511 = vcmp.gt.f32.partialorder %v2361, 0.0
      %vm2512 = vcmp.gt.f32.partialorder %v2366, 0.0
      %vm2513 = vcmp.gt.f32.partialorder %v2371, 0.0
      %vm2514 = vcmp.gt.f32.partialorder %v2376, 0.0
      %vm2515 = vcmp.gt.f32.partialorder %v2381, 0.0
      %vm2516 = vcmp.gt.f32.partialorder %v2386, 0.0
      %vm2517 = vcmp.gt.f32.partialorder %v2391, 0.0
      %vm2518 = vcmp.gt.f32.partialorder %v2396, 0.0
      %vm2519 = vcmp.gt.f32.partialorder %v2401, 0.0
      %vm2520 = vcmp.gt.f32.partialorder %v2406, 0.0
      %vm2521 = vcmp.gt.f32.partialorder %v2411, 0.0
      %vm2522 = vcmp.gt.f32.partialorder %v2416, 0.0
      %vm2523 = vcmp.gt.f32.partialorder %v2421, 0.0
      %vm2524 = vcmp.gt.f32.partialorder %v2426, 0.0
      %vm2525 = vcmp.gt.f32.partialorder %v2431, 0.0
      %vm2526 = vcmp.gt.f32.partialorder %v2436, 0.0
      %vm2527 = vcmp.gt.f32.partialorder %v2441, 0.0
      %vm2528 = vcmp.gt.f32.partialorder %v2446, 0.0
      %vm2529 = vcmp.gt.f32.partialorder %v2451, 0.0
      %vm2530 = vcmp.gt.f32.partialorder %v2456, 0.0
      %vm2531 = vcmp.gt.f32.partialorder %v2461, 0.0
      %vm2532 = vcmp.gt.f32.partialorder %v2466, 0.0
      %vm2533 = vcmp.gt.f32.partialorder %v2471, 0.0
      %vm2534 = vcmp.gt.f32.partialorder %v2476, 0.0
      %vm2535 = vcmp.gt.f32.partialorder %v2481, 0.0
      %vm2536 = vcmp.gt.f32.partialorder %v2486, 0.0
      %vm2537 = vcmp.gt.f32.partialorder %v2491, 0.0
      %vm2538 = vcmp.gt.f32.partialorder %v2496, 0.0
      %vm2539 = vcmp.gt.f32.partialorder %v2501, 0.0
      %vm2540 = vcmp.gt.f32.partialorder %v2506, 0.0
      %v2541 = vmul.f32 %v2351, 0.2
      %v2542 = vmul.f32 %v2356, 0.2
      %v2543 = vmul.f32 %v2361, 0.2
      %v2544 = vmul.f32 %v2366, 0.2
      %v2545 = vmul.f32 %v2371, 0.2
      %v2546 = vmul.f32 %v2376, 0.2
      %v2547 = vmul.f32 %v2381, 0.2
      %v2548 = vmul.f32 %v2386, 0.2
      %v2549 = vmul.f32 %v2391, 0.2
      %v2550 = vmul.f32 %v2396, 0.2
      %v2551 = vmul.f32 %v2401, 0.2
      %v2552 = vmul.f32 %v2406, 0.2
      %v2553 = vmul.f32 %v2411, 0.2
      %v2554 = vmul.f32 %v2416, 0.2
      %v2555 = vmul.f32 %v2421, 0.2
      %v2556 = vmul.f32 %v2426, 0.2
      %v2557 = vmul.f32 %v2431, 0.2
      %v2558 = vmul.f32 %v2436, 0.2
      %v2559 = vmul.f32 %v2441, 0.2
      %v2560 = vmul.f32 %v2446, 0.2
      %v2561 = vmul.f32 %v2451, 0.2
      %v2562 = vmul.f32 %v2456, 0.2
      %v2563 = vmul.f32 %v2461, 0.2
      %v2564 = vmul.f32 %v2466, 0.2
      %v2565 = vmul.f32 %v2471, 0.2
      %v2566 = vmul.f32 %v2476, 0.2
      %v2567 = vmul.f32 %v2481, 0.2
      %v2568 = vmul.f32 %v2486, 0.2
      %v2569 = vmul.f32 %v2491, 0.2
      %v2570 = vmul.f32 %v2496, 0.2
      %v2571 = vmul.f32 %v2501, 0.2
      %v2572 = vmul.f32 %v2506, 0.2
      %v2573 = vsel %vm2509, %v2351, %v2541
      %v2574 = vsel %vm2510, %v2356, %v2542
      %v2575 = vsel %vm2511, %v2361, %v2543
      %v2576 = vsel %vm2512, %v2366, %v2544
      %v2577 = vsel %vm2513, %v2371, %v2545
      %v2578 = vsel %vm2514, %v2376, %v2546
      %v2579 = vsel %vm2515, %v2381, %v2547
      %v2580 = vsel %vm2516, %v2386, %v2548
      %v2581 = vsel %vm2517, %v2391, %v2549
      %v2582 = vsel %vm2518, %v2396, %v2550
      %v2583 = vsel %vm2519, %v2401, %v2551
      %v2584 = vsel %vm2520, %v2406, %v2552
      %v2585 = vsel %vm2521, %v2411, %v2553
      %v2586 = vsel %vm2522, %v2416, %v2554
      %v2587 = vsel %vm2523, %v2421, %v2555
      %v2588 = vsel %vm2524, %v2426, %v2556
      %v2589 = vsel %vm2525, %v2431, %v2557
      %v2590 = vsel %vm2526, %v2436, %v2558
      %v2591 = vsel %vm2527, %v2441, %v2559
      %v2592 = vsel %vm2528, %v2446, %v2560
      %v2593 = vsel %vm2529, %v2451, %v2561
      %v2594 = vsel %vm2530, %v2456, %v2562
      %v2595 = vsel %vm2531, %v2461, %v2563
      %v2596 = vsel %vm2532, %v2466, %v2564
      %v2597 = vsel %vm2533, %v2471, %v2565
      %v2598 = vsel %vm2534, %v2476, %v2566
      %v2599 = vsel %vm2535, %v2481, %v2567
      %v2600 = vsel %vm2536, %v2486, %v2568
      %v2601 = vsel %vm2537, %v2491, %v2569
      %v2602 = vsel %vm2538, %v2496, %v2570
      %v2603 = vsel %vm2539, %v2501, %v2571
      %v2604 = vsel %vm2540, %v2506, %v2572
      %2605 = vst.msk [vmem:[%s212] sm:$0xff] %vm1600, %v2573
      %2606 = vst.msk [vmem:[%s212 + $0x8] sm:$0xff] %vm1600, %v2574
      %2607 = vst.msk [vmem:[%s212 + $0x10] sm:$0xff] %vm1600, %v2575
      %2608 = vst.msk [vmem:[%s212 + $0x18] sm:$0xff] %vm1600, %v2576
      %2609 = vst.msk [vmem:[%s212 + $0x20] sm:$0xff] %vm1600, %v2577
      %2610 = vst.msk [vmem:[%s212 + $0x28] sm:$0xff] %vm1600, %v2578
      %2611 = vst.msk [vmem:[%s212 + $0x30] sm:$0xff] %vm1600, %v2579
      %2612 = vst.msk [vmem:[%s212 + $0x38] sm:$0xff] %vm1600, %v2580
      %2613 = vst.msk [vmem:[%s212 + $0x40] sm:$0xff] %vm1600, %v2581
      %2614 = vst.msk [vmem:[%s212 + $0x48] sm:$0xff] %vm1600, %v2582
      %2615 = vst.msk [vmem:[%s212 + $0x50] sm:$0xff] %vm1600, %v2583
      %2616 = vst.msk [vmem:[%s212 + $0x58] sm:$0xff] %vm1600, %v2584
      %2617 = vst.msk [vmem:[%s212 + $0x60] sm:$0xff] %vm1600, %v2585
      %2618 = vst.msk [vmem:[%s212 + $0x68] sm:$0xff] %vm1600, %v2586
      %2619 = vst.msk [vmem:[%s212 + $0x70] sm:$0xff] %vm1600, %v2587
      %2620 = vst.msk [vmem:[%s212 + $0x78] sm:$0xff] %vm1600, %v2588
      %2621 = vst.msk [vmem:[%s212 + $0x80] sm:$0xff] %vm1600, %v2589
      %2622 = vst.msk [vmem:[%s212 + $0x88] sm:$0xff] %vm1600, %v2590
      %2623 = vst.msk [vmem:[%s212 + $0x90] sm:$0xff] %vm1600, %v2591
      %2624 = vst.msk [vmem:[%s212 + $0x98] sm:$0xff] %vm1600, %v2592
      %2625 = vst.msk [vmem:[%s212 + $0xa0] sm:$0xff] %vm1600, %v2593
      %2626 = vst.msk [vmem:[%s212 + $0xa8] sm:$0xff] %vm1600, %v2594
      %2627 = vst.msk [vmem:[%s212 + $0xb0] sm:$0xff] %vm1600, %v2595
      %2628 = vst.msk [vmem:[%s212 + $0xb8] sm:$0xff] %vm1600, %v2596
      %2629 = vst.msk [vmem:[%s212 + $0xc0] sm:$0xff] %vm1600, %v2597
      %2630 = vst.msk [vmem:[%s212 + $0xc8] sm:$0xff] %vm1600, %v2598
      %2631 = vst.msk [vmem:[%s212 + $0xd0] sm:$0xff] %vm1600, %v2599
      %2632 = vst.msk [vmem:[%s212 + $0xd8] sm:$0xff] %vm1600, %v2600
      %2633 = vst.msk [vmem:[%s212 + $0xe0] sm:$0xff] %vm1600, %v2601
      %2634 = vst.msk [vmem:[%s212 + $0xe8] sm:$0xff] %vm1600, %v2602
      %2635 = vst.msk [vmem:[%s212 + $0xf0] sm:$0xff] %vm1600, %v2603
      %2636 = vst.msk [vmem:[%s212 + $0xf8] sm:$0xff] %vm1600, %v2604
      %s2637 = smul.u32 32, %s14
      %p2638 = scmp.lt.s32.totalorder %s2637, 63
      %s2639 = scalar_select %p2638, %s2637, 63
      %s2640 = smul.addr %s2639, 8
      %s2641 = scalar_lea.vmem %s3, %s2640
      // Predicated region
      $region33: #{_lambda_.7} parent=31 // pred_check
        %p2642 = pneg %p110
      $region34: #{_lambda_.7} parent=31 // pred_check_branch
        %2644 = sbr.rel (%p2642) target = $region36
      $region35: #{_lambda_.7} parent=31 // pred_region
        %s2645 = smul.u32 32, %s14
      $region36: #{_lambda_.7} parent=31 // pred_fallthru
        _
    $region32: #{_lambda_.7} parent=5 // pred_fallthru
      _
    %p2646 = scmp.le.s32.totalorder 2, %s9
    // Predicated region
    $region37: #{_lambda_.7} parent=5 // pred_check
      %p2647 = pneg %p2646
    $region38: #{_lambda_.7} parent=5 // pred_check_branch
      %2649 = sbr.rel (%p2647) target = $region40
    $region39: #{_lambda_.7} parent=5 // pred_region
      %s2650 = ssub.s32 %s9, 2
      // Predicated region
      $region41: #{_lambda_.7} parent=39 // pred_check
        %p2651 = pneg %p116
      $region42: #{_lambda_.7} parent=39 // pred_check_branch
        %2653 = sbr.rel (%p2651) target = $region44
      $region43: #{_lambda_.7} parent=39 // pred_region
        %s2654 = smul.u32 32, %s15
        %p2655 = scmp.lt.s32.totalorder %s2654, 63
        %s2656 = scalar_select %p2655, %s2654, 63
        %s2657 = smul.addr %s2656, 8
        %s2658 = scalar_lea.vmem %s3, %s2657
      $region44: #{_lambda_.7} parent=39 // pred_fallthru
        _
    $region40: #{_lambda_.7} parent=5 // pred_fallthru
      _
  $region6: #{_lambda_.7} parent=0 // loop_footer
    %s13 = sadd.s32 1, %s9
  $region7: #{_lambda_.7} parent=0 // loop_footer_branch
    %8 = sbr.rel target = $region3
  $region8: #{_lambda_.7} parent=0 // loop_exit
    _

// kernel: _lambda_.9
$region0: #{_lambda_.9}
  #allocation0 [shape = 'u32[]', space=smem, size = 0x4, offset = 0x4, fixed_abs, tag = 'smem constant byte address 0x4 - core index']
  #allocation1 [shape = 'u32[144,128]{1,0:T(1,128)}', space=vmem, size = 0x12000, scoped, tag = 'internal scratch']
  %s0 = inlined_call_operand.vmem [shape: f32[8,8,8,26], index: 0, kind: input, shape index: {}]
  %s1 = inlined_call_operand.vmem [shape: f32[8,8,8,8], index: 1, kind: input, shape index: {}]
  %s2 = inlined_call_operand.vmem [shape: f32[26,8], index: 2, kind: input, shape index: {}]
  %s3 = inlined_call_operand.vmem [shape: f32[1,8], index: 3, kind: input, shape index: {}]
  %s4 = inlined_call_operand.vmem [shape: f32[72,8], index: 4, kind: input, shape index: {}]
  %s5 = inlined_call_operand.vmem [shape: f32[1,8], index: 5, kind: input, shape index: {}]
  %s6 = inlined_call_operand.vmem [shape: f32[8,8,8,8], index: 6, kind: output, shape index: {}]
  %s7 = sld [smem:[#allocation0]]
  $region57: #{_lambda_.9} parent=0
    _
  %s9 = ssub.s32 1, %s7
  %s10 = scalar_select 0, %s9, %s7
  loop: start=0, step=1, limit=4
  $region2: #{_lambda_.9} parent=0 // loop_pre_header
    _
  $region3: #{_lambda_.9} parent=0 // loop_header
    %s12 = sphi 0, %s16
    %p13 = scmp.ge.s32.totalorder %s12, 4
    %s22 = sphi 0, %s24
    %s25 = sphi 0, %s22
    %s26 = sphi 0, %s25
    %s42 = sphi 0, %s26
    %s48 = sphi 0, %s50
    %s51 = sphi 0, %s48
    %s52 = sphi 0, %s51
    %s68 = sphi 0, %s52
    %s72 = sphi 0, %s72
    %s74 = sphi 0, %s72
    %s75 = sphi 0, %s74
    %s89 = sphi 0, %s75
    %s93 = sphi 0, %s93
    %s95 = sphi 0, %s93
    %s96 = sphi 0, %s95
    %s110 = sphi 0, %s96
    %s114 = sphi 0, %s114
    %s116 = sphi 0, %s114
    %s117 = sphi 0, %s116
    %s131 = sphi 0, %s117
    %s135 = sphi 0, %s135
    %s137 = sphi 0, %s135
    %s138 = sphi 0, %s137
    %s152 = sphi 0, %s138
    %s158 = sphi 0, %s160
    %s161 = sphi 0, %s158
    %s162 = sphi 0, %s161
    %s178 = sphi 0, %s162
  $region4: #{_lambda_.9} parent=0 // loop_header_branch
    %15 = sbr.rel (%p13) target = $region8
  $region5: #{_lambda_.9} parent=0 // loop_body
    %s17 = ssub.s32 %s12, 1
    %s18 = ssub.s32 %s12, 2
    %s19 = sadd.s32 %s12, 1
    %s20 = ssub.s32 %s12, %s19
    %p21 = scmp.eq.s32.totalorder %s20, 0
    %s23 = sadd.s32 %s22, 1
    %s24 = scalar_select %p21, %s22, %s23
    %p27 = pneg %p21
    %p28 = scmp.eq.s32.totalorder %s12, 1
    %p29 = por %p27, %p28
    %p30 = scmp.ne.s32.totalorder %s22, %s25
    %p31 = scmp.eq.s32.totalorder %s12, 0
    %p32 = por %p30, %p31
    %p33 = scmp.ne.s32.totalorder %s22, %s25
    %p34 = scmp.eq.s32.totalorder %s17, 1
    %p35 = por %p33, %p34
    %p36 = scmp.ne.s32.totalorder %s25, %s26
    %p37 = scmp.eq.s32.totalorder %s17, 0
    %p38 = por %p36, %p37
    %p39 = scmp.ne.s32.totalorder %s25, %s26
    %p40 = scmp.eq.s32.totalorder %s18, 1
    %p41 = por %p39, %p40
    %p43 = scmp.ne.s32.totalorder %s26, %s42
    %p44 = scmp.eq.s32.totalorder %s18, 0
    %p45 = por %p43, %p44
    %s46 = ssub.s32 %s12, %s19
    %p47 = scmp.eq.s32.totalorder %s46, 0
    %s49 = sadd.s32 %s48, 1
    %s50 = scalar_select %p47, %s48, %s49
    %p53 = pneg %p47
    %p54 = scmp.eq.s32.totalorder %s12, 1
    %p55 = por %p53, %p54
    %p56 = scmp.ne.s32.totalorder %s48, %s51
    %p57 = scmp.eq.s32.totalorder %s12, 0
    %p58 = por %p56, %p57
    %p59 = scmp.ne.s32.totalorder %s48, %s51
    %p60 = scmp.eq.s32.totalorder %s17, 1
    %p61 = por %p59, %p60
    %p62 = scmp.ne.s32.totalorder %s51, %s52
    %p63 = scmp.eq.s32.totalorder %s17, 0
    %p64 = por %p62, %p63
    %p65 = scmp.ne.s32.totalorder %s51, %s52
    %p66 = scmp.eq.s32.totalorder %s18, 1
    %p67 = por %p65, %p66
    %p69 = scmp.ne.s32.totalorder %s52, %s68
    %p70 = scmp.eq.s32.totalorder %s18, 0
    %p71 = por %p69, %p70
    %s73 = sadd.s32 %s72, 1
    %p76 = scmp.eq.s32.totalorder %s12, 1
    %p77 = scmp.ne.s32.totalorder %s72, %s74
    %p78 = scmp.eq.s32.totalorder %s12, 0
    %p79 = por %p77, %p78
    %p80 = scmp.ne.s32.totalorder %s72, %s74
    %p81 = scmp.eq.s32.totalorder %s17, 1
    %p82 = por %p80, %p81
    %p83 = scmp.ne.s32.totalorder %s74, %s75
    %p84 = scmp.eq.s32.totalorder %s17, 0
    %p85 = por %p83, %p84
    %p86 = scmp.ne.s32.totalorder %s74, %s75
    %p87 = scmp.eq.s32.totalorder %s18, 1
    %p88 = por %p86, %p87
    %p90 = scmp.ne.s32.totalorder %s75, %s89
    %p91 = scmp.eq.s32.totalorder %s18, 0
    %p92 = por %p90, %p91
    %s94 = sadd.s32 %s93, 1
    %p97 = scmp.eq.s32.totalorder %s12, 1
    %p98 = scmp.ne.s32.totalorder %s93, %s95
    %p99 = scmp.eq.s32.totalorder %s12, 0
    %p100 = por %p98, %p99
    %p101 = scmp.ne.s32.totalorder %s93, %s95
    %p102 = scmp.eq.s32.totalorder %s17, 1
    %p103 = por %p101, %p102
    %p104 = scmp.ne.s32.totalorder %s95, %s96
    %p105 = scmp.eq.s32.totalorder %s17, 0
    %p106 = por %p104, %p105
    %p107 = scmp.ne.s32.totalorder %s95, %s96
    %p108 = scmp.eq.s32.totalorder %s18, 1
    %p109 = por %p107, %p108
    %p111 = scmp.ne.s32.totalorder %s96, %s110
    %p112 = scmp.eq.s32.totalorder %s18, 0
    %p113 = por %p111, %p112
    %s115 = sadd.s32 %s114, 1
    %p118 = scmp.eq.s32.totalorder %s12, 1
    %p119 = scmp.ne.s32.totalorder %s114, %s116
    %p120 = scmp.eq.s32.totalorder %s12, 0
    %p121 = por %p119, %p120
    %p122 = scmp.ne.s32.totalorder %s114, %s116
    %p123 = scmp.eq.s32.totalorder %s17, 1
    %p124 = por %p122, %p123
    %p125 = scmp.ne.s32.totalorder %s116, %s117
    %p126 = scmp.eq.s32.totalorder %s17, 0
    %p127 = por %p125, %p126
    %p128 = scmp.ne.s32.totalorder %s116, %s117
    %p129 = scmp.eq.s32.totalorder %s18, 1
    %p130 = por %p128, %p129
    %p132 = scmp.ne.s32.totalorder %s117, %s131
    %p133 = scmp.eq.s32.totalorder %s18, 0
    %p134 = por %p132, %p133
    %s136 = sadd.s32 %s135, 1
    %p139 = scmp.eq.s32.totalorder %s12, 1
    %p140 = scmp.ne.s32.totalorder %s135, %s137
    %p141 = scmp.eq.s32.totalorder %s12, 0
    %p142 = por %p140, %p141
    %p143 = scmp.ne.s32.totalorder %s135, %s137
    %p144 = scmp.eq.s32.totalorder %s17, 1
    %p145 = por %p143, %p144
    %p146 = scmp.ne.s32.totalorder %s137, %s138
    %p147 = scmp.eq.s32.totalorder %s17, 0
    %p148 = por %p146, %p147
    %p149 = scmp.ne.s32.totalorder %s137, %s138
    %p150 = scmp.eq.s32.totalorder %s18, 1
    %p151 = por %p149, %p150
    %p153 = scmp.ne.s32.totalorder %s138, %s152
    %p154 = scmp.eq.s32.totalorder %s18, 0
    %p155 = por %p153, %p154
    %s156 = ssub.s32 %s12, %s19
    %p157 = scmp.eq.s32.totalorder %s156, 0
    %s159 = sadd.s32 %s158, 1
    %s160 = scalar_select %p157, %s158, %s159
    %p163 = pneg %p157
    %p164 = scmp.eq.s32.totalorder %s12, 1
    %p165 = por %p163, %p164
    %p166 = scmp.ne.s32.totalorder %s158, %s161
    %p167 = scmp.eq.s32.totalorder %s12, 0
    %p168 = por %p166, %p167
    %p169 = scmp.ne.s32.totalorder %s158, %s161
    %p170 = scmp.eq.s32.totalorder %s17, 1
    %p171 = por %p169, %p170
    %p172 = scmp.ne.s32.totalorder %s161, %s162
    %p173 = scmp.eq.s32.totalorder %s17, 0
    %p174 = por %p172, %p173
    %p175 = scmp.ne.s32.totalorder %s161, %s162
    %p176 = scmp.eq.s32.totalorder %s18, 1
    %p177 = por %p175, %p176
    %p179 = scmp.ne.s32.totalorder %s162, %s178
    %p180 = scmp.eq.s32.totalorder %s18, 0
    %p181 = por %p179, %p180
    %p182 = scmp.le.s32.totalorder 1, %s12
    %p183 = scmp.lt.s32.totalorder %s12, 3
    %p184 = pnand %p182, %p183
    %p185 = pneg %p184
    // Predicated region
    $region9: #{_lambda_.9} parent=5 // pred_check
      _
    $region10: #{_lambda_.9} parent=5 // pred_check_branch
      %187 = sbr.rel (%p184) target = $region12
    $region11: #{_lambda_.9} parent=5 // pred_region
      %s188 = ssub.s32 %s12, 1
      // Predicated region
      $region13: #{_lambda_.9} parent=11 // pred_check
        %p189 = pneg %p85
      $region14: #{_lambda_.9} parent=11 // pred_check_branch
        %191 = sbr.rel (%p189) target = $region16
      $region15: #{_lambda_.9} parent=11 // pred_region
        _
      $region16: #{_lambda_.9} parent=11 // pred_fallthru
        _
      // Predicated region
      $region17: #{_lambda_.9} parent=11 // pred_check
        %p192 = pneg %p106
      $region18: #{_lambda_.9} parent=11 // pred_check_branch
        %194 = sbr.rel (%p192) target = $region20
      $region19: #{_lambda_.9} parent=11 // pred_region
        _
      $region20: #{_lambda_.9} parent=11 // pred_fallthru
        _
      // Predicated region
      $region21: #{_lambda_.9} parent=11 // pred_check
        %p195 = pneg %p127
      $region22: #{_lambda_.9} parent=11 // pred_check_branch
        %197 = sbr.rel (%p195) target = $region24
      $region23: #{_lambda_.9} parent=11 // pred_region
        _
      $region24: #{_lambda_.9} parent=11 // pred_fallthru
        _
      // Predicated region
      $region25: #{_lambda_.9} parent=11 // pred_check
        %p198 = pneg %p148
      $region26: #{_lambda_.9} parent=11 // pred_check_branch
        %200 = sbr.rel (%p198) target = $region28
      $region27: #{_lambda_.9} parent=11 // pred_region
        _
      $region28: #{_lambda_.9} parent=11 // pred_fallthru
        _
    $region12: #{_lambda_.9} parent=5 // pred_fallthru
      _
    %p201 = scmp.lt.s32.totalorder %s12, 2
    // Predicated region
    $region29: #{_lambda_.9} parent=5 // pred_check
      %p202 = pneg %p201
    $region30: #{_lambda_.9} parent=5 // pred_check_branch
      %204 = sbr.rel (%p202) target = $region32
    $region31: #{_lambda_.9} parent=5 // pred_region
      // Predicated region
      $region33: #{_lambda_.9} parent=31 // pred_check
        %p205 = pneg %p32
      $region34: #{_lambda_.9} parent=31 // pred_check_branch
        %207 = sbr.rel (%p205) target = $region36
      $region35: #{_lambda_.9} parent=31 // pred_region
        %s208 = smul.u32 4, %s12
        %p209 = scmp.lt.s32.totalorder %s208, 7
        %s210 = scalar_select %p209, %s208, 7
        %s211 = smul.addr %s210, 8
        %s212 = smul.addr %s211, 8
        %s213 = scalar_lea.vmem %s0, %s212
        %s214 = smul.u32 4, %s12
      $region36: #{_lambda_.9} parent=31 // pred_fallthru
        _
      // Predicated region
      $region37: #{_lambda_.9} parent=31 // pred_check
        %p215 = pneg %p58
      $region38: #{_lambda_.9} parent=31 // pred_check_branch
        %217 = sbr.rel (%p215) target = $region40
      $region39: #{_lambda_.9} parent=31 // pred_region
        %s218 = smul.u32 4, %s12
        %p219 = scmp.lt.s32.totalorder %s218, 7
        %s220 = scalar_select %p219, %s218, 7
        %s221 = smul.addr %s220, 8
        %s222 = smul.addr %s221, 8
        %s223 = scalar_lea.vmem %s1, %s222
        %s224 = smul.u32 4, %s12
      $region40: #{_lambda_.9} parent=31 // pred_fallthru
        _
    $region32: #{_lambda_.9} parent=5 // pred_fallthru
      _
    %p225 = scmp.le.s32.totalorder 1, %s12
    %p226 = scmp.lt.s32.totalorder %s12, 3
    %p227 = pnand %p225, %p226
    %p228 = pneg %p227
    // Predicated region
    $region41: #{_lambda_.9} parent=5 // pred_check
      _
    $region42: #{_lambda_.9} parent=5 // pred_check_branch
      %230 = sbr.rel (%p227) target = $region44
    $region43: #{_lambda_.9} parent=5 // pred_region
      %s231 = ssub.s32 %s12, 1
      %s232 = smul.u32 4, %s17
      %p233 = scmp.lt.s32.totalorder %s232, 7
      %s234 = scalar_select %p233, %s232, 7
      %s235 = smul.addr %s234, 8
      %s236 = smul.addr %s235, 8
      %s237 = scalar_lea.vmem %s0, %s236
      %p238 = pneg %p38
      %p239 = pneg %p35
      %s240 = smul.u32 4, %s17
      %p241 = scmp.lt.s32.totalorder %s240, 7
      %s242 = scalar_select %p241, %s240, 7
      %s243 = smul.addr %s242, 8
      %s244 = smul.addr %s243, 8
      %s245 = scalar_lea.vmem %s1, %s244
      %p246 = pneg %p64
      %p247 = pneg %p61
      %p248 = pneg %p85
      %p249 = pneg %p82
      %p250 = pneg %p106
      %p251 = pneg %p103
      %p252 = pneg %p127
      %p253 = pneg %p124
      %p254 = pneg %p148
      %p255 = pneg %p145
      %p256 = pneg %p174
      %p257 = pneg %p171
      %s258 = smul.u32 4, %s17
      %p259 = scmp.lt.s32.totalorder %s258, 7
      %s260 = scalar_select %p259, %s258, 7
      %s261 = smul.addr %s260, 8
      %s262 = smul.addr %s261, 8
      %s263 = scalar_lea.vmem %s6, %s262
      %s264 = smul.u32 4, %s17
      %p265 = scmp.lt.s32.totalorder %s264, 7
      %s266 = scalar_select %p265, %s264, 7
      %s267 = smul.addr %s266, 8
      %s268 = smul.addr %s267, 8
      %s269 = scalar_lea.vmem %s0, %s268
      %s270 = smul.u32 4, %s17
      %s271 = smul.u32 4, %s17
      %p272 = scmp.lt.s32.totalorder %s271, 7
      %s273 = scalar_select %p272, %s271, 7
      %s274 = smul.addr %s273, 8
      %s275 = smul.addr %s274, 8
      %s276 = scalar_lea.vmem %s1, %s275
      %s277 = smul.u32 4, %s17
      %s278 = smul.u32 4, %s17
      %p279 = scmp.lt.s32.totalorder %s278, 7
      %s280 = scalar_select %p279, %s278, 7
      %s281 = smul.addr %s280, 8
      %s282 = smul.addr %s281, 8
      %s283 = scalar_lea.vmem %s6, %s282
      %s284 = smul.u32 4, %s17
      %v285 = vld [vmem:[%s269] sm:$0xff]
      %v286 = vld [vmem:[%s269 + $0x8] sm:$0xff]
      %v287 = vld [vmem:[%s269 + $0x10] sm:$0xff]
      %v288 = vld [vmem:[%s269 + $0x18] sm:$0xff]
      %v289 = vld [vmem:[%s269 + $0x20] sm:$0xff]
      %v290 = vld [vmem:[%s269 + $0x28] sm:$0xff]
      %v291 = vld [vmem:[%s269 + $0x30] sm:$0xff]
      %v292 = vld [vmem:[%s269 + $0x38] sm:$0xff]
      %v293 = vld [vmem:[%s269 + $0x40] sm:$0xff]
      %v294 = vld [vmem:[%s269 + $0x48] sm:$0xff]
      %v295 = vld [vmem:[%s269 + $0x50] sm:$0xff]
      %v296 = vld [vmem:[%s269 + $0x58] sm:$0xff]
      %v297 = vld [vmem:[%s269 + $0x60] sm:$0xff]
      %v298 = vld [vmem:[%s269 + $0x68] sm:$0xff]
      %v299 = vld [vmem:[%s269 + $0x70] sm:$0xff]
      %v300 = vld [vmem:[%s269 + $0x78] sm:$0xff]
      %v301 = vld [vmem:[%s269 + $0x80] sm:$0xff]
      %v302 = vld [vmem:[%s269 + $0x88] sm:$0xff]
      %v303 = vld [vmem:[%s269 + $0x90] sm:$0xff]
      %v304 = vld [vmem:[%s269 + $0x98] sm:$0xff]
      %v305 = vld [vmem:[%s269 + $0xa0] sm:$0xff]
      %v306 = vld [vmem:[%s269 + $0xa8] sm:$0xff]
      %v307 = vld [vmem:[%s269 + $0xb0] sm:$0xff]
      %v308 = vld [vmem:[%s269 + $0xb8] sm:$0xff]
      %v309 = vld [vmem:[%s269 + $0xc0] sm:$0xff]
      %v310 = vld [vmem:[%s269 + $0xc8] sm:$0xff]
      %v311 = vld [vmem:[%s269 + $0xd0] sm:$0xff]
      %v312 = vld [vmem:[%s269 + $0xd8] sm:$0xff]
      %v313 = vld [vmem:[%s269 + $0xe0] sm:$0xff]
      %v314 = vld [vmem:[%s269 + $0xe8] sm:$0xff]
      %v315 = vld [vmem:[%s269 + $0xf0] sm:$0xff]
      %v316 = vld [vmem:[%s269 + $0xf8] sm:$0xff]
      %v317 = vld [vmem:[%s276] sm:$0xff]
      %v318 = vld [vmem:[%s276 + $0x8] sm:$0xff]
      %v319 = vld [vmem:[%s276 + $0x10] sm:$0xff]
      %v320 = vld [vmem:[%s276 + $0x18] sm:$0xff]
      %v321 = vld [vmem:[%s276 + $0x20] sm:$0xff]
      %v322 = vld [vmem:[%s276 + $0x28] sm:$0xff]
      %v323 = vld [vmem:[%s276 + $0x30] sm:$0xff]
      %v324 = vld [vmem:[%s276 + $0x38] sm:$0xff]
      %v325 = vld [vmem:[%s276 + $0x40] sm:$0xff]
      %v326 = vld [vmem:[%s276 + $0x48] sm:$0xff]
      %v327 = vld [vmem:[%s276 + $0x50] sm:$0xff]
      %v328 = vld [vmem:[%s276 + $0x58] sm:$0xff]
      %v329 = vld [vmem:[%s276 + $0x60] sm:$0xff]
      %v330 = vld [vmem:[%s276 + $0x68] sm:$0xff]
      %v331 = vld [vmem:[%s276 + $0x70] sm:$0xff]
      %v332 = vld [vmem:[%s276 + $0x78] sm:$0xff]
      %v333 = vld [vmem:[%s276 + $0x80] sm:$0xff]
      %v334 = vld [vmem:[%s276 + $0x88] sm:$0xff]
      %v335 = vld [vmem:[%s276 + $0x90] sm:$0xff]
      %v336 = vld [vmem:[%s276 + $0x98] sm:$0xff]
      %v337 = vld [vmem:[%s276 + $0xa0] sm:$0xff]
      %v338 = vld [vmem:[%s276 + $0xa8] sm:$0xff]
      %v339 = vld [vmem:[%s276 + $0xb0] sm:$0xff]
      %v340 = vld [vmem:[%s276 + $0xb8] sm:$0xff]
      %v341 = vld [vmem:[%s276 + $0xc0] sm:$0xff]
      %v342 = vld [vmem:[%s276 + $0xc8] sm:$0xff]
      %v343 = vld [vmem:[%s276 + $0xd0] sm:$0xff]
      %v344 = vld [vmem:[%s276 + $0xd8] sm:$0xff]
      %v345 = vld [vmem:[%s276 + $0xe0] sm:$0xff]
      %v346 = vld [vmem:[%s276 + $0xe8] sm:$0xff]
      %v347 = vld [vmem:[%s276 + $0xf0] sm:$0xff]
      %v348 = vld [vmem:[%s276 + $0xf8] sm:$0xff]
      %v349 = vld [vmem:[%s2] sm:$0xff]
      %v350 = vld [vmem:[%s2 + $0x8] sm:$0xff]
      %v351 = vld [vmem:[%s2 + $0x10] sm:$0xff]
      %v352 = vld [vmem:[%s2 + $0x18] sm:$0x3]
      %v353 = vld [vmem:[%s3] sm:$0x1]
      %v354 = vld [vmem:[%s4] sm:$0xff]
      %v355 = vld [vmem:[%s4 + $0x8] sm:$0xff]
      %v356 = vld [vmem:[%s4 + $0x10] sm:$0xff]
      %v357 = vld [vmem:[%s4 + $0x18] sm:$0xff]
      %v358 = vld [vmem:[%s4 + $0x20] sm:$0xff]
      %v359 = vld [vmem:[%s4 + $0x28] sm:$0xff]
      %v360 = vld [vmem:[%s4 + $0x30] sm:$0xff]
      %v361 = vld [vmem:[%s4 + $0x38] sm:$0xff]
      %v362 = vld [vmem:[%s4 + $0x40] sm:$0xff]
      %v363 = vld [vmem:[%s5] sm:$0x1]
      %v365 = vlaneseq
      %v366 = vshrl.u32 %v365, 7
      %v367 = vsub.s32 0, %v366
      %v368 = vrot.slane %v353, %v367
      %vm370 = vcmask 211968
      %v372 = vsel %vm370, %v285, 0
      %v375 = vsel %vm370, %v286, 0
      %v378 = vsel %vm370, %v287, 0
      %v381 = vsel %vm370, %v288, 0
      %v384 = vsel %vm370, %v289, 0
      %v387 = vsel %vm370, %v290, 0
      %v390 = vsel %vm370, %v291, 0
      %v393 = vsel %vm370, %v292, 0
      %v396 = vsel %vm370, %v293, 0
      %v399 = vsel %vm370, %v294, 0
      %v402 = vsel %vm370, %v295, 0
      %v405 = vsel %vm370, %v296, 0
      %v408 = vsel %vm370, %v297, 0
      %v411 = vsel %vm370, %v298, 0
      %v414 = vsel %vm370, %v299, 0
      %v417 = vsel %vm370, %v300, 0
      %v420 = vsel %vm370, %v301, 0
      %v423 = vsel %vm370, %v302, 0
      %v426 = vsel %vm370, %v303, 0
      %v429 = vsel %vm370, %v304, 0
      %v432 = vsel %vm370, %v305, 0
      %v435 = vsel %vm370, %v306, 0
      %v438 = vsel %vm370, %v307, 0
      %v441 = vsel %vm370, %v308, 0
      %v444 = vsel %vm370, %v309, 0
      %v447 = vsel %vm370, %v310, 0
      %v450 = vsel %vm370, %v311, 0
      %v453 = vsel %vm370, %v312, 0
      %v456 = vsel %vm370, %v313, 0
      %v459 = vsel %vm370, %v314, 0
      %v462 = vsel %vm370, %v315, 0
      %v465 = vsel %vm370, %v316, 0
      %vm467 = vcmask 1041408
      %v469 = vsel %vm467, %v352, 0
      %471 = vmatprep.subr.mxu0 0.0
      %472 = vmatpush1.msra.mxu0 %v349
      %473 = vmatprep.subr.mxu0 0.0
      %474 = vmatpush1.msra.mxu0 %v350
      %475 = vmatprep.subr.mxu0 0.0
      %476 = vmatpush1.msra.mxu0 %v351
      %477 = vmatprep.subr.mxu0 0.0
      %478 = vmatpush1.msra.mxu0 %v469
      %479 = vmatprep.subr.mxu0 0.0
      %480 = vmatpush1.msra.mxu0 0.0
      %481 = vmatprep.subr.mxu0 0.0
      %482 = vmatpush1.msra.mxu0 0.0
      %483 = vmatprep.subr.mxu0 0.0
      %484 = vmatpush1.msra.mxu0 0.0
      %485 = vmatprep.subr.mxu0 0.0
      %486 = vmatpush1.msra.mxu0 0.0
      %487 = vmatprep.subr.mxu0 0.0
      %488 = vmatpush1.msra.mxu0 0.0
      %489 = vmatprep.subr.mxu0 0.0
      %490 = vmatpush1.msra.mxu0 0.0
      %491 = vmatprep.subr.mxu0 0.0
      %492 = vmatpush1.msra.mxu0 0.0
      %493 = vmatprep.subr.mxu0 0.0
      %494 = vmatpush1.msra.mxu0 0.0
      %495 = vmatprep.subr.mxu0 0.0
      %496 = vmatpush1.msra.mxu0 0.0
      %497 = vmatprep.subr.mxu0 0.0
      %498 = vmatpush1.msra.mxu0 0.0
      %499 = vmatprep.subr.mxu0 0.0
      %500 = vmatpush1.msra.mxu0 0.0
      %501 = vmatprep.subr.mxu0 0.0
      %502 = vmatpush1.msra.mxu0 0.0
      %503 = vmatprep.subr.mxu0 0.0
      %504 = vmatpush1.msra.mxu0 0.0
      %505 = vmatprep.subr.mxu0 0.0
      %506 = vmatpush1.msra.mxu0 0.0
      %507 = vmatprep.subr.mxu0 0.0
      %508 = vmatpush1.msra.mxu0 0.0
      %509 = vmatprep.subr.mxu0 0.0
      %510 = vmatpush1.msra.mxu0 0.0
      %511 = vmatprep.subr.mxu0 0.0
      %512 = vmatpush1.msra.mxu0 0.0
      %513 = vmatprep.subr.mxu0 0.0
      %514 = vmatpush1.msra.mxu0 0.0
      %515 = vmatprep.subr.mxu0 0.0
      %516 = vmatpush1.msra.mxu0 0.0
      %517 = vmatprep.subr.mxu0 0.0
      %518 = vmatpush1.msra.mxu0 0.0
      %519 = vmatprep.subr.mxu0 0.0
      %520 = vmatpush1.msra.mxu0 0.0
      %521 = vmatprep.subr.mxu0 0.0
      %522 = vmatpush1.msra.mxu0 0.0
      %523 = vmatprep.subr.mxu0 0.0
      %524 = vmatpush1.msra.mxu0 0.0
      %525 = vmatprep.subr.mxu0 0.0
      %526 = vmatpush1.msra.mxu0 0.0
      %527 = vmatprep.subr.mxu0 0.0
      %528 = vmatpush1.msra.mxu0 0.0
      %529 = vmatprep.subr.mxu0 0.0
      %530 = vmatpush1.msra.mxu0 0.0
      %531 = vmatprep.subr.mxu0 0.0
      %532 = vmatpush1.msra.mxu0 0.0
      %533 = vmatprep.subr.mxu0 0.0
      %534 = vmatpush1.msra.mxu0 0.0
      %535 = vmatprep.mubr.f32.mxu0 0.0
      %536 = vmatmul.mubr.f32.gmra.mrb[0].mxu0 %v372
      %v537 = vpop.f32.mrb[0].mxu0
      %v538 = vadd.f32 %v368, %v537
      %v539 = vpop.f32.mrb[0].mxu0
      %540 = vmatprep.mubr.f32.mxu0 0.0
      %541 = vmatmul.mubr.f32.gmra.mrb[0].mxu0 %v375
      %v542 = vpop.f32.mrb[0].mxu0
      %v543 = vadd.f32 %v368, %v542
      %v544 = vpop.f32.mrb[0].mxu0
      %545 = vmatprep.mubr.f32.mxu0 0.0
      %546 = vmatmul.mubr.f32.gmra.mrb[0].mxu0 %v378
      %v547 = vpop.f32.mrb[0].mxu0
      %v548 = vadd.f32 %v368, %v547
      %v549 = vpop.f32.mrb[0].mxu0
      %550 = vmatprep.mubr.f32.mxu0 0.0
      %551 = vmatmul.mubr.f32.gmra.mrb[0].mxu0 %v381
      %v552 = vpop.f32.mrb[0].mxu0
      %v553 = vadd.f32 %v368, %v552
      %v554 = vpop.f32.mrb[0].mxu0
      %555 = vmatprep.mubr.f32.mxu0 0.0
      %556 = vmatmul.mubr.f32.gmra.mrb[0].mxu0 %v384
      %v557 = vpop.f32.mrb[0].mxu0
      %v558 = vadd.f32 %v368, %v557
      %v559 = vpop.f32.mrb[0].mxu0
      %560 = vmatprep.mubr.f32.mxu0 0.0
      %561 = vmatmul.mubr.f32.gmra.mrb[0].mxu0 %v387
      %v562 = vpop.f32.mrb[0].mxu0
      %v563 = vadd.f32 %v368, %v562
      %v564 = vpop.f32.mrb[0].mxu0
      %565 = vmatprep.mubr.f32.mxu0 0.0
      %566 = vmatmul.mubr.f32.gmra.mrb[0].mxu0 %v390
      %v567 = vpop.f32.mrb[0].mxu0
      %v568 = vadd.f32 %v368, %v567
      %v569 = vpop.f32.mrb[0].mxu0
      %570 = vmatprep.mubr.f32.mxu0 0.0
      %571 = vmatmul.mubr.f32.gmra.mrb[0].mxu0 %v393
      %v572 = vpop.f32.mrb[0].mxu0
      %v573 = vadd.f32 %v368, %v572
      %v574 = vpop.f32.mrb[0].mxu0
      %575 = vmatprep.mubr.f32.mxu0 0.0
      %576 = vmatmul.mubr.f32.gmra.mrb[0].mxu0 %v396
      %v577 = vpop.f32.mrb[0].mxu0
      %v578 = vadd.f32 %v368, %v577
      %v579 = vpop.f32.mrb[0].mxu0
      %580 = vmatprep.mubr.f32.mxu0 0.0
      %581 = vmatmul.mubr.f32.gmra.mrb[0].mxu0 %v399
      %v582 = vpop.f32.mrb[0].mxu0
      %v583 = vadd.f32 %v368, %v582
      %v584 = vpop.f32.mrb[0].mxu0
      %585 = vmatprep.mubr.f32.mxu0 0.0
      %586 = vmatmul.mubr.f32.gmra.mrb[0].mxu0 %v402
      %v587 = vpop.f32.mrb[0].mxu0
      %v588 = vadd.f32 %v368, %v587
      %v589 = vpop.f32.mrb[0].mxu0
      %590 = vmatprep.mubr.f32.mxu0 0.0
      %591 = vmatmul.mubr.f32.gmra.mrb[0].mxu0 %v405
      %v592 = vpop.f32.mrb[0].mxu0
      %v593 = vadd.f32 %v368, %v592
      %v594 = vpop.f32.mrb[0].mxu0
      %595 = vmatprep.mubr.f32.mxu0 0.0
      %596 = vmatmul.mubr.f32.gmra.mrb[0].mxu0 %v408
      %v597 = vpop.f32.mrb[0].mxu0
      %v598 = vadd.f32 %v368, %v597
      %v599 = vpop.f32.mrb[0].mxu0
      %600 = vmatprep.mubr.f32.mxu0 0.0
      %601 = vmatmul.mubr.f32.gmra.mrb[0].mxu0 %v411
      %v602 = vpop.f32.mrb[0].mxu0
      %v603 = vadd.f32 %v368, %v602
      %v604 = vpop.f32.mrb[0].mxu0
      %605 = vmatprep.mubr.f32.mxu0 0.0
      %606 = vmatmul.mubr.f32.gmra.mrb[0].mxu0 %v414
      %v607 = vpop.f32.mrb[0].mxu0
      %v608 = vadd.f32 %v368, %v607
      %v609 = vpop.f32.mrb[0].mxu0
      %610 = vmatprep.mubr.f32.mxu0 0.0
      %611 = vmatmul.mubr.f32.gmra.mrb[0].mxu0 %v417
      %v612 = vpop.f32.mrb[0].mxu0
      %v613 = vadd.f32 %v368, %v612
      %v614 = vpop.f32.mrb[0].mxu0
      %615 = vmatprep.mubr.f32.mxu0 0.0
      %616 = vmatmul.mubr.f32.gmra.mrb[0].mxu0 %v420
      %v617 = vpop.f32.mrb[0].mxu0
      %v618 = vadd.f32 %v368, %v617
      %v619 = vpop.f32.mrb[0].mxu0
      %620 = vmatprep.mubr.f32.mxu0 0.0
      %621 = vmatmul.mubr.f32.gmra.mrb[0].mxu0 %v423
      %v622 = vpop.f32.mrb[0].mxu0
      %v623 = vadd.f32 %v368, %v622
      %v624 = vpop.f32.mrb[0].mxu0
      %625 = vmatprep.mubr.f32.mxu0 0.0
      %626 = vmatmul.mubr.f32.gmra.mrb[0].mxu0 %v426
      %v627 = vpop.f32.mrb[0].mxu0
      %v628 = vadd.f32 %v368, %v627
      %v629 = vpop.f32.mrb[0].mxu0
      %630 = vmatprep.mubr.f32.mxu0 0.0
      %631 = vmatmul.mubr.f32.gmra.mrb[0].mxu0 %v429
      %v632 = vpop.f32.mrb[0].mxu0
      %v633 = vadd.f32 %v368, %v632
      %v634 = vpop.f32.mrb[0].mxu0
      %635 = vmatprep.mubr.f32.mxu0 0.0
      %636 = vmatmul.mubr.f32.gmra.mrb[0].mxu0 %v432
      %v637 = vpop.f32.mrb[0].mxu0
      %v638 = vadd.f32 %v368, %v637
      %v639 = vpop.f32.mrb[0].mxu0
      %640 = vmatprep.mubr.f32.mxu0 0.0
      %641 = vmatmul.mubr.f32.gmra.mrb[0].mxu0 %v435
      %v642 = vpop.f32.mrb[0].mxu0
      %v643 = vadd.f32 %v368, %v642
      %v644 = vpop.f32.mrb[0].mxu0
      %645 = vmatprep.mubr.f32.mxu0 0.0
      %646 = vmatmul.mubr.f32.gmra.mrb[0].mxu0 %v438
      %v647 = vpop.f32.mrb[0].mxu0
      %v648 = vadd.f32 %v368, %v647
      %v649 = vpop.f32.mrb[0].mxu0
      %650 = vmatprep.mubr.f32.mxu0 0.0
      %651 = vmatmul.mubr.f32.gmra.mrb[0].mxu0 %v441
      %v652 = vpop.f32.mrb[0].mxu0
      %v653 = vadd.f32 %v368, %v652
      %v654 = vpop.f32.mrb[0].mxu0
      %655 = vmatprep.mubr.f32.mxu0 0.0
      %656 = vmatmul.mubr.f32.gmra.mrb[0].mxu0 %v444
      %v657 = vpop.f32.mrb[0].mxu0
      %v658 = vadd.f32 %v368, %v657
      %v659 = vpop.f32.mrb[0].mxu0
      %660 = vmatprep.mubr.f32.mxu0 0.0
      %661 = vmatmul.mubr.f32.gmra.mrb[0].mxu0 %v447
      %v662 = vpop.f32.mrb[0].mxu0
      %v663 = vadd.f32 %v368, %v662
      %v664 = vpop.f32.mrb[0].mxu0
      %665 = vmatprep.mubr.f32.mxu0 0.0
      %666 = vmatmul.mubr.f32.gmra.mrb[0].mxu0 %v450
      %v667 = vpop.f32.mrb[0].mxu0
      %v668 = vadd.f32 %v368, %v667
      %v669 = vpop.f32.mrb[0].mxu0
      %670 = vmatprep.mubr.f32.mxu0 0.0
      %671 = vmatmul.mubr.f32.gmra.mrb[0].mxu0 %v453
      %v672 = vpop.f32.mrb[0].mxu0
      %v673 = vadd.f32 %v368, %v672
      %v674 = vpop.f32.mrb[0].mxu0
      %675 = vmatprep.mubr.f32.mxu0 0.0
      %676 = vmatmul.mubr.f32.gmra.mrb[0].mxu0 %v456
      %v677 = vpop.f32.mrb[0].mxu0
      %v678 = vadd.f32 %v368, %v677
      %v679 = vpop.f32.mrb[0].mxu0
      %680 = vmatprep.mubr.f32.mxu0 0.0
      %681 = vmatmul.mubr.f32.gmra.mrb[0].mxu0 %v459
      %v682 = vpop.f32.mrb[0].mxu0
      %v683 = vadd.f32 %v368, %v682
      %v684 = vpop.f32.mrb[0].mxu0
      %685 = vmatprep.mubr.f32.mxu0 0.0
      %686 = vmatmul.mubr.f32.gmra.mrb[0].mxu0 %v462
      %v687 = vpop.f32.mrb[0].mxu0
      %v688 = vadd.f32 %v368, %v687
      %v689 = vpop.f32.mrb[0].mxu0
      %690 = vmatprep.mubr.f32.mxu0 0.0
      %691 = vmatmul.mubr.f32.gmra.mrb[0].mxu0 %v465
      %v692 = vpop.f32.mrb[0].mxu0
      %v693 = vadd.f32 %v368, %v692
      %v694 = vpop.f32.mrb[0].mxu0
      %695 = vdwg.mxu0
      %vm696 = vcmp.gt.f32.partialorder %v538, 0.0
      %vm697 = vcmp.gt.f32.partialorder %v543, 0.0
      %vm698 = vcmp.gt.f32.partialorder %v548, 0.0
      %vm699 = vcmp.gt.f32.partialorder %v553, 0.0
      %vm700 = vcmp.gt.f32.partialorder %v558, 0.0
      %vm701 = vcmp.gt.f32.partialorder %v563, 0.0
      %vm702 = vcmp.gt.f32.partialorder %v568, 0.0
      %vm703 = vcmp.gt.f32.partialorder %v573, 0.0
      %vm704 = vcmp.gt.f32.partialorder %v578, 0.0
      %vm705 = vcmp.gt.f32.partialorder %v583, 0.0
      %vm706 = vcmp.gt.f32.partialorder %v588, 0.0
      %vm707 = vcmp.gt.f32.partialorder %v593, 0.0
      %vm708 = vcmp.gt.f32.partialorder %v598, 0.0
      %vm709 = vcmp.gt.f32.partialorder %v603, 0.0
      %vm710 = vcmp.gt.f32.partialorder %v608, 0.0
      %vm711 = vcmp.gt.f32.partialorder %v613, 0.0
      %vm712 = vcmp.gt.f32.partialorder %v618, 0.0
      %vm713 = vcmp.gt.f32.partialorder %v623, 0.0
      %vm714 = vcmp.gt.f32.partialorder %v628, 0.0
      %vm715 = vcmp.gt.f32.partialorder %v633, 0.0
      %vm716 = vcmp.gt.f32.partialorder %v638, 0.0
      %vm717 = vcmp.gt.f32.partialorder %v643, 0.0
      %vm718 = vcmp.gt.f32.partialorder %v648, 0.0
      %vm719 = vcmp.gt.f32.partialorder %v653, 0.0
      %vm720 = vcmp.gt.f32.partialorder %v658, 0.0
      %vm721 = vcmp.gt.f32.partialorder %v663, 0.0
      %vm722 = vcmp.gt.f32.partialorder %v668, 0.0
      %vm723 = vcmp.gt.f32.partialorder %v673, 0.0
      %vm724 = vcmp.gt.f32.partialorder %v678, 0.0
      %vm725 = vcmp.gt.f32.partialorder %v683, 0.0
      %vm726 = vcmp.gt.f32.partialorder %v688, 0.0
      %vm727 = vcmp.gt.f32.partialorder %v693, 0.0
      %v728 = vmul.f32 %v538, 0.2
      %v729 = vmul.f32 %v543, 0.2
      %v730 = vmul.f32 %v548, 0.2
      %v731 = vmul.f32 %v553, 0.2
      %v732 = vmul.f32 %v558, 0.2
      %v733 = vmul.f32 %v563, 0.2
      %v734 = vmul.f32 %v568, 0.2
      %v735 = vmul.f32 %v573, 0.2
      %v736 = vmul.f32 %v578, 0.2
      %v737 = vmul.f32 %v583, 0.2
      %v738 = vmul.f32 %v588, 0.2
      %v739 = vmul.f32 %v593, 0.2
      %v740 = vmul.f32 %v598, 0.2
      %v741 = vmul.f32 %v603, 0.2
      %v742 = vmul.f32 %v608, 0.2
      %v743 = vmul.f32 %v613, 0.2
      %v744 = vmul.f32 %v618, 0.2
      %v745 = vmul.f32 %v623, 0.2
      %v746 = vmul.f32 %v628, 0.2
      %v747 = vmul.f32 %v633, 0.2
      %v748 = vmul.f32 %v638, 0.2
      %v749 = vmul.f32 %v643, 0.2
      %v750 = vmul.f32 %v648, 0.2
      %v751 = vmul.f32 %v653, 0.2
      %v752 = vmul.f32 %v658, 0.2
      %v753 = vmul.f32 %v663, 0.2
      %v754 = vmul.f32 %v668, 0.2
      %v755 = vmul.f32 %v673, 0.2
      %v756 = vmul.f32 %v678, 0.2
      %v757 = vmul.f32 %v683, 0.2
      %v758 = vmul.f32 %v688, 0.2
      %v759 = vmul.f32 %v693, 0.2
      %v760 = vsel %vm696, %v538, %v728
      %v761 = vsel %vm697, %v543, %v729
      %v762 = vsel %vm698, %v548, %v730
      %v763 = vsel %vm699, %v553, %v731
      %v764 = vsel %vm700, %v558, %v732
      %v765 = vsel %vm701, %v563, %v733
      %v766 = vsel %vm702, %v568, %v734
      %v767 = vsel %vm703, %v573, %v735
      %v768 = vsel %vm704, %v578, %v736
      %v769 = vsel %vm705, %v583, %v737
      %v770 = vsel %vm706, %v588, %v738
      %v771 = vsel %vm707, %v593, %v739
      %v772 = vsel %vm708, %v598, %v740
      %v773 = vsel %vm709, %v603, %v741
      %v774 = vsel %vm710, %v608, %v742
      %v775 = vsel %vm711, %v613, %v743
      %v776 = vsel %vm712, %v618, %v744
      %v777 = vsel %vm713, %v623, %v745
      %v778 = vsel %vm714, %v628, %v746
      %v779 = vsel %vm715, %v633, %v747
      %v780 = vsel %vm716, %v638, %v748
      %v781 = vsel %vm717, %v643, %v749
      %v782 = vsel %vm718, %v648, %v750
      %v783 = vsel %vm719, %v653, %v751
      %v784 = vsel %vm720, %v658, %v752
      %v785 = vsel %vm721, %v663, %v753
      %v786 = vsel %vm722, %v668, %v754
      %v787 = vsel %vm723, %v673, %v755
      %v788 = vsel %vm724, %v678, %v756
      %v789 = vsel %vm725, %v683, %v757
      %v790 = vsel %vm726, %v688, %v758
      %v791 = vsel %vm727, %v693, %v759
      %v824 = vrot.slane %v760, 7
      %v825 = vrot.slane %v761, 7
      %v826 = vrot.slane %v762, 7
      %v827 = vrot.slane %v763, 7
      %v828 = vrot.slane %v764, 7
      %v829 = vrot.slane %v765, 7
      %v830 = vrot.slane %v766, 7
      %v831 = vrot.slane %v767, 7
      %v832 = vrot.slane %v768, 7
      %v833 = vrot.slane %v769, 7
      %v834 = vrot.slane %v770, 7
      %v835 = vrot.slane %v771, 7
      %v836 = vrot.slane %v772, 7
      %v837 = vrot.slane %v773, 7
      %v838 = vrot.slane %v774, 7
      %v839 = vrot.slane %v775, 7
      %v840 = vrot.slane %v776, 7
      %v841 = vrot.slane %v777, 7
      %v842 = vrot.slane %v778, 7
      %v843 = vrot.slane %v779, 7
      %v844 = vrot.slane %v780, 7
      %v845 = vrot.slane %v781, 7
      %v846 = vrot.slane %v782, 7
      %v847 = vrot.slane %v783, 7
      %v848 = vrot.slane %v784, 7
      %v849 = vrot.slane %v785, 7
      %v850 = vrot.slane %v786, 7
      %v851 = vrot.slane %v787, 7
      %v852 = vrot.slane %v788, 7
      %v853 = vrot.slane %v789, 7
      %v854 = vrot.slane %v790, 7
      %v855 = vrot.slane %v791, 7
      %vm888 = vcmask 1040384
      %v889 = vsel %vm888, 0.0, %v824
      %v890 = vsel %vm888, 0.0, %v825
      %v891 = vsel %vm888, 0.0, %v826
      %v892 = vsel %vm888, 0.0, %v827
      %v893 = vsel %vm888, 0.0, %v828
      %v894 = vsel %vm888, 0.0, %v829
      %v895 = vsel %vm888, 0.0, %v830
      %v896 = vsel %vm888, 0.0, %v831
      %v897 = vsel %vm888, 0.0, %v832
      %v898 = vsel %vm888, 0.0, %v833
      %v899 = vsel %vm888, 0.0, %v834
      %v900 = vsel %vm888, 0.0, %v835
      %v901 = vsel %vm888, 0.0, %v836
      %v902 = vsel %vm888, 0.0, %v837
      %v903 = vsel %vm888, 0.0, %v838
      %v904 = vsel %vm888, 0.0, %v839
      %v905 = vsel %vm888, 0.0, %v840
      %v906 = vsel %vm888, 0.0, %v841
      %v907 = vsel %vm888, 0.0, %v842
      %v908 = vsel %vm888, 0.0, %v843
      %v909 = vsel %vm888, 0.0, %v844
      %v910 = vsel %vm888, 0.0, %v845
      %v911 = vsel %vm888, 0.0, %v846
      %v912 = vsel %vm888, 0.0, %v847
      %v913 = vsel %vm888, 0.0, %v848
      %v914 = vsel %vm888, 0.0, %v849
      %v915 = vsel %vm888, 0.0, %v850
      %v916 = vsel %vm888, 0.0, %v851
      %v917 = vsel %vm888, 0.0, %v852
      %v918 = vsel %vm888, 0.0, %v853
      %v919 = vsel %vm888, 0.0, %v854
      %v920 = vsel %vm888, 0.0, %v855
      %v921 = vsel %vm888, %v824, 0.0
      %v922 = vsel %vm888, %v825, 0.0
      %v923 = vsel %vm888, %v826, 0.0
      %v924 = vsel %vm888, %v827, 0.0
      %v925 = vsel %vm888, %v828, 0.0
      %v926 = vsel %vm888, %v829, 0.0
      %v927 = vsel %vm888, %v830, 0.0
      %v928 = vsel %vm888, %v831, 0.0
      %v929 = vsel %vm888, %v832, 0.0
      %v930 = vsel %vm888, %v833, 0.0
      %v931 = vsel %vm888, %v834, 0.0
      %v932 = vsel %vm888, %v835, 0.0
      %v933 = vsel %vm888, %v836, 0.0
      %v934 = vsel %vm888, %v837, 0.0
      %v935 = vsel %vm888, %v838, 0.0
      %v936 = vsel %vm888, %v839, 0.0
      %v937 = vsel %vm888, %v840, 0.0
      %v938 = vsel %vm888, %v841, 0.0
      %v939 = vsel %vm888, %v842, 0.0
      %v940 = vsel %vm888, %v843, 0.0
      %v941 = vsel %vm888, %v844, 0.0
      %v942 = vsel %vm888, %v845, 0.0
      %v943 = vsel %vm888, %v846, 0.0
      %v944 = vsel %vm888, %v847, 0.0
      %v945 = vsel %vm888, %v848, 0.0
      %v946 = vsel %vm888, %v849, 0.0
      %v947 = vsel %vm888, %v850, 0.0
      %v948 = vsel %vm888, %v851, 0.0
      %v949 = vsel %vm888, %v852, 0.0
      %v950 = vsel %vm888, %v853, 0.0
      %v951 = vsel %vm888, %v854, 0.0
      %v952 = vsel %vm888, %v855, 0.0
      %vm1010 = vcmask 1046528
      %v1011 = vrot.slane 0.0, 1
      %v1012 = vsel %vm1010, %v1011, %v1011
      %v1013 = vrot.slane %v889, 1
      %v1014 = vrot.slane %v921, 1
      %v1015 = vsel %vm1010, %v1013, %v1014
      %v1016 = vrot.slane %v890, 1
      %v1017 = vrot.slane %v922, 1
      %v1018 = vsel %vm1010, %v1016, %v1017
      %v1019 = vrot.slane %v891, 1
      %v1020 = vrot.slane %v923, 1
      %v1021 = vsel %vm1010, %v1019, %v1020
      %v1022 = vrot.slane %v892, 1
      %v1023 = vrot.slane %v924, 1
      %v1024 = vsel %vm1010, %v1022, %v1023
      %v1025 = vrot.slane %v893, 1
      %v1026 = vrot.slane %v925, 1
      %v1027 = vsel %vm1010, %v1025, %v1026
      %v1028 = vrot.slane %v894, 1
      %v1029 = vrot.slane %v926, 1
      %v1030 = vsel %vm1010, %v1028, %v1029
      %v1031 = vrot.slane %v895, 1
      %v1032 = vrot.slane %v927, 1
      %v1033 = vsel %vm1010, %v1031, %v1032
      %v1034 = vrot.slane %v897, 1
      %v1035 = vrot.slane %v929, 1
      %v1036 = vsel %vm1010, %v1034, %v1035
      %v1037 = vrot.slane %v898, 1
      %v1038 = vrot.slane %v930, 1
      %v1039 = vsel %vm1010, %v1037, %v1038
      %v1040 = vrot.slane %v899, 1
      %v1041 = vrot.slane %v931, 1
      %v1042 = vsel %vm1010, %v1040, %v1041
      %v1043 = vrot.slane %v900, 1
      %v1044 = vrot.slane %v932, 1
      %v1045 = vsel %vm1010, %v1043, %v1044
      %v1046 = vrot.slane %v901, 1
      %v1047 = vrot.slane %v933, 1
      %v1048 = vsel %vm1010, %v1046, %v1047
      %v1049 = vrot.slane %v902, 1
      %v1050 = vrot.slane %v934, 1
      %v1051 = vsel %vm1010, %v1049, %v1050
      %v1052 = vrot.slane %v903, 1
      %v1053 = vrot.slane %v935, 1
      %v1054 = vsel %vm1010, %v1052, %v1053
      %v1055 = vrot.slane %v905, 1
      %v1056 = vrot.slane %v937, 1
      %v1057 = vsel %vm1010, %v1055, %v1056
      %v1058 = vrot.slane %v906, 1
      %v1059 = vrot.slane %v938, 1
      %v1060 = vsel %vm1010, %v1058, %v1059
      %v1061 = vrot.slane %v907, 1
      %v1062 = vrot.slane %v939, 1
      %v1063 = vsel %vm1010, %v1061, %v1062
      %v1064 = vrot.slane %v908, 1
      %v1065 = vrot.slane %v940, 1
      %v1066 = vsel %vm1010, %v1064, %v1065
      %v1067 = vrot.slane %v909, 1
      %v1068 = vrot.slane %v941, 1
      %v1069 = vsel %vm1010, %v1067, %v1068
      %v1070 = vrot.slane %v910, 1
      %v1071 = vrot.slane %v942, 1
      %v1072 = vsel %vm1010, %v1070, %v1071
      %v1073 = vrot.slane %v911, 1
      %v1074 = vrot.slane %v943, 1
      %v1075 = vsel %vm1010, %v1073, %v1074
      %v1076 = vrot.slane %v913, 1
      %v1077 = vrot.slane %v945, 1
      %v1078 = vsel %vm1010, %v1076, %v1077
      %v1079 = vrot.slane %v914, 1
      %v1080 = vrot.slane %v946, 1
      %v1081 = vsel %vm1010, %v1079, %v1080
      %v1082 = vrot.slane %v915, 1
      %v1083 = vrot.slane %v947, 1
      %v1084 = vsel %vm1010, %v1082, %v1083
      %v1085 = vrot.slane %v916, 1
      %v1086 = vrot.slane %v948, 1
      %v1087 = vsel %vm1010, %v1085, %v1086
      %v1088 = vrot.slane %v917, 1
      %v1089 = vrot.slane %v949, 1
      %v1090 = vsel %vm1010, %v1088, %v1089
      %v1091 = vrot.slane %v918, 1
      %v1092 = vrot.slane %v950, 1
      %v1093 = vsel %vm1010, %v1091, %v1092
      %v1094 = vrot.slane %v919, 1
      %v1095 = vrot.slane %v951, 1
      %v1096 = vsel %vm1010, %v1094, %v1095
      %vm1097 = vcmask 1045504
      %v1098 = vrot.slane 0.0, 2
      %v1099 = vsel %vm1097, %v1098, %v1098
      %v1100 = vrot.slane %v889, 2
      %v1101 = vrot.slane %v921, 2
      %v1102 = vsel %vm1097, %v1100, %v1101
      %v1103 = vrot.slane %v890, 2
      %v1104 = vrot.slane %v922, 2
      %v1105 = vsel %vm1097, %v1103, %v1104
      %v1106 = vrot.slane %v891, 2
      %v1107 = vrot.slane %v923, 2
      %v1108 = vsel %vm1097, %v1106, %v1107
      %v1109 = vrot.slane %v892, 2
      %v1110 = vrot.slane %v924, 2
      %v1111 = vsel %vm1097, %v1109, %v1110
      %v1112 = vrot.slane %v893, 2
      %v1113 = vrot.slane %v925, 2
      %v1114 = vsel %vm1097, %v1112, %v1113
      %v1115 = vrot.slane %v894, 2
      %v1116 = vrot.slane %v926, 2
      %v1117 = vsel %vm1097, %v1115, %v1116
      %v1118 = vrot.slane %v895, 2
      %v1119 = vrot.slane %v927, 2
      %v1120 = vsel %vm1097, %v1118, %v1119
      %v1121 = vrot.slane %v897, 2
      %v1122 = vrot.slane %v929, 2
      %v1123 = vsel %vm1097, %v1121, %v1122
      %v1124 = vrot.slane %v898, 2
      %v1125 = vrot.slane %v930, 2
      %v1126 = vsel %vm1097, %v1124, %v1125
      %v1127 = vrot.slane %v899, 2
      %v1128 = vrot.slane %v931, 2
      %v1129 = vsel %vm1097, %v1127, %v1128
      %v1130 = vrot.slane %v900, 2
      %v1131 = vrot.slane %v932, 2
      %v1132 = vsel %vm1097, %v1130, %v1131
      %v1133 = vrot.slane %v901, 2
      %v1134 = vrot.slane %v933, 2
      %v1135 = vsel %vm1097, %v1133, %v1134
      %v1136 = vrot.slane %v902, 2
      %v1137 = vrot.slane %v934, 2
      %v1138 = vsel %vm1097, %v1136, %v1137
      %v1139 = vrot.slane %v903, 2
      %v1140 = vrot.slane %v935, 2
      %v1141 = vsel %vm1097, %v1139, %v1140
      %v1142 = vrot.slane %v905, 2
      %v1143 = vrot.slane %v937, 2
      %v1144 = vsel %vm1097, %v1142, %v1143
      %v1145 = vrot.slane %v906, 2
      %v1146 = vrot.slane %v938, 2
      %v1147 = vsel %vm1097, %v1145, %v1146
      %v1148 = vrot.slane %v907, 2
      %v1149 = vrot.slane %v939, 2
      %v1150 = vsel %vm1097, %v1148, %v1149
      %v1151 = vrot.slane %v908, 2
      %v1152 = vrot.slane %v940, 2
      %v1153 = vsel %vm1097, %v1151, %v1152
      %v1154 = vrot.slane %v909, 2
      %v1155 = vrot.slane %v941, 2
      %v1156 = vsel %vm1097, %v1154, %v1155
      %v1157 = vrot.slane %v910, 2
      %v1158 = vrot.slane %v942, 2
      %v1159 = vsel %vm1097, %v1157, %v1158
      %v1160 = vrot.slane %v911, 2
      %v1161 = vrot.slane %v943, 2
      %v1162 = vsel %vm1097, %v1160, %v1161
      %v1163 = vrot.slane %v913, 2
      %v1164 = vrot.slane %v945, 2
      %v1165 = vsel %vm1097, %v1163, %v1164
      %v1166 = vrot.slane %v914, 2
      %v1167 = vrot.slane %v946, 2
      %v1168 = vsel %vm1097, %v1166, %v1167
      %v1169 = vrot.slane %v915, 2
      %v1170 = vrot.slane %v947, 2
      %v1171 = vsel %vm1097, %v1169, %v1170
      %v1172 = vrot.slane %v916, 2
      %v1173 = vrot.slane %v948, 2
      %v1174 = vsel %vm1097, %v1172, %v1173
      %v1175 = vrot.slane %v917, 2
      %v1176 = vrot.slane %v949, 2
      %v1177 = vsel %vm1097, %v1175, %v1176
      %v1178 = vrot.slane %v918, 2
      %v1179 = vrot.slane %v950, 2
      %v1180 = vsel %vm1097, %v1178, %v1179
      %v1181 = vrot.slane %v919, 2
      %v1182 = vrot.slane %v951, 2
      %v1183 = vsel %vm1097, %v1181, %v1182
      %v1192 = vrot.slane %v896, 1
      %v1193 = vrot.slane %v928, 1
      %v1194 = vsel %vm1010, %v1192, %v1193
      %v1195 = vrot.slane %v904, 1
      %v1196 = vrot.slane %v936, 1
      %v1197 = vsel %vm1010, %v1195, %v1196
      %v1198 = vrot.slane %v912, 1
      %v1199 = vrot.slane %v944, 1
      %v1200 = vsel %vm1010, %v1198, %v1199
      %v1201 = vrot.slane %v920, 1
      %v1202 = vrot.slane %v952, 1
      %v1203 = vsel %vm1010, %v1201, %v1202
      %v1204 = vrot.slane %v896, 2
      %v1205 = vrot.slane %v928, 2
      %v1206 = vsel %vm1097, %v1204, %v1205
      %v1207 = vrot.slane %v904, 2
      %v1208 = vrot.slane %v936, 2
      %v1209 = vsel %vm1097, %v1207, %v1208
      %v1210 = vrot.slane %v912, 2
      %v1211 = vrot.slane %v944, 2
      %v1212 = vsel %vm1097, %v1210, %v1211
      %v1213 = vrot.slane %v920, 2
      %v1214 = vrot.slane %v952, 2
      %v1215 = vsel %vm1097, %v1213, %v1214
      %1216 = vrot.lane.b32.xlu0 %v1012, 8
      %v1217 = vpop.permute.xlu0 %1216
      %1218 = vrot.lane.b32.xlu0 %v1015, 8
      %v1219 = vpop.permute.xlu0 %1218
      %1220 = vrot.lane.b32.xlu0 %v1018, 8
      %v1221 = vpop.permute.xlu0 %1220
      %1222 = vrot.lane.b32.xlu0 %v1021, 8
      %v1223 = vpop.permute.xlu0 %1222
      %1224 = vrot.lane.b32.xlu0 %v1024, 8
      %v1225 = vpop.permute.xlu0 %1224
      %1226 = vrot.lane.b32.xlu0 %v1027, 8
      %v1227 = vpop.permute.xlu0 %1226
      %1228 = vrot.lane.b32.xlu0 %v1030, 8
      %v1229 = vpop.permute.xlu0 %1228
      %1230 = vrot.lane.b32.xlu0 %v1033, 8
      %v1231 = vpop.permute.xlu0 %1230
      %1232 = vrot.lane.b32.xlu0 %v1036, 8
      %v1233 = vpop.permute.xlu0 %1232
      %1234 = vrot.lane.b32.xlu0 %v1039, 8
      %v1235 = vpop.permute.xlu0 %1234
      %1236 = vrot.lane.b32.xlu0 %v1042, 8
      %v1237 = vpop.permute.xlu0 %1236
      %1238 = vrot.lane.b32.xlu0 %v1045, 8
      %v1239 = vpop.permute.xlu0 %1238
      %1240 = vrot.lane.b32.xlu0 %v1048, 8
      %v1241 = vpop.permute.xlu0 %1240
      %1242 = vrot.lane.b32.xlu0 %v1051, 8
      %v1243 = vpop.permute.xlu0 %1242
      %1244 = vrot.lane.b32.xlu0 %v1054, 8
      %v1245 = vpop.permute.xlu0 %1244
      %1246 = vrot.lane.b32.xlu0 %v1057, 8
      %v1247 = vpop.permute.xlu0 %1246
      %1248 = vrot.lane.b32.xlu0 %v1060, 8
      %v1249 = vpop.permute.xlu0 %1248
      %1250 = vrot.lane.b32.xlu0 %v1063, 8
      %v1251 = vpop.permute.xlu0 %1250
      %1252 = vrot.lane.b32.xlu0 %v1066, 8
      %v1253 = vpop.permute.xlu0 %1252
      %1254 = vrot.lane.b32.xlu0 %v1069, 8
      %v1255 = vpop.permute.xlu0 %1254
      %1256 = vrot.lane.b32.xlu0 %v1072, 8
      %v1257 = vpop.permute.xlu0 %1256
      %1258 = vrot.lane.b32.xlu0 %v1075, 8
      %v1259 = vpop.permute.xlu0 %1258
      %1260 = vrot.lane.b32.xlu0 %v1078, 8
      %v1261 = vpop.permute.xlu0 %1260
      %1262 = vrot.lane.b32.xlu0 %v1081, 8
      %v1263 = vpop.permute.xlu0 %1262
      %1264 = vrot.lane.b32.xlu0 %v1084, 8
      %v1265 = vpop.permute.xlu0 %1264
      %1266 = vrot.lane.b32.xlu0 %v1087, 8
      %v1267 = vpop.permute.xlu0 %1266
      %1268 = vrot.lane.b32.xlu0 %v1090, 8
      %v1269 = vpop.permute.xlu0 %1268
      %1270 = vrot.lane.b32.xlu0 %v1093, 8
      %v1271 = vpop.permute.xlu0 %1270
      %1272 = vrot.lane.b32.xlu0 %v1096, 8
      %v1273 = vpop.permute.xlu0 %1272
      %1303 = vrot.lane.b32.xlu0 %v1099, 16
      %v1304 = vpop.permute.xlu0 %1303
      %1305 = vrot.lane.b32.xlu0 %v1102, 16
      %v1306 = vpop.permute.xlu0 %1305
      %1307 = vrot.lane.b32.xlu0 %v1105, 16
      %v1308 = vpop.permute.xlu0 %1307
      %1309 = vrot.lane.b32.xlu0 %v1108, 16
      %v1310 = vpop.permute.xlu0 %1309
      %1311 = vrot.lane.b32.xlu0 %v1111, 16
      %v1312 = vpop.permute.xlu0 %1311
      %1313 = vrot.lane.b32.xlu0 %v1114, 16
      %v1314 = vpop.permute.xlu0 %1313
      %1315 = vrot.lane.b32.xlu0 %v1117, 16
      %v1316 = vpop.permute.xlu0 %1315
      %1317 = vrot.lane.b32.xlu0 %v1120, 16
      %v1318 = vpop.permute.xlu0 %1317
      %1319 = vrot.lane.b32.xlu0 %v1123, 16
      %v1320 = vpop.permute.xlu0 %1319
      %1321 = vrot.lane.b32.xlu0 %v1126, 16
      %v1322 = vpop.permute.xlu0 %1321
      %1323 = vrot.lane.b32.xlu0 %v1129, 16
      %v1324 = vpop.permute.xlu0 %1323
      %1325 = vrot.lane.b32.xlu0 %v1132, 16
      %v1326 = vpop.permute.xlu0 %1325
      %1327 = vrot.lane.b32.xlu0 %v1135, 16
      %v1328 = vpop.permute.xlu0 %1327
      %1329 = vrot.lane.b32.xlu0 %v1138, 16
      %v1330 = vpop.permute.xlu0 %1329
      %1331 = vrot.lane.b32.xlu0 %v1141, 16
      %v1332 = vpop.permute.xlu0 %1331
      %1333 = vrot.lane.b32.xlu0 %v1144, 16
      %v1334 = vpop.permute.xlu0 %1333
      %1335 = vrot.lane.b32.xlu0 %v1147, 16
      %v1336 = vpop.permute.xlu0 %1335
      %1337 = vrot.lane.b32.xlu0 %v1150, 16
      %v1338 = vpop.permute.xlu0 %1337
      %1339 = vrot.lane.b32.xlu0 %v1153, 16
      %v1340 = vpop.permute.xlu0 %1339
      %1341 = vrot.lane.b32.xlu0 %v1156, 16
      %v1342 = vpop.permute.xlu0 %1341
      %1343 = vrot.lane.b32.xlu0 %v1159, 16
      %v1344 = vpop.permute.xlu0 %1343
      %1345 = vrot.lane.b32.xlu0 %v1162, 16
      %v1346 = vpop.permute.xlu0 %1345
      %1347 = vrot.lane.b32.xlu0 %v1165, 16
      %v1348 = vpop.permute.xlu0 %1347
      %1349 = vrot.lane.b32.xlu0 %v1168, 16
      %v1350 = vpop.permute.xlu0 %1349
      %1351 = vrot.lane.b32.xlu0 %v1171, 16
      %v1352 = vpop.permute.xlu0 %1351
      %1353 = vrot.lane.b32.xlu0 %v1174, 16
      %v1354 = vpop.permute.xlu0 %1353
      %1355 = vrot.lane.b32.xlu0 %v1177, 16
      %v1356 = vpop.permute.xlu0 %1355
      %1357 = vrot.lane.b32.xlu0 %v1180, 16
      %v1358 = vpop.permute.xlu0 %1357
      %1359 = vrot.lane.b32.xlu0 %v1183, 16
      %v1360 = vpop.permute.xlu0 %1359
      %1390 = vrot.lane.b32.xlu0 %v889, 24
      %v1391 = vpop.permute.xlu0 %1390
      %1392 = vrot.lane.b32.xlu0 %v890, 24
      %v1393 = vpop.permute.xlu0 %1392
      %1394 = vrot.lane.b32.xlu0 %v891, 24
      %v1395 = vpop.permute.xlu0 %1394
      %1396 = vrot.lane.b32.xlu0 %v892, 24
      %v1397 = vpop.permute.xlu0 %1396
      %1398 = vrot.lane.b32.xlu0 %v893, 24
      %v1399 = vpop.permute.xlu0 %1398
      %1400 = vrot.lane.b32.xlu0 %v894, 24
      %v1401 = vpop.permute.xlu0 %1400
      %1402 = vrot.lane.b32.xlu0 %v895, 24
      %v1403 = vpop.permute.xlu0 %1402
      %1404 = vrot.lane.b32.xlu0 %v896, 24
      %v1405 = vpop.permute.xlu0 %1404
      %1406 = vrot.lane.b32.xlu0 %v897, 24
      %v1407 = vpop.permute.xlu0 %1406
      %1408 = vrot.lane.b32.xlu0 %v898, 24
      %v1409 = vpop.permute.xlu0 %1408
      %1410 = vrot.lane.b32.xlu0 %v899, 24
      %v1411 = vpop.permute.xlu0 %1410
      %1412 = vrot.lane.b32.xlu0 %v900, 24
      %v1413 = vpop.permute.xlu0 %1412
      %1414 = vrot.lane.b32.xlu0 %v901, 24
      %v1415 = vpop.permute.xlu0 %1414
      %1416 = vrot.lane.b32.xlu0 %v902, 24
      %v1417 = vpop.permute.xlu0 %1416
      %1418 = vrot.lane.b32.xlu0 %v903, 24
      %v1419 = vpop.permute.xlu0 %1418
      %1420 = vrot.lane.b32.xlu0 %v904, 24
      %v1421 = vpop.permute.xlu0 %1420
      %1422 = vrot.lane.b32.xlu0 %v905, 24
      %v1423 = vpop.permute.xlu0 %1422
      %1424 = vrot.lane.b32.xlu0 %v906, 24
      %v1425 = vpop.permute.xlu0 %1424
      %1426 = vrot.lane.b32.xlu0 %v907, 24
      %v1427 = vpop.permute.xlu0 %1426
      %1428 = vrot.lane.b32.xlu0 %v908, 24
      %v1429 = vpop.permute.xlu0 %1428
      %1430 = vrot.lane.b32.xlu0 %v909, 24
      %v1431 = vpop.permute.xlu0 %1430
      %1432 = vrot.lane.b32.xlu0 %v910, 24
      %v1433 = vpop.permute.xlu0 %1432
      %1434 = vrot.lane.b32.xlu0 %v911, 24
      %v1435 = vpop.permute.xlu0 %1434
      %1436 = vrot.lane.b32.xlu0 %v912, 24
      %v1437 = vpop.permute.xlu0 %1436
      %1438 = vrot.lane.b32.xlu0 %v913, 24
      %v1439 = vpop.permute.xlu0 %1438
      %1440 = vrot.lane.b32.xlu0 %v914, 24
      %v1441 = vpop.permute.xlu0 %1440
      %1442 = vrot.lane.b32.xlu0 %v915, 24
      %v1443 = vpop.permute.xlu0 %1442
      %1444 = vrot.lane.b32.xlu0 %v916, 24
      %v1445 = vpop.permute.xlu0 %1444
      %1446 = vrot.lane.b32.xlu0 %v917, 24
      %v1447 = vpop.permute.xlu0 %1446
      %1448 = vrot.lane.b32.xlu0 %v918, 24
      %v1449 = vpop.permute.xlu0 %1448
      %1450 = vrot.lane.b32.xlu0 %v919, 24
      %v1451 = vpop.permute.xlu0 %1450
      %1452 = vrot.lane.b32.xlu0 %v920, 24
      %v1453 = vpop.permute.xlu0 %1452
      %1486 = vrot.lane.b32.xlu0 %v1015, 32
      %v1487 = vpop.permute.xlu0 %1486
      %1488 = vrot.lane.b32.xlu0 %v1018, 32
      %v1489 = vpop.permute.xlu0 %1488
      %1490 = vrot.lane.b32.xlu0 %v1021, 32
      %v1491 = vpop.permute.xlu0 %1490
      %1492 = vrot.lane.b32.xlu0 %v1024, 32
      %v1493 = vpop.permute.xlu0 %1492
      %1494 = vrot.lane.b32.xlu0 %v1027, 32
      %v1495 = vpop.permute.xlu0 %1494
      %1496 = vrot.lane.b32.xlu0 %v1030, 32
      %v1497 = vpop.permute.xlu0 %1496
      %1498 = vrot.lane.b32.xlu0 %v1033, 32
      %v1499 = vpop.permute.xlu0 %1498
      %1500 = vrot.lane.b32.xlu0 %v1194, 32
      %v1501 = vpop.permute.xlu0 %1500
      %1502 = vrot.lane.b32.xlu0 %v1036, 32
      %v1503 = vpop.permute.xlu0 %1502
      %1504 = vrot.lane.b32.xlu0 %v1039, 32
      %v1505 = vpop.permute.xlu0 %1504
      %1506 = vrot.lane.b32.xlu0 %v1042, 32
      %v1507 = vpop.permute.xlu0 %1506
      %1508 = vrot.lane.b32.xlu0 %v1045, 32
      %v1509 = vpop.permute.xlu0 %1508
      %1510 = vrot.lane.b32.xlu0 %v1048, 32
      %v1511 = vpop.permute.xlu0 %1510
      %1512 = vrot.lane.b32.xlu0 %v1051, 32
      %v1513 = vpop.permute.xlu0 %1512
      %1514 = vrot.lane.b32.xlu0 %v1054, 32
      %v1515 = vpop.permute.xlu0 %1514
      %1516 = vrot.lane.b32.xlu0 %v1197, 32
      %v1517 = vpop.permute.xlu0 %1516
      %1518 = vrot.lane.b32.xlu0 %v1057, 32
      %v1519 = vpop.permute.xlu0 %1518
      %1520 = vrot.lane.b32.xlu0 %v1060, 32
      %v1521 = vpop.permute.xlu0 %1520
      %1522 = vrot.lane.b32.xlu0 %v1063, 32
      %v1523 = vpop.permute.xlu0 %1522
      %1524 = vrot.lane.b32.xlu0 %v1066, 32
      %v1525 = vpop.permute.xlu0 %1524
      %1526 = vrot.lane.b32.xlu0 %v1069, 32
      %v1527 = vpop.permute.xlu0 %1526
      %1528 = vrot.lane.b32.xlu0 %v1072, 32
      %v1529 = vpop.permute.xlu0 %1528
      %1530 = vrot.lane.b32.xlu0 %v1075, 32
      %v1531 = vpop.permute.xlu0 %1530
      %1532 = vrot.lane.b32.xlu0 %v1200, 32
      %v1533 = vpop.permute.xlu0 %1532
      %1534 = vrot.lane.b32.xlu0 %v1078, 32
      %v1535 = vpop.permute.xlu0 %1534
      %1536 = vrot.lane.b32.xlu0 %v1081, 32
      %v1537 = vpop.permute.xlu0 %1536
      %1538 = vrot.lane.b32.xlu0 %v1084, 32
      %v1539 = vpop.permute.xlu0 %1538
      %1540 = vrot.lane.b32.xlu0 %v1087, 32
      %v1541 = vpop.permute.xlu0 %1540
      %1542 = vrot.lane.b32.xlu0 %v1090, 32
      %v1543 = vpop.permute.xlu0 %1542
      %1544 = vrot.lane.b32.xlu0 %v1093, 32
      %v1545 = vpop.permute.xlu0 %1544
      %1546 = vrot.lane.b32.xlu0 %v1096, 32
      %v1547 = vpop.permute.xlu0 %1546
      %1548 = vrot.lane.b32.xlu0 %v1203, 32
      %v1549 = vpop.permute.xlu0 %1548
      %1582 = vrot.lane.b32.xlu0 %v1102, 40
      %v1583 = vpop.permute.xlu0 %1582
      %1584 = vrot.lane.b32.xlu0 %v1105, 40
      %v1585 = vpop.permute.xlu0 %1584
      %1586 = vrot.lane.b32.xlu0 %v1108, 40
      %v1587 = vpop.permute.xlu0 %1586
      %1588 = vrot.lane.b32.xlu0 %v1111, 40
      %v1589 = vpop.permute.xlu0 %1588
      %1590 = vrot.lane.b32.xlu0 %v1114, 40
      %v1591 = vpop.permute.xlu0 %1590
      %1592 = vrot.lane.b32.xlu0 %v1117, 40
      %v1593 = vpop.permute.xlu0 %1592
      %1594 = vrot.lane.b32.xlu0 %v1120, 40
      %v1595 = vpop.permute.xlu0 %1594
      %1596 = vrot.lane.b32.xlu0 %v1206, 40
      %v1597 = vpop.permute.xlu0 %1596
      %1598 = vrot.lane.b32.xlu0 %v1123, 40
      %v1599 = vpop.permute.xlu0 %1598
      %1600 = vrot.lane.b32.xlu0 %v1126, 40
      %v1601 = vpop.permute.xlu0 %1600
      %1602 = vrot.lane.b32.xlu0 %v1129, 40
      %v1603 = vpop.permute.xlu0 %1602
      %1604 = vrot.lane.b32.xlu0 %v1132, 40
      %v1605 = vpop.permute.xlu0 %1604
      %1606 = vrot.lane.b32.xlu0 %v1135, 40
      %v1607 = vpop.permute.xlu0 %1606
      %1608 = vrot.lane.b32.xlu0 %v1138, 40
      %v1609 = vpop.permute.xlu0 %1608
      %1610 = vrot.lane.b32.xlu0 %v1141, 40
      %v1611 = vpop.permute.xlu0 %1610
      %1612 = vrot.lane.b32.xlu0 %v1209, 40
      %v1613 = vpop.permute.xlu0 %1612
      %1614 = vrot.lane.b32.xlu0 %v1144, 40
      %v1615 = vpop.permute.xlu0 %1614
      %1616 = vrot.lane.b32.xlu0 %v1147, 40
      %v1617 = vpop.permute.xlu0 %1616
      %1618 = vrot.lane.b32.xlu0 %v1150, 40
      %v1619 = vpop.permute.xlu0 %1618
      %1620 = vrot.lane.b32.xlu0 %v1153, 40
      %v1621 = vpop.permute.xlu0 %1620
      %1622 = vrot.lane.b32.xlu0 %v1156, 40
      %v1623 = vpop.permute.xlu0 %1622
      %1624 = vrot.lane.b32.xlu0 %v1159, 40
      %v1625 = vpop.permute.xlu0 %1624
      %1626 = vrot.lane.b32.xlu0 %v1162, 40
      %v1627 = vpop.permute.xlu0 %1626
      %1628 = vrot.lane.b32.xlu0 %v1212, 40
      %v1629 = vpop.permute.xlu0 %1628
      %1630 = vrot.lane.b32.xlu0 %v1165, 40
      %v1631 = vpop.permute.xlu0 %1630
      %1632 = vrot.lane.b32.xlu0 %v1168, 40
      %v1633 = vpop.permute.xlu0 %1632
      %1634 = vrot.lane.b32.xlu0 %v1171, 40
      %v1635 = vpop.permute.xlu0 %1634
      %1636 = vrot.lane.b32.xlu0 %v1174, 40
      %v1637 = vpop.permute.xlu0 %1636
      %1638 = vrot.lane.b32.xlu0 %v1177, 40
      %v1639 = vpop.permute.xlu0 %1638
      %1640 = vrot.lane.b32.xlu0 %v1180, 40
      %v1641 = vpop.permute.xlu0 %1640
      %1642 = vrot.lane.b32.xlu0 %v1183, 40
      %v1643 = vpop.permute.xlu0 %1642
      %1644 = vrot.lane.b32.xlu0 %v1215, 40
      %v1645 = vpop.permute.xlu0 %1644
      %1678 = vrot.lane.b32.xlu0 %v890, 48
      %v1679 = vpop.permute.xlu0 %1678
      %1680 = vrot.lane.b32.xlu0 %v891, 48
      %v1681 = vpop.permute.xlu0 %1680
      %1682 = vrot.lane.b32.xlu0 %v892, 48
      %v1683 = vpop.permute.xlu0 %1682
      %1684 = vrot.lane.b32.xlu0 %v893, 48
      %v1685 = vpop.permute.xlu0 %1684
      %1686 = vrot.lane.b32.xlu0 %v894, 48
      %v1687 = vpop.permute.xlu0 %1686
      %1688 = vrot.lane.b32.xlu0 %v895, 48
      %v1689 = vpop.permute.xlu0 %1688
      %1690 = vrot.lane.b32.xlu0 %v896, 48
      %v1691 = vpop.permute.xlu0 %1690
      %1692 = vrot.lane.b32.xlu0 0.0, 48
      %v1693 = vpop.permute.xlu0 %1692
      %1694 = vrot.lane.b32.xlu0 %v898, 48
      %v1695 = vpop.permute.xlu0 %1694
      %1696 = vrot.lane.b32.xlu0 %v899, 48
      %v1697 = vpop.permute.xlu0 %1696
      %1698 = vrot.lane.b32.xlu0 %v900, 48
      %v1699 = vpop.permute.xlu0 %1698
      %1700 = vrot.lane.b32.xlu0 %v901, 48
      %v1701 = vpop.permute.xlu0 %1700
      %1702 = vrot.lane.b32.xlu0 %v902, 48
      %v1703 = vpop.permute.xlu0 %1702
      %1704 = vrot.lane.b32.xlu0 %v903, 48
      %v1705 = vpop.permute.xlu0 %1704
      %1706 = vrot.lane.b32.xlu0 %v904, 48
      %v1707 = vpop.permute.xlu0 %1706
      %1708 = vrot.lane.b32.xlu0 %v906, 48
      %v1709 = vpop.permute.xlu0 %1708
      %1710 = vrot.lane.b32.xlu0 %v907, 48
      %v1711 = vpop.permute.xlu0 %1710
      %1712 = vrot.lane.b32.xlu0 %v908, 48
      %v1713 = vpop.permute.xlu0 %1712
      %1714 = vrot.lane.b32.xlu0 %v909, 48
      %v1715 = vpop.permute.xlu0 %1714
      %1716 = vrot.lane.b32.xlu0 %v910, 48
      %v1717 = vpop.permute.xlu0 %1716
      %1718 = vrot.lane.b32.xlu0 %v911, 48
      %v1719 = vpop.permute.xlu0 %1718
      %1720 = vrot.lane.b32.xlu0 %v912, 48
      %v1721 = vpop.permute.xlu0 %1720
      %1722 = vrot.lane.b32.xlu0 %v914, 48
      %v1723 = vpop.permute.xlu0 %1722
      %1724 = vrot.lane.b32.xlu0 %v915, 48
      %v1725 = vpop.permute.xlu0 %1724
      %1726 = vrot.lane.b32.xlu0 %v916, 48
      %v1727 = vpop.permute.xlu0 %1726
      %1728 = vrot.lane.b32.xlu0 %v917, 48
      %v1729 = vpop.permute.xlu0 %1728
      %1730 = vrot.lane.b32.xlu0 %v918, 48
      %v1731 = vpop.permute.xlu0 %1730
      %1732 = vrot.lane.b32.xlu0 %v919, 48
      %v1733 = vpop.permute.xlu0 %1732
      %1734 = vrot.lane.b32.xlu0 %v920, 48
      %v1735 = vpop.permute.xlu0 %1734
      %1765 = vrot.lane.b32.xlu0 %v1018, 56
      %v1766 = vpop.permute.xlu0 %1765
      %1767 = vrot.lane.b32.xlu0 %v1021, 56
      %v1768 = vpop.permute.xlu0 %1767
      %1769 = vrot.lane.b32.xlu0 %v1024, 56
      %v1770 = vpop.permute.xlu0 %1769
      %1771 = vrot.lane.b32.xlu0 %v1027, 56
      %v1772 = vpop.permute.xlu0 %1771
      %1773 = vrot.lane.b32.xlu0 %v1030, 56
      %v1774 = vpop.permute.xlu0 %1773
      %1775 = vrot.lane.b32.xlu0 %v1033, 56
      %v1776 = vpop.permute.xlu0 %1775
      %1777 = vrot.lane.b32.xlu0 %v1194, 56
      %v1778 = vpop.permute.xlu0 %1777
      %1779 = vrot.lane.b32.xlu0 %v1012, 56
      %v1780 = vpop.permute.xlu0 %1779
      %1781 = vrot.lane.b32.xlu0 %v1039, 56
      %v1782 = vpop.permute.xlu0 %1781
      %1783 = vrot.lane.b32.xlu0 %v1042, 56
      %v1784 = vpop.permute.xlu0 %1783
      %1785 = vrot.lane.b32.xlu0 %v1045, 56
      %v1786 = vpop.permute.xlu0 %1785
      %1787 = vrot.lane.b32.xlu0 %v1048, 56
      %v1788 = vpop.permute.xlu0 %1787
      %1789 = vrot.lane.b32.xlu0 %v1051, 56
      %v1790 = vpop.permute.xlu0 %1789
      %1791 = vrot.lane.b32.xlu0 %v1054, 56
      %v1792 = vpop.permute.xlu0 %1791
      %1793 = vrot.lane.b32.xlu0 %v1197, 56
      %v1794 = vpop.permute.xlu0 %1793
      %1795 = vrot.lane.b32.xlu0 %v1060, 56
      %v1796 = vpop.permute.xlu0 %1795
      %1797 = vrot.lane.b32.xlu0 %v1063, 56
      %v1798 = vpop.permute.xlu0 %1797
      %1799 = vrot.lane.b32.xlu0 %v1066, 56
      %v1800 = vpop.permute.xlu0 %1799
      %1801 = vrot.lane.b32.xlu0 %v1069, 56
      %v1802 = vpop.permute.xlu0 %1801
      %1803 = vrot.lane.b32.xlu0 %v1072, 56
      %v1804 = vpop.permute.xlu0 %1803
      %1805 = vrot.lane.b32.xlu0 %v1075, 56
      %v1806 = vpop.permute.xlu0 %1805
      %1807 = vrot.lane.b32.xlu0 %v1200, 56
      %v1808 = vpop.permute.xlu0 %1807
      %1809 = vrot.lane.b32.xlu0 %v1081, 56
      %v1810 = vpop.permute.xlu0 %1809
      %1811 = vrot.lane.b32.xlu0 %v1084, 56
      %v1812 = vpop.permute.xlu0 %1811
      %1813 = vrot.lane.b32.xlu0 %v1087, 56
      %v1814 = vpop.permute.xlu0 %1813
      %1815 = vrot.lane.b32.xlu0 %v1090, 56
      %v1816 = vpop.permute.xlu0 %1815
      %1817 = vrot.lane.b32.xlu0 %v1093, 56
      %v1818 = vpop.permute.xlu0 %1817
      %1819 = vrot.lane.b32.xlu0 %v1096, 56
      %v1820 = vpop.permute.xlu0 %1819
      %1821 = vrot.lane.b32.xlu0 %v1203, 56
      %v1822 = vpop.permute.xlu0 %1821
      %1852 = vrot.lane.b32.xlu0 %v1105, 64
      %v1853 = vpop.permute.xlu0 %1852
      %1854 = vrot.lane.b32.xlu0 %v1108, 64
      %v1855 = vpop.permute.xlu0 %1854
      %1856 = vrot.lane.b32.xlu0 %v1111, 64
      %v1857 = vpop.permute.xlu0 %1856
      %1858 = vrot.lane.b32.xlu0 %v1114, 64
      %v1859 = vpop.permute.xlu0 %1858
      %1860 = vrot.lane.b32.xlu0 %v1117, 64
      %v1861 = vpop.permute.xlu0 %1860
      %1862 = vrot.lane.b32.xlu0 %v1120, 64
      %v1863 = vpop.permute.xlu0 %1862
      %1864 = vrot.lane.b32.xlu0 %v1206, 64
      %v1865 = vpop.permute.xlu0 %1864
      %1866 = vrot.lane.b32.xlu0 %v1099, 64
      %v1867 = vpop.permute.xlu0 %1866
      %1868 = vrot.lane.b32.xlu0 %v1126, 64
      %v1869 = vpop.permute.xlu0 %1868
      %1870 = vrot.lane.b32.xlu0 %v1129, 64
      %v1871 = vpop.permute.xlu0 %1870
      %1872 = vrot.lane.b32.xlu0 %v1132, 64
      %v1873 = vpop.permute.xlu0 %1872
      %1874 = vrot.lane.b32.xlu0 %v1135, 64
      %v1875 = vpop.permute.xlu0 %1874
      %1876 = vrot.lane.b32.xlu0 %v1138, 64
      %v1877 = vpop.permute.xlu0 %1876
      %1878 = vrot.lane.b32.xlu0 %v1141, 64
      %v1879 = vpop.permute.xlu0 %1878
      %1880 = vrot.lane.b32.xlu0 %v1209, 64
      %v1881 = vpop.permute.xlu0 %1880
      %1882 = vrot.lane.b32.xlu0 %v1147, 64
      %v1883 = vpop.permute.xlu0 %1882
      %1884 = vrot.lane.b32.xlu0 %v1150, 64
      %v1885 = vpop.permute.xlu0 %1884
      %1886 = vrot.lane.b32.xlu0 %v1153, 64
      %v1887 = vpop.permute.xlu0 %1886
      %1888 = vrot.lane.b32.xlu0 %v1156, 64
      %v1889 = vpop.permute.xlu0 %1888
      %1890 = vrot.lane.b32.xlu0 %v1159, 64
      %v1891 = vpop.permute.xlu0 %1890
      %1892 = vrot.lane.b32.xlu0 %v1162, 64
      %v1893 = vpop.permute.xlu0 %1892
      %1894 = vrot.lane.b32.xlu0 %v1212, 64
      %v1895 = vpop.permute.xlu0 %1894
      %1896 = vrot.lane.b32.xlu0 %v1168, 64
      %v1897 = vpop.permute.xlu0 %1896
      %1898 = vrot.lane.b32.xlu0 %v1171, 64
      %v1899 = vpop.permute.xlu0 %1898
      %1900 = vrot.lane.b32.xlu0 %v1174, 64
      %v1901 = vpop.permute.xlu0 %1900
      %1902 = vrot.lane.b32.xlu0 %v1177, 64
      %v1903 = vpop.permute.xlu0 %1902
      %1904 = vrot.lane.b32.xlu0 %v1180, 64
      %v1905 = vpop.permute.xlu0 %1904
      %1906 = vrot.lane.b32.xlu0 %v1183, 64
      %v1907 = vpop.permute.xlu0 %1906
      %1908 = vrot.lane.b32.xlu0 %v1215, 64
      %v1909 = vpop.permute.xlu0 %1908
      %vm1939 = vcmask 64512
      %v1940 = vsel %vm1939, 0.0, %v1217
      %v1941 = vsel %vm1939, %v889, %v1219
      %v1942 = vsel %vm1939, %v890, %v1221
      %v1943 = vsel %vm1939, %v891, %v1223
      %v1944 = vsel %vm1939, %v892, %v1225
      %v1945 = vsel %vm1939, %v893, %v1227
      %v1946 = vsel %vm1939, %v894, %v1229
      %v1947 = vsel %vm1939, %v895, %v1231
      %v1948 = vsel %vm1939, %v897, %v1233
      %v1949 = vsel %vm1939, %v898, %v1235
      %v1950 = vsel %vm1939, %v899, %v1237
      %v1951 = vsel %vm1939, %v900, %v1239
      %v1952 = vsel %vm1939, %v901, %v1241
      %v1953 = vsel %vm1939, %v902, %v1243
      %v1954 = vsel %vm1939, %v903, %v1245
      %v1955 = vsel %vm1939, %v905, %v1247
      %v1956 = vsel %vm1939, %v906, %v1249
      %v1957 = vsel %vm1939, %v907, %v1251
      %v1958 = vsel %vm1939, %v908, %v1253
      %v1959 = vsel %vm1939, %v909, %v1255
      %v1960 = vsel %vm1939, %v910, %v1257
      %v1961 = vsel %vm1939, %v911, %v1259
      %v1962 = vsel %vm1939, %v913, %v1261
      %v1963 = vsel %vm1939, %v914, %v1263
      %v1964 = vsel %vm1939, %v915, %v1265
      %v1965 = vsel %vm1939, %v916, %v1267
      %v1966 = vsel %vm1939, %v917, %v1269
      %v1967 = vsel %vm1939, %v918, %v1271
      %v1968 = vsel %vm1939, %v919, %v1273
      %vm1969 = vcmask 130048
      %v1970 = vsel %vm1969, %v1940, %v1304
      %v1971 = vsel %vm1969, %v1941, %v1306
      %v1972 = vsel %vm1969, %v1942, %v1308
      %v1973 = vsel %vm1969, %v1943, %v1310
      %v1974 = vsel %vm1969, %v1944, %v1312
      %v1975 = vsel %vm1969, %v1945, %v1314
      %v1976 = vsel %vm1969, %v1946, %v1316
      %v1977 = vsel %vm1969, %v1947, %v1318
      %v1978 = vsel %vm1969, %v1948, %v1320
      %v1979 = vsel %vm1969, %v1949, %v1322
      %v1980 = vsel %vm1969, %v1950, %v1324
      %v1981 = vsel %vm1969, %v1951, %v1326
      %v1982 = vsel %vm1969, %v1952, %v1328
      %v1983 = vsel %vm1969, %v1953, %v1330
      %v1984 = vsel %vm1969, %v1954, %v1332
      %v1985 = vsel %vm1969, %v1955, %v1334
      %v1986 = vsel %vm1969, %v1956, %v1336
      %v1987 = vsel %vm1969, %v1957, %v1338
      %v1988 = vsel %vm1969, %v1958, %v1340
      %v1989 = vsel %vm1969, %v1959, %v1342
      %v1990 = vsel %vm1969, %v1960, %v1344
      %v1991 = vsel %vm1969, %v1961, %v1346
      %v1992 = vsel %vm1969, %v1962, %v1348
      %v1993 = vsel %vm1969, %v1963, %v1350
      %v1994 = vsel %vm1969, %v1964, %v1352
      %v1995 = vsel %vm1969, %v1965, %v1354
      %v1996 = vsel %vm1969, %v1966, %v1356
      %v1997 = vsel %vm1969, %v1967, %v1358
      %v1998 = vsel %vm1969, %v1968, %v1360
      %vm1999 = vcmask 195584
      %v2000 = vsel %vm1999, %v1970, %v1391
      %v2001 = vsel %vm1999, %v1971, %v1393
      %v2002 = vsel %vm1999, %v1972, %v1395
      %v2003 = vsel %vm1999, %v1973, %v1397
      %v2004 = vsel %vm1999, %v1974, %v1399
      %v2005 = vsel %vm1999, %v1975, %v1401
      %v2006 = vsel %vm1999, %v1976, %v1403
      %v2007 = vsel %vm1999, %v1977, %v1405
      %v2008 = vsel %vm1999, %v1970, %v1407
      %v2009 = vsel %vm1999, %v1978, %v1409
      %v2010 = vsel %vm1999, %v1979, %v1411
      %v2011 = vsel %vm1999, %v1980, %v1413
      %v2012 = vsel %vm1999, %v1981, %v1415
      %v2013 = vsel %vm1999, %v1982, %v1417
      %v2014 = vsel %vm1999, %v1983, %v1419
      %v2015 = vsel %vm1999, %v1984, %v1421
      %v2016 = vsel %vm1999, %v1970, %v1423
      %v2017 = vsel %vm1999, %v1985, %v1425
      %v2018 = vsel %vm1999, %v1986, %v1427
      %v2019 = vsel %vm1999, %v1987, %v1429
      %v2020 = vsel %vm1999, %v1988, %v1431
      %v2021 = vsel %vm1999, %v1989, %v1433
      %v2022 = vsel %vm1999, %v1990, %v1435
      %v2023 = vsel %vm1999, %v1991, %v1437
      %v2024 = vsel %vm1999, %v1970, %v1439
      %v2025 = vsel %vm1999, %v1992, %v1441
      %v2026 = vsel %vm1999, %v1993, %v1443
      %v2027 = vsel %vm1999, %v1994, %v1445
      %v2028 = vsel %vm1999, %v1995, %v1447
      %v2029 = vsel %vm1999, %v1996, %v1449
      %v2030 = vsel %vm1999, %v1997, %v1451
      %v2031 = vsel %vm1999, %v1998, %v1453
      %vm2032 = vcmask 261120
      %v2033 = vsel %vm2032, %v2000, %v1487
      %v2034 = vsel %vm2032, %v2001, %v1489
      %v2035 = vsel %vm2032, %v2002, %v1491
      %v2036 = vsel %vm2032, %v2003, %v1493
      %v2037 = vsel %vm2032, %v2004, %v1495
      %v2038 = vsel %vm2032, %v2005, %v1497
      %v2039 = vsel %vm2032, %v2006, %v1499
      %v2040 = vsel %vm2032, %v2007, %v1501
      %v2041 = vsel %vm2032, %v2008, %v1503
      %v2042 = vsel %vm2032, %v2009, %v1505
      %v2043 = vsel %vm2032, %v2010, %v1507
      %v2044 = vsel %vm2032, %v2011, %v1509
      %v2045 = vsel %vm2032, %v2012, %v1511
      %v2046 = vsel %vm2032, %v2013, %v1513
      %v2047 = vsel %vm2032, %v2014, %v1515
      %v2048 = vsel %vm2032, %v2015, %v1517
      %v2049 = vsel %vm2032, %v2016, %v1519
      %v2050 = vsel %vm2032, %v2017, %v1521
      %v2051 = vsel %vm2032, %v2018, %v1523
      %v2052 = vsel %vm2032, %v2019, %v1525
      %v2053 = vsel %vm2032, %v2020, %v1527
      %v2054 = vsel %vm2032, %v2021, %v1529
      %v2055 = vsel %vm2032, %v2022, %v1531
      %v2056 = vsel %vm2032, %v2023, %v1533
      %v2057 = vsel %vm2032, %v2024, %v1535
      %v2058 = vsel %vm2032, %v2025, %v1537
      %v2059 = vsel %vm2032, %v2026, %v1539
      %v2060 = vsel %vm2032, %v2027, %v1541
      %v2061 = vsel %vm2032, %v2028, %v1543
      %v2062 = vsel %vm2032, %v2029, %v1545
      %v2063 = vsel %vm2032, %v2030, %v1547
      %v2064 = vsel %vm2032, %v2031, %v1549
      %vm2065 = vcmask 326656
      %v2066 = vsel %vm2065, %v2033, %v1583
      %v2067 = vsel %vm2065, %v2034, %v1585
      %v2068 = vsel %vm2065, %v2035, %v1587
      %v2069 = vsel %vm2065, %v2036, %v1589
      %v2070 = vsel %vm2065, %v2037, %v1591
      %v2071 = vsel %vm2065, %v2038, %v1593
      %v2072 = vsel %vm2065, %v2039, %v1595
      %v2073 = vsel %vm2065, %v2040, %v1597
      %v2074 = vsel %vm2065, %v2041, %v1599
      %v2075 = vsel %vm2065, %v2042, %v1601
      %v2076 = vsel %vm2065, %v2043, %v1603
      %v2077 = vsel %vm2065, %v2044, %v1605
      %v2078 = vsel %vm2065, %v2045, %v1607
      %v2079 = vsel %vm2065, %v2046, %v1609
      %v2080 = vsel %vm2065, %v2047, %v1611
      %v2081 = vsel %vm2065, %v2048, %v1613
      %v2082 = vsel %vm2065, %v2049, %v1615
      %v2083 = vsel %vm2065, %v2050, %v1617
      %v2084 = vsel %vm2065, %v2051, %v1619
      %v2085 = vsel %vm2065, %v2052, %v1621
      %v2086 = vsel %vm2065, %v2053, %v1623
      %v2087 = vsel %vm2065, %v2054, %v1625
      %v2088 = vsel %vm2065, %v2055, %v1627
      %v2089 = vsel %vm2065, %v2056, %v1629
      %v2090 = vsel %vm2065, %v2057, %v1631
      %v2091 = vsel %vm2065, %v2058, %v1633
      %v2092 = vsel %vm2065, %v2059, %v1635
      %v2093 = vsel %vm2065, %v2060, %v1637
      %v2094 = vsel %vm2065, %v2061, %v1639
      %v2095 = vsel %vm2065, %v2062, %v1641
      %v2096 = vsel %vm2065, %v2063, %v1643
      %v2097 = vsel %vm2065, %v2064, %v1645
      %vm2098 = vcmask 392192
      %v2099 = vsel %vm2098, %v2066, %v1679
      %v2100 = vsel %vm2098, %v2067, %v1681
      %v2101 = vsel %vm2098, %v2068, %v1683
      %v2102 = vsel %vm2098, %v2069, %v1685
      %v2103 = vsel %vm2098, %v2070, %v1687
      %v2104 = vsel %vm2098, %v2071, %v1689
      %v2105 = vsel %vm2098, %v2072, %v1691
      %v2106 = vsel %vm2098, %v2073, %v1693
      %v2107 = vsel %vm2098, %v2074, %v1695
      %v2108 = vsel %vm2098, %v2075, %v1697
      %v2109 = vsel %vm2098, %v2076, %v1699
      %v2110 = vsel %vm2098, %v2077, %v1701
      %v2111 = vsel %vm2098, %v2078, %v1703
      %v2112 = vsel %vm2098, %v2079, %v1705
      %v2113 = vsel %vm2098, %v2080, %v1707
      %v2114 = vsel %vm2098, %v2081, %v1693
      %v2115 = vsel %vm2098, %v2082, %v1709
      %v2116 = vsel %vm2098, %v2083, %v1711
      %v2117 = vsel %vm2098, %v2084, %v1713
      %v2118 = vsel %vm2098, %v2085, %v1715
      %v2119 = vsel %vm2098, %v2086, %v1717
      %v2120 = vsel %vm2098, %v2087, %v1719
      %v2121 = vsel %vm2098, %v2088, %v1721
      %v2122 = vsel %vm2098, %v2089, %v1693
      %v2123 = vsel %vm2098, %v2090, %v1723
      %v2124 = vsel %vm2098, %v2091, %v1725
      %v2125 = vsel %vm2098, %v2092, %v1727
      %v2126 = vsel %vm2098, %v2093, %v1729
      %v2127 = vsel %vm2098, %v2094, %v1731
      %v2128 = vsel %vm2098, %v2095, %v1733
      %v2129 = vsel %vm2098, %v2096, %v1735
      %v2130 = vsel %vm2098, %v2097, %v1693
      %vm2131 = vcmask 457728
      %v2132 = vsel %vm2131, %v2099, %v1766
      %v2133 = vsel %vm2131, %v2100, %v1768
      %v2134 = vsel %vm2131, %v2101, %v1770
      %v2135 = vsel %vm2131, %v2102, %v1772
      %v2136 = vsel %vm2131, %v2103, %v1774
      %v2137 = vsel %vm2131, %v2104, %v1776
      %v2138 = vsel %vm2131, %v2105, %v1778
      %v2139 = vsel %vm2131, %v2106, %v1780
      %v2140 = vsel %vm2131, %v2107, %v1782
      %v2141 = vsel %vm2131, %v2108, %v1784
      %v2142 = vsel %vm2131, %v2109, %v1786
      %v2143 = vsel %vm2131, %v2110, %v1788
      %v2144 = vsel %vm2131, %v2111, %v1790
      %v2145 = vsel %vm2131, %v2112, %v1792
      %v2146 = vsel %vm2131, %v2113, %v1794
      %v2147 = vsel %vm2131, %v2114, %v1780
      %v2148 = vsel %vm2131, %v2115, %v1796
      %v2149 = vsel %vm2131, %v2116, %v1798
      %v2150 = vsel %vm2131, %v2117, %v1800
      %v2151 = vsel %vm2131, %v2118, %v1802
      %v2152 = vsel %vm2131, %v2119, %v1804
      %v2153 = vsel %vm2131, %v2120, %v1806
      %v2154 = vsel %vm2131, %v2121, %v1808
      %v2155 = vsel %vm2131, %v2122, %v1780
      %v2156 = vsel %vm2131, %v2123, %v1810
      %v2157 = vsel %vm2131, %v2124, %v1812
      %v2158 = vsel %vm2131, %v2125, %v1814
      %v2159 = vsel %vm2131, %v2126, %v1816
      %v2160 = vsel %vm2131, %v2127, %v1818
      %v2161 = vsel %vm2131, %v2128, %v1820
      %v2162 = vsel %vm2131, %v2129, %v1822
      %v2163 = vsel %vm2131, %v2130, %v1780
      %vm2164 = vcmask 523264
      %v2165 = vsel %vm2164, %v2132, %v1853
      %v2166 = vsel %vm2164, %v2133, %v1855
      %v2167 = vsel %vm2164, %v2134, %v1857
      %v2168 = vsel %vm2164, %v2135, %v1859
      %v2169 = vsel %vm2164, %v2136, %v1861
      %v2170 = vsel %vm2164, %v2137, %v1863
      %v2171 = vsel %vm2164, %v2138, %v1865
      %v2172 = vsel %vm2164, %v2139, %v1867
      %v2173 = vsel %vm2164, %v2140, %v1869
      %v2174 = vsel %vm2164, %v2141, %v1871
      %v2175 = vsel %vm2164, %v2142, %v1873
      %v2176 = vsel %vm2164, %v2143, %v1875
      %v2177 = vsel %vm2164, %v2144, %v1877
      %v2178 = vsel %vm2164, %v2145, %v1879
      %v2179 = vsel %vm2164, %v2146, %v1881
      %v2180 = vsel %vm2164, %v2147, %v1867
      %v2181 = vsel %vm2164, %v2148, %v1883
      %v2182 = vsel %vm2164, %v2149, %v1885
      %v2183 = vsel %vm2164, %v2150, %v1887
      %v2184 = vsel %vm2164, %v2151, %v1889
      %v2185 = vsel %vm2164, %v2152, %v1891
      %v2186 = vsel %vm2164, %v2153, %v1893
      %v2187 = vsel %vm2164, %v2154, %v1895
      %v2188 = vsel %vm2164, %v2155, %v1867
      %v2189 = vsel %vm2164, %v2156, %v1897
      %v2190 = vsel %vm2164, %v2157, %v1899
      %v2191 = vsel %vm2164, %v2158, %v1901
      %v2192 = vsel %vm2164, %v2159, %v1903
      %v2193 = vsel %vm2164, %v2160, %v1905
      %v2194 = vsel %vm2164, %v2161, %v1907
      %v2195 = vsel %vm2164, %v2162, %v1909
      %v2196 = vsel %vm2164, %v2163, %v1867
      %v2198 = vlaneseq
      %v2199 = vshrl.u32 %v2198, 7
      %v2200 = vsub.s32 0, %v2199
      %v2201 = vrot.slane %v363, %v2200
      %vm2203 = vcmask 588800
      %v2205 = vsel %vm2203, %v2165, 0
      %v2208 = vsel %vm2203, %v2166, 0
      %v2211 = vsel %vm2203, %v2167, 0
      %v2214 = vsel %vm2203, %v2168, 0
      %v2217 = vsel %vm2203, %v2169, 0
      %v2220 = vsel %vm2203, %v2170, 0
      %v2223 = vsel %vm2203, %v2171, 0
      %v2226 = vsel %vm2203, %v2172, 0
      %v2229 = vsel %vm2203, %v2173, 0
      %v2232 = vsel %vm2203, %v2174, 0
      %v2235 = vsel %vm2203, %v2175, 0
      %v2238 = vsel %vm2203, %v2176, 0
      %v2241 = vsel %vm2203, %v2177, 0
      %v2244 = vsel %vm2203, %v2178, 0
      %v2247 = vsel %vm2203, %v2179, 0
      %v2250 = vsel %vm2203, %v2180, 0
      %v2253 = vsel %vm2203, %v2181, 0
      %v2256 = vsel %vm2203, %v2182, 0
      %v2259 = vsel %vm2203, %v2183, 0
      %v2262 = vsel %vm2203, %v2184, 0
      %v2265 = vsel %vm2203, %v2185, 0
      %v2268 = vsel %vm2203, %v2186, 0
      %v2271 = vsel %vm2203, %v2187, 0
      %v2274 = vsel %vm2203, %v2188, 0
      %v2277 = vsel %vm2203, %v2189, 0
      %v2280 = vsel %vm2203, %v2190, 0
      %v2283 = vsel %vm2203, %v2191, 0
      %v2286 = vsel %vm2203, %v2192, 0
      %v2289 = vsel %vm2203, %v2193, 0
      %v2292 = vsel %vm2203, %v2194, 0
      %v2295 = vsel %vm2203, %v2195, 0
      %v2298 = vsel %vm2203, %v2196, 0
      %2300 = vmatprep.subr.mxu0 0.0
      %2301 = vmatpush1.msra.mxu0 %v354
      %2302 = vmatprep.subr.mxu0 0.0
      %2303 = vmatpush1.msra.mxu0 %v355
      %2304 = vmatprep.subr.mxu0 0.0
      %2305 = vmatpush1.msra.mxu0 %v356
      %2306 = vmatprep.subr.mxu0 0.0
      %2307 = vmatpush1.msra.mxu0 %v357
      %2308 = vmatprep.subr.mxu0 0.0
      %2309 = vmatpush1.msra.mxu0 %v358
      %2310 = vmatprep.subr.mxu0 0.0
      %2311 = vmatpush1.msra.mxu0 %v359
      %2312 = vmatprep.subr.mxu0 0.0
      %2313 = vmatpush1.msra.mxu0 %v360
      %2314 = vmatprep.subr.mxu0 0.0
      %2315 = vmatpush1.msra.mxu0 %v361
      %2316 = vmatprep.subr.mxu0 0.0
      %2317 = vmatpush1.msra.mxu0 %v362
      %2318 = vmatprep.subr.mxu0 0.0
      %2319 = vmatpush1.msra.mxu0 0.0
      %2320 = vmatprep.subr.mxu0 0.0
      %2321 = vmatpush1.msra.mxu0 0.0
      %2322 = vmatprep.subr.mxu0 0.0
      %2323 = vmatpush1.msra.mxu0 0.0
      %2324 = vmatprep.subr.mxu0 0.0
      %2325 = vmatpush1.msra.mxu0 0.0
      %2326 = vmatprep.subr.mxu0 0.0
      %2327 = vmatpush1.msra.mxu0 0.0
      %2328 = vmatprep.subr.mxu0 0.0
      %2329 = vmatpush1.msra.mxu0 0.0
      %2330 = vmatprep.subr.mxu0 0.0
      %2331 = vmatpush1.msra.mxu0 0.0
      %2332 = vmatprep.subr.mxu0 0.0
      %2333 = vmatpush1.msra.mxu0 0.0
      %2334 = vmatprep.subr.mxu0 0.0
      %2335 = vmatpush1.msra.mxu0 0.0
      %2336 = vmatprep.subr.mxu0 0.0
      %2337 = vmatpush1.msra.mxu0 0.0
      %2338 = vmatprep.subr.mxu0 0.0
      %2339 = vmatpush1.msra.mxu0 0.0
      %2340 = vmatprep.subr.mxu0 0.0
      %2341 = vmatpush1.msra.mxu0 0.0
      %2342 = vmatprep.subr.mxu0 0.0
      %2343 = vmatpush1.msra.mxu0 0.0
      %2344 = vmatprep.subr.mxu0 0.0
      %2345 = vmatpush1.msra.mxu0 0.0
      %2346 = vmatprep.subr.mxu0 0.0
      %2347 = vmatpush1.msra.mxu0 0.0
      %2348 = vmatprep.subr.mxu0 0.0
      %2349 = vmatpush1.msra.mxu0 0.0
      %2350 = vmatprep.subr.mxu0 0.0
      %2351 = vmatpush1.msra.mxu0 0.0
      %2352 = vmatprep.subr.mxu0 0.0
      %2353 = vmatpush1.msra.mxu0 0.0
      %2354 = vmatprep.subr.mxu0 0.0
      %2355 = vmatpush1.msra.mxu0 0.0
      %2356 = vmatprep.subr.mxu0 0.0
      %2357 = vmatpush1.msra.mxu0 0.0
      %2358 = vmatprep.subr.mxu0 0.0
      %2359 = vmatpush1.msra.mxu0 0.0
      %2360 = vmatprep.subr.mxu0 0.0
      %2361 = vmatpush1.msra.mxu0 0.0
      %2362 = vmatprep.subr.mxu0 0.0
      %2363 = vmatpush1.msra.mxu0 0.0
      %2364 = vmatprep.mubr.f32.mxu0 0.0
      %2365 = vmatmul.mubr.f32.gmra.mrb[0].mxu0 %v2205
      %v2366 = vpop.f32.mrb[0].mxu0
      %v2367 = vadd.f32 %v2201, %v2366
      %v2368 = vpop.f32.mrb[0].mxu0
      %2369 = vmatprep.mubr.f32.mxu0 0.0
      %2370 = vmatmul.mubr.f32.gmra.mrb[0].mxu0 %v2208
      %v2371 = vpop.f32.mrb[0].mxu0
      %v2372 = vadd.f32 %v2201, %v2371
      %v2373 = vpop.f32.mrb[0].mxu0
      %2374 = vmatprep.mubr.f32.mxu0 0.0
      %2375 = vmatmul.mubr.f32.gmra.mrb[0].mxu0 %v2211
      %v2376 = vpop.f32.mrb[0].mxu0
      %v2377 = vadd.f32 %v2201, %v2376
      %v2378 = vpop.f32.mrb[0].mxu0
      %2379 = vmatprep.mubr.f32.mxu0 0.0
      %2380 = vmatmul.mubr.f32.gmra.mrb[0].mxu0 %v2214
      %v2381 = vpop.f32.mrb[0].mxu0
      %v2382 = vadd.f32 %v2201, %v2381
      %v2383 = vpop.f32.mrb[0].mxu0
      %2384 = vmatprep.mubr.f32.mxu0 0.0
      %2385 = vmatmul.mubr.f32.gmra.mrb[0].mxu0 %v2217
      %v2386 = vpop.f32.mrb[0].mxu0
      %v2387 = vadd.f32 %v2201, %v2386
      %v2388 = vpop.f32.mrb[0].mxu0
      %2389 = vmatprep.mubr.f32.mxu0 0.0
      %2390 = vmatmul.mubr.f32.gmra.mrb[0].mxu0 %v2220
      %v2391 = vpop.f32.mrb[0].mxu0
      %v2392 = vadd.f32 %v2201, %v2391
      %v2393 = vpop.f32.mrb[0].mxu0
      %2394 = vmatprep.mubr.f32.mxu0 0.0
      %2395 = vmatmul.mubr.f32.gmra.mrb[0].mxu0 %v2223
      %v2396 = vpop.f32.mrb[0].mxu0
      %v2397 = vadd.f32 %v2201, %v2396
      %v2398 = vpop.f32.mrb[0].mxu0
      %2399 = vmatprep.mubr.f32.mxu0 0.0
      %2400 = vmatmul.mubr.f32.gmra.mrb[0].mxu0 %v2226
      %v2401 = vpop.f32.mrb[0].mxu0
      %v2402 = vadd.f32 %v2201, %v2401
      %v2403 = vpop.f32.mrb[0].mxu0
      %2404 = vmatprep.mubr.f32.mxu0 0.0
      %2405 = vmatmul.mubr.f32.gmra.mrb[0].mxu0 %v2229
      %v2406 = vpop.f32.mrb[0].mxu0
      %v2407 = vadd.f32 %v2201, %v2406
      %v2408 = vpop.f32.mrb[0].mxu0
      %2409 = vmatprep.mubr.f32.mxu0 0.0
      %2410 = vmatmul.mubr.f32.gmra.mrb[0].mxu0 %v2232
      %v2411 = vpop.f32.mrb[0].mxu0
      %v2412 = vadd.f32 %v2201, %v2411
      %v2413 = vpop.f32.mrb[0].mxu0
      %2414 = vmatprep.mubr.f32.mxu0 0.0
      %2415 = vmatmul.mubr.f32.gmra.mrb[0].mxu0 %v2235
      %v2416 = vpop.f32.mrb[0].mxu0
      %v2417 = vadd.f32 %v2201, %v2416
      %v2418 = vpop.f32.mrb[0].mxu0
      %2419 = vmatprep.mubr.f32.mxu0 0.0
      %2420 = vmatmul.mubr.f32.gmra.mrb[0].mxu0 %v2238
      %v2421 = vpop.f32.mrb[0].mxu0
      %v2422 = vadd.f32 %v2201, %v2421
      %v2423 = vpop.f32.mrb[0].mxu0
      %2424 = vmatprep.mubr.f32.mxu0 0.0
      %2425 = vmatmul.mubr.f32.gmra.mrb[0].mxu0 %v2241
      %v2426 = vpop.f32.mrb[0].mxu0
      %v2427 = vadd.f32 %v2201, %v2426
      %v2428 = vpop.f32.mrb[0].mxu0
      %2429 = vmatprep.mubr.f32.mxu0 0.0
      %2430 = vmatmul.mubr.f32.gmra.mrb[0].mxu0 %v2244
      %v2431 = vpop.f32.mrb[0].mxu0
      %v2432 = vadd.f32 %v2201, %v2431
      %v2433 = vpop.f32.mrb[0].mxu0
      %2434 = vmatprep.mubr.f32.mxu0 0.0
      %2435 = vmatmul.mubr.f32.gmra.mrb[0].mxu0 %v2247
      %v2436 = vpop.f32.mrb[0].mxu0
      %v2437 = vadd.f32 %v2201, %v2436
      %v2438 = vpop.f32.mrb[0].mxu0
      %2439 = vmatprep.mubr.f32.mxu0 0.0
      %2440 = vmatmul.mubr.f32.gmra.mrb[0].mxu0 %v2250
      %v2441 = vpop.f32.mrb[0].mxu0
      %v2442 = vadd.f32 %v2201, %v2441
      %v2443 = vpop.f32.mrb[0].mxu0
      %2444 = vmatprep.mubr.f32.mxu0 0.0
      %2445 = vmatmul.mubr.f32.gmra.mrb[0].mxu0 %v2253
      %v2446 = vpop.f32.mrb[0].mxu0
      %v2447 = vadd.f32 %v2201, %v2446
      %v2448 = vpop.f32.mrb[0].mxu0
      %2449 = vmatprep.mubr.f32.mxu0 0.0
      %2450 = vmatmul.mubr.f32.gmra.mrb[0].mxu0 %v2256
      %v2451 = vpop.f32.mrb[0].mxu0
      %v2452 = vadd.f32 %v2201, %v2451
      %v2453 = vpop.f32.mrb[0].mxu0
      %2454 = vmatprep.mubr.f32.mxu0 0.0
      %2455 = vmatmul.mubr.f32.gmra.mrb[0].mxu0 %v2259
      %v2456 = vpop.f32.mrb[0].mxu0
      %v2457 = vadd.f32 %v2201, %v2456
      %v2458 = vpop.f32.mrb[0].mxu0
      %2459 = vmatprep.mubr.f32.mxu0 0.0
      %2460 = vmatmul.mubr.f32.gmra.mrb[0].mxu0 %v2262
      %v2461 = vpop.f32.mrb[0].mxu0
      %v2462 = vadd.f32 %v2201, %v2461
      %v2463 = vpop.f32.mrb[0].mxu0
      %2464 = vmatprep.mubr.f32.mxu0 0.0
      %2465 = vmatmul.mubr.f32.gmra.mrb[0].mxu0 %v2265
      %v2466 = vpop.f32.mrb[0].mxu0
      %v2467 = vadd.f32 %v2201, %v2466
      %v2468 = vpop.f32.mrb[0].mxu0
      %2469 = vmatprep.mubr.f32.mxu0 0.0
      %2470 = vmatmul.mubr.f32.gmra.mrb[0].mxu0 %v2268
      %v2471 = vpop.f32.mrb[0].mxu0
      %v2472 = vadd.f32 %v2201, %v2471
      %v2473 = vpop.f32.mrb[0].mxu0
      %2474 = vmatprep.mubr.f32.mxu0 0.0
      %2475 = vmatmul.mubr.f32.gmra.mrb[0].mxu0 %v2271
      %v2476 = vpop.f32.mrb[0].mxu0
      %v2477 = vadd.f32 %v2201, %v2476
      %v2478 = vpop.f32.mrb[0].mxu0
      %2479 = vmatprep.mubr.f32.mxu0 0.0
      %2480 = vmatmul.mubr.f32.gmra.mrb[0].mxu0 %v2274
      %v2481 = vpop.f32.mrb[0].mxu0
      %v2482 = vadd.f32 %v2201, %v2481
      %v2483 = vpop.f32.mrb[0].mxu0
      %2484 = vmatprep.mubr.f32.mxu0 0.0
      %2485 = vmatmul.mubr.f32.gmra.mrb[0].mxu0 %v2277
      %v2486 = vpop.f32.mrb[0].mxu0
      %v2487 = vadd.f32 %v2201, %v2486
      %v2488 = vpop.f32.mrb[0].mxu0
      %2489 = vmatprep.mubr.f32.mxu0 0.0
      %2490 = vmatmul.mubr.f32.gmra.mrb[0].mxu0 %v2280
      %v2491 = vpop.f32.mrb[0].mxu0
      %v2492 = vadd.f32 %v2201, %v2491
      %v2493 = vpop.f32.mrb[0].mxu0
      %2494 = vmatprep.mubr.f32.mxu0 0.0
      %2495 = vmatmul.mubr.f32.gmra.mrb[0].mxu0 %v2283
      %v2496 = vpop.f32.mrb[0].mxu0
      %v2497 = vadd.f32 %v2201, %v2496
      %v2498 = vpop.f32.mrb[0].mxu0
      %2499 = vmatprep.mubr.f32.mxu0 0.0
      %2500 = vmatmul.mubr.f32.gmra.mrb[0].mxu0 %v2286
      %v2501 = vpop.f32.mrb[0].mxu0
      %v2502 = vadd.f32 %v2201, %v2501
      %v2503 = vpop.f32.mrb[0].mxu0
      %2504 = vmatprep.mubr.f32.mxu0 0.0
      %2505 = vmatmul.mubr.f32.gmra.mrb[0].mxu0 %v2289
      %v2506 = vpop.f32.mrb[0].mxu0
      %v2507 = vadd.f32 %v2201, %v2506
      %v2508 = vpop.f32.mrb[0].mxu0
      %2509 = vmatprep.mubr.f32.mxu0 0.0
      %2510 = vmatmul.mubr.f32.gmra.mrb[0].mxu0 %v2292
      %v2511 = vpop.f32.mrb[0].mxu0
      %v2512 = vadd.f32 %v2201, %v2511
      %v2513 = vpop.f32.mrb[0].mxu0
      %2514 = vmatprep.mubr.f32.mxu0 0.0
      %2515 = vmatmul.mubr.f32.gmra.mrb[0].mxu0 %v2295
      %v2516 = vpop.f32.mrb[0].mxu0
      %v2517 = vadd.f32 %v2201, %v2516
      %v2518 = vpop.f32.mrb[0].mxu0
      %2519 = vmatprep.mubr.f32.mxu0 0.0
      %2520 = vmatmul.mubr.f32.gmra.mrb[0].mxu0 %v2298
      %v2521 = vpop.f32.mrb[0].mxu0
      %v2522 = vadd.f32 %v2201, %v2521
      %v2523 = vpop.f32.mrb[0].mxu0
      %2524 = vdwg.mxu0
      %v2525 = vadd.f32 %v2367, %v317
      %v2526 = vadd.f32 %v2372, %v318
      %v2527 = vadd.f32 %v2377, %v319
      %v2528 = vadd.f32 %v2382, %v320
      %v2529 = vadd.f32 %v2387, %v321
      %v2530 = vadd.f32 %v2392, %v322
      %v2531 = vadd.f32 %v2397, %v323
      %v2532 = vadd.f32 %v2402, %v324
      %v2533 = vadd.f32 %v2407, %v325
      %v2534 = vadd.f32 %v2412, %v326
      %v2535 = vadd.f32 %v2417, %v327
      %v2536 = vadd.f32 %v2422, %v328
      %v2537 = vadd.f32 %v2427, %v329
      %v2538 = vadd.f32 %v2432, %v330
      %v2539 = vadd.f32 %v2437, %v331
      %v2540 = vadd.f32 %v2442, %v332
      %v2541 = vadd.f32 %v2447, %v333
      %v2542 = vadd.f32 %v2452, %v334
      %v2543 = vadd.f32 %v2457, %v335
      %v2544 = vadd.f32 %v2462, %v336
      %v2545 = vadd.f32 %v2467, %v337
      %v2546 = vadd.f32 %v2472, %v338
      %v2547 = vadd.f32 %v2477, %v339
      %v2548 = vadd.f32 %v2482, %v340
      %v2549 = vadd.f32 %v2487, %v341
      %v2550 = vadd.f32 %v2492, %v342
      %v2551 = vadd.f32 %v2497, %v343
      %v2552 = vadd.f32 %v2502, %v344
      %v2553 = vadd.f32 %v2507, %v345
      %v2554 = vadd.f32 %v2512, %v346
      %v2555 = vadd.f32 %v2517, %v347
      %v2556 = vadd.f32 %v2522, %v348
      %2557 = vst.msk [vmem:[%s283] sm:$0xff] %vm1939, %v2525
      %2558 = vst.msk [vmem:[%s283 + $0x8] sm:$0xff] %vm1939, %v2526
      %2559 = vst.msk [vmem:[%s283 + $0x10] sm:$0xff] %vm1939, %v2527
      %2560 = vst.msk [vmem:[%s283 + $0x18] sm:$0xff] %vm1939, %v2528
      %2561 = vst.msk [vmem:[%s283 + $0x20] sm:$0xff] %vm1939, %v2529
      %2562 = vst.msk [vmem:[%s283 + $0x28] sm:$0xff] %vm1939, %v2530
      %2563 = vst.msk [vmem:[%s283 + $0x30] sm:$0xff] %vm1939, %v2531
      %2564 = vst.msk [vmem:[%s283 + $0x38] sm:$0xff] %vm1939, %v2532
      %2565 = vst.msk [vmem:[%s283 + $0x40] sm:$0xff] %vm1939, %v2533
      %2566 = vst.msk [vmem:[%s283 + $0x48] sm:$0xff] %vm1939, %v2534
      %2567 = vst.msk [vmem:[%s283 + $0x50] sm:$0xff] %vm1939, %v2535
      %2568 = vst.msk [vmem:[%s283 + $0x58] sm:$0xff] %vm1939, %v2536
      %2569 = vst.msk [vmem:[%s283 + $0x60] sm:$0xff] %vm1939, %v2537
      %2570 = vst.msk [vmem:[%s283 + $0x68] sm:$0xff] %vm1939, %v2538
      %2571 = vst.msk [vmem:[%s283 + $0x70] sm:$0xff] %vm1939, %v2539
      %2572 = vst.msk [vmem:[%s283 + $0x78] sm:$0xff] %vm1939, %v2540
      %2573 = vst.msk [vmem:[%s283 + $0x80] sm:$0xff] %vm1939, %v2541
      %2574 = vst.msk [vmem:[%s283 + $0x88] sm:$0xff] %vm1939, %v2542
      %2575 = vst.msk [vmem:[%s283 + $0x90] sm:$0xff] %vm1939, %v2543
      %2576 = vst.msk [vmem:[%s283 + $0x98] sm:$0xff] %vm1939, %v2544
      %2577 = vst.msk [vmem:[%s283 + $0xa0] sm:$0xff] %vm1939, %v2545
      %2578 = vst.msk [vmem:[%s283 + $0xa8] sm:$0xff] %vm1939, %v2546
      %2579 = vst.msk [vmem:[%s283 + $0xb0] sm:$0xff] %vm1939, %v2547
      %2580 = vst.msk [vmem:[%s283 + $0xb8] sm:$0xff] %vm1939, %v2548
      %2581 = vst.msk [vmem:[%s283 + $0xc0] sm:$0xff] %vm1939, %v2549
      %2582 = vst.msk [vmem:[%s283 + $0xc8] sm:$0xff] %vm1939, %v2550
      %2583 = vst.msk [vmem:[%s283 + $0xd0] sm:$0xff] %vm1939, %v2551
      %2584 = vst.msk [vmem:[%s283 + $0xd8] sm:$0xff] %vm1939, %v2552
      %2585 = vst.msk [vmem:[%s283 + $0xe0] sm:$0xff] %vm1939, %v2553
      %2586 = vst.msk [vmem:[%s283 + $0xe8] sm:$0xff] %vm1939, %v2554
      %2587 = vst.msk [vmem:[%s283 + $0xf0] sm:$0xff] %vm1939, %v2555
      %2588 = vst.msk [vmem:[%s283 + $0xf8] sm:$0xff] %vm1939, %v2556
      %s2589 = smul.u32 4, %s17
      %p2590 = scmp.lt.s32.totalorder %s2589, 7
      %s2591 = scalar_select %p2590, %s2589, 7
      %s2592 = smul.addr %s2591, 8
      %s2593 = smul.addr %s2592, 8
      %s2594 = scalar_lea.vmem %s6, %s2593
      // Predicated region
      $region45: #{_lambda_.9} parent=43 // pred_check
        %p2595 = pneg %p171
      $region46: #{_lambda_.9} parent=43 // pred_check_branch
        %2597 = sbr.rel (%p2595) target = $region48
      $region47: #{_lambda_.9} parent=43 // pred_region
        %s2598 = smul.u32 4, %s17
      $region48: #{_lambda_.9} parent=43 // pred_fallthru
        _
    $region44: #{_lambda_.9} parent=5 // pred_fallthru
      _
    %p2599 = scmp.le.s32.totalorder 2, %s12
    // Predicated region
    $region49: #{_lambda_.9} parent=5 // pred_check
      %p2600 = pneg %p2599
    $region50: #{_lambda_.9} parent=5 // pred_check_branch
      %2602 = sbr.rel (%p2600) target = $region52
    $region51: #{_lambda_.9} parent=5 // pred_region
      %s2603 = ssub.s32 %s12, 2
      // Predicated region
      $region53: #{_lambda_.9} parent=51 // pred_check
        %p2604 = pneg %p177
      $region54: #{_lambda_.9} parent=51 // pred_check_branch
        %2606 = sbr.rel (%p2604) target = $region56
      $region55: #{_lambda_.9} parent=51 // pred_region
        %s2607 = smul.u32 4, %s18
        %p2608 = scmp.lt.s32.totalorder %s2607, 7
        %s2609 = scalar_select %p2608, %s2607, 7
        %s2610 = smul.addr %s2609, 8
        %s2611 = smul.addr %s2610, 8
        %s2612 = scalar_lea.vmem %s6, %s2611
      $region56: #{_lambda_.9} parent=51 // pred_fallthru
        _
    $region52: #{_lambda_.9} parent=5 // pred_fallthru
      _
  $region6: #{_lambda_.9} parent=0 // loop_footer
    %s16 = sadd.s32 1, %s12
  $region7: #{_lambda_.9} parent=0 // loop_footer_branch
    %11 = sbr.rel target = $region3
  $region8: #{_lambda_.9} parent=0 // loop_exit
    _

</llo_original>
